<compile_context>
chip_gen: v5e
topology: v5e:2x2
jax: 0.10.0
libtpu: 0.0.40
codegen_flags: <defaults>
</compile_context>

<pallas_src>
import functools

import numpy as np

import jax
import jax.numpy as jnp
from jax.experimental import pallas as pl
from jax.experimental.pallas import tpu as pltpu


_TAPS = tuple((dh, dw) for dh in (-1, 0, 1) for dw in (-1, 0, 1))  # 3x3 taps


# ----------------------------------------------------------------------------
# Fused kernel
# ----------------------------------------------------------------------------
def _fused_dqn_kernel(x_ref, masks_ref, w1_ref, b1_ref, w2_ref, b2_ref,
                      w3_ref, b3_ref, wf1_ref, bf1_ref, wf2_ref, bf2_ref,
                      o_ref, *, H, W, A, tb):
    f32, bf16 = jnp.float32, jnp.bfloat16
    HW = H * W
    rows = tb * HW

    masks = masks_ref[...]                      # (rows, 128) f32; col t = tap-t validity

    def shift_rows(a, off):
        # out[r] = a[(r + off) mod rows]; wrapped rows are zeroed by the tap mask.
        k = off % rows
        if k == 0:
            return a
        return jnp.concatenate([a[k:, :], a[:k, :]], axis=0)

    def conv3x3(a, w_ref, b_ref):
        acc = jnp.zeros((rows, 128), f32)
        for t, (dh, dw) in enumerate(_TAPS):
            shifted = shift_rows(a, dh * W + dw) * masks[:, t:t + 1]
            acc = acc + jnp.dot(shifted.astype(bf16), w_ref[t],
                                preferred_element_type=f32)
        return jnp.maximum(acc + b_ref[...], 0.0)

    # --- conv stack (channels on the 128-wide lane axis, zero padded) -------
    x0 = x_ref[...].astype(f32)                                        # (rows, 128)
    a1 = conv3x3(x0, w1_ref, b1_ref)                                   # conv1 + ReLU
    a2 = conv3x3(a1, w2_ref, b2_ref)                                   # conv2 + ReLU
    a3 = jnp.maximum(
        jnp.dot(a2.astype(bf16), w3_ref[...], preferred_element_type=f32)
        + b3_ref[...], 0.0)                                            # conv3 (1x1) + ReLU

    # --- fc1: adv|val fused to 1024 lanes, BN(eval) folded into W/b ---------
    # Flatten handled as a sum over spatial positions (weight rows were
    # permuted accordingly at prep time), avoiding a lane-merging reshape.
    a3 = a3.reshape(tb, HW, 128)                 # tile-aligned regroup (HW % 8 == 0)
    acc = jnp.zeros((tb, 1024), f32)
    for p in range(HW):
        acc = acc + jnp.dot(a3[:, p, :].astype(bf16), wf1_ref[p],
                            preferred_element_type=f32)
    h1 = jnp.maximum(acc + bf1_ref[...], 0.0)                          # (tb, 1024)

    # --- fc2 (adv cols [0,A), val col A) + dueling combine ------------------
    y2 = jnp.dot(h1.astype(bf16), wf2_ref[...], preferred_element_type=f32)
    y2 = y2 + bf2_ref[...]                                             # (tb, 128)
    lane = jax.lax.broadcasted_iota(jnp.int32, (tb, 128), 1)
    adv_sum = jnp.sum(jnp.where(lane < A, y2, 0.0), axis=-1, keepdims=True)
    val = jnp.sum(jnp.where(lane == A, y2, 0.0), axis=-1, keepdims=True)
    # cols [0,A) hold Q = val + adv - mean(adv); cols >= A are don't-care.
    o_ref[...] = y2 + (val - adv_sum * (1.0 / A))


# ----------------------------------------------------------------------------
# Parameter preparation (one-time; folds BN, fuses heads, pads to 128 lanes)
# ----------------------------------------------------------------------------
def _conv_tap_weights(w_conv, cin, cout):
    """(cout, cin, 3, 3) torch layout -> (9, 128, 128) bf16, zero padded."""
    t = jnp.transpose(w_conv, (2, 3, 1, 0)).reshape(9, cin, cout)
    return jnp.pad(t, ((0, 0), (0, 128 - cin), (0, 128 - cout))).astype(jnp.bfloat16)


def _row_bias(b, n=128):
    return jnp.pad(b.astype(jnp.float32), (0, n - b.shape[0])).reshape(1, n)


def prepare_kernel_params(params, *, in_channels, h, w, num_actions, eps=1e-5):
    HW = h * w
    A = num_actions
    kp = {}
    kp["w1"] = _conv_tap_weights(params["conv1_w"], in_channels, 32)
    kp["b1"] = _row_bias(params["conv1_b"])
    kp["w2"] = _conv_tap_weights(params["conv2_w"], 32, 64)
    kp["b2"] = _row_bias(params["conv2_b"])
    kp["w3"] = jnp.pad(params["conv3_w"].reshape(128, 64).T,
                       ((0, 64), (0, 0))).astype(jnp.bfloat16)          # (128, 128)
    kp["b3"] = _row_bias(params["conv3_b"])

    # fc1: concat adv|val, fold BatchNorm1d(eval) scale/shift into W/b, and
    # permute rows from PyTorch CHW-flatten order to (spatial, channel).
    scale = params["bn_gamma"] / jnp.sqrt(params["bn_var"] + eps)       # (512,)
    shift = params["bn_beta"] - params["bn_mean"] * scale
    wf1 = jnp.concatenate([params["fc1_adv_w"] * scale[None, :],
                           params["fc1_val_w"] * scale[None, :]], axis=1)   # (feat, 1024)
    kp["wf1"] = wf1.reshape(128, HW, 1024).transpose(1, 0, 2).astype(jnp.bfloat16)
    bf1 = (jnp.concatenate([params["fc1_adv_b"], params["fc1_val_b"]])
           * jnp.concatenate([scale, scale]) + jnp.concatenate([shift, shift]))
    kp["bf1"] = bf1.reshape(1, 1024).astype(jnp.float32)

    # fc2: adv -> cols [0, A), val -> col A, rest zero padded to 128 lanes.
    wf2 = jnp.zeros((1024, 128), jnp.float32)
    wf2 = wf2.at[:512, :A].set(params["fc2_adv_w"])
    wf2 = wf2.at[512:, A].set(params["fc2_val_w"][:, 0])
    kp["wf2"] = wf2.astype(jnp.bfloat16)
    bf2 = jnp.zeros((128,), jnp.float32)
    bf2 = bf2.at[:A].set(params["fc2_adv_b"]).at[A].set(params["fc2_val_b"][0])
    kp["bf2"] = bf2.reshape(1, 128)
    return kp


# ----------------------------------------------------------------------------
# Forward pass (mirrors ConvDuelingDQN.forward, inference mode)
# ----------------------------------------------------------------------------
def conv_dueling_dqn_forward(kparams, x, *, in_channels, h, w, num_actions, tb=8):
    assert in_channels <= 128 and num_actions <= 127
    B = x.shape[0]
    HW = h * w
    A = num_actions
    rows = tb * HW

    # Input prep: drop trailing feature, NCHW -> (batch*spatial rows, 128 lanes).
    xi = x[:, :-1].reshape(B, in_channels, h, w).transpose(0, 2, 3, 1)
    xi = xi.reshape(B * HW, in_channels)
    xi = jnp.pad(xi, ((0, 0), (0, 128 - in_channels)))
    Bp = pl.cdiv(B, tb) * tb
    xi = jnp.pad(xi, ((0, (Bp - B) * HW), (0, 0))).astype(jnp.bfloat16)

    # Static per-tap validity masks (conv zero padding), shared by conv1/conv2.
    rr = np.arange(rows)
    hh, ww = (rr // w) % h, rr % w
    tap_masks = np.zeros((rows, 128), np.float32)
    for t, (dh, dw) in enumerate(_TAPS):
        tap_masks[:, t] = ((hh + dh >= 0) & (hh + dh < h) &
                           (ww + dw >= 0) & (ww + dw < w))
    tap_masks = jnp.asarray(tap_masks)

    kern = functools.partial(_fused_dqn_kernel, H=h, W=w, A=A, tb=tb)
    out = pl.pallas_call(
        kern,
        out_shape=jax.ShapeDtypeStruct((Bp, 128), jnp.float32),
        grid=(Bp // tb,),
        in_specs=[
            pl.BlockSpec((rows, 128), lambda i: (i, 0)),         # x rows (batch block i)
            pl.BlockSpec((rows, 128), lambda i: (0, 0)),         # tap masks (resident)
            pl.BlockSpec((9, 128, 128), lambda i: (0, 0, 0)),    # conv1 taps
            pl.BlockSpec((1, 128), lambda i: (0, 0)),
            pl.BlockSpec((9, 128, 128), lambda i: (0, 0, 0)),    # conv2 taps
            pl.BlockSpec((1, 128), lambda i: (0, 0)),
            pl.BlockSpec((128, 128), lambda i: (0, 0)),          # conv3 (1x1)
            pl.BlockSpec((1, 128), lambda i: (0, 0)),
            pl.BlockSpec((HW, 128, 1024), lambda i: (0, 0, 0)),  # fc1 adv|val, BN folded
            pl.BlockSpec((1, 1024), lambda i: (0, 0)),
            pl.BlockSpec((1024, 128), lambda i: (0, 0)),         # fc2 adv|val fused
            pl.BlockSpec((1, 128), lambda i: (0, 0)),
        ],
        out_specs=pl.BlockSpec((tb, 128), lambda i: (i, 0)),
        compiler_params=pltpu.CompilerParams(
            dimension_semantics=("parallel",)),
    )(xi, tap_masks, kparams["w1"], kparams["b1"], kparams["w2"], kparams["b2"],
      kparams["w3"], kparams["b3"], kparams["wf1"], kparams["bf1"],
      kparams["wf2"], kparams["bf2"])
    return out[:B, :A]


# ----------------------------------------------------------------------------
# Pure-JAX reference (f32), parameters
# ----------------------------------------------------------------------------
def reference_forward(params, x, *, in_channels, h, w, num_actions, eps=1e-5):
    x = x[:, :-1].reshape(-1, in_channels, h, w)

    def conv(a, wt, b, pad):
        y = jax.lax.conv_general_dilated(
            a, wt, window_strides=(1, 1), padding=((pad, pad), (pad, pad)),
            dimension_numbers=("NCHW", "OIHW", "NCHW"))
        return jax.nn.relu(y + b[None, :, None, None])

    a = conv(x, params["conv1_w"], params["conv1_b"], 1)
    a = conv(a, params["conv2_w"], params["conv2_b"], 1)
    a = conv(a, params["conv3_w"], params["conv3_b"], 0)
    a = a.reshape(a.shape[0], -1)
    scale = params["bn_gamma"] / jnp.sqrt(params["bn_var"] + eps)
    shift = params["bn_beta"] - params["bn_mean"] * scale
    adv = jax.nn.relu((a @ params["fc1_adv_w"] + params["fc1_adv_b"]) * scale + shift)
    val = jax.nn.relu((a @ params["fc1_val_w"] + params["fc1_val_b"]) * scale + shift)
    adv = adv @ params["fc2_adv_w"] + params["fc2_adv_b"]
    val = val @ params["fc2_val_w"] + params["fc2_val_b"]
    return val + adv - adv.mean(axis=1, keepdims=True)


def init_params(key, in_channels, h, w, num_actions):
    ks = jax.random.split(key, 14)
    feat = h * w * 128

    def xavier(k, fan_in, fan_out, shape):
        limit = (6.0 / (fan_in + fan_out)) ** 0.5
        return jax.random.uniform(k, shape, jnp.float32, -limit, limit)

    def conv_init(k, cout, cin, kh, kw):
        limit = (1.0 / (cin * kh * kw)) ** 0.5
        return jax.random.uniform(k, (cout, cin, kh, kw), jnp.float32, -limit, limit)

    return {
        "conv1_w": conv_init(ks[0], 32, in_channels, 3, 3),
        "conv1_b": jax.random.uniform(ks[1], (32,), jnp.float32, -0.05, 0.05),
        "conv2_w": conv_init(ks[2], 64, 32, 3, 3),
        "conv2_b": jax.random.uniform(ks[3], (64,), jnp.float32, -0.05, 0.05),
        "conv3_w": conv_init(ks[4], 128, 64, 1, 1),
        "conv3_b": jax.random.uniform(ks[5], (128,), jnp.float32, -0.05, 0.05),
        # Linear weights stored as (in, out); equivalent to PyTorch x @ W.T.
        "fc1_adv_w": xavier(ks[6], feat, 512, (feat, 512)),
        "fc1_adv_b": jnp.zeros((512,), jnp.float32),
        "fc1_val_w": xavier(ks[7], feat, 512, (feat, 512)),
        "fc1_val_b": jnp.zeros((512,), jnp.float32),
        "fc2_adv_w": xavier(ks[8], 512, num_actions, (512, num_actions)),
        "fc2_adv_b": jnp.zeros((num_actions,), jnp.float32),
        "fc2_val_w": xavier(ks[9], 512, 1, (512, 1)),
        "fc2_val_b": jnp.zeros((1,), jnp.float32),
        # BatchNorm1d(512) affine params + running stats (eval mode).
        "bn_gamma": jax.random.uniform(ks[10], (512,), jnp.float32, 0.5, 1.5),
        "bn_beta": jax.random.uniform(ks[11], (512,), jnp.float32, -0.1, 0.1),
        "bn_mean": jax.random.uniform(ks[12], (512,), jnp.float32, -0.1, 0.1),
        "bn_var": jax.random.uniform(ks[13], (512,), jnp.float32, 0.5, 1.5),
    }


# ----------------------------------------------------------------------------
# Demo
# ----------------------------------------------------------------------------
if __name__ == "__main__":
    B, C, H, W, A = 2, 4, 4, 4, 4
    key = jax.random.PRNGKey(0)
    kparam_key, kx = jax.random.split(key)
    params = init_params(kparam_key, C, H, W, A)
    # Module expects a flat vector of size in_channels*h*w + 1 per sample.
    x = jax.random.normal(kx, (B, C * H * W + 1), jnp.float32)

    kparams = prepare_kernel_params(params, in_channels=C, h=H, w=W, num_actions=A)
    fwd = jax.jit(functools.partial(
        conv_dueling_dqn_forward, in_channels=C, h=H, w=W, num_actions=A))
    out = fwd(kparams, x)
    jax.block_until_ready(out)
    assert out.shape == (B, A) and out.dtype == jnp.float32

    ref = reference_forward(params, x, in_channels=C, h=H, w=W, num_actions=A)
    np.testing.assert_allclose(np.asarray(out), np.asarray(ref), rtol=5e-2, atol=5e-2)
    print("KERNEL_OK")
</pallas_src>

<mosaic_0001>
module attributes {stable_mosaic.version = 11 : i64} {
  func.func @_fused_dqn_kernel(%arg0: i32, %arg1: memref<128x128xbf16, #tpu.memory_space<vmem>>, %arg2: memref<128x128xf32, #tpu.memory_space<vmem>>, %arg3: memref<9x128x128xbf16, #tpu.memory_space<vmem>>, %arg4: memref<1x128xf32, #tpu.memory_space<vmem>>, %arg5: memref<9x128x128xbf16, #tpu.memory_space<vmem>>, %arg6: memref<1x128xf32, #tpu.memory_space<vmem>>, %arg7: memref<128x128xbf16, #tpu.memory_space<vmem>>, %arg8: memref<1x128xf32, #tpu.memory_space<vmem>>, %arg9: memref<16x128x1024xbf16, #tpu.memory_space<vmem>>, %arg10: memref<1x1024xf32, #tpu.memory_space<vmem>>, %arg11: memref<1024x128xbf16, #tpu.memory_space<vmem>>, %arg12: memref<1x128xf32, #tpu.memory_space<vmem>>, %arg13: memref<8x128xf32, #tpu.memory_space<vmem>>) attributes {dimension_semantics = [#tpu.dimension_semantics<parallel>], iteration_bounds = array<i64: 1>, scalar_prefetch = 0 : i64, scratch_operands = 0 : i64, tpu.core_type = #tpu.core_type<tc>, window_params = [{transform_indices = @transform_0, window_bounds = array<i64: 128, 128>}, {pipeline_mode = #tpu.pipeline_mode<synchronous>, transform_indices = @transform_1, window_bounds = array<i64: 128, 128>}, {pipeline_mode = #tpu.pipeline_mode<synchronous>, transform_indices = @transform_2, window_bounds = array<i64: 9, 128, 128>}, {pipeline_mode = #tpu.pipeline_mode<synchronous>, transform_indices = @transform_3, window_bounds = array<i64: 1, 128>}, {pipeline_mode = #tpu.pipeline_mode<synchronous>, transform_indices = @transform_4, window_bounds = array<i64: 9, 128, 128>}, {pipeline_mode = #tpu.pipeline_mode<synchronous>, transform_indices = @transform_5, window_bounds = array<i64: 1, 128>}, {pipeline_mode = #tpu.pipeline_mode<synchronous>, transform_indices = @transform_6, window_bounds = array<i64: 128, 128>}, {pipeline_mode = #tpu.pipeline_mode<synchronous>, transform_indices = @transform_7, window_bounds = array<i64: 1, 128>}, {pipeline_mode = #tpu.pipeline_mode<synchronous>, transform_indices = @transform_8, window_bounds = array<i64: 16, 128, 1024>}, {pipeline_mode = #tpu.pipeline_mode<synchronous>, transform_indices = @transform_9, window_bounds = array<i64: 1, 1024>}, {pipeline_mode = #tpu.pipeline_mode<synchronous>, transform_indices = @transform_10, window_bounds = array<i64: 1024, 128>}, {pipeline_mode = #tpu.pipeline_mode<synchronous>, transform_indices = @transform_11, window_bounds = array<i64: 1, 128>}, {transform_indices = @transform_12, window_bounds = array<i64: 8, 128>}]} {
    %c0 = arith.constant 0 : index
    %c0_0 = arith.constant 0 : index
    %0 = vector.load %arg2[%c0, %c0_0] : memref<128x128xf32, #tpu.memory_space<vmem>>, vector<128x128xf32>
    %c0_1 = arith.constant 0 : index
    %c0_2 = arith.constant 0 : index
    %1 = vector.load %arg1[%c0_1, %c0_2] : memref<128x128xbf16, #tpu.memory_space<vmem>>, vector<128x128xbf16>
    %2 = arith.extf %1 : vector<128x128xbf16> to vector<128x128xf32>
    %cst = arith.constant 0.000000e+00 : f32
    %3 = vector.broadcast %cst : f32 to vector<128x128xf32>
    %4 = vector.extract_strided_slice %2 {offsets = [123, 0], sizes = [5, 128], strides = [1, 1]} : vector<128x128xf32> to vector<5x128xf32>
    %5 = vector.extract_strided_slice %2 {offsets = [0, 0], sizes = [123, 128], strides = [1, 1]} : vector<128x128xf32> to vector<123x128xf32>
    %6 = tpu.concatenate %4, %5 in 0 : vector<5x128xf32>, vector<123x128xf32> -> vector<128x128xf32>
    %7 = vector.extract_strided_slice %0 {offsets = [0, 0], sizes = [128, 1], strides = [1, 1]} : vector<128x128xf32> to vector<128x1xf32>
    %8 = vector.broadcast %7 : vector<128x1xf32> to vector<128x128xf32>
    %9 = arith.mulf %6, %8 : vector<128x128xf32>
    %10 = arith.truncf %9 : vector<128x128xf32> to vector<128x128xbf16>
    %c0_3 = arith.constant 0 : index
    %c0_4 = arith.constant 0 : index
    %c0_5 = arith.constant 0 : index
    %11 = vector.load %arg3[%c0_3, %c0_4, %c0_5] : memref<9x128x128xbf16, #tpu.memory_space<vmem>>, vector<1x128x128xbf16>
    %12 = vector.shape_cast %11 : vector<1x128x128xbf16> to vector<128x128xbf16>
    %cst_6 = arith.constant dense<0.000000e+00> : vector<128x128xf32>
    %13 = tpu.matmul %10, %12, %cst_6 {dimension_numbers = #tpu.dot_dimension_numbers<[1], [0], [0], [1], [0, 0, 1, 1], [], []>} : vector<128x128xbf16>, vector<128x128xbf16>, vector<128x128xf32> -> vector<128x128xf32>
    %14 = arith.addf %3, %13 : vector<128x128xf32>
    %15 = vector.extract_strided_slice %2 {offsets = [124, 0], sizes = [4, 128], strides = [1, 1]} : vector<128x128xf32> to vector<4x128xf32>
    %16 = vector.extract_strided_slice %2 {offsets = [0, 0], sizes = [124, 128], strides = [1, 1]} : vector<128x128xf32> to vector<124x128xf32>
    %17 = tpu.concatenate %15, %16 in 0 : vector<4x128xf32>, vector<124x128xf32> -> vector<128x128xf32>
    %18 = vector.extract_strided_slice %0 {offsets = [0, 1], sizes = [128, 1], strides = [1, 1]} : vector<128x128xf32> to vector<128x1xf32>
    %19 = vector.broadcast %18 : vector<128x1xf32> to vector<128x128xf32>
    %20 = arith.mulf %17, %19 : vector<128x128xf32>
    %21 = arith.truncf %20 : vector<128x128xf32> to vector<128x128xbf16>
    %c1 = arith.constant 1 : index
    %c0_7 = arith.constant 0 : index
    %c0_8 = arith.constant 0 : index
    %22 = vector.load %arg3[%c1, %c0_7, %c0_8] : memref<9x128x128xbf16, #tpu.memory_space<vmem>>, vector<1x128x128xbf16>
    %23 = vector.shape_cast %22 : vector<1x128x128xbf16> to vector<128x128xbf16>
    %cst_9 = arith.constant dense<0.000000e+00> : vector<128x128xf32>
    %24 = tpu.matmul %21, %23, %cst_9 {dimension_numbers = #tpu.dot_dimension_numbers<[1], [0], [0], [1], [0, 0, 1, 1], [], []>} : vector<128x128xbf16>, vector<128x128xbf16>, vector<128x128xf32> -> vector<128x128xf32>
    %25 = arith.addf %14, %24 : vector<128x128xf32>
    %26 = vector.extract_strided_slice %2 {offsets = [125, 0], sizes = [3, 128], strides = [1, 1]} : vector<128x128xf32> to vector<3x128xf32>
    %27 = vector.extract_strided_slice %2 {offsets = [0, 0], sizes = [125, 128], strides = [1, 1]} : vector<128x128xf32> to vector<125x128xf32>
    %28 = tpu.concatenate %26, %27 in 0 : vector<3x128xf32>, vector<125x128xf32> -> vector<128x128xf32>
    %29 = vector.extract_strided_slice %0 {offsets = [0, 2], sizes = [128, 1], strides = [1, 1]} : vector<128x128xf32> to vector<128x1xf32>
    %30 = vector.broadcast %29 : vector<128x1xf32> to vector<128x128xf32>
    %31 = arith.mulf %28, %30 : vector<128x128xf32>
    %32 = arith.truncf %31 : vector<128x128xf32> to vector<128x128xbf16>
    %c2 = arith.constant 2 : index
    %c0_10 = arith.constant 0 : index
    %c0_11 = arith.constant 0 : index
    %33 = vector.load %arg3[%c2, %c0_10, %c0_11] : memref<9x128x128xbf16, #tpu.memory_space<vmem>>, vector<1x128x128xbf16>
    %34 = vector.shape_cast %33 : vector<1x128x128xbf16> to vector<128x128xbf16>
    %cst_12 = arith.constant dense<0.000000e+00> : vector<128x128xf32>
    %35 = tpu.matmul %32, %34, %cst_12 {dimension_numbers = #tpu.dot_dimension_numbers<[1], [0], [0], [1], [0, 0, 1, 1], [], []>} : vector<128x128xbf16>, vector<128x128xbf16>, vector<128x128xf32> -> vector<128x128xf32>
    %36 = arith.addf %25, %35 : vector<128x128xf32>
    %37 = vector.extract_strided_slice %2 {offsets = [127, 0], sizes = [1, 128], strides = [1, 1]} : vector<128x128xf32> to vector<1x128xf32>
    %38 = vector.extract_strided_slice %2 {offsets = [0, 0], sizes = [127, 128], strides = [1, 1]} : vector<128x128xf32> to vector<127x128xf32>
    %39 = tpu.concatenate %37, %38 in 0 : vector<1x128xf32>, vector<127x128xf32> -> vector<128x128xf32>
    %40 = vector.extract_strided_slice %0 {offsets = [0, 3], sizes = [128, 1], strides = [1, 1]} : vector<128x128xf32> to vector<128x1xf32>
    %41 = vector.broadcast %40 : vector<128x1xf32> to vector<128x128xf32>
    %42 = arith.mulf %39, %41 : vector<128x128xf32>
    %43 = arith.truncf %42 : vector<128x128xf32> to vector<128x128xbf16>
    %c3 = arith.constant 3 : index
    %c0_13 = arith.constant 0 : index
    %c0_14 = arith.constant 0 : index
    %44 = vector.load %arg3[%c3, %c0_13, %c0_14] : memref<9x128x128xbf16, #tpu.memory_space<vmem>>, vector<1x128x128xbf16>
    %45 = vector.shape_cast %44 : vector<1x128x128xbf16> to vector<128x128xbf16>
    %cst_15 = arith.constant dense<0.000000e+00> : vector<128x128xf32>
    %46 = tpu.matmul %43, %45, %cst_15 {dimension_numbers = #tpu.dot_dimension_numbers<[1], [0], [0], [1], [0, 0, 1, 1], [], []>} : vector<128x128xbf16>, vector<128x128xbf16>, vector<128x128xf32> -> vector<128x128xf32>
    %47 = arith.addf %36, %46 : vector<128x128xf32>
    %48 = vector.extract_strided_slice %0 {offsets = [0, 4], sizes = [128, 1], strides = [1, 1]} : vector<128x128xf32> to vector<128x1xf32>
    %49 = vector.broadcast %48 : vector<128x1xf32> to vector<128x128xf32>
    %50 = arith.mulf %2, %49 : vector<128x128xf32>
    %51 = arith.truncf %50 : vector<128x128xf32> to vector<128x128xbf16>
    %c4 = arith.constant 4 : index
    %c0_16 = arith.constant 0 : index
    %c0_17 = arith.constant 0 : index
    %52 = vector.load %arg3[%c4, %c0_16, %c0_17] : memref<9x128x128xbf16, #tpu.memory_space<vmem>>, vector<1x128x128xbf16>
    %53 = vector.shape_cast %52 : vector<1x128x128xbf16> to vector<128x128xbf16>
    %cst_18 = arith.constant dense<0.000000e+00> : vector<128x128xf32>
    %54 = tpu.matmul %51, %53, %cst_18 {dimension_numbers = #tpu.dot_dimension_numbers<[1], [0], [0], [1], [0, 0, 1, 1], [], []>} : vector<128x128xbf16>, vector<128x128xbf16>, vector<128x128xf32> -> vector<128x128xf32>
    %55 = arith.addf %47, %54 : vector<128x128xf32>
    %56 = vector.extract_strided_slice %2 {offsets = [1, 0], sizes = [127, 128], strides = [1, 1]} : vector<128x128xf32> to vector<127x128xf32>
    %57 = vector.extract_strided_slice %2 {offsets = [0, 0], sizes = [1, 128], strides = [1, 1]} : vector<128x128xf32> to vector<1x128xf32>
    %58 = tpu.concatenate %56, %57 in 0 : vector<127x128xf32>, vector<1x128xf32> -> vector<128x128xf32>
    %59 = vector.extract_strided_slice %0 {offsets = [0, 5], sizes = [128, 1], strides = [1, 1]} : vector<128x128xf32> to vector<128x1xf32>
    %60 = vector.broadcast %59 : vector<128x1xf32> to vector<128x128xf32>
    %61 = arith.mulf %58, %60 : vector<128x128xf32>
    %62 = arith.truncf %61 : vector<128x128xf32> to vector<128x128xbf16>
    %c5 = arith.constant 5 : index
    %c0_19 = arith.constant 0 : index
    %c0_20 = arith.constant 0 : index
    %63 = vector.load %arg3[%c5, %c0_19, %c0_20] : memref<9x128x128xbf16, #tpu.memory_space<vmem>>, vector<1x128x128xbf16>
    %64 = vector.shape_cast %63 : vector<1x128x128xbf16> to vector<128x128xbf16>
    %cst_21 = arith.constant dense<0.000000e+00> : vector<128x128xf32>
    %65 = tpu.matmul %62, %64, %cst_21 {dimension_numbers = #tpu.dot_dimension_numbers<[1], [0], [0], [1], [0, 0, 1, 1], [], []>} : vector<128x128xbf16>, vector<128x128xbf16>, vector<128x128xf32> -> vector<128x128xf32>
    %66 = arith.addf %55, %65 : vector<128x128xf32>
    %67 = vector.extract_strided_slice %2 {offsets = [3, 0], sizes = [125, 128], strides = [1, 1]} : vector<128x128xf32> to vector<125x128xf32>
    %68 = vector.extract_strided_slice %2 {offsets = [0, 0], sizes = [3, 128], strides = [1, 1]} : vector<128x128xf32> to vector<3x128xf32>
    %69 = tpu.concatenate %67, %68 in 0 : vector<125x128xf32>, vector<3x128xf32> -> vector<128x128xf32>
    %70 = vector.extract_strided_slice %0 {offsets = [0, 6], sizes = [128, 1], strides = [1, 1]} : vector<128x128xf32> to vector<128x1xf32>
    %71 = vector.broadcast %70 : vector<128x1xf32> to vector<128x128xf32>
    %72 = arith.mulf %69, %71 : vector<128x128xf32>
    %73 = arith.truncf %72 : vector<128x128xf32> to vector<128x128xbf16>
    %c6 = arith.constant 6 : index
    %c0_22 = arith.constant 0 : index
    %c0_23 = arith.constant 0 : index
    %74 = vector.load %arg3[%c6, %c0_22, %c0_23] : memref<9x128x128xbf16, #tpu.memory_space<vmem>>, vector<1x128x128xbf16>
    %75 = vector.shape_cast %74 : vector<1x128x128xbf16> to vector<128x128xbf16>
    %cst_24 = arith.constant dense<0.000000e+00> : vector<128x128xf32>
    %76 = tpu.matmul %73, %75, %cst_24 {dimension_numbers = #tpu.dot_dimension_numbers<[1], [0], [0], [1], [0, 0, 1, 1], [], []>} : vector<128x128xbf16>, vector<128x128xbf16>, vector<128x128xf32> -> vector<128x128xf32>
    %77 = arith.addf %66, %76 : vector<128x128xf32>
    %78 = vector.extract_strided_slice %2 {offsets = [4, 0], sizes = [124, 128], strides = [1, 1]} : vector<128x128xf32> to vector<124x128xf32>
    %79 = vector.extract_strided_slice %2 {offsets = [0, 0], sizes = [4, 128], strides = [1, 1]} : vector<128x128xf32> to vector<4x128xf32>
    %80 = tpu.concatenate %78, %79 in 0 : vector<124x128xf32>, vector<4x128xf32> -> vector<128x128xf32>
    %81 = vector.extract_strided_slice %0 {offsets = [0, 7], sizes = [128, 1], strides = [1, 1]} : vector<128x128xf32> to vector<128x1xf32>
    %82 = vector.broadcast %81 : vector<128x1xf32> to vector<128x128xf32>
    %83 = arith.mulf %80, %82 : vector<128x128xf32>
    %84 = arith.truncf %83 : vector<128x128xf32> to vector<128x128xbf16>
    %c7 = arith.constant 7 : index
    %c0_25 = arith.constant 0 : index
    %c0_26 = arith.constant 0 : index
    %85 = vector.load %arg3[%c7, %c0_25, %c0_26] : memref<9x128x128xbf16, #tpu.memory_space<vmem>>, vector<1x128x128xbf16>
    %86 = vector.shape_cast %85 : vector<1x128x128xbf16> to vector<128x128xbf16>
    %cst_27 = arith.constant dense<0.000000e+00> : vector<128x128xf32>
    %87 = tpu.matmul %84, %86, %cst_27 {dimension_numbers = #tpu.dot_dimension_numbers<[1], [0], [0], [1], [0, 0, 1, 1], [], []>} : vector<128x128xbf16>, vector<128x128xbf16>, vector<128x128xf32> -> vector<128x128xf32>
    %88 = arith.addf %77, %87 : vector<128x128xf32>
    %89 = vector.extract_strided_slice %2 {offsets = [5, 0], sizes = [123, 128], strides = [1, 1]} : vector<128x128xf32> to vector<123x128xf32>
    %90 = vector.extract_strided_slice %2 {offsets = [0, 0], sizes = [5, 128], strides = [1, 1]} : vector<128x128xf32> to vector<5x128xf32>
    %91 = tpu.concatenate %89, %90 in 0 : vector<123x128xf32>, vector<5x128xf32> -> vector<128x128xf32>
    %92 = vector.extract_strided_slice %0 {offsets = [0, 8], sizes = [128, 1], strides = [1, 1]} : vector<128x128xf32> to vector<128x1xf32>
    %93 = vector.broadcast %92 : vector<128x1xf32> to vector<128x128xf32>
    %94 = arith.mulf %91, %93 : vector<128x128xf32>
    %95 = arith.truncf %94 : vector<128x128xf32> to vector<128x128xbf16>
    %c8 = arith.constant 8 : index
    %c0_28 = arith.constant 0 : index
    %c0_29 = arith.constant 0 : index
    %96 = vector.load %arg3[%c8, %c0_28, %c0_29] : memref<9x128x128xbf16, #tpu.memory_space<vmem>>, vector<1x128x128xbf16>
    %97 = vector.shape_cast %96 : vector<1x128x128xbf16> to vector<128x128xbf16>
    %cst_30 = arith.constant dense<0.000000e+00> : vector<128x128xf32>
    %98 = tpu.matmul %95, %97, %cst_30 {dimension_numbers = #tpu.dot_dimension_numbers<[1], [0], [0], [1], [0, 0, 1, 1], [], []>} : vector<128x128xbf16>, vector<128x128xbf16>, vector<128x128xf32> -> vector<128x128xf32>
    %99 = arith.addf %88, %98 : vector<128x128xf32>
    %c0_31 = arith.constant 0 : index
    %c0_32 = arith.constant 0 : index
    %100 = vector.load %arg4[%c0_31, %c0_32] : memref<1x128xf32, #tpu.memory_space<vmem>>, vector<1x128xf32>
    %101 = vector.broadcast %100 : vector<1x128xf32> to vector<128x128xf32>
    %102 = arith.addf %99, %101 : vector<128x128xf32>
    %cst_33 = arith.constant 0.000000e+00 : f32
    %103 = vector.broadcast %cst_33 : f32 to vector<128x128xf32>
    %104 = arith.maximumf %102, %103 : vector<128x128xf32>
    %cst_34 = arith.constant 0.000000e+00 : f32
    %105 = vector.broadcast %cst_34 : f32 to vector<128x128xf32>
    %106 = vector.extract_strided_slice %104 {offsets = [123, 0], sizes = [5, 128], strides = [1, 1]} : vector<128x128xf32> to vector<5x128xf32>
    %107 = vector.extract_strided_slice %104 {offsets = [0, 0], sizes = [123, 128], strides = [1, 1]} : vector<128x128xf32> to vector<123x128xf32>
    %108 = tpu.concatenate %106, %107 in 0 : vector<5x128xf32>, vector<123x128xf32> -> vector<128x128xf32>
    %109 = vector.extract_strided_slice %0 {offsets = [0, 0], sizes = [128, 1], strides = [1, 1]} : vector<128x128xf32> to vector<128x1xf32>
    %110 = vector.broadcast %109 : vector<128x1xf32> to vector<128x128xf32>
    %111 = arith.mulf %108, %110 : vector<128x128xf32>
    %112 = arith.truncf %111 : vector<128x128xf32> to vector<128x128xbf16>
    %c0_35 = arith.constant 0 : index
    %c0_36 = arith.constant 0 : index
    %c0_37 = arith.constant 0 : index
    %113 = vector.load %arg5[%c0_35, %c0_36, %c0_37] : memref<9x128x128xbf16, #tpu.memory_space<vmem>>, vector<1x128x128xbf16>
    %114 = vector.shape_cast %113 : vector<1x128x128xbf16> to vector<128x128xbf16>
    %cst_38 = arith.constant dense<0.000000e+00> : vector<128x128xf32>
    %115 = tpu.matmul %112, %114, %cst_38 {dimension_numbers = #tpu.dot_dimension_numbers<[1], [0], [0], [1], [0, 0, 1, 1], [], []>} : vector<128x128xbf16>, vector<128x128xbf16>, vector<128x128xf32> -> vector<128x128xf32>
    %116 = arith.addf %105, %115 : vector<128x128xf32>
    %117 = vector.extract_strided_slice %104 {offsets = [124, 0], sizes = [4, 128], strides = [1, 1]} : vector<128x128xf32> to vector<4x128xf32>
    %118 = vector.extract_strided_slice %104 {offsets = [0, 0], sizes = [124, 128], strides = [1, 1]} : vector<128x128xf32> to vector<124x128xf32>
    %119 = tpu.concatenate %117, %118 in 0 : vector<4x128xf32>, vector<124x128xf32> -> vector<128x128xf32>
    %120 = vector.extract_strided_slice %0 {offsets = [0, 1], sizes = [128, 1], strides = [1, 1]} : vector<128x128xf32> to vector<128x1xf32>
    %121 = vector.broadcast %120 : vector<128x1xf32> to vector<128x128xf32>
    %122 = arith.mulf %119, %121 : vector<128x128xf32>
    %123 = arith.truncf %122 : vector<128x128xf32> to vector<128x128xbf16>
    %c1_39 = arith.constant 1 : index
    %c0_40 = arith.constant 0 : index
    %c0_41 = arith.constant 0 : index
    %124 = vector.load %arg5[%c1_39, %c0_40, %c0_41] : memref<9x128x128xbf16, #tpu.memory_space<vmem>>, vector<1x128x128xbf16>
    %125 = vector.shape_cast %124 : vector<1x128x128xbf16> to vector<128x128xbf16>
    %cst_42 = arith.constant dense<0.000000e+00> : vector<128x128xf32>
    %126 = tpu.matmul %123, %125, %cst_42 {dimension_numbers = #tpu.dot_dimension_numbers<[1], [0], [0], [1], [0, 0, 1, 1], [], []>} : vector<128x128xbf16>, vector<128x128xbf16>, vector<128x128xf32> -> vector<128x128xf32>
    %127 = arith.addf %116, %126 : vector<128x128xf32>
    %128 = vector.extract_strided_slice %104 {offsets = [125, 0], sizes = [3, 128], strides = [1, 1]} : vector<128x128xf32> to vector<3x128xf32>
    %129 = vector.extract_strided_slice %104 {offsets = [0, 0], sizes = [125, 128], strides = [1, 1]} : vector<128x128xf32> to vector<125x128xf32>
    %130 = tpu.concatenate %128, %129 in 0 : vector<3x128xf32>, vector<125x128xf32> -> vector<128x128xf32>
    %131 = vector.extract_strided_slice %0 {offsets = [0, 2], sizes = [128, 1], strides = [1, 1]} : vector<128x128xf32> to vector<128x1xf32>
    %132 = vector.broadcast %131 : vector<128x1xf32> to vector<128x128xf32>
    %133 = arith.mulf %130, %132 : vector<128x128xf32>
    %134 = arith.truncf %133 : vector<128x128xf32> to vector<128x128xbf16>
    %c2_43 = arith.constant 2 : index
    %c0_44 = arith.constant 0 : index
    %c0_45 = arith.constant 0 : index
    %135 = vector.load %arg5[%c2_43, %c0_44, %c0_45] : memref<9x128x128xbf16, #tpu.memory_space<vmem>>, vector<1x128x128xbf16>
    %136 = vector.shape_cast %135 : vector<1x128x128xbf16> to vector<128x128xbf16>
    %cst_46 = arith.constant dense<0.000000e+00> : vector<128x128xf32>
    %137 = tpu.matmul %134, %136, %cst_46 {dimension_numbers = #tpu.dot_dimension_numbers<[1], [0], [0], [1], [0, 0, 1, 1], [], []>} : vector<128x128xbf16>, vector<128x128xbf16>, vector<128x128xf32> -> vector<128x128xf32>
    %138 = arith.addf %127, %137 : vector<128x128xf32>
    %139 = vector.extract_strided_slice %104 {offsets = [127, 0], sizes = [1, 128], strides = [1, 1]} : vector<128x128xf32> to vector<1x128xf32>
    %140 = vector.extract_strided_slice %104 {offsets = [0, 0], sizes = [127, 128], strides = [1, 1]} : vector<128x128xf32> to vector<127x128xf32>
    %141 = tpu.concatenate %139, %140 in 0 : vector<1x128xf32>, vector<127x128xf32> -> vector<128x128xf32>
    %142 = vector.extract_strided_slice %0 {offsets = [0, 3], sizes = [128, 1], strides = [1, 1]} : vector<128x128xf32> to vector<128x1xf32>
    %143 = vector.broadcast %142 : vector<128x1xf32> to vector<128x128xf32>
    %144 = arith.mulf %141, %143 : vector<128x128xf32>
    %145 = arith.truncf %144 : vector<128x128xf32> to vector<128x128xbf16>
    %c3_47 = arith.constant 3 : index
    %c0_48 = arith.constant 0 : index
    %c0_49 = arith.constant 0 : index
    %146 = vector.load %arg5[%c3_47, %c0_48, %c0_49] : memref<9x128x128xbf16, #tpu.memory_space<vmem>>, vector<1x128x128xbf16>
    %147 = vector.shape_cast %146 : vector<1x128x128xbf16> to vector<128x128xbf16>
    %cst_50 = arith.constant dense<0.000000e+00> : vector<128x128xf32>
    %148 = tpu.matmul %145, %147, %cst_50 {dimension_numbers = #tpu.dot_dimension_numbers<[1], [0], [0], [1], [0, 0, 1, 1], [], []>} : vector<128x128xbf16>, vector<128x128xbf16>, vector<128x128xf32> -> vector<128x128xf32>
    %149 = arith.addf %138, %148 : vector<128x128xf32>
    %150 = vector.extract_strided_slice %0 {offsets = [0, 4], sizes = [128, 1], strides = [1, 1]} : vector<128x128xf32> to vector<128x1xf32>
    %151 = vector.broadcast %150 : vector<128x1xf32> to vector<128x128xf32>
    %152 = arith.mulf %104, %151 : vector<128x128xf32>
    %153 = arith.truncf %152 : vector<128x128xf32> to vector<128x128xbf16>
    %c4_51 = arith.constant 4 : index
    %c0_52 = arith.constant 0 : index
    %c0_53 = arith.constant 0 : index
    %154 = vector.load %arg5[%c4_51, %c0_52, %c0_53] : memref<9x128x128xbf16, #tpu.memory_space<vmem>>, vector<1x128x128xbf16>
    %155 = vector.shape_cast %154 : vector<1x128x128xbf16> to vector<128x128xbf16>
    %cst_54 = arith.constant dense<0.000000e+00> : vector<128x128xf32>
    %156 = tpu.matmul %153, %155, %cst_54 {dimension_numbers = #tpu.dot_dimension_numbers<[1], [0], [0], [1], [0, 0, 1, 1], [], []>} : vector<128x128xbf16>, vector<128x128xbf16>, vector<128x128xf32> -> vector<128x128xf32>
    %157 = arith.addf %149, %156 : vector<128x128xf32>
    %158 = vector.extract_strided_slice %104 {offsets = [1, 0], sizes = [127, 128], strides = [1, 1]} : vector<128x128xf32> to vector<127x128xf32>
    %159 = vector.extract_strided_slice %104 {offsets = [0, 0], sizes = [1, 128], strides = [1, 1]} : vector<128x128xf32> to vector<1x128xf32>
    %160 = tpu.concatenate %158, %159 in 0 : vector<127x128xf32>, vector<1x128xf32> -> vector<128x128xf32>
    %161 = vector.extract_strided_slice %0 {offsets = [0, 5], sizes = [128, 1], strides = [1, 1]} : vector<128x128xf32> to vector<128x1xf32>
    %162 = vector.broadcast %161 : vector<128x1xf32> to vector<128x128xf32>
    %163 = arith.mulf %160, %162 : vector<128x128xf32>
    %164 = arith.truncf %163 : vector<128x128xf32> to vector<128x128xbf16>
    %c5_55 = arith.constant 5 : index
    %c0_56 = arith.constant 0 : index
    %c0_57 = arith.constant 0 : index
    %165 = vector.load %arg5[%c5_55, %c0_56, %c0_57] : memref<9x128x128xbf16, #tpu.memory_space<vmem>>, vector<1x128x128xbf16>
    %166 = vector.shape_cast %165 : vector<1x128x128xbf16> to vector<128x128xbf16>
    %cst_58 = arith.constant dense<0.000000e+00> : vector<128x128xf32>
    %167 = tpu.matmul %164, %166, %cst_58 {dimension_numbers = #tpu.dot_dimension_numbers<[1], [0], [0], [1], [0, 0, 1, 1], [], []>} : vector<128x128xbf16>, vector<128x128xbf16>, vector<128x128xf32> -> vector<128x128xf32>
    %168 = arith.addf %157, %167 : vector<128x128xf32>
    %169 = vector.extract_strided_slice %104 {offsets = [3, 0], sizes = [125, 128], strides = [1, 1]} : vector<128x128xf32> to vector<125x128xf32>
    %170 = vector.extract_strided_slice %104 {offsets = [0, 0], sizes = [3, 128], strides = [1, 1]} : vector<128x128xf32> to vector<3x128xf32>
    %171 = tpu.concatenate %169, %170 in 0 : vector<125x128xf32>, vector<3x128xf32> -> vector<128x128xf32>
    %172 = vector.extract_strided_slice %0 {offsets = [0, 6], sizes = [128, 1], strides = [1, 1]} : vector<128x128xf32> to vector<128x1xf32>
    %173 = vector.broadcast %172 : vector<128x1xf32> to vector<128x128xf32>
    %174 = arith.mulf %171, %173 : vector<128x128xf32>
    %175 = arith.truncf %174 : vector<128x128xf32> to vector<128x128xbf16>
    %c6_59 = arith.constant 6 : index
    %c0_60 = arith.constant 0 : index
    %c0_61 = arith.constant 0 : index
    %176 = vector.load %arg5[%c6_59, %c0_60, %c0_61] : memref<9x128x128xbf16, #tpu.memory_space<vmem>>, vector<1x128x128xbf16>
    %177 = vector.shape_cast %176 : vector<1x128x128xbf16> to vector<128x128xbf16>
    %cst_62 = arith.constant dense<0.000000e+00> : vector<128x128xf32>
    %178 = tpu.matmul %175, %177, %cst_62 {dimension_numbers = #tpu.dot_dimension_numbers<[1], [0], [0], [1], [0, 0, 1, 1], [], []>} : vector<128x128xbf16>, vector<128x128xbf16>, vector<128x128xf32> -> vector<128x128xf32>
    %179 = arith.addf %168, %178 : vector<128x128xf32>
    %180 = vector.extract_strided_slice %104 {offsets = [4, 0], sizes = [124, 128], strides = [1, 1]} : vector<128x128xf32> to vector<124x128xf32>
    %181 = vector.extract_strided_slice %104 {offsets = [0, 0], sizes = [4, 128], strides = [1, 1]} : vector<128x128xf32> to vector<4x128xf32>
    %182 = tpu.concatenate %180, %181 in 0 : vector<124x128xf32>, vector<4x128xf32> -> vector<128x128xf32>
    %183 = vector.extract_strided_slice %0 {offsets = [0, 7], sizes = [128, 1], strides = [1, 1]} : vector<128x128xf32> to vector<128x1xf32>
    %184 = vector.broadcast %183 : vector<128x1xf32> to vector<128x128xf32>
    %185 = arith.mulf %182, %184 : vector<128x128xf32>
    %186 = arith.truncf %185 : vector<128x128xf32> to vector<128x128xbf16>
    %c7_63 = arith.constant 7 : index
    %c0_64 = arith.constant 0 : index
    %c0_65 = arith.constant 0 : index
    %187 = vector.load %arg5[%c7_63, %c0_64, %c0_65] : memref<9x128x128xbf16, #tpu.memory_space<vmem>>, vector<1x128x128xbf16>
    %188 = vector.shape_cast %187 : vector<1x128x128xbf16> to vector<128x128xbf16>
    %cst_66 = arith.constant dense<0.000000e+00> : vector<128x128xf32>
    %189 = tpu.matmul %186, %188, %cst_66 {dimension_numbers = #tpu.dot_dimension_numbers<[1], [0], [0], [1], [0, 0, 1, 1], [], []>} : vector<128x128xbf16>, vector<128x128xbf16>, vector<128x128xf32> -> vector<128x128xf32>
    %190 = arith.addf %179, %189 : vector<128x128xf32>
    %191 = vector.extract_strided_slice %104 {offsets = [5, 0], sizes = [123, 128], strides = [1, 1]} : vector<128x128xf32> to vector<123x128xf32>
    %192 = vector.extract_strided_slice %104 {offsets = [0, 0], sizes = [5, 128], strides = [1, 1]} : vector<128x128xf32> to vector<5x128xf32>
    %193 = tpu.concatenate %191, %192 in 0 : vector<123x128xf32>, vector<5x128xf32> -> vector<128x128xf32>
    %194 = vector.extract_strided_slice %0 {offsets = [0, 8], sizes = [128, 1], strides = [1, 1]} : vector<128x128xf32> to vector<128x1xf32>
    %195 = vector.broadcast %194 : vector<128x1xf32> to vector<128x128xf32>
    %196 = arith.mulf %193, %195 : vector<128x128xf32>
    %197 = arith.truncf %196 : vector<128x128xf32> to vector<128x128xbf16>
    %c8_67 = arith.constant 8 : index
    %c0_68 = arith.constant 0 : index
    %c0_69 = arith.constant 0 : index
    %198 = vector.load %arg5[%c8_67, %c0_68, %c0_69] : memref<9x128x128xbf16, #tpu.memory_space<vmem>>, vector<1x128x128xbf16>
    %199 = vector.shape_cast %198 : vector<1x128x128xbf16> to vector<128x128xbf16>
    %cst_70 = arith.constant dense<0.000000e+00> : vector<128x128xf32>
    %200 = tpu.matmul %197, %199, %cst_70 {dimension_numbers = #tpu.dot_dimension_numbers<[1], [0], [0], [1], [0, 0, 1, 1], [], []>} : vector<128x128xbf16>, vector<128x128xbf16>, vector<128x128xf32> -> vector<128x128xf32>
    %201 = arith.addf %190, %200 : vector<128x128xf32>
    %c0_71 = arith.constant 0 : index
    %c0_72 = arith.constant 0 : index
    %202 = vector.load %arg6[%c0_71, %c0_72] : memref<1x128xf32, #tpu.memory_space<vmem>>, vector<1x128xf32>
    %203 = vector.broadcast %202 : vector<1x128xf32> to vector<128x128xf32>
    %204 = arith.addf %201, %203 : vector<128x128xf32>
    %cst_73 = arith.constant 0.000000e+00 : f32
    %205 = vector.broadcast %cst_73 : f32 to vector<128x128xf32>
    %206 = arith.maximumf %204, %205 : vector<128x128xf32>
    %207 = arith.truncf %206 : vector<128x128xf32> to vector<128x128xbf16>
    %c0_74 = arith.constant 0 : index
    %c0_75 = arith.constant 0 : index
    %208 = vector.load %arg7[%c0_74, %c0_75] : memref<128x128xbf16, #tpu.memory_space<vmem>>, vector<128x128xbf16>
    %cst_76 = arith.constant dense<0.000000e+00> : vector<128x128xf32>
    %209 = tpu.matmul %207, %208, %cst_76 {dimension_numbers = #tpu.dot_dimension_numbers<[1], [0], [0], [1], [0, 0, 1, 1], [], []>} : vector<128x128xbf16>, vector<128x128xbf16>, vector<128x128xf32> -> vector<128x128xf32>
    %c0_77 = arith.constant 0 : index
    %c0_78 = arith.constant 0 : index
    %210 = vector.load %arg8[%c0_77, %c0_78] : memref<1x128xf32, #tpu.memory_space<vmem>>, vector<1x128xf32>
    %211 = vector.broadcast %210 : vector<1x128xf32> to vector<128x128xf32>
    %212 = arith.addf %209, %211 : vector<128x128xf32>
    %cst_79 = arith.constant 0.000000e+00 : f32
    %213 = vector.broadcast %cst_79 : f32 to vector<128x128xf32>
    %214 = arith.maximumf %212, %213 : vector<128x128xf32>
    %215 = vector.shape_cast %214 : vector<128x128xf32> to vector<8x16x128xf32>
    %cst_80 = arith.constant 0.000000e+00 : f32
    %216 = vector.broadcast %cst_80 : f32 to vector<8x1024xf32>
    %217 = vector.extract_strided_slice %215 {offsets = [0, 0, 0], sizes = [8, 1, 128], strides = [1, 1, 1]} : vector<8x16x128xf32> to vector<8x1x128xf32>
    %218 = vector.shape_cast %217 : vector<8x1x128xf32> to vector<8x128xf32>
    %219 = arith.truncf %218 : vector<8x128xf32> to vector<8x128xbf16>
    %c0_81 = arith.constant 0 : index
    %c0_82 = arith.constant 0 : index
    %c0_83 = arith.constant 0 : index
    %220 = vector.load %arg9[%c0_81, %c0_82, %c0_83] : memref<16x128x1024xbf16, #tpu.memory_space<vmem>>, vector<1x128x1024xbf16>
    %221 = vector.shape_cast %220 : vector<1x128x1024xbf16> to vector<128x1024xbf16>
    %cst_84 = arith.constant dense<0.000000e+00> : vector<8x1024xf32>
    %222 = tpu.matmul %219, %221, %cst_84 {dimension_numbers = #tpu.dot_dimension_numbers<[1], [0], [0], [1], [0, 0, 1, 1], [], []>} : vector<8x128xbf16>, vector<128x1024xbf16>, vector<8x1024xf32> -> vector<8x1024xf32>
    %223 = arith.addf %216, %222 : vector<8x1024xf32>
    %224 = vector.extract_strided_slice %215 {offsets = [0, 1, 0], sizes = [8, 1, 128], strides = [1, 1, 1]} : vector<8x16x128xf32> to vector<8x1x128xf32>
    %225 = vector.shape_cast %224 : vector<8x1x128xf32> to vector<8x128xf32>
    %226 = arith.truncf %225 : vector<8x128xf32> to vector<8x128xbf16>
    %c1_85 = arith.constant 1 : index
    %c0_86 = arith.constant 0 : index
    %c0_87 = arith.constant 0 : index
    %227 = vector.load %arg9[%c1_85, %c0_86, %c0_87] : memref<16x128x1024xbf16, #tpu.memory_space<vmem>>, vector<1x128x1024xbf16>
    %228 = vector.shape_cast %227 : vector<1x128x1024xbf16> to vector<128x1024xbf16>
    %cst_88 = arith.constant dense<0.000000e+00> : vector<8x1024xf32>
    %229 = tpu.matmul %226, %228, %cst_88 {dimension_numbers = #tpu.dot_dimension_numbers<[1], [0], [0], [1], [0, 0, 1, 1], [], []>} : vector<8x128xbf16>, vector<128x1024xbf16>, vector<8x1024xf32> -> vector<8x1024xf32>
    %230 = arith.addf %223, %229 : vector<8x1024xf32>
    %231 = vector.extract_strided_slice %215 {offsets = [0, 2, 0], sizes = [8, 1, 128], strides = [1, 1, 1]} : vector<8x16x128xf32> to vector<8x1x128xf32>
    %232 = vector.shape_cast %231 : vector<8x1x128xf32> to vector<8x128xf32>
    %233 = arith.truncf %232 : vector<8x128xf32> to vector<8x128xbf16>
    %c2_89 = arith.constant 2 : index
    %c0_90 = arith.constant 0 : index
    %c0_91 = arith.constant 0 : index
    %234 = vector.load %arg9[%c2_89, %c0_90, %c0_91] : memref<16x128x1024xbf16, #tpu.memory_space<vmem>>, vector<1x128x1024xbf16>
    %235 = vector.shape_cast %234 : vector<1x128x1024xbf16> to vector<128x1024xbf16>
    %cst_92 = arith.constant dense<0.000000e+00> : vector<8x1024xf32>
    %236 = tpu.matmul %233, %235, %cst_92 {dimension_numbers = #tpu.dot_dimension_numbers<[1], [0], [0], [1], [0, 0, 1, 1], [], []>} : vector<8x128xbf16>, vector<128x1024xbf16>, vector<8x1024xf32> -> vector<8x1024xf32>
    %237 = arith.addf %230, %236 : vector<8x1024xf32>
    %238 = vector.extract_strided_slice %215 {offsets = [0, 3, 0], sizes = [8, 1, 128], strides = [1, 1, 1]} : vector<8x16x128xf32> to vector<8x1x128xf32>
    %239 = vector.shape_cast %238 : vector<8x1x128xf32> to vector<8x128xf32>
    %240 = arith.truncf %239 : vector<8x128xf32> to vector<8x128xbf16>
    %c3_93 = arith.constant 3 : index
    %c0_94 = arith.constant 0 : index
    %c0_95 = arith.constant 0 : index
    %241 = vector.load %arg9[%c3_93, %c0_94, %c0_95] : memref<16x128x1024xbf16, #tpu.memory_space<vmem>>, vector<1x128x1024xbf16>
    %242 = vector.shape_cast %241 : vector<1x128x1024xbf16> to vector<128x1024xbf16>
    %cst_96 = arith.constant dense<0.000000e+00> : vector<8x1024xf32>
    %243 = tpu.matmul %240, %242, %cst_96 {dimension_numbers = #tpu.dot_dimension_numbers<[1], [0], [0], [1], [0, 0, 1, 1], [], []>} : vector<8x128xbf16>, vector<128x1024xbf16>, vector<8x1024xf32> -> vector<8x1024xf32>
    %244 = arith.addf %237, %243 : vector<8x1024xf32>
    %245 = vector.extract_strided_slice %215 {offsets = [0, 4, 0], sizes = [8, 1, 128], strides = [1, 1, 1]} : vector<8x16x128xf32> to vector<8x1x128xf32>
    %246 = vector.shape_cast %245 : vector<8x1x128xf32> to vector<8x128xf32>
    %247 = arith.truncf %246 : vector<8x128xf32> to vector<8x128xbf16>
    %c4_97 = arith.constant 4 : index
    %c0_98 = arith.constant 0 : index
    %c0_99 = arith.constant 0 : index
    %248 = vector.load %arg9[%c4_97, %c0_98, %c0_99] : memref<16x128x1024xbf16, #tpu.memory_space<vmem>>, vector<1x128x1024xbf16>
    %249 = vector.shape_cast %248 : vector<1x128x1024xbf16> to vector<128x1024xbf16>
    %cst_100 = arith.constant dense<0.000000e+00> : vector<8x1024xf32>
    %250 = tpu.matmul %247, %249, %cst_100 {dimension_numbers = #tpu.dot_dimension_numbers<[1], [0], [0], [1], [0, 0, 1, 1], [], []>} : vector<8x128xbf16>, vector<128x1024xbf16>, vector<8x1024xf32> -> vector<8x1024xf32>
    %251 = arith.addf %244, %250 : vector<8x1024xf32>
    %252 = vector.extract_strided_slice %215 {offsets = [0, 5, 0], sizes = [8, 1, 128], strides = [1, 1, 1]} : vector<8x16x128xf32> to vector<8x1x128xf32>
    %253 = vector.shape_cast %252 : vector<8x1x128xf32> to vector<8x128xf32>
    %254 = arith.truncf %253 : vector<8x128xf32> to vector<8x128xbf16>
    %c5_101 = arith.constant 5 : index
    %c0_102 = arith.constant 0 : index
    %c0_103 = arith.constant 0 : index
    %255 = vector.load %arg9[%c5_101, %c0_102, %c0_103] : memref<16x128x1024xbf16, #tpu.memory_space<vmem>>, vector<1x128x1024xbf16>
    %256 = vector.shape_cast %255 : vector<1x128x1024xbf16> to vector<128x1024xbf16>
    %cst_104 = arith.constant dense<0.000000e+00> : vector<8x1024xf32>
    %257 = tpu.matmul %254, %256, %cst_104 {dimension_numbers = #tpu.dot_dimension_numbers<[1], [0], [0], [1], [0, 0, 1, 1], [], []>} : vector<8x128xbf16>, vector<128x1024xbf16>, vector<8x1024xf32> -> vector<8x1024xf32>
    %258 = arith.addf %251, %257 : vector<8x1024xf32>
    %259 = vector.extract_strided_slice %215 {offsets = [0, 6, 0], sizes = [8, 1, 128], strides = [1, 1, 1]} : vector<8x16x128xf32> to vector<8x1x128xf32>
    %260 = vector.shape_cast %259 : vector<8x1x128xf32> to vector<8x128xf32>
    %261 = arith.truncf %260 : vector<8x128xf32> to vector<8x128xbf16>
    %c6_105 = arith.constant 6 : index
    %c0_106 = arith.constant 0 : index
    %c0_107 = arith.constant 0 : index
    %262 = vector.load %arg9[%c6_105, %c0_106, %c0_107] : memref<16x128x1024xbf16, #tpu.memory_space<vmem>>, vector<1x128x1024xbf16>
    %263 = vector.shape_cast %262 : vector<1x128x1024xbf16> to vector<128x1024xbf16>
    %cst_108 = arith.constant dense<0.000000e+00> : vector<8x1024xf32>
    %264 = tpu.matmul %261, %263, %cst_108 {dimension_numbers = #tpu.dot_dimension_numbers<[1], [0], [0], [1], [0, 0, 1, 1], [], []>} : vector<8x128xbf16>, vector<128x1024xbf16>, vector<8x1024xf32> -> vector<8x1024xf32>
    %265 = arith.addf %258, %264 : vector<8x1024xf32>
    %266 = vector.extract_strided_slice %215 {offsets = [0, 7, 0], sizes = [8, 1, 128], strides = [1, 1, 1]} : vector<8x16x128xf32> to vector<8x1x128xf32>
    %267 = vector.shape_cast %266 : vector<8x1x128xf32> to vector<8x128xf32>
    %268 = arith.truncf %267 : vector<8x128xf32> to vector<8x128xbf16>
    %c7_109 = arith.constant 7 : index
    %c0_110 = arith.constant 0 : index
    %c0_111 = arith.constant 0 : index
    %269 = vector.load %arg9[%c7_109, %c0_110, %c0_111] : memref<16x128x1024xbf16, #tpu.memory_space<vmem>>, vector<1x128x1024xbf16>
    %270 = vector.shape_cast %269 : vector<1x128x1024xbf16> to vector<128x1024xbf16>
    %cst_112 = arith.constant dense<0.000000e+00> : vector<8x1024xf32>
    %271 = tpu.matmul %268, %270, %cst_112 {dimension_numbers = #tpu.dot_dimension_numbers<[1], [0], [0], [1], [0, 0, 1, 1], [], []>} : vector<8x128xbf16>, vector<128x1024xbf16>, vector<8x1024xf32> -> vector<8x1024xf32>
    %272 = arith.addf %265, %271 : vector<8x1024xf32>
    %273 = vector.extract_strided_slice %215 {offsets = [0, 8, 0], sizes = [8, 1, 128], strides = [1, 1, 1]} : vector<8x16x128xf32> to vector<8x1x128xf32>
    %274 = vector.shape_cast %273 : vector<8x1x128xf32> to vector<8x128xf32>
    %275 = arith.truncf %274 : vector<8x128xf32> to vector<8x128xbf16>
    %c8_113 = arith.constant 8 : index
    %c0_114 = arith.constant 0 : index
    %c0_115 = arith.constant 0 : index
    %276 = vector.load %arg9[%c8_113, %c0_114, %c0_115] : memref<16x128x1024xbf16, #tpu.memory_space<vmem>>, vector<1x128x1024xbf16>
    %277 = vector.shape_cast %276 : vector<1x128x1024xbf16> to vector<128x1024xbf16>
    %cst_116 = arith.constant dense<0.000000e+00> : vector<8x1024xf32>
    %278 = tpu.matmul %275, %277, %cst_116 {dimension_numbers = #tpu.dot_dimension_numbers<[1], [0], [0], [1], [0, 0, 1, 1], [], []>} : vector<8x128xbf16>, vector<128x1024xbf16>, vector<8x1024xf32> -> vector<8x1024xf32>
    %279 = arith.addf %272, %278 : vector<8x1024xf32>
    %280 = vector.extract_strided_slice %215 {offsets = [0, 9, 0], sizes = [8, 1, 128], strides = [1, 1, 1]} : vector<8x16x128xf32> to vector<8x1x128xf32>
    %281 = vector.shape_cast %280 : vector<8x1x128xf32> to vector<8x128xf32>
    %282 = arith.truncf %281 : vector<8x128xf32> to vector<8x128xbf16>
    %c9 = arith.constant 9 : index
    %c0_117 = arith.constant 0 : index
    %c0_118 = arith.constant 0 : index
    %283 = vector.load %arg9[%c9, %c0_117, %c0_118] : memref<16x128x1024xbf16, #tpu.memory_space<vmem>>, vector<1x128x1024xbf16>
    %284 = vector.shape_cast %283 : vector<1x128x1024xbf16> to vector<128x1024xbf16>
    %cst_119 = arith.constant dense<0.000000e+00> : vector<8x1024xf32>
    %285 = tpu.matmul %282, %284, %cst_119 {dimension_numbers = #tpu.dot_dimension_numbers<[1], [0], [0], [1], [0, 0, 1, 1], [], []>} : vector<8x128xbf16>, vector<128x1024xbf16>, vector<8x1024xf32> -> vector<8x1024xf32>
    %286 = arith.addf %279, %285 : vector<8x1024xf32>
    %287 = vector.extract_strided_slice %215 {offsets = [0, 10, 0], sizes = [8, 1, 128], strides = [1, 1, 1]} : vector<8x16x128xf32> to vector<8x1x128xf32>
    %288 = vector.shape_cast %287 : vector<8x1x128xf32> to vector<8x128xf32>
    %289 = arith.truncf %288 : vector<8x128xf32> to vector<8x128xbf16>
    %c10 = arith.constant 10 : index
    %c0_120 = arith.constant 0 : index
    %c0_121 = arith.constant 0 : index
    %290 = vector.load %arg9[%c10, %c0_120, %c0_121] : memref<16x128x1024xbf16, #tpu.memory_space<vmem>>, vector<1x128x1024xbf16>
    %291 = vector.shape_cast %290 : vector<1x128x1024xbf16> to vector<128x1024xbf16>
    %cst_122 = arith.constant dense<0.000000e+00> : vector<8x1024xf32>
    %292 = tpu.matmul %289, %291, %cst_122 {dimension_numbers = #tpu.dot_dimension_numbers<[1], [0], [0], [1], [0, 0, 1, 1], [], []>} : vector<8x128xbf16>, vector<128x1024xbf16>, vector<8x1024xf32> -> vector<8x1024xf32>
    %293 = arith.addf %286, %292 : vector<8x1024xf32>
    %294 = vector.extract_strided_slice %215 {offsets = [0, 11, 0], sizes = [8, 1, 128], strides = [1, 1, 1]} : vector<8x16x128xf32> to vector<8x1x128xf32>
    %295 = vector.shape_cast %294 : vector<8x1x128xf32> to vector<8x128xf32>
    %296 = arith.truncf %295 : vector<8x128xf32> to vector<8x128xbf16>
    %c11 = arith.constant 11 : index
    %c0_123 = arith.constant 0 : index
    %c0_124 = arith.constant 0 : index
    %297 = vector.load %arg9[%c11, %c0_123, %c0_124] : memref<16x128x1024xbf16, #tpu.memory_space<vmem>>, vector<1x128x1024xbf16>
    %298 = vector.shape_cast %297 : vector<1x128x1024xbf16> to vector<128x1024xbf16>
    %cst_125 = arith.constant dense<0.000000e+00> : vector<8x1024xf32>
    %299 = tpu.matmul %296, %298, %cst_125 {dimension_numbers = #tpu.dot_dimension_numbers<[1], [0], [0], [1], [0, 0, 1, 1], [], []>} : vector<8x128xbf16>, vector<128x1024xbf16>, vector<8x1024xf32> -> vector<8x1024xf32>
    %300 = arith.addf %293, %299 : vector<8x1024xf32>
    %301 = vector.extract_strided_slice %215 {offsets = [0, 12, 0], sizes = [8, 1, 128], strides = [1, 1, 1]} : vector<8x16x128xf32> to vector<8x1x128xf32>
    %302 = vector.shape_cast %301 : vector<8x1x128xf32> to vector<8x128xf32>
    %303 = arith.truncf %302 : vector<8x128xf32> to vector<8x128xbf16>
    %c12 = arith.constant 12 : index
    %c0_126 = arith.constant 0 : index
    %c0_127 = arith.constant 0 : index
    %304 = vector.load %arg9[%c12, %c0_126, %c0_127] : memref<16x128x1024xbf16, #tpu.memory_space<vmem>>, vector<1x128x1024xbf16>
    %305 = vector.shape_cast %304 : vector<1x128x1024xbf16> to vector<128x1024xbf16>
    %cst_128 = arith.constant dense<0.000000e+00> : vector<8x1024xf32>
    %306 = tpu.matmul %303, %305, %cst_128 {dimension_numbers = #tpu.dot_dimension_numbers<[1], [0], [0], [1], [0, 0, 1, 1], [], []>} : vector<8x128xbf16>, vector<128x1024xbf16>, vector<8x1024xf32> -> vector<8x1024xf32>
    %307 = arith.addf %300, %306 : vector<8x1024xf32>
    %308 = vector.extract_strided_slice %215 {offsets = [0, 13, 0], sizes = [8, 1, 128], strides = [1, 1, 1]} : vector<8x16x128xf32> to vector<8x1x128xf32>
    %309 = vector.shape_cast %308 : vector<8x1x128xf32> to vector<8x128xf32>
    %310 = arith.truncf %309 : vector<8x128xf32> to vector<8x128xbf16>
    %c13 = arith.constant 13 : index
    %c0_129 = arith.constant 0 : index
    %c0_130 = arith.constant 0 : index
    %311 = vector.load %arg9[%c13, %c0_129, %c0_130] : memref<16x128x1024xbf16, #tpu.memory_space<vmem>>, vector<1x128x1024xbf16>
    %312 = vector.shape_cast %311 : vector<1x128x1024xbf16> to vector<128x1024xbf16>
    %cst_131 = arith.constant dense<0.000000e+00> : vector<8x1024xf32>
    %313 = tpu.matmul %310, %312, %cst_131 {dimension_numbers = #tpu.dot_dimension_numbers<[1], [0], [0], [1], [0, 0, 1, 1], [], []>} : vector<8x128xbf16>, vector<128x1024xbf16>, vector<8x1024xf32> -> vector<8x1024xf32>
    %314 = arith.addf %307, %313 : vector<8x1024xf32>
    %315 = vector.extract_strided_slice %215 {offsets = [0, 14, 0], sizes = [8, 1, 128], strides = [1, 1, 1]} : vector<8x16x128xf32> to vector<8x1x128xf32>
    %316 = vector.shape_cast %315 : vector<8x1x128xf32> to vector<8x128xf32>
    %317 = arith.truncf %316 : vector<8x128xf32> to vector<8x128xbf16>
    %c14 = arith.constant 14 : index
    %c0_132 = arith.constant 0 : index
    %c0_133 = arith.constant 0 : index
    %318 = vector.load %arg9[%c14, %c0_132, %c0_133] : memref<16x128x1024xbf16, #tpu.memory_space<vmem>>, vector<1x128x1024xbf16>
    %319 = vector.shape_cast %318 : vector<1x128x1024xbf16> to vector<128x1024xbf16>
    %cst_134 = arith.constant dense<0.000000e+00> : vector<8x1024xf32>
    %320 = tpu.matmul %317, %319, %cst_134 {dimension_numbers = #tpu.dot_dimension_numbers<[1], [0], [0], [1], [0, 0, 1, 1], [], []>} : vector<8x128xbf16>, vector<128x1024xbf16>, vector<8x1024xf32> -> vector<8x1024xf32>
    %321 = arith.addf %314, %320 : vector<8x1024xf32>
    %322 = vector.extract_strided_slice %215 {offsets = [0, 15, 0], sizes = [8, 1, 128], strides = [1, 1, 1]} : vector<8x16x128xf32> to vector<8x1x128xf32>
    %323 = vector.shape_cast %322 : vector<8x1x128xf32> to vector<8x128xf32>
    %324 = arith.truncf %323 : vector<8x128xf32> to vector<8x128xbf16>
    %c15 = arith.constant 15 : index
    %c0_135 = arith.constant 0 : index
    %c0_136 = arith.constant 0 : index
    %325 = vector.load %arg9[%c15, %c0_135, %c0_136] : memref<16x128x1024xbf16, #tpu.memory_space<vmem>>, vector<1x128x1024xbf16>
    %326 = vector.shape_cast %325 : vector<1x128x1024xbf16> to vector<128x1024xbf16>
    %cst_137 = arith.constant dense<0.000000e+00> : vector<8x1024xf32>
    %327 = tpu.matmul %324, %326, %cst_137 {dimension_numbers = #tpu.dot_dimension_numbers<[1], [0], [0], [1], [0, 0, 1, 1], [], []>} : vector<8x128xbf16>, vector<128x1024xbf16>, vector<8x1024xf32> -> vector<8x1024xf32>
    %328 = arith.addf %321, %327 : vector<8x1024xf32>
    %c0_138 = arith.constant 0 : index
    %c0_139 = arith.constant 0 : index
    %329 = vector.load %arg10[%c0_138, %c0_139] : memref<1x1024xf32, #tpu.memory_space<vmem>>, vector<1x1024xf32>
    %330 = vector.broadcast %329 : vector<1x1024xf32> to vector<8x1024xf32>
    %331 = arith.addf %328, %330 : vector<8x1024xf32>
    %cst_140 = arith.constant 0.000000e+00 : f32
    %332 = vector.broadcast %cst_140 : f32 to vector<8x1024xf32>
    %333 = arith.maximumf %331, %332 : vector<8x1024xf32>
    %334 = arith.truncf %333 : vector<8x1024xf32> to vector<8x1024xbf16>
    %c0_141 = arith.constant 0 : index
    %c0_142 = arith.constant 0 : index
    %335 = vector.load %arg11[%c0_141, %c0_142] : memref<1024x128xbf16, #tpu.memory_space<vmem>>, vector<1024x128xbf16>
    %cst_143 = arith.constant dense<0.000000e+00> : vector<8x128xf32>
    %336 = tpu.matmul %334, %335, %cst_143 {dimension_numbers = #tpu.dot_dimension_numbers<[1], [0], [0], [1], [0, 0, 1, 1], [], []>} : vector<8x1024xbf16>, vector<1024x128xbf16>, vector<8x128xf32> -> vector<8x128xf32>
    %c0_144 = arith.constant 0 : index
    %c0_145 = arith.constant 0 : index
    %337 = vector.load %arg12[%c0_144, %c0_145] : memref<1x128xf32, #tpu.memory_space<vmem>>, vector<1x128xf32>
    %338 = vector.broadcast %337 : vector<1x128xf32> to vector<8x128xf32>
    %339 = arith.addf %336, %338 : vector<8x128xf32>
    %340 = tpu.iota {dimensions = array<i32: 1>} : vector<8x128xi32>
    %c4_i32 = arith.constant 4 : i32
    %341 = vector.broadcast %c4_i32 : i32 to vector<8x128xi32>
    %342 = arith.cmpi slt, %340, %341 : vector<8x128xi32>
    %cst_146 = arith.constant 0.000000e+00 : f32
    %343 = vector.broadcast %cst_146 : f32 to vector<8x128xf32>
    %344 = arith.select %342, %339, %343 : vector<8x128xi1>, vector<8x128xf32>
    %cst_147 = arith.constant dense<0.000000e+00> : vector<8xf32>
    %345 = vector.multi_reduction <add>, %344, %cst_147 [1] : vector<8x128xf32> to vector<8xf32>
    %346 = vector.shape_cast %345 : vector<8xf32> to vector<8x1xf32>
    %c4_i32_148 = arith.constant 4 : i32
    %347 = vector.broadcast %c4_i32_148 : i32 to vector<8x128xi32>
    %348 = arith.cmpi eq, %340, %347 : vector<8x128xi32>
    %cst_149 = arith.constant 0.000000e+00 : f32
    %349 = vector.broadcast %cst_149 : f32 to vector<8x128xf32>
    %350 = arith.select %348, %339, %349 : vector<8x128xi1>, vector<8x128xf32>
    %cst_150 = arith.constant dense<0.000000e+00> : vector<8xf32>
    %351 = vector.multi_reduction <add>, %350, %cst_150 [1] : vector<8x128xf32> to vector<8xf32>
    %352 = vector.shape_cast %351 : vector<8xf32> to vector<8x1xf32>
    %cst_151 = arith.constant 2.500000e-01 : f32
    %353 = vector.broadcast %cst_151 : f32 to vector<8x1xf32>
    %354 = arith.mulf %346, %353 : vector<8x1xf32>
    %355 = arith.subf %352, %354 : vector<8x1xf32>
    %356 = vector.broadcast %355 : vector<8x1xf32> to vector<8x128xf32>
    %357 = arith.addf %339, %356 : vector<8x128xf32>
    %c0_152 = arith.constant 0 : index
    %c0_153 = arith.constant 0 : index
    %358 = vector.load %arg13[%c0_152, %c0_153] : memref<8x128xf32, #tpu.memory_space<vmem>>, vector<8x128xf32>
    tpu.vector_store %arg13[%c0_152, %c0_153], %357 {strides = array<i32>} : memref<8x128xf32, #tpu.memory_space<vmem>>, vector<8x128xf32>,
    return
  }
  func.func @transform_0(%arg0: i32) -> (i32, i32) {
    %c0_i32 = arith.constant 0 : i32
    %c0_i32_0 = arith.constant 0 : i32
    return %arg0, %c0_i32 : i32, i32
  }
  func.func @transform_1(%arg0: i32) -> (i32, i32) {
    %c0_i32 = arith.constant 0 : i32
    %c0_i32_0 = arith.constant 0 : i32
    %c0_i32_1 = arith.constant 0 : i32
    return %c0_i32, %c0_i32_0 : i32, i32
  }
  func.func @transform_2(%arg0: i32) -> (i32, i32, i32) {
    %c0_i32 = arith.constant 0 : i32
    %c0_i32_0 = arith.constant 0 : i32
    %c0_i32_1 = arith.constant 0 : i32
    %c0_i32_2 = arith.constant 0 : i32
    return %c0_i32, %c0_i32_0, %c0_i32_1 : i32, i32, i32
  }
  func.func @transform_3(%arg0: i32) -> (i32, i32) {
    %c0_i32 = arith.constant 0 : i32
    %c0_i32_0 = arith.constant 0 : i32
    %c0_i32_1 = arith.constant 0 : i32
    return %c0_i32, %c0_i32_0 : i32, i32
  }
  func.func @transform_4(%arg0: i32) -> (i32, i32, i32) {
    %c0_i32 = arith.constant 0 : i32
    %c0_i32_0 = arith.constant 0 : i32
    %c0_i32_1 = arith.constant 0 : i32
    %c0_i32_2 = arith.constant 0 : i32
    return %c0_i32, %c0_i32_0, %c0_i32_1 : i32, i32, i32
  }
  func.func @transform_5(%arg0: i32) -> (i32, i32) {
    %c0_i32 = arith.constant 0 : i32
    %c0_i32_0 = arith.constant 0 : i32
    %c0_i32_1 = arith.constant 0 : i32
    return %c0_i32, %c0_i32_0 : i32, i32
  }
  func.func @transform_6(%arg0: i32) -> (i32, i32) {
    %c0_i32 = arith.constant 0 : i32
    %c0_i32_0 = arith.constant 0 : i32
    %c0_i32_1 = arith.constant 0 : i32
    return %c0_i32, %c0_i32_0 : i32, i32
  }
  func.func @transform_7(%arg0: i32) -> (i32, i32) {
    %c0_i32 = arith.constant 0 : i32
    %c0_i32_0 = arith.constant 0 : i32
    %c0_i32_1 = arith.constant 0 : i32
    return %c0_i32, %c0_i32_0 : i32, i32
  }
  func.func @transform_8(%arg0: i32) -> (i32, i32, i32) {
    %c0_i32 = arith.constant 0 : i32
    %c0_i32_0 = arith.constant 0 : i32
    %c0_i32_1 = arith.constant 0 : i32
    %c0_i32_2 = arith.constant 0 : i32
    return %c0_i32, %c0_i32_0, %c0_i32_1 : i32, i32, i32
  }
  func.func @transform_9(%arg0: i32) -> (i32, i32) {
    %c0_i32 = arith.constant 0 : i32
    %c0_i32_0 = arith.constant 0 : i32
    %c0_i32_1 = arith.constant 0 : i32
    return %c0_i32, %c0_i32_0 : i32, i32
  }
  func.func @transform_10(%arg0: i32) -> (i32, i32) {
    %c0_i32 = arith.constant 0 : i32
    %c0_i32_0 = arith.constant 0 : i32
    %c0_i32_1 = arith.constant 0 : i32
    return %c0_i32, %c0_i32_0 : i32, i32
  }
  func.func @transform_11(%arg0: i32) -> (i32, i32) {
    %c0_i32 = arith.constant 0 : i32
    %c0_i32_0 = arith.constant 0 : i32
    %c0_i32_1 = arith.constant 0 : i32
    return %c0_i32, %c0_i32_0 : i32, i32
  }
  func.func @transform_12(%arg0: i32) -> (i32, i32) {
    %c0_i32 = arith.constant 0 : i32
    %c0_i32_0 = arith.constant 0 : i32
    return %arg0, %c0_i32 : i32, i32
  }
}

</mosaic_0001>

<llo_original>
// kernel: conv_dueling_dqn_forward.1
$region0: #{conv_dueling_dqn_forward.1}
  #allocation0 [shape = 'u32[]', space=smem, size = 0x4, offset = 0x4, fixed_abs, tag = 'smem constant byte address 0x4 - core index']
  #allocation1 [shape = 'u32[72,128]{1,0:T(1,128)}', space=vmem, size = 0x9000, scoped, tag = 'internal scratch']
  %s0 = inlined_call_operand.vmem [shape: bf16[128,128], index: 0, kind: input, shape index: {}]
  %s1 = inlined_call_operand.hbm [shape: f32[128,128], index: 1, kind: input, shape index: {}]
  %s2 = inlined_call_operand.hbm [shape: bf16[9,128,128], index: 2, kind: input, shape index: {}]
  %s3 = inlined_call_operand.hbm [shape: f32[1,128], index: 3, kind: input, shape index: {}]
  %s4 = inlined_call_operand.hbm [shape: bf16[9,128,128], index: 4, kind: input, shape index: {}]
  %s5 = inlined_call_operand.hbm [shape: f32[1,128], index: 5, kind: input, shape index: {}]
  %s6 = inlined_call_operand.hbm [shape: bf16[128,128], index: 6, kind: input, shape index: {}]
  %s7 = inlined_call_operand.hbm [shape: f32[1,128], index: 7, kind: input, shape index: {}]
  %s8 = inlined_call_operand.hbm [shape: bf16[16,128,1024], index: 8, kind: input, shape index: {}]
  %s9 = inlined_call_operand.hbm [shape: f32[1,1024], index: 9, kind: input, shape index: {}]
  %s10 = inlined_call_operand.hbm [shape: bf16[1024,128], index: 10, kind: input, shape index: {}]
  %s11 = inlined_call_operand.hbm [shape: f32[1,128], index: 11, kind: input, shape index: {}]
  %s12 = inlined_call_operand.vmem [shape: f32[8,128], index: 12, kind: output, shape index: {}]
  %s13 = sld [smem:[#allocation0]]
  $region102: #{conv_dueling_dqn_forward.1} parent=0
    _
  %s15 = ssub.s32 1, %s13
  %s16 = scalar_select 0, %s15, %s13
  $region1: #{conv_dueling_dqn_forward.1} parent=0
    #allocation2 [shape = 'u8[65536]{0}', space=vmem, size = 0x10000, scoped, tag = 'input window, operand 1, single buffered']
    #allocation3 [shape = 's32[1]{0}', space=sflag, size = 0x4, scoped, tag = 'scoped memory for conv_dueling_dqn_forward.1']
    #allocation4 [shape = 'u8[294912]{0}', space=vmem, size = 0x48000, scoped, tag = 'input window, operand 2, single buffered']
    #allocation5 [shape = 's32[1]{0}', space=sflag, size = 0x4, scoped, tag = 'scoped memory for conv_dueling_dqn_forward.1']
    #allocation6 [shape = 'u8[512]{0}', space=vmem, size = 0x400, scoped, tag = 'input window, operand 3, single buffered']
    #allocation7 [shape = 'u8[294912]{0}', space=vmem, size = 0x48000, scoped, tag = 'input window, operand 4, single buffered']
    #allocation8 [shape = 's32[1]{0}', space=sflag, size = 0x4, scoped, tag = 'scoped memory for conv_dueling_dqn_forward.1']
    #allocation9 [shape = 'u8[512]{0}', space=vmem, size = 0x400, scoped, tag = 'input window, operand 5, single buffered']
    #allocation10 [shape = 'u8[32768]{0}', space=vmem, size = 0x8000, scoped, tag = 'input window, operand 6, single buffered']
    #allocation11 [shape = 's32[1]{0}', space=sflag, size = 0x4, scoped, tag = 'scoped memory for conv_dueling_dqn_forward.1']
    #allocation12 [shape = 'u8[512]{0}', space=vmem, size = 0x400, scoped, tag = 'input window, operand 7, single buffered']
    #allocation13 [shape = 'u8[4194304]{0}', space=vmem, size = 0x400000, scoped, tag = 'input window, operand 8, single buffered']
    #allocation14 [shape = 's32[1]{0}', space=sflag, size = 0x4, scoped, tag = 'scoped memory for conv_dueling_dqn_forward.1']
    #allocation15 [shape = 'u8[4096]{0}', space=vmem, size = 0x1000, scoped, tag = 'input window, operand 9, single buffered']
    #allocation16 [shape = 'u8[262144]{0}', space=vmem, size = 0x40000, scoped, tag = 'input window, operand 10, single buffered']
    #allocation17 [shape = 's32[1]{0}', space=sflag, size = 0x4, scoped, tag = 'scoped memory for conv_dueling_dqn_forward.1']
    #allocation18 [shape = 'u8[512]{0}', space=vmem, size = 0x400, scoped, tag = 'input window, operand 11, single buffered']
    %17 = vsyncpa [#allocation3], 0
    %18 = vsyncpa [#allocation5], 0
    %19 = vsyncpa [#allocation8], 0
    %20 = vsyncpa [#allocation11], 0
    %21 = vsyncpa [#allocation14], 0
    %22 = vsyncpa [#allocation17], 0
    // Predicated region
    $region2: #{conv_dueling_dqn_forward.1} parent=1 // pred_check
      _
    $region3: #{conv_dueling_dqn_forward.1} parent=1 // pred_check_branch
      %24 = sbr.rel (0) target = $region5
    $region4: #{conv_dueling_dqn_forward.1} parent=1 // pred_region
      _
    $region5: #{conv_dueling_dqn_forward.1} parent=1 // pred_fallthru
      _
    // Predicated region
    $region6: #{conv_dueling_dqn_forward.1} parent=1 // pred_check
      _
    $region7: #{conv_dueling_dqn_forward.1} parent=1 // pred_check_branch
      %26 = sbr.rel (0) target = $region9
    $region8: #{conv_dueling_dqn_forward.1} parent=1 // pred_region
      %28 = vsyncadd [#allocation3], 0
      %s29 = sshll.u32 %s1, 4
      %s30 = int_to_ptr.hbm [resolvable:$true] %s29
      %s31 = sshll.u32 [#allocation2], 4
      %s32 = int_to_ptr.vmem [resolvable:$true] %s31
      %37 = dma.hbm_to_vmem [thread:$0]  %s30, 2048, %s32, [#allocation3], 128, 128, 8
    $region9: #{conv_dueling_dqn_forward.1} parent=1 // pred_fallthru
      _
    // Predicated region
    $region10: #{conv_dueling_dqn_forward.1} parent=1 // pred_check
      _
    $region11: #{conv_dueling_dqn_forward.1} parent=1 // pred_check_branch
      %39 = sbr.rel (0) target = $region13
    $region12: #{conv_dueling_dqn_forward.1} parent=1 // pred_region
      %41 = vsyncadd [#allocation5], 0
      %s42 = sshll.u32 %s2, 4
      %s43 = int_to_ptr.hbm [resolvable:$true] %s42
      %s44 = sshll.u32 [#allocation4], 4
      %s45 = int_to_ptr.vmem [resolvable:$true] %s44
      %50 = dma.hbm_to_vmem [thread:$0]  %s43, 9216, %s45, [#allocation5], 64, 64, 4
    $region13: #{conv_dueling_dqn_forward.1} parent=1 // pred_fallthru
      _
    // Predicated region
    $region14: #{conv_dueling_dqn_forward.1} parent=1 // pred_check
      _
    $region15: #{conv_dueling_dqn_forward.1} parent=1 // pred_check_branch
      %52 = sbr.rel (0) target = $region17
    $region16: #{conv_dueling_dqn_forward.1} parent=1 // pred_region
      %54 = vsyncadd [#allocation5], 0
      %s56 = sshll.u32 %s3, 4
      %s57 = int_to_ptr.hbm [resolvable:$true] %s56
      %s58 = sshll.u32 [#allocation6], 4
      %s59 = int_to_ptr.vmem [resolvable:$true] %s58
      %61 = dma.hbm_to_vmem [thread:$0]  %s57, 16, %s59, [#allocation5]
    $region17: #{conv_dueling_dqn_forward.1} parent=1 // pred_fallthru
      _
    // Predicated region
    $region18: #{conv_dueling_dqn_forward.1} parent=1 // pred_check
      _
    $region19: #{conv_dueling_dqn_forward.1} parent=1 // pred_check_branch
      %63 = sbr.rel (0) target = $region21
    $region20: #{conv_dueling_dqn_forward.1} parent=1 // pred_region
      %65 = vsyncadd [#allocation8], 0
      %s66 = sshll.u32 %s4, 4
      %s67 = int_to_ptr.hbm [resolvable:$true] %s66
      %s68 = sshll.u32 [#allocation7], 4
      %s69 = int_to_ptr.vmem [resolvable:$true] %s68
      %74 = dma.hbm_to_vmem [thread:$0]  %s67, 9216, %s69, [#allocation8], 64, 64, 4
    $region21: #{conv_dueling_dqn_forward.1} parent=1 // pred_fallthru
      _
    // Predicated region
    $region22: #{conv_dueling_dqn_forward.1} parent=1 // pred_check
      _
    $region23: #{conv_dueling_dqn_forward.1} parent=1 // pred_check_branch
      %76 = sbr.rel (0) target = $region25
    $region24: #{conv_dueling_dqn_forward.1} parent=1 // pred_region
      %78 = vsyncadd [#allocation8], 0
      %s80 = sshll.u32 %s5, 4
      %s81 = int_to_ptr.hbm [resolvable:$true] %s80
      %s82 = sshll.u32 [#allocation9], 4
      %s83 = int_to_ptr.vmem [resolvable:$true] %s82
      %85 = dma.hbm_to_vmem [thread:$0]  %s81, 16, %s83, [#allocation8]
    $region25: #{conv_dueling_dqn_forward.1} parent=1 // pred_fallthru
      _
    // Predicated region
    $region26: #{conv_dueling_dqn_forward.1} parent=1 // pred_check
      _
    $region27: #{conv_dueling_dqn_forward.1} parent=1 // pred_check_branch
      %87 = sbr.rel (0) target = $region29
    $region28: #{conv_dueling_dqn_forward.1} parent=1 // pred_region
      %89 = vsyncadd [#allocation11], 0
      %s90 = sshll.u32 %s6, 4
      %s91 = int_to_ptr.hbm [resolvable:$true] %s90
      %s92 = sshll.u32 [#allocation10], 4
      %s93 = int_to_ptr.vmem [resolvable:$true] %s92
      %98 = dma.hbm_to_vmem [thread:$0]  %s91, 1024, %s93, [#allocation11], 64, 64, 4
    $region29: #{conv_dueling_dqn_forward.1} parent=1 // pred_fallthru
      _
    // Predicated region
    $region30: #{conv_dueling_dqn_forward.1} parent=1 // pred_check
      _
    $region31: #{conv_dueling_dqn_forward.1} parent=1 // pred_check_branch
      %100 = sbr.rel (0) target = $region33
    $region32: #{conv_dueling_dqn_forward.1} parent=1 // pred_region
      %102 = vsyncadd [#allocation11], 0
      %s104 = sshll.u32 %s7, 4
      %s105 = int_to_ptr.hbm [resolvable:$true] %s104
      %s106 = sshll.u32 [#allocation12], 4
      %s107 = int_to_ptr.vmem [resolvable:$true] %s106
      %109 = dma.hbm_to_vmem [thread:$0]  %s105, 16, %s107, [#allocation11]
    $region33: #{conv_dueling_dqn_forward.1} parent=1 // pred_fallthru
      _
    // Predicated region
    $region34: #{conv_dueling_dqn_forward.1} parent=1 // pred_check
      _
    $region35: #{conv_dueling_dqn_forward.1} parent=1 // pred_check_branch
      %111 = sbr.rel (0) target = $region37
    $region36: #{conv_dueling_dqn_forward.1} parent=1 // pred_region
      %113 = vsyncadd [#allocation14], 0
      %s114 = sshll.u32 %s8, 4
      %s115 = int_to_ptr.hbm [resolvable:$true] %s114
      %s116 = sshll.u32 [#allocation13], 4
      %s117 = int_to_ptr.vmem [resolvable:$true] %s116
      %122 = dma.hbm_to_vmem [thread:$0]  %s115, 131072, %s117, [#allocation14], 512, 512, 32
    $region37: #{conv_dueling_dqn_forward.1} parent=1 // pred_fallthru
      _
    // Predicated region
    $region38: #{conv_dueling_dqn_forward.1} parent=1 // pred_check
      _
    $region39: #{conv_dueling_dqn_forward.1} parent=1 // pred_check_branch
      %124 = sbr.rel (0) target = $region41
    $region40: #{conv_dueling_dqn_forward.1} parent=1 // pred_region
      %126 = vsyncadd [#allocation14], 0
      %s128 = sshll.u32 %s9, 4
      %s129 = int_to_ptr.hbm [resolvable:$true] %s128
      %s130 = sshll.u32 [#allocation15], 4
      %s131 = int_to_ptr.vmem [resolvable:$true] %s130
      %133 = dma.hbm_to_vmem [thread:$0]  %s129, 128, %s131, [#allocation14]
    $region41: #{conv_dueling_dqn_forward.1} parent=1 // pred_fallthru
      _
    // Predicated region
    $region42: #{conv_dueling_dqn_forward.1} parent=1 // pred_check
      _
    $region43: #{conv_dueling_dqn_forward.1} parent=1 // pred_check_branch
      %135 = sbr.rel (0) target = $region45
    $region44: #{conv_dueling_dqn_forward.1} parent=1 // pred_region
      %137 = vsyncadd [#allocation17], 0
      %s138 = sshll.u32 %s10, 4
      %s139 = int_to_ptr.hbm [resolvable:$true] %s138
      %s140 = sshll.u32 [#allocation16], 4
      %s141 = int_to_ptr.vmem [resolvable:$true] %s140
      %146 = dma.hbm_to_vmem [thread:$0]  %s139, 8192, %s141, [#allocation17], 64, 64, 4
    $region45: #{conv_dueling_dqn_forward.1} parent=1 // pred_fallthru
      _
    // Predicated region
    $region46: #{conv_dueling_dqn_forward.1} parent=1 // pred_check
      _
    $region47: #{conv_dueling_dqn_forward.1} parent=1 // pred_check_branch
      %148 = sbr.rel (0) target = $region49
    $region48: #{conv_dueling_dqn_forward.1} parent=1 // pred_region
      %150 = vsyncadd [#allocation17], 0
      %s152 = sshll.u32 %s11, 4
      %s153 = int_to_ptr.hbm [resolvable:$true] %s152
      %s154 = sshll.u32 [#allocation18], 4
      %s155 = int_to_ptr.vmem [resolvable:$true] %s154
      %157 = dma.hbm_to_vmem [thread:$0]  %s153, 16, %s155, [#allocation17]
    $region49: #{conv_dueling_dqn_forward.1} parent=1 // pred_fallthru
      _
    // Predicated region
    $region50: #{conv_dueling_dqn_forward.1} parent=1 // pred_check
      _
    $region51: #{conv_dueling_dqn_forward.1} parent=1 // pred_check_branch
      %159 = sbr.rel (0) target = $region53
    $region52: #{conv_dueling_dqn_forward.1} parent=1 // pred_region
      %161 = dma.done [#allocation3], 2048
    $region53: #{conv_dueling_dqn_forward.1} parent=1 // pred_fallthru
      _
    // Predicated region
    $region54: #{conv_dueling_dqn_forward.1} parent=1 // pred_check
      _
    $region55: #{conv_dueling_dqn_forward.1} parent=1 // pred_check_branch
      %163 = sbr.rel (0) target = $region57
    $region56: #{conv_dueling_dqn_forward.1} parent=1 // pred_region
      %165 = dma.done [#allocation5], 9216
    $region57: #{conv_dueling_dqn_forward.1} parent=1 // pred_fallthru
      _
    // Predicated region
    $region58: #{conv_dueling_dqn_forward.1} parent=1 // pred_check
      _
    $region59: #{conv_dueling_dqn_forward.1} parent=1 // pred_check_branch
      %167 = sbr.rel (0) target = $region61
    $region60: #{conv_dueling_dqn_forward.1} parent=1 // pred_region
      %169 = dma.done [#allocation5], 16
    $region61: #{conv_dueling_dqn_forward.1} parent=1 // pred_fallthru
      _
    // Predicated region
    $region62: #{conv_dueling_dqn_forward.1} parent=1 // pred_check
      _
    $region63: #{conv_dueling_dqn_forward.1} parent=1 // pred_check_branch
      %171 = sbr.rel (0) target = $region65
    $region64: #{conv_dueling_dqn_forward.1} parent=1 // pred_region
      %173 = dma.done [#allocation8], 9216
    $region65: #{conv_dueling_dqn_forward.1} parent=1 // pred_fallthru
      _
    // Predicated region
    $region66: #{conv_dueling_dqn_forward.1} parent=1 // pred_check
      _
    $region67: #{conv_dueling_dqn_forward.1} parent=1 // pred_check_branch
      %175 = sbr.rel (0) target = $region69
    $region68: #{conv_dueling_dqn_forward.1} parent=1 // pred_region
      %177 = dma.done [#allocation8], 16
    $region69: #{conv_dueling_dqn_forward.1} parent=1 // pred_fallthru
      _
    // Predicated region
    $region70: #{conv_dueling_dqn_forward.1} parent=1 // pred_check
      _
    $region71: #{conv_dueling_dqn_forward.1} parent=1 // pred_check_branch
      %179 = sbr.rel (0) target = $region73
    $region72: #{conv_dueling_dqn_forward.1} parent=1 // pred_region
      %181 = dma.done [#allocation11], 1024
    $region73: #{conv_dueling_dqn_forward.1} parent=1 // pred_fallthru
      _
    // Predicated region
    $region74: #{conv_dueling_dqn_forward.1} parent=1 // pred_check
      _
    $region75: #{conv_dueling_dqn_forward.1} parent=1 // pred_check_branch
      %183 = sbr.rel (0) target = $region77
    $region76: #{conv_dueling_dqn_forward.1} parent=1 // pred_region
      %185 = dma.done [#allocation11], 16
    $region77: #{conv_dueling_dqn_forward.1} parent=1 // pred_fallthru
      _
    // Predicated region
    $region78: #{conv_dueling_dqn_forward.1} parent=1 // pred_check
      _
    $region79: #{conv_dueling_dqn_forward.1} parent=1 // pred_check_branch
      %187 = sbr.rel (0) target = $region81
    $region80: #{conv_dueling_dqn_forward.1} parent=1 // pred_region
      %189 = dma.done [#allocation14], 131072
    $region81: #{conv_dueling_dqn_forward.1} parent=1 // pred_fallthru
      _
    // Predicated region
    $region82: #{conv_dueling_dqn_forward.1} parent=1 // pred_check
      _
    $region83: #{conv_dueling_dqn_forward.1} parent=1 // pred_check_branch
      %191 = sbr.rel (0) target = $region85
    $region84: #{conv_dueling_dqn_forward.1} parent=1 // pred_region
      %193 = dma.done [#allocation14], 128
    $region85: #{conv_dueling_dqn_forward.1} parent=1 // pred_fallthru
      _
    // Predicated region
    $region86: #{conv_dueling_dqn_forward.1} parent=1 // pred_check
      _
    $region87: #{conv_dueling_dqn_forward.1} parent=1 // pred_check_branch
      %195 = sbr.rel (0) target = $region89
    $region88: #{conv_dueling_dqn_forward.1} parent=1 // pred_region
      %197 = dma.done [#allocation17], 8192
    $region89: #{conv_dueling_dqn_forward.1} parent=1 // pred_fallthru
      _
    // Predicated region
    $region90: #{conv_dueling_dqn_forward.1} parent=1 // pred_check
      _
    $region91: #{conv_dueling_dqn_forward.1} parent=1 // pred_check_branch
      %199 = sbr.rel (0) target = $region93
    $region92: #{conv_dueling_dqn_forward.1} parent=1 // pred_region
      %201 = dma.done [#allocation17], 16
    $region93: #{conv_dueling_dqn_forward.1} parent=1 // pred_fallthru
      _
    %v202 = vld [vmem:[#allocation2] sm:$0xff]
    %v203 = vld [vmem:[#allocation2 + $0x8] sm:$0xff]
    %v204 = vld [vmem:[#allocation2 + $0x10] sm:$0xff]
    %v205 = vld [vmem:[#allocation2 + $0x18] sm:$0xff]
    %v206 = vld [vmem:[#allocation2 + $0x20] sm:$0xff]
    %v207 = vld [vmem:[#allocation2 + $0x28] sm:$0xff]
    %v208 = vld [vmem:[#allocation2 + $0x30] sm:$0xff]
    %v209 = vld [vmem:[#allocation2 + $0x38] sm:$0xff]
    %v210 = vld [vmem:[#allocation2 + $0x40] sm:$0xff]
    %v211 = vld [vmem:[#allocation2 + $0x48] sm:$0xff]
    %v212 = vld [vmem:[#allocation2 + $0x50] sm:$0xff]
    %v213 = vld [vmem:[#allocation2 + $0x58] sm:$0xff]
    %v214 = vld [vmem:[#allocation2 + $0x60] sm:$0xff]
    %v215 = vld [vmem:[#allocation2 + $0x68] sm:$0xff]
    %v216 = vld [vmem:[#allocation2 + $0x70] sm:$0xff]
    %v217 = vld [vmem:[#allocation2 + $0x78] sm:$0xff]
    %v218 = vld [vmem:[%s0] sm:$0xf]
    %v219 = vld [vmem:[%s0 + $0x4] sm:$0xf]
    %v220 = vld [vmem:[%s0 + $0x8] sm:$0xf]
    %v221 = vld [vmem:[%s0 + $0xc] sm:$0xf]
    %v222 = vld [vmem:[%s0 + $0x10] sm:$0xf]
    %v223 = vld [vmem:[%s0 + $0x14] sm:$0xf]
    %v224 = vld [vmem:[%s0 + $0x18] sm:$0xf]
    %v225 = vld [vmem:[%s0 + $0x1c] sm:$0xf]
    %v226 = vld [vmem:[%s0 + $0x20] sm:$0xf]
    %v227 = vld [vmem:[%s0 + $0x24] sm:$0xf]
    %v228 = vld [vmem:[%s0 + $0x28] sm:$0xf]
    %v229 = vld [vmem:[%s0 + $0x2c] sm:$0xf]
    %v230 = vld [vmem:[%s0 + $0x30] sm:$0xf]
    %v231 = vld [vmem:[%s0 + $0x34] sm:$0xf]
    %v232 = vld [vmem:[%s0 + $0x38] sm:$0xf]
    %v233 = vld [vmem:[%s0 + $0x3c] sm:$0xf]
    %v234 = vunpack.c.l.bf16 %v218
    %v235 = vunpack.c.l.bf16 %v219
    %v236 = vunpack.c.l.bf16 %v220
    %v237 = vunpack.c.l.bf16 %v221
    %v238 = vunpack.c.l.bf16 %v222
    %v239 = vunpack.c.l.bf16 %v223
    %v240 = vunpack.c.l.bf16 %v224
    %v241 = vunpack.c.l.bf16 %v225
    %v242 = vunpack.c.l.bf16 %v226
    %v243 = vunpack.c.l.bf16 %v227
    %v244 = vunpack.c.l.bf16 %v228
    %v245 = vunpack.c.l.bf16 %v229
    %v246 = vunpack.c.l.bf16 %v230
    %v247 = vunpack.c.l.bf16 %v231
    %v248 = vunpack.c.l.bf16 %v232
    %v249 = vunpack.c.l.bf16 %v233
    %v251 = vrot.slane %v249, 3
    %vm268 = vcmask 1044480
    %v269 = vrot.slane %v234, 3
    %v270 = vrot.slane %v235, 3
    %v271 = vsel %vm268, %v269, %v270
    %v272 = vrot.slane %v236, 3
    %v273 = vsel %vm268, %v270, %v272
    %v274 = vrot.slane %v237, 3
    %v275 = vsel %vm268, %v272, %v274
    %v276 = vrot.slane %v238, 3
    %v277 = vsel %vm268, %v274, %v276
    %v278 = vrot.slane %v239, 3
    %v279 = vsel %vm268, %v276, %v278
    %v280 = vrot.slane %v240, 3
    %v281 = vsel %vm268, %v278, %v280
    %v282 = vrot.slane %v241, 3
    %v283 = vsel %vm268, %v280, %v282
    %v284 = vrot.slane %v242, 3
    %v285 = vsel %vm268, %v282, %v284
    %v286 = vrot.slane %v243, 3
    %v287 = vsel %vm268, %v284, %v286
    %v288 = vrot.slane %v244, 3
    %v289 = vsel %vm268, %v286, %v288
    %v290 = vrot.slane %v245, 3
    %v291 = vsel %vm268, %v288, %v290
    %v292 = vrot.slane %v246, 3
    %v293 = vsel %vm268, %v290, %v292
    %v294 = vrot.slane %v247, 3
    %v295 = vsel %vm268, %v292, %v294
    %v296 = vrot.slane %v248, 3
    %v297 = vsel %vm268, %v294, %v296
    %v298 = vsel %vm268, %v296, %v251
    %v315 = vsel %vm268, %v251, %v269
    %317 = vset.pattern.permute.xlu0 0
    %318 = vperm.xlu0 %317, %v202
    %v319 = vpop.permute.xlu0 %318
    %322 = vset.pattern.permute.xlu0 0
    %323 = vperm.xlu0 %322, %v203
    %v324 = vpop.permute.xlu0 %323
    %327 = vset.pattern.permute.xlu0 0
    %328 = vperm.xlu0 %327, %v204
    %v329 = vpop.permute.xlu0 %328
    %332 = vset.pattern.permute.xlu0 0
    %333 = vperm.xlu0 %332, %v205
    %v334 = vpop.permute.xlu0 %333
    %337 = vset.pattern.permute.xlu0 0
    %338 = vperm.xlu0 %337, %v206
    %v339 = vpop.permute.xlu0 %338
    %342 = vset.pattern.permute.xlu0 0
    %343 = vperm.xlu0 %342, %v207
    %v344 = vpop.permute.xlu0 %343
    %347 = vset.pattern.permute.xlu0 0
    %348 = vperm.xlu0 %347, %v208
    %v349 = vpop.permute.xlu0 %348
    %352 = vset.pattern.permute.xlu0 0
    %353 = vperm.xlu0 %352, %v209
    %v354 = vpop.permute.xlu0 %353
    %357 = vset.pattern.permute.xlu0 0
    %358 = vperm.xlu0 %357, %v210
    %v359 = vpop.permute.xlu0 %358
    %362 = vset.pattern.permute.xlu0 0
    %363 = vperm.xlu0 %362, %v211
    %v364 = vpop.permute.xlu0 %363
    %367 = vset.pattern.permute.xlu0 0
    %368 = vperm.xlu0 %367, %v212
    %v369 = vpop.permute.xlu0 %368
    %372 = vset.pattern.permute.xlu0 0
    %373 = vperm.xlu0 %372, %v213
    %v374 = vpop.permute.xlu0 %373
    %377 = vset.pattern.permute.xlu0 0
    %378 = vperm.xlu0 %377, %v214
    %v379 = vpop.permute.xlu0 %378
    %382 = vset.pattern.permute.xlu0 0
    %383 = vperm.xlu0 %382, %v215
    %v384 = vpop.permute.xlu0 %383
    %387 = vset.pattern.permute.xlu0 0
    %388 = vperm.xlu0 %387, %v216
    %v389 = vpop.permute.xlu0 %388
    %392 = vset.pattern.permute.xlu0 0
    %393 = vperm.xlu0 %392, %v217
    %v394 = vpop.permute.xlu0 %393
    %v396 = vmul.f32 %v315, %v319
    %v397 = vmul.f32 %v271, %v324
    %v398 = vmul.f32 %v273, %v329
    %v399 = vmul.f32 %v275, %v334
    %v400 = vmul.f32 %v277, %v339
    %v401 = vmul.f32 %v279, %v344
    %v402 = vmul.f32 %v281, %v349
    %v403 = vmul.f32 %v283, %v354
    %v404 = vmul.f32 %v285, %v359
    %v405 = vmul.f32 %v287, %v364
    %v406 = vmul.f32 %v289, %v369
    %v407 = vmul.f32 %v291, %v374
    %v408 = vmul.f32 %v293, %v379
    %v409 = vmul.f32 %v295, %v384
    %v410 = vmul.f32 %v297, %v389
    %v411 = vmul.f32 %v298, %v394
    %v412 = vpack.c.bf16 %v397, %v396
    %v413 = vpack.c.bf16 %v399, %v398
    %v414 = vpack.c.bf16 %v401, %v400
    %v415 = vpack.c.bf16 %v403, %v402
    %v416 = vpack.c.bf16 %v405, %v404
    %v417 = vpack.c.bf16 %v407, %v406
    %v418 = vpack.c.bf16 %v409, %v408
    %v419 = vpack.c.bf16 %v411, %v410
    %v420 = vld [vmem:[#allocation4] sm:$0xf]
    %v421 = vld [vmem:[#allocation4 + $0x4] sm:$0xf]
    %v422 = vld [vmem:[#allocation4 + $0x8] sm:$0xf]
    %v423 = vld [vmem:[#allocation4 + $0xc] sm:$0xf]
    %v424 = vld [vmem:[#allocation4 + $0x10] sm:$0xf]
    %v425 = vld [vmem:[#allocation4 + $0x14] sm:$0xf]
    %v426 = vld [vmem:[#allocation4 + $0x18] sm:$0xf]
    %v427 = vld [vmem:[#allocation4 + $0x1c] sm:$0xf]
    %v428 = vld [vmem:[#allocation4 + $0x20] sm:$0xf]
    %v429 = vld [vmem:[#allocation4 + $0x24] sm:$0xf]
    %v430 = vld [vmem:[#allocation4 + $0x28] sm:$0xf]
    %v431 = vld [vmem:[#allocation4 + $0x2c] sm:$0xf]
    %v432 = vld [vmem:[#allocation4 + $0x30] sm:$0xf]
    %v433 = vld [vmem:[#allocation4 + $0x34] sm:$0xf]
    %v434 = vld [vmem:[#allocation4 + $0x38] sm:$0xf]
    %v435 = vld [vmem:[#allocation4 + $0x3c] sm:$0xf]
    %v436 = vrot.slane %v249, 4
    %vm438 = vcmask 1043456
    %v439 = vrot.slane %v234, 4
    %v440 = vrot.slane %v235, 4
    %v441 = vsel %vm438, %v439, %v440
    %v442 = vrot.slane %v236, 4
    %v443 = vsel %vm438, %v440, %v442
    %v444 = vrot.slane %v237, 4
    %v445 = vsel %vm438, %v442, %v444
    %v446 = vrot.slane %v238, 4
    %v447 = vsel %vm438, %v444, %v446
    %v448 = vrot.slane %v239, 4
    %v449 = vsel %vm438, %v446, %v448
    %v450 = vrot.slane %v240, 4
    %v451 = vsel %vm438, %v448, %v450
    %v452 = vrot.slane %v241, 4
    %v453 = vsel %vm438, %v450, %v452
    %v454 = vrot.slane %v242, 4
    %v455 = vsel %vm438, %v452, %v454
    %v456 = vrot.slane %v243, 4
    %v457 = vsel %vm438, %v454, %v456
    %v458 = vrot.slane %v244, 4
    %v459 = vsel %vm438, %v456, %v458
    %v460 = vrot.slane %v245, 4
    %v461 = vsel %vm438, %v458, %v460
    %v462 = vrot.slane %v246, 4
    %v463 = vsel %vm438, %v460, %v462
    %v464 = vrot.slane %v247, 4
    %v465 = vsel %vm438, %v462, %v464
    %v466 = vrot.slane %v248, 4
    %v467 = vsel %vm438, %v464, %v466
    %v468 = vsel %vm438, %v466, %v436
    %v485 = vsel %vm438, %v436, %v439
    %486 = vset.pattern.permute.xlu0 1
    %487 = vperm.xlu0 %486, %v202
    %v488 = vpop.permute.xlu0 %487
    %490 = vset.pattern.permute.xlu0 1
    %491 = vperm.xlu0 %490, %v203
    %v492 = vpop.permute.xlu0 %491
    %494 = vset.pattern.permute.xlu0 1
    %495 = vperm.xlu0 %494, %v204
    %v496 = vpop.permute.xlu0 %495
    %498 = vset.pattern.permute.xlu0 1
    %499 = vperm.xlu0 %498, %v205
    %v500 = vpop.permute.xlu0 %499
    %502 = vset.pattern.permute.xlu0 1
    %503 = vperm.xlu0 %502, %v206
    %v504 = vpop.permute.xlu0 %503
    %506 = vset.pattern.permute.xlu0 1
    %507 = vperm.xlu0 %506, %v207
    %v508 = vpop.permute.xlu0 %507
    %510 = vset.pattern.permute.xlu0 1
    %511 = vperm.xlu0 %510, %v208
    %v512 = vpop.permute.xlu0 %511
    %514 = vset.pattern.permute.xlu0 1
    %515 = vperm.xlu0 %514, %v209
    %v516 = vpop.permute.xlu0 %515
    %518 = vset.pattern.permute.xlu0 1
    %519 = vperm.xlu0 %518, %v210
    %v520 = vpop.permute.xlu0 %519
    %522 = vset.pattern.permute.xlu0 1
    %523 = vperm.xlu0 %522, %v211
    %v524 = vpop.permute.xlu0 %523
    %526 = vset.pattern.permute.xlu0 1
    %527 = vperm.xlu0 %526, %v212
    %v528 = vpop.permute.xlu0 %527
    %530 = vset.pattern.permute.xlu0 1
    %531 = vperm.xlu0 %530, %v213
    %v532 = vpop.permute.xlu0 %531
    %534 = vset.pattern.permute.xlu0 1
    %535 = vperm.xlu0 %534, %v214
    %v536 = vpop.permute.xlu0 %535
    %538 = vset.pattern.permute.xlu0 1
    %539 = vperm.xlu0 %538, %v215
    %v540 = vpop.permute.xlu0 %539
    %542 = vset.pattern.permute.xlu0 1
    %543 = vperm.xlu0 %542, %v216
    %v544 = vpop.permute.xlu0 %543
    %546 = vset.pattern.permute.xlu0 1
    %547 = vperm.xlu0 %546, %v217
    %v548 = vpop.permute.xlu0 %547
    %v550 = vmul.f32 %v485, %v488
    %v551 = vmul.f32 %v441, %v492
    %v552 = vmul.f32 %v443, %v496
    %v553 = vmul.f32 %v445, %v500
    %v554 = vmul.f32 %v447, %v504
    %v555 = vmul.f32 %v449, %v508
    %v556 = vmul.f32 %v451, %v512
    %v557 = vmul.f32 %v453, %v516
    %v558 = vmul.f32 %v455, %v520
    %v559 = vmul.f32 %v457, %v524
    %v560 = vmul.f32 %v459, %v528
    %v561 = vmul.f32 %v461, %v532
    %v562 = vmul.f32 %v463, %v536
    %v563 = vmul.f32 %v465, %v540
    %v564 = vmul.f32 %v467, %v544
    %v565 = vmul.f32 %v468, %v548
    %v566 = vpack.c.bf16 %v551, %v550
    %v567 = vpack.c.bf16 %v553, %v552
    %v568 = vpack.c.bf16 %v555, %v554
    %v569 = vpack.c.bf16 %v557, %v556
    %v570 = vpack.c.bf16 %v559, %v558
    %v571 = vpack.c.bf16 %v561, %v560
    %v572 = vpack.c.bf16 %v563, %v562
    %v573 = vpack.c.bf16 %v565, %v564
    %s574 = scalar_lea.vmem [#allocation4], 64
    %v575 = vld [vmem:[%s574] sm:$0xf]
    %v576 = vld [vmem:[%s574 + $0x4] sm:$0xf]
    %v577 = vld [vmem:[%s574 + $0x8] sm:$0xf]
    %v578 = vld [vmem:[%s574 + $0xc] sm:$0xf]
    %v579 = vld [vmem:[%s574 + $0x10] sm:$0xf]
    %v580 = vld [vmem:[%s574 + $0x14] sm:$0xf]
    %v581 = vld [vmem:[%s574 + $0x18] sm:$0xf]
    %v582 = vld [vmem:[%s574 + $0x1c] sm:$0xf]
    %v583 = vld [vmem:[%s574 + $0x20] sm:$0xf]
    %v584 = vld [vmem:[%s574 + $0x24] sm:$0xf]
    %v585 = vld [vmem:[%s574 + $0x28] sm:$0xf]
    %v586 = vld [vmem:[%s574 + $0x2c] sm:$0xf]
    %v587 = vld [vmem:[%s574 + $0x30] sm:$0xf]
    %v588 = vld [vmem:[%s574 + $0x34] sm:$0xf]
    %v589 = vld [vmem:[%s574 + $0x38] sm:$0xf]
    %v590 = vld [vmem:[%s574 + $0x3c] sm:$0xf]
    %v607 = vunpack.c.l.b16 %v575
    %v608 = vunpack.c.l.b16 %v576
    %v609 = vunpack.c.l.b16 %v577
    %v610 = vunpack.c.l.b16 %v578
    %v611 = vunpack.c.l.b16 %v579
    %v612 = vunpack.c.l.b16 %v580
    %v613 = vunpack.c.l.b16 %v581
    %v614 = vunpack.c.l.b16 %v582
    %v615 = vunpack.c.l.b16 %v583
    %v616 = vunpack.c.l.b16 %v584
    %v617 = vunpack.c.l.b16 %v585
    %v618 = vunpack.c.l.b16 %v586
    %v619 = vunpack.c.l.b16 %v587
    %v620 = vunpack.c.l.b16 %v588
    %v621 = vunpack.c.l.b16 %v589
    %v622 = vunpack.c.l.b16 %v590
    %v623 = vpack.c.b16 %v608, %v607
    %v624 = vpack.c.b16 %v610, %v609
    %v625 = vpack.c.b16 %v612, %v611
    %v626 = vpack.c.b16 %v614, %v613
    %v627 = vpack.c.b16 %v616, %v615
    %v628 = vpack.c.b16 %v618, %v617
    %v629 = vpack.c.b16 %v620, %v619
    %v630 = vpack.c.b16 %v622, %v621
    %639 = vmatpush.bf16.msra.mxu0 %v630
    %640 = vmatpush.bf16.msra.mxu0 %v629
    %641 = vmatpush.bf16.msra.mxu0 %v628
    %642 = vmatpush.bf16.msra.mxu0 %v627
    %643 = vmatpush.bf16.msra.mxu0 %v626
    %644 = vmatpush.bf16.msra.mxu0 %v625
    %645 = vmatpush.bf16.msra.mxu0 %v624
    %646 = vmatpush.bf16.msra.mxu0 %v623
    %647 = vmatmul.bf16.gmra.mxu0 %v566
    %v648 = vpop.f32.mrf.mxu0
    %v649 = vadd.f32 0.0, %v648
    %v650 = vpop.f32.mrf.mxu0
    %v651 = vadd.f32 0.0, %v650
    %652 = vmatmul.bf16.gmra.mxu0 %v567
    %v653 = vpop.f32.mrf.mxu0
    %v654 = vadd.f32 0.0, %v653
    %v655 = vpop.f32.mrf.mxu0
    %v656 = vadd.f32 0.0, %v655
    %657 = vmatmul.bf16.gmra.mxu0 %v568
    %v658 = vpop.f32.mrf.mxu0
    %v659 = vadd.f32 0.0, %v658
    %v660 = vpop.f32.mrf.mxu0
    %v661 = vadd.f32 0.0, %v660
    %662 = vmatmul.bf16.gmra.mxu0 %v569
    %v663 = vpop.f32.mrf.mxu0
    %v664 = vadd.f32 0.0, %v663
    %v665 = vpop.f32.mrf.mxu0
    %v666 = vadd.f32 0.0, %v665
    %667 = vmatmul.bf16.gmra.mxu0 %v570
    %v668 = vpop.f32.mrf.mxu0
    %v669 = vadd.f32 0.0, %v668
    %v670 = vpop.f32.mrf.mxu0
    %v671 = vadd.f32 0.0, %v670
    %672 = vmatmul.bf16.gmra.mxu0 %v571
    %v673 = vpop.f32.mrf.mxu0
    %v674 = vadd.f32 0.0, %v673
    %v675 = vpop.f32.mrf.mxu0
    %v676 = vadd.f32 0.0, %v675
    %677 = vmatmul.bf16.gmra.mxu0 %v572
    %v678 = vpop.f32.mrf.mxu0
    %v679 = vadd.f32 0.0, %v678
    %v680 = vpop.f32.mrf.mxu0
    %v681 = vadd.f32 0.0, %v680
    %682 = vmatmul.bf16.gmra.mxu0 %v573
    %v683 = vpop.f32.mrf.mxu0
    %v684 = vadd.f32 0.0, %v683
    %v685 = vpop.f32.mrf.mxu0
    %v686 = vadd.f32 0.0, %v685
    %687 = vdwg.mxu0
    %v704 = vunpack.c.l.b16 %v420
    %v705 = vunpack.c.l.b16 %v421
    %v706 = vunpack.c.l.b16 %v422
    %v707 = vunpack.c.l.b16 %v423
    %v708 = vunpack.c.l.b16 %v424
    %v709 = vunpack.c.l.b16 %v425
    %v710 = vunpack.c.l.b16 %v426
    %v711 = vunpack.c.l.b16 %v427
    %v712 = vunpack.c.l.b16 %v428
    %v713 = vunpack.c.l.b16 %v429
    %v714 = vunpack.c.l.b16 %v430
    %v715 = vunpack.c.l.b16 %v431
    %v716 = vunpack.c.l.b16 %v432
    %v717 = vunpack.c.l.b16 %v433
    %v718 = vunpack.c.l.b16 %v434
    %v719 = vunpack.c.l.b16 %v435
    %v720 = vpack.c.b16 %v705, %v704
    %v721 = vpack.c.b16 %v707, %v706
    %v722 = vpack.c.b16 %v709, %v708
    %v723 = vpack.c.b16 %v711, %v710
    %v724 = vpack.c.b16 %v713, %v712
    %v725 = vpack.c.b16 %v715, %v714
    %v726 = vpack.c.b16 %v717, %v716
    %v727 = vpack.c.b16 %v719, %v718
    %736 = vmatpush.bf16.msra.mxu0 %v727
    %737 = vmatpush.bf16.msra.mxu0 %v726
    %738 = vmatpush.bf16.msra.mxu0 %v725
    %739 = vmatpush.bf16.msra.mxu0 %v724
    %740 = vmatpush.bf16.msra.mxu0 %v723
    %741 = vmatpush.bf16.msra.mxu0 %v722
    %742 = vmatpush.bf16.msra.mxu0 %v721
    %743 = vmatpush.bf16.msra.mxu0 %v720
    %744 = vmatmul.bf16.gmra.mxu0 %v412
    %v745 = vpop.f32.mrf.mxu0
    %v746 = vadd.f32 %v649, %v745
    %v747 = vpop.f32.mrf.mxu0
    %v748 = vadd.f32 %v651, %v747
    %749 = vmatmul.bf16.gmra.mxu0 %v413
    %v750 = vpop.f32.mrf.mxu0
    %v751 = vadd.f32 %v654, %v750
    %v752 = vpop.f32.mrf.mxu0
    %v753 = vadd.f32 %v656, %v752
    %754 = vmatmul.bf16.gmra.mxu0 %v414
    %v755 = vpop.f32.mrf.mxu0
    %v756 = vadd.f32 %v659, %v755
    %v757 = vpop.f32.mrf.mxu0
    %v758 = vadd.f32 %v661, %v757
    %759 = vmatmul.bf16.gmra.mxu0 %v415
    %v760 = vpop.f32.mrf.mxu0
    %v761 = vadd.f32 %v664, %v760
    %v762 = vpop.f32.mrf.mxu0
    %v763 = vadd.f32 %v666, %v762
    %764 = vmatmul.bf16.gmra.mxu0 %v416
    %v765 = vpop.f32.mrf.mxu0
    %v766 = vadd.f32 %v669, %v765
    %v767 = vpop.f32.mrf.mxu0
    %v768 = vadd.f32 %v671, %v767
    %769 = vmatmul.bf16.gmra.mxu0 %v417
    %v770 = vpop.f32.mrf.mxu0
    %v771 = vadd.f32 %v674, %v770
    %v772 = vpop.f32.mrf.mxu0
    %v773 = vadd.f32 %v676, %v772
    %774 = vmatmul.bf16.gmra.mxu0 %v418
    %v775 = vpop.f32.mrf.mxu0
    %v776 = vadd.f32 %v679, %v775
    %v777 = vpop.f32.mrf.mxu0
    %v778 = vadd.f32 %v681, %v777
    %779 = vmatmul.bf16.gmra.mxu0 %v419
    %v780 = vpop.f32.mrf.mxu0
    %v781 = vadd.f32 %v684, %v780
    %v782 = vpop.f32.mrf.mxu0
    %v783 = vadd.f32 %v686, %v782
    %784 = vdwg.mxu0
    %v785 = vrot.slane %v249, 5
    %vm787 = vcmask 1042432
    %v788 = vrot.slane %v234, 5
    %v789 = vrot.slane %v235, 5
    %v790 = vsel %vm787, %v788, %v789
    %v791 = vrot.slane %v236, 5
    %v792 = vsel %vm787, %v789, %v791
    %v793 = vrot.slane %v237, 5
    %v794 = vsel %vm787, %v791, %v793
    %v795 = vrot.slane %v238, 5
    %v796 = vsel %vm787, %v793, %v795
    %v797 = vrot.slane %v239, 5
    %v798 = vsel %vm787, %v795, %v797
    %v799 = vrot.slane %v240, 5
    %v800 = vsel %vm787, %v797, %v799
    %v801 = vrot.slane %v241, 5
    %v802 = vsel %vm787, %v799, %v801
    %v803 = vrot.slane %v242, 5
    %v804 = vsel %vm787, %v801, %v803
    %v805 = vrot.slane %v243, 5
    %v806 = vsel %vm787, %v803, %v805
    %v807 = vrot.slane %v244, 5
    %v808 = vsel %vm787, %v805, %v807
    %v809 = vrot.slane %v245, 5
    %v810 = vsel %vm787, %v807, %v809
    %v811 = vrot.slane %v246, 5
    %v812 = vsel %vm787, %v809, %v811
    %v813 = vrot.slane %v247, 5
    %v814 = vsel %vm787, %v811, %v813
    %v815 = vrot.slane %v248, 5
    %v816 = vsel %vm787, %v813, %v815
    %v817 = vsel %vm787, %v815, %v785
    %v834 = vsel %vm787, %v785, %v788
    %835 = vset.pattern.permute.xlu0 2
    %836 = vperm.xlu0 %835, %v202
    %v837 = vpop.permute.xlu0 %836
    %839 = vset.pattern.permute.xlu0 2
    %840 = vperm.xlu0 %839, %v203
    %v841 = vpop.permute.xlu0 %840
    %843 = vset.pattern.permute.xlu0 2
    %844 = vperm.xlu0 %843, %v204
    %v845 = vpop.permute.xlu0 %844
    %847 = vset.pattern.permute.xlu0 2
    %848 = vperm.xlu0 %847, %v205
    %v849 = vpop.permute.xlu0 %848
    %851 = vset.pattern.permute.xlu0 2
    %852 = vperm.xlu0 %851, %v206
    %v853 = vpop.permute.xlu0 %852
    %855 = vset.pattern.permute.xlu0 2
    %856 = vperm.xlu0 %855, %v207
    %v857 = vpop.permute.xlu0 %856
    %859 = vset.pattern.permute.xlu0 2
    %860 = vperm.xlu0 %859, %v208
    %v861 = vpop.permute.xlu0 %860
    %863 = vset.pattern.permute.xlu0 2
    %864 = vperm.xlu0 %863, %v209
    %v865 = vpop.permute.xlu0 %864
    %867 = vset.pattern.permute.xlu0 2
    %868 = vperm.xlu0 %867, %v210
    %v869 = vpop.permute.xlu0 %868
    %871 = vset.pattern.permute.xlu0 2
    %872 = vperm.xlu0 %871, %v211
    %v873 = vpop.permute.xlu0 %872
    %875 = vset.pattern.permute.xlu0 2
    %876 = vperm.xlu0 %875, %v212
    %v877 = vpop.permute.xlu0 %876
    %879 = vset.pattern.permute.xlu0 2
    %880 = vperm.xlu0 %879, %v213
    %v881 = vpop.permute.xlu0 %880
    %883 = vset.pattern.permute.xlu0 2
    %884 = vperm.xlu0 %883, %v214
    %v885 = vpop.permute.xlu0 %884
    %887 = vset.pattern.permute.xlu0 2
    %888 = vperm.xlu0 %887, %v215
    %v889 = vpop.permute.xlu0 %888
    %891 = vset.pattern.permute.xlu0 2
    %892 = vperm.xlu0 %891, %v216
    %v893 = vpop.permute.xlu0 %892
    %895 = vset.pattern.permute.xlu0 2
    %896 = vperm.xlu0 %895, %v217
    %v897 = vpop.permute.xlu0 %896
    %v899 = vmul.f32 %v834, %v837
    %v900 = vmul.f32 %v790, %v841
    %v901 = vmul.f32 %v792, %v845
    %v902 = vmul.f32 %v794, %v849
    %v903 = vmul.f32 %v796, %v853
    %v904 = vmul.f32 %v798, %v857
    %v905 = vmul.f32 %v800, %v861
    %v906 = vmul.f32 %v802, %v865
    %v907 = vmul.f32 %v804, %v869
    %v908 = vmul.f32 %v806, %v873
    %v909 = vmul.f32 %v808, %v877
    %v910 = vmul.f32 %v810, %v881
    %v911 = vmul.f32 %v812, %v885
    %v912 = vmul.f32 %v814, %v889
    %v913 = vmul.f32 %v816, %v893
    %v914 = vmul.f32 %v817, %v897
    %v915 = vpack.c.bf16 %v900, %v899
    %v916 = vpack.c.bf16 %v902, %v901
    %v917 = vpack.c.bf16 %v904, %v903
    %v918 = vpack.c.bf16 %v906, %v905
    %v919 = vpack.c.bf16 %v908, %v907
    %v920 = vpack.c.bf16 %v910, %v909
    %v921 = vpack.c.bf16 %v912, %v911
    %v922 = vpack.c.bf16 %v914, %v913
    %s923 = scalar_lea.vmem [#allocation4], 128
    %v924 = vld [vmem:[%s923] sm:$0xf]
    %v925 = vld [vmem:[%s923 + $0x4] sm:$0xf]
    %v926 = vld [vmem:[%s923 + $0x8] sm:$0xf]
    %v927 = vld [vmem:[%s923 + $0xc] sm:$0xf]
    %v928 = vld [vmem:[%s923 + $0x10] sm:$0xf]
    %v929 = vld [vmem:[%s923 + $0x14] sm:$0xf]
    %v930 = vld [vmem:[%s923 + $0x18] sm:$0xf]
    %v931 = vld [vmem:[%s923 + $0x1c] sm:$0xf]
    %v932 = vld [vmem:[%s923 + $0x20] sm:$0xf]
    %v933 = vld [vmem:[%s923 + $0x24] sm:$0xf]
    %v934 = vld [vmem:[%s923 + $0x28] sm:$0xf]
    %v935 = vld [vmem:[%s923 + $0x2c] sm:$0xf]
    %v936 = vld [vmem:[%s923 + $0x30] sm:$0xf]
    %v937 = vld [vmem:[%s923 + $0x34] sm:$0xf]
    %v938 = vld [vmem:[%s923 + $0x38] sm:$0xf]
    %v939 = vld [vmem:[%s923 + $0x3c] sm:$0xf]
    %v956 = vunpack.c.l.b16 %v924
    %v957 = vunpack.c.l.b16 %v925
    %v958 = vunpack.c.l.b16 %v926
    %v959 = vunpack.c.l.b16 %v927
    %v960 = vunpack.c.l.b16 %v928
    %v961 = vunpack.c.l.b16 %v929
    %v962 = vunpack.c.l.b16 %v930
    %v963 = vunpack.c.l.b16 %v931
    %v964 = vunpack.c.l.b16 %v932
    %v965 = vunpack.c.l.b16 %v933
    %v966 = vunpack.c.l.b16 %v934
    %v967 = vunpack.c.l.b16 %v935
    %v968 = vunpack.c.l.b16 %v936
    %v969 = vunpack.c.l.b16 %v937
    %v970 = vunpack.c.l.b16 %v938
    %v971 = vunpack.c.l.b16 %v939
    %v972 = vpack.c.b16 %v957, %v956
    %v973 = vpack.c.b16 %v959, %v958
    %v974 = vpack.c.b16 %v961, %v960
    %v975 = vpack.c.b16 %v963, %v962
    %v976 = vpack.c.b16 %v965, %v964
    %v977 = vpack.c.b16 %v967, %v966
    %v978 = vpack.c.b16 %v969, %v968
    %v979 = vpack.c.b16 %v971, %v970
    %988 = vmatpush.bf16.msra.mxu0 %v979
    %989 = vmatpush.bf16.msra.mxu0 %v978
    %990 = vmatpush.bf16.msra.mxu0 %v977
    %991 = vmatpush.bf16.msra.mxu0 %v976
    %992 = vmatpush.bf16.msra.mxu0 %v975
    %993 = vmatpush.bf16.msra.mxu0 %v974
    %994 = vmatpush.bf16.msra.mxu0 %v973
    %995 = vmatpush.bf16.msra.mxu0 %v972
    %996 = vmatmul.bf16.gmra.mxu0 %v915
    %v997 = vpop.f32.mrf.mxu0
    %v998 = vadd.f32 0.0, %v997
    %v999 = vpop.f32.mrf.mxu0
    %v1000 = vadd.f32 0.0, %v999
    %1001 = vmatmul.bf16.gmra.mxu0 %v916
    %v1002 = vpop.f32.mrf.mxu0
    %v1003 = vadd.f32 0.0, %v1002
    %v1004 = vpop.f32.mrf.mxu0
    %v1005 = vadd.f32 0.0, %v1004
    %1006 = vmatmul.bf16.gmra.mxu0 %v917
    %v1007 = vpop.f32.mrf.mxu0
    %v1008 = vadd.f32 0.0, %v1007
    %v1009 = vpop.f32.mrf.mxu0
    %v1010 = vadd.f32 0.0, %v1009
    %1011 = vmatmul.bf16.gmra.mxu0 %v918
    %v1012 = vpop.f32.mrf.mxu0
    %v1013 = vadd.f32 0.0, %v1012
    %v1014 = vpop.f32.mrf.mxu0
    %v1015 = vadd.f32 0.0, %v1014
    %1016 = vmatmul.bf16.gmra.mxu0 %v919
    %v1017 = vpop.f32.mrf.mxu0
    %v1018 = vadd.f32 0.0, %v1017
    %v1019 = vpop.f32.mrf.mxu0
    %v1020 = vadd.f32 0.0, %v1019
    %1021 = vmatmul.bf16.gmra.mxu0 %v920
    %v1022 = vpop.f32.mrf.mxu0
    %v1023 = vadd.f32 0.0, %v1022
    %v1024 = vpop.f32.mrf.mxu0
    %v1025 = vadd.f32 0.0, %v1024
    %1026 = vmatmul.bf16.gmra.mxu0 %v921
    %v1027 = vpop.f32.mrf.mxu0
    %v1028 = vadd.f32 0.0, %v1027
    %v1029 = vpop.f32.mrf.mxu0
    %v1030 = vadd.f32 0.0, %v1029
    %1031 = vmatmul.bf16.gmra.mxu0 %v922
    %v1032 = vpop.f32.mrf.mxu0
    %v1033 = vadd.f32 0.0, %v1032
    %v1034 = vpop.f32.mrf.mxu0
    %v1035 = vadd.f32 0.0, %v1034
    %1036 = vdwg.mxu0
    %v1037 = vadd.f32 %v746, %v998
    %v1038 = vadd.f32 %v748, %v1000
    %v1039 = vadd.f32 %v751, %v1003
    %v1040 = vadd.f32 %v753, %v1005
    %v1041 = vadd.f32 %v756, %v1008
    %v1042 = vadd.f32 %v758, %v1010
    %v1043 = vadd.f32 %v761, %v1013
    %v1044 = vadd.f32 %v763, %v1015
    %v1045 = vadd.f32 %v766, %v1018
    %v1046 = vadd.f32 %v768, %v1020
    %v1047 = vadd.f32 %v771, %v1023
    %v1048 = vadd.f32 %v773, %v1025
    %v1049 = vadd.f32 %v776, %v1028
    %v1050 = vadd.f32 %v778, %v1030
    %v1051 = vadd.f32 %v781, %v1033
    %v1052 = vadd.f32 %v783, %v1035
    %v1053 = vrot.slane %v249, 7
    %vm1055 = vcmask 1040384
    %v1056 = vrot.slane %v234, 7
    %v1057 = vrot.slane %v235, 7
    %v1058 = vsel %vm1055, %v1056, %v1057
    %v1059 = vrot.slane %v236, 7
    %v1060 = vsel %vm1055, %v1057, %v1059
    %v1061 = vrot.slane %v237, 7
    %v1062 = vsel %vm1055, %v1059, %v1061
    %v1063 = vrot.slane %v238, 7
    %v1064 = vsel %vm1055, %v1061, %v1063
    %v1065 = vrot.slane %v239, 7
    %v1066 = vsel %vm1055, %v1063, %v1065
    %v1067 = vrot.slane %v240, 7
    %v1068 = vsel %vm1055, %v1065, %v1067
    %v1069 = vrot.slane %v241, 7
    %v1070 = vsel %vm1055, %v1067, %v1069
    %v1071 = vrot.slane %v242, 7
    %v1072 = vsel %vm1055, %v1069, %v1071
    %v1073 = vrot.slane %v243, 7
    %v1074 = vsel %vm1055, %v1071, %v1073
    %v1075 = vrot.slane %v244, 7
    %v1076 = vsel %vm1055, %v1073, %v1075
    %v1077 = vrot.slane %v245, 7
    %v1078 = vsel %vm1055, %v1075, %v1077
    %v1079 = vrot.slane %v246, 7
    %v1080 = vsel %vm1055, %v1077, %v1079
    %v1081 = vrot.slane %v247, 7
    %v1082 = vsel %vm1055, %v1079, %v1081
    %v1083 = vrot.slane %v248, 7
    %v1084 = vsel %vm1055, %v1081, %v1083
    %v1085 = vsel %vm1055, %v1083, %v1053
    %v1102 = vsel %vm1055, %v1053, %v1056
    %1103 = vset.pattern.permute.xlu0 3
    %1104 = vperm.xlu0 %1103, %v202
    %v1105 = vpop.permute.xlu0 %1104
    %1107 = vset.pattern.permute.xlu0 3
    %1108 = vperm.xlu0 %1107, %v203
    %v1109 = vpop.permute.xlu0 %1108
    %1111 = vset.pattern.permute.xlu0 3
    %1112 = vperm.xlu0 %1111, %v204
    %v1113 = vpop.permute.xlu0 %1112
    %1115 = vset.pattern.permute.xlu0 3
    %1116 = vperm.xlu0 %1115, %v205
    %v1117 = vpop.permute.xlu0 %1116
    %1119 = vset.pattern.permute.xlu0 3
    %1120 = vperm.xlu0 %1119, %v206
    %v1121 = vpop.permute.xlu0 %1120
    %1123 = vset.pattern.permute.xlu0 3
    %1124 = vperm.xlu0 %1123, %v207
    %v1125 = vpop.permute.xlu0 %1124
    %1127 = vset.pattern.permute.xlu0 3
    %1128 = vperm.xlu0 %1127, %v208
    %v1129 = vpop.permute.xlu0 %1128
    %1131 = vset.pattern.permute.xlu0 3
    %1132 = vperm.xlu0 %1131, %v209
    %v1133 = vpop.permute.xlu0 %1132
    %1135 = vset.pattern.permute.xlu0 3
    %1136 = vperm.xlu0 %1135, %v210
    %v1137 = vpop.permute.xlu0 %1136
    %1139 = vset.pattern.permute.xlu0 3
    %1140 = vperm.xlu0 %1139, %v211
    %v1141 = vpop.permute.xlu0 %1140
    %1143 = vset.pattern.permute.xlu0 3
    %1144 = vperm.xlu0 %1143, %v212
    %v1145 = vpop.permute.xlu0 %1144
    %1147 = vset.pattern.permute.xlu0 3
    %1148 = vperm.xlu0 %1147, %v213
    %v1149 = vpop.permute.xlu0 %1148
    %1151 = vset.pattern.permute.xlu0 3
    %1152 = vperm.xlu0 %1151, %v214
    %v1153 = vpop.permute.xlu0 %1152
    %1155 = vset.pattern.permute.xlu0 3
    %1156 = vperm.xlu0 %1155, %v215
    %v1157 = vpop.permute.xlu0 %1156
    %1159 = vset.pattern.permute.xlu0 3
    %1160 = vperm.xlu0 %1159, %v216
    %v1161 = vpop.permute.xlu0 %1160
    %1163 = vset.pattern.permute.xlu0 3
    %1164 = vperm.xlu0 %1163, %v217
    %v1165 = vpop.permute.xlu0 %1164
    %v1167 = vmul.f32 %v1102, %v1105
    %v1168 = vmul.f32 %v1058, %v1109
    %v1169 = vmul.f32 %v1060, %v1113
    %v1170 = vmul.f32 %v1062, %v1117
    %v1171 = vmul.f32 %v1064, %v1121
    %v1172 = vmul.f32 %v1066, %v1125
    %v1173 = vmul.f32 %v1068, %v1129
    %v1174 = vmul.f32 %v1070, %v1133
    %v1175 = vmul.f32 %v1072, %v1137
    %v1176 = vmul.f32 %v1074, %v1141
    %v1177 = vmul.f32 %v1076, %v1145
    %v1178 = vmul.f32 %v1078, %v1149
    %v1179 = vmul.f32 %v1080, %v1153
    %v1180 = vmul.f32 %v1082, %v1157
    %v1181 = vmul.f32 %v1084, %v1161
    %v1182 = vmul.f32 %v1085, %v1165
    %v1183 = vpack.c.bf16 %v1168, %v1167
    %v1184 = vpack.c.bf16 %v1170, %v1169
    %v1185 = vpack.c.bf16 %v1172, %v1171
    %v1186 = vpack.c.bf16 %v1174, %v1173
    %v1187 = vpack.c.bf16 %v1176, %v1175
    %v1188 = vpack.c.bf16 %v1178, %v1177
    %v1189 = vpack.c.bf16 %v1180, %v1179
    %v1190 = vpack.c.bf16 %v1182, %v1181
    %s1191 = scalar_lea.vmem [#allocation4], 192
    %v1192 = vld [vmem:[%s1191] sm:$0xf]
    %v1193 = vld [vmem:[%s1191 + $0x4] sm:$0xf]
    %v1194 = vld [vmem:[%s1191 + $0x8] sm:$0xf]
    %v1195 = vld [vmem:[%s1191 + $0xc] sm:$0xf]
    %v1196 = vld [vmem:[%s1191 + $0x10] sm:$0xf]
    %v1197 = vld [vmem:[%s1191 + $0x14] sm:$0xf]
    %v1198 = vld [vmem:[%s1191 + $0x18] sm:$0xf]
    %v1199 = vld [vmem:[%s1191 + $0x1c] sm:$0xf]
    %v1200 = vld [vmem:[%s1191 + $0x20] sm:$0xf]
    %v1201 = vld [vmem:[%s1191 + $0x24] sm:$0xf]
    %v1202 = vld [vmem:[%s1191 + $0x28] sm:$0xf]
    %v1203 = vld [vmem:[%s1191 + $0x2c] sm:$0xf]
    %v1204 = vld [vmem:[%s1191 + $0x30] sm:$0xf]
    %v1205 = vld [vmem:[%s1191 + $0x34] sm:$0xf]
    %v1206 = vld [vmem:[%s1191 + $0x38] sm:$0xf]
    %v1207 = vld [vmem:[%s1191 + $0x3c] sm:$0xf]
    %v1224 = vunpack.c.l.b16 %v1192
    %v1225 = vunpack.c.l.b16 %v1193
    %v1226 = vunpack.c.l.b16 %v1194
    %v1227 = vunpack.c.l.b16 %v1195
    %v1228 = vunpack.c.l.b16 %v1196
    %v1229 = vunpack.c.l.b16 %v1197
    %v1230 = vunpack.c.l.b16 %v1198
    %v1231 = vunpack.c.l.b16 %v1199
    %v1232 = vunpack.c.l.b16 %v1200
    %v1233 = vunpack.c.l.b16 %v1201
    %v1234 = vunpack.c.l.b16 %v1202
    %v1235 = vunpack.c.l.b16 %v1203
    %v1236 = vunpack.c.l.b16 %v1204
    %v1237 = vunpack.c.l.b16 %v1205
    %v1238 = vunpack.c.l.b16 %v1206
    %v1239 = vunpack.c.l.b16 %v1207
    %v1240 = vpack.c.b16 %v1225, %v1224
    %v1241 = vpack.c.b16 %v1227, %v1226
    %v1242 = vpack.c.b16 %v1229, %v1228
    %v1243 = vpack.c.b16 %v1231, %v1230
    %v1244 = vpack.c.b16 %v1233, %v1232
    %v1245 = vpack.c.b16 %v1235, %v1234
    %v1246 = vpack.c.b16 %v1237, %v1236
    %v1247 = vpack.c.b16 %v1239, %v1238
    %1256 = vmatpush.bf16.msra.mxu0 %v1247
    %1257 = vmatpush.bf16.msra.mxu0 %v1246
    %1258 = vmatpush.bf16.msra.mxu0 %v1245
    %1259 = vmatpush.bf16.msra.mxu0 %v1244
    %1260 = vmatpush.bf16.msra.mxu0 %v1243
    %1261 = vmatpush.bf16.msra.mxu0 %v1242
    %1262 = vmatpush.bf16.msra.mxu0 %v1241
    %1263 = vmatpush.bf16.msra.mxu0 %v1240
    %1264 = vmatmul.bf16.gmra.mxu0 %v1183
    %v1265 = vpop.f32.mrf.mxu0
    %v1266 = vadd.f32 0.0, %v1265
    %v1267 = vpop.f32.mrf.mxu0
    %v1268 = vadd.f32 0.0, %v1267
    %1269 = vmatmul.bf16.gmra.mxu0 %v1184
    %v1270 = vpop.f32.mrf.mxu0
    %v1271 = vadd.f32 0.0, %v1270
    %v1272 = vpop.f32.mrf.mxu0
    %v1273 = vadd.f32 0.0, %v1272
    %1274 = vmatmul.bf16.gmra.mxu0 %v1185
    %v1275 = vpop.f32.mrf.mxu0
    %v1276 = vadd.f32 0.0, %v1275
    %v1277 = vpop.f32.mrf.mxu0
    %v1278 = vadd.f32 0.0, %v1277
    %1279 = vmatmul.bf16.gmra.mxu0 %v1186
    %v1280 = vpop.f32.mrf.mxu0
    %v1281 = vadd.f32 0.0, %v1280
    %v1282 = vpop.f32.mrf.mxu0
    %v1283 = vadd.f32 0.0, %v1282
    %1284 = vmatmul.bf16.gmra.mxu0 %v1187
    %v1285 = vpop.f32.mrf.mxu0
    %v1286 = vadd.f32 0.0, %v1285
    %v1287 = vpop.f32.mrf.mxu0
    %v1288 = vadd.f32 0.0, %v1287
    %1289 = vmatmul.bf16.gmra.mxu0 %v1188
    %v1290 = vpop.f32.mrf.mxu0
    %v1291 = vadd.f32 0.0, %v1290
    %v1292 = vpop.f32.mrf.mxu0
    %v1293 = vadd.f32 0.0, %v1292
    %1294 = vmatmul.bf16.gmra.mxu0 %v1189
    %v1295 = vpop.f32.mrf.mxu0
    %v1296 = vadd.f32 0.0, %v1295
    %v1297 = vpop.f32.mrf.mxu0
    %v1298 = vadd.f32 0.0, %v1297
    %1299 = vmatmul.bf16.gmra.mxu0 %v1190
    %v1300 = vpop.f32.mrf.mxu0
    %v1301 = vadd.f32 0.0, %v1300
    %v1302 = vpop.f32.mrf.mxu0
    %v1303 = vadd.f32 0.0, %v1302
    %1304 = vdwg.mxu0
    %v1305 = vadd.f32 %v1037, %v1266
    %v1306 = vadd.f32 %v1038, %v1268
    %v1307 = vadd.f32 %v1039, %v1271
    %v1308 = vadd.f32 %v1040, %v1273
    %v1309 = vadd.f32 %v1041, %v1276
    %v1310 = vadd.f32 %v1042, %v1278
    %v1311 = vadd.f32 %v1043, %v1281
    %v1312 = vadd.f32 %v1044, %v1283
    %v1313 = vadd.f32 %v1045, %v1286
    %v1314 = vadd.f32 %v1046, %v1288
    %v1315 = vadd.f32 %v1047, %v1291
    %v1316 = vadd.f32 %v1048, %v1293
    %v1317 = vadd.f32 %v1049, %v1296
    %v1318 = vadd.f32 %v1050, %v1298
    %v1319 = vadd.f32 %v1051, %v1301
    %v1320 = vadd.f32 %v1052, %v1303
    %1321 = vset.pattern.permute.xlu0 4
    %1322 = vperm.xlu0 %1321, %v202
    %v1323 = vpop.permute.xlu0 %1322
    %1325 = vset.pattern.permute.xlu0 4
    %1326 = vperm.xlu0 %1325, %v203
    %v1327 = vpop.permute.xlu0 %1326
    %1329 = vset.pattern.permute.xlu0 4
    %1330 = vperm.xlu0 %1329, %v204
    %v1331 = vpop.permute.xlu0 %1330
    %1333 = vset.pattern.permute.xlu0 4
    %1334 = vperm.xlu0 %1333, %v205
    %v1335 = vpop.permute.xlu0 %1334
    %1337 = vset.pattern.permute.xlu0 4
    %1338 = vperm.xlu0 %1337, %v206
    %v1339 = vpop.permute.xlu0 %1338
    %1341 = vset.pattern.permute.xlu0 4
    %1342 = vperm.xlu0 %1341, %v207
    %v1343 = vpop.permute.xlu0 %1342
    %1345 = vset.pattern.permute.xlu0 4
    %1346 = vperm.xlu0 %1345, %v208
    %v1347 = vpop.permute.xlu0 %1346
    %1349 = vset.pattern.permute.xlu0 4
    %1350 = vperm.xlu0 %1349, %v209
    %v1351 = vpop.permute.xlu0 %1350
    %1353 = vset.pattern.permute.xlu0 4
    %1354 = vperm.xlu0 %1353, %v210
    %v1355 = vpop.permute.xlu0 %1354
    %1357 = vset.pattern.permute.xlu0 4
    %1358 = vperm.xlu0 %1357, %v211
    %v1359 = vpop.permute.xlu0 %1358
    %1361 = vset.pattern.permute.xlu0 4
    %1362 = vperm.xlu0 %1361, %v212
    %v1363 = vpop.permute.xlu0 %1362
    %1365 = vset.pattern.permute.xlu0 4
    %1366 = vperm.xlu0 %1365, %v213
    %v1367 = vpop.permute.xlu0 %1366
    %1369 = vset.pattern.permute.xlu0 4
    %1370 = vperm.xlu0 %1369, %v214
    %v1371 = vpop.permute.xlu0 %1370
    %1373 = vset.pattern.permute.xlu0 4
    %1374 = vperm.xlu0 %1373, %v215
    %v1375 = vpop.permute.xlu0 %1374
    %1377 = vset.pattern.permute.xlu0 4
    %1378 = vperm.xlu0 %1377, %v216
    %v1379 = vpop.permute.xlu0 %1378
    %1381 = vset.pattern.permute.xlu0 4
    %1382 = vperm.xlu0 %1381, %v217
    %v1383 = vpop.permute.xlu0 %1382
    %v1385 = vmul.f32 %v234, %v1323
    %v1386 = vmul.f32 %v235, %v1327
    %v1387 = vmul.f32 %v236, %v1331
    %v1388 = vmul.f32 %v237, %v1335
    %v1389 = vmul.f32 %v238, %v1339
    %v1390 = vmul.f32 %v239, %v1343
    %v1391 = vmul.f32 %v240, %v1347
    %v1392 = vmul.f32 %v241, %v1351
    %v1393 = vmul.f32 %v242, %v1355
    %v1394 = vmul.f32 %v243, %v1359
    %v1395 = vmul.f32 %v244, %v1363
    %v1396 = vmul.f32 %v245, %v1367
    %v1397 = vmul.f32 %v246, %v1371
    %v1398 = vmul.f32 %v247, %v1375
    %v1399 = vmul.f32 %v248, %v1379
    %v1400 = vmul.f32 %v249, %v1383
    %v1401 = vpack.c.bf16 %v1386, %v1385
    %v1402 = vpack.c.bf16 %v1388, %v1387
    %v1403 = vpack.c.bf16 %v1390, %v1389
    %v1404 = vpack.c.bf16 %v1392, %v1391
    %v1405 = vpack.c.bf16 %v1394, %v1393
    %v1406 = vpack.c.bf16 %v1396, %v1395
    %v1407 = vpack.c.bf16 %v1398, %v1397
    %v1408 = vpack.c.bf16 %v1400, %v1399
    %s1409 = scalar_lea.vmem [#allocation4], 256
    %v1410 = vld [vmem:[%s1409] sm:$0xf]
    %v1411 = vld [vmem:[%s1409 + $0x4] sm:$0xf]
    %v1412 = vld [vmem:[%s1409 + $0x8] sm:$0xf]
    %v1413 = vld [vmem:[%s1409 + $0xc] sm:$0xf]
    %v1414 = vld [vmem:[%s1409 + $0x10] sm:$0xf]
    %v1415 = vld [vmem:[%s1409 + $0x14] sm:$0xf]
    %v1416 = vld [vmem:[%s1409 + $0x18] sm:$0xf]
    %v1417 = vld [vmem:[%s1409 + $0x1c] sm:$0xf]
    %v1418 = vld [vmem:[%s1409 + $0x20] sm:$0xf]
    %v1419 = vld [vmem:[%s1409 + $0x24] sm:$0xf]
    %v1420 = vld [vmem:[%s1409 + $0x28] sm:$0xf]
    %v1421 = vld [vmem:[%s1409 + $0x2c] sm:$0xf]
    %v1422 = vld [vmem:[%s1409 + $0x30] sm:$0xf]
    %v1423 = vld [vmem:[%s1409 + $0x34] sm:$0xf]
    %v1424 = vld [vmem:[%s1409 + $0x38] sm:$0xf]
    %v1425 = vld [vmem:[%s1409 + $0x3c] sm:$0xf]
    %v1442 = vunpack.c.l.b16 %v1410
    %v1443 = vunpack.c.l.b16 %v1411
    %v1444 = vunpack.c.l.b16 %v1412
    %v1445 = vunpack.c.l.b16 %v1413
    %v1446 = vunpack.c.l.b16 %v1414
    %v1447 = vunpack.c.l.b16 %v1415
    %v1448 = vunpack.c.l.b16 %v1416
    %v1449 = vunpack.c.l.b16 %v1417
    %v1450 = vunpack.c.l.b16 %v1418
    %v1451 = vunpack.c.l.b16 %v1419
    %v1452 = vunpack.c.l.b16 %v1420
    %v1453 = vunpack.c.l.b16 %v1421
    %v1454 = vunpack.c.l.b16 %v1422
    %v1455 = vunpack.c.l.b16 %v1423
    %v1456 = vunpack.c.l.b16 %v1424
    %v1457 = vunpack.c.l.b16 %v1425
    %v1458 = vpack.c.b16 %v1443, %v1442
    %v1459 = vpack.c.b16 %v1445, %v1444
    %v1460 = vpack.c.b16 %v1447, %v1446
    %v1461 = vpack.c.b16 %v1449, %v1448
    %v1462 = vpack.c.b16 %v1451, %v1450
    %v1463 = vpack.c.b16 %v1453, %v1452
    %v1464 = vpack.c.b16 %v1455, %v1454
    %v1465 = vpack.c.b16 %v1457, %v1456
    %1474 = vmatpush.bf16.msra.mxu0 %v1465
    %1475 = vmatpush.bf16.msra.mxu0 %v1464
    %1476 = vmatpush.bf16.msra.mxu0 %v1463
    %1477 = vmatpush.bf16.msra.mxu0 %v1462
    %1478 = vmatpush.bf16.msra.mxu0 %v1461
    %1479 = vmatpush.bf16.msra.mxu0 %v1460
    %1480 = vmatpush.bf16.msra.mxu0 %v1459
    %1481 = vmatpush.bf16.msra.mxu0 %v1458
    %1482 = vmatmul.bf16.gmra.mxu0 %v1401
    %v1483 = vpop.f32.mrf.mxu0
    %v1484 = vadd.f32 0.0, %v1483
    %v1485 = vpop.f32.mrf.mxu0
    %v1486 = vadd.f32 0.0, %v1485
    %1487 = vmatmul.bf16.gmra.mxu0 %v1402
    %v1488 = vpop.f32.mrf.mxu0
    %v1489 = vadd.f32 0.0, %v1488
    %v1490 = vpop.f32.mrf.mxu0
    %v1491 = vadd.f32 0.0, %v1490
    %1492 = vmatmul.bf16.gmra.mxu0 %v1403
    %v1493 = vpop.f32.mrf.mxu0
    %v1494 = vadd.f32 0.0, %v1493
    %v1495 = vpop.f32.mrf.mxu0
    %v1496 = vadd.f32 0.0, %v1495
    %1497 = vmatmul.bf16.gmra.mxu0 %v1404
    %v1498 = vpop.f32.mrf.mxu0
    %v1499 = vadd.f32 0.0, %v1498
    %v1500 = vpop.f32.mrf.mxu0
    %v1501 = vadd.f32 0.0, %v1500
    %1502 = vmatmul.bf16.gmra.mxu0 %v1405
    %v1503 = vpop.f32.mrf.mxu0
    %v1504 = vadd.f32 0.0, %v1503
    %v1505 = vpop.f32.mrf.mxu0
    %v1506 = vadd.f32 0.0, %v1505
    %1507 = vmatmul.bf16.gmra.mxu0 %v1406
    %v1508 = vpop.f32.mrf.mxu0
    %v1509 = vadd.f32 0.0, %v1508
    %v1510 = vpop.f32.mrf.mxu0
    %v1511 = vadd.f32 0.0, %v1510
    %1512 = vmatmul.bf16.gmra.mxu0 %v1407
    %v1513 = vpop.f32.mrf.mxu0
    %v1514 = vadd.f32 0.0, %v1513
    %v1515 = vpop.f32.mrf.mxu0
    %v1516 = vadd.f32 0.0, %v1515
    %1517 = vmatmul.bf16.gmra.mxu0 %v1408
    %v1518 = vpop.f32.mrf.mxu0
    %v1519 = vadd.f32 0.0, %v1518
    %v1520 = vpop.f32.mrf.mxu0
    %v1521 = vadd.f32 0.0, %v1520
    %1522 = vdwg.mxu0
    %v1523 = vadd.f32 %v1305, %v1484
    %v1524 = vadd.f32 %v1306, %v1486
    %v1525 = vadd.f32 %v1307, %v1489
    %v1526 = vadd.f32 %v1308, %v1491
    %v1527 = vadd.f32 %v1309, %v1494
    %v1528 = vadd.f32 %v1310, %v1496
    %v1529 = vadd.f32 %v1311, %v1499
    %v1530 = vadd.f32 %v1312, %v1501
    %v1531 = vadd.f32 %v1313, %v1504
    %v1532 = vadd.f32 %v1314, %v1506
    %v1533 = vadd.f32 %v1315, %v1509
    %v1534 = vadd.f32 %v1316, %v1511
    %v1535 = vadd.f32 %v1317, %v1514
    %v1536 = vadd.f32 %v1318, %v1516
    %v1537 = vadd.f32 %v1319, %v1519
    %v1538 = vadd.f32 %v1320, %v1521
    %vm1539 = vcmask 1046528
    %v1540 = vrot.slane %v234, 1
    %v1541 = vrot.slane %v235, 1
    %v1542 = vsel %vm1539, %v1540, %v1541
    %v1543 = vrot.slane %v236, 1
    %v1544 = vsel %vm1539, %v1541, %v1543
    %v1545 = vrot.slane %v237, 1
    %v1546 = vsel %vm1539, %v1543, %v1545
    %v1547 = vrot.slane %v238, 1
    %v1548 = vsel %vm1539, %v1545, %v1547
    %v1549 = vrot.slane %v239, 1
    %v1550 = vsel %vm1539, %v1547, %v1549
    %v1551 = vrot.slane %v240, 1
    %v1552 = vsel %vm1539, %v1549, %v1551
    %v1553 = vrot.slane %v241, 1
    %v1554 = vsel %vm1539, %v1551, %v1553
    %v1555 = vrot.slane %v242, 1
    %v1556 = vsel %vm1539, %v1553, %v1555
    %v1557 = vrot.slane %v243, 1
    %v1558 = vsel %vm1539, %v1555, %v1557
    %v1559 = vrot.slane %v244, 1
    %v1560 = vsel %vm1539, %v1557, %v1559
    %v1561 = vrot.slane %v245, 1
    %v1562 = vsel %vm1539, %v1559, %v1561
    %v1563 = vrot.slane %v246, 1
    %v1564 = vsel %vm1539, %v1561, %v1563
    %v1565 = vrot.slane %v247, 1
    %v1566 = vsel %vm1539, %v1563, %v1565
    %v1567 = vrot.slane %v248, 1
    %v1568 = vsel %vm1539, %v1565, %v1567
    %v1569 = vrot.slane %v249, 1
    %v1570 = vsel %vm1539, %v1567, %v1569
    %v1588 = vsel %vm1539, %v1569, %v1540
    %1589 = vset.pattern.permute.xlu0 5
    %1590 = vperm.xlu0 %1589, %v202
    %v1591 = vpop.permute.xlu0 %1590
    %1593 = vset.pattern.permute.xlu0 5
    %1594 = vperm.xlu0 %1593, %v203
    %v1595 = vpop.permute.xlu0 %1594
    %1597 = vset.pattern.permute.xlu0 5
    %1598 = vperm.xlu0 %1597, %v204
    %v1599 = vpop.permute.xlu0 %1598
    %1601 = vset.pattern.permute.xlu0 5
    %1602 = vperm.xlu0 %1601, %v205
    %v1603 = vpop.permute.xlu0 %1602
    %1605 = vset.pattern.permute.xlu0 5
    %1606 = vperm.xlu0 %1605, %v206
    %v1607 = vpop.permute.xlu0 %1606
    %1609 = vset.pattern.permute.xlu0 5
    %1610 = vperm.xlu0 %1609, %v207
    %v1611 = vpop.permute.xlu0 %1610
    %1613 = vset.pattern.permute.xlu0 5
    %1614 = vperm.xlu0 %1613, %v208
    %v1615 = vpop.permute.xlu0 %1614
    %1617 = vset.pattern.permute.xlu0 5
    %1618 = vperm.xlu0 %1617, %v209
    %v1619 = vpop.permute.xlu0 %1618
    %1621 = vset.pattern.permute.xlu0 5
    %1622 = vperm.xlu0 %1621, %v210
    %v1623 = vpop.permute.xlu0 %1622
    %1625 = vset.pattern.permute.xlu0 5
    %1626 = vperm.xlu0 %1625, %v211
    %v1627 = vpop.permute.xlu0 %1626
    %1629 = vset.pattern.permute.xlu0 5
    %1630 = vperm.xlu0 %1629, %v212
    %v1631 = vpop.permute.xlu0 %1630
    %1633 = vset.pattern.permute.xlu0 5
    %1634 = vperm.xlu0 %1633, %v213
    %v1635 = vpop.permute.xlu0 %1634
    %1637 = vset.pattern.permute.xlu0 5
    %1638 = vperm.xlu0 %1637, %v214
    %v1639 = vpop.permute.xlu0 %1638
    %1641 = vset.pattern.permute.xlu0 5
    %1642 = vperm.xlu0 %1641, %v215
    %v1643 = vpop.permute.xlu0 %1642
    %1645 = vset.pattern.permute.xlu0 5
    %1646 = vperm.xlu0 %1645, %v216
    %v1647 = vpop.permute.xlu0 %1646
    %1649 = vset.pattern.permute.xlu0 5
    %1650 = vperm.xlu0 %1649, %v217
    %v1651 = vpop.permute.xlu0 %1650
    %v1653 = vmul.f32 %v1542, %v1591
    %v1654 = vmul.f32 %v1544, %v1595
    %v1655 = vmul.f32 %v1546, %v1599
    %v1656 = vmul.f32 %v1548, %v1603
    %v1657 = vmul.f32 %v1550, %v1607
    %v1658 = vmul.f32 %v1552, %v1611
    %v1659 = vmul.f32 %v1554, %v1615
    %v1660 = vmul.f32 %v1556, %v1619
    %v1661 = vmul.f32 %v1558, %v1623
    %v1662 = vmul.f32 %v1560, %v1627
    %v1663 = vmul.f32 %v1562, %v1631
    %v1664 = vmul.f32 %v1564, %v1635
    %v1665 = vmul.f32 %v1566, %v1639
    %v1666 = vmul.f32 %v1568, %v1643
    %v1667 = vmul.f32 %v1570, %v1647
    %v1668 = vmul.f32 %v1588, %v1651
    %v1669 = vpack.c.bf16 %v1654, %v1653
    %v1670 = vpack.c.bf16 %v1656, %v1655
    %v1671 = vpack.c.bf16 %v1658, %v1657
    %v1672 = vpack.c.bf16 %v1660, %v1659
    %v1673 = vpack.c.bf16 %v1662, %v1661
    %v1674 = vpack.c.bf16 %v1664, %v1663
    %v1675 = vpack.c.bf16 %v1666, %v1665
    %v1676 = vpack.c.bf16 %v1668, %v1667
    %s1677 = scalar_lea.vmem [#allocation4], 320
    %v1678 = vld [vmem:[%s1677] sm:$0xf]
    %v1679 = vld [vmem:[%s1677 + $0x4] sm:$0xf]
    %v1680 = vld [vmem:[%s1677 + $0x8] sm:$0xf]
    %v1681 = vld [vmem:[%s1677 + $0xc] sm:$0xf]
    %v1682 = vld [vmem:[%s1677 + $0x10] sm:$0xf]
    %v1683 = vld [vmem:[%s1677 + $0x14] sm:$0xf]
    %v1684 = vld [vmem:[%s1677 + $0x18] sm:$0xf]
    %v1685 = vld [vmem:[%s1677 + $0x1c] sm:$0xf]
    %v1686 = vld [vmem:[%s1677 + $0x20] sm:$0xf]
    %v1687 = vld [vmem:[%s1677 + $0x24] sm:$0xf]
    %v1688 = vld [vmem:[%s1677 + $0x28] sm:$0xf]
    %v1689 = vld [vmem:[%s1677 + $0x2c] sm:$0xf]
    %v1690 = vld [vmem:[%s1677 + $0x30] sm:$0xf]
    %v1691 = vld [vmem:[%s1677 + $0x34] sm:$0xf]
    %v1692 = vld [vmem:[%s1677 + $0x38] sm:$0xf]
    %v1693 = vld [vmem:[%s1677 + $0x3c] sm:$0xf]
    %v1710 = vunpack.c.l.b16 %v1678
    %v1711 = vunpack.c.l.b16 %v1679
    %v1712 = vunpack.c.l.b16 %v1680
    %v1713 = vunpack.c.l.b16 %v1681
    %v1714 = vunpack.c.l.b16 %v1682
    %v1715 = vunpack.c.l.b16 %v1683
    %v1716 = vunpack.c.l.b16 %v1684
    %v1717 = vunpack.c.l.b16 %v1685
    %v1718 = vunpack.c.l.b16 %v1686
    %v1719 = vunpack.c.l.b16 %v1687
    %v1720 = vunpack.c.l.b16 %v1688
    %v1721 = vunpack.c.l.b16 %v1689
    %v1722 = vunpack.c.l.b16 %v1690
    %v1723 = vunpack.c.l.b16 %v1691
    %v1724 = vunpack.c.l.b16 %v1692
    %v1725 = vunpack.c.l.b16 %v1693
    %v1726 = vpack.c.b16 %v1711, %v1710
    %v1727 = vpack.c.b16 %v1713, %v1712
    %v1728 = vpack.c.b16 %v1715, %v1714
    %v1729 = vpack.c.b16 %v1717, %v1716
    %v1730 = vpack.c.b16 %v1719, %v1718
    %v1731 = vpack.c.b16 %v1721, %v1720
    %v1732 = vpack.c.b16 %v1723, %v1722
    %v1733 = vpack.c.b16 %v1725, %v1724
    %1742 = vmatpush.bf16.msra.mxu0 %v1733
    %1743 = vmatpush.bf16.msra.mxu0 %v1732
    %1744 = vmatpush.bf16.msra.mxu0 %v1731
    %1745 = vmatpush.bf16.msra.mxu0 %v1730
    %1746 = vmatpush.bf16.msra.mxu0 %v1729
    %1747 = vmatpush.bf16.msra.mxu0 %v1728
    %1748 = vmatpush.bf16.msra.mxu0 %v1727
    %1749 = vmatpush.bf16.msra.mxu0 %v1726
    %1750 = vmatmul.bf16.gmra.mxu0 %v1669
    %v1751 = vpop.f32.mrf.mxu0
    %v1752 = vadd.f32 0.0, %v1751
    %v1753 = vpop.f32.mrf.mxu0
    %v1754 = vadd.f32 0.0, %v1753
    %1755 = vmatmul.bf16.gmra.mxu0 %v1670
    %v1756 = vpop.f32.mrf.mxu0
    %v1757 = vadd.f32 0.0, %v1756
    %v1758 = vpop.f32.mrf.mxu0
    %v1759 = vadd.f32 0.0, %v1758
    %1760 = vmatmul.bf16.gmra.mxu0 %v1671
    %v1761 = vpop.f32.mrf.mxu0
    %v1762 = vadd.f32 0.0, %v1761
    %v1763 = vpop.f32.mrf.mxu0
    %v1764 = vadd.f32 0.0, %v1763
    %1765 = vmatmul.bf16.gmra.mxu0 %v1672
    %v1766 = vpop.f32.mrf.mxu0
    %v1767 = vadd.f32 0.0, %v1766
    %v1768 = vpop.f32.mrf.mxu0
    %v1769 = vadd.f32 0.0, %v1768
    %1770 = vmatmul.bf16.gmra.mxu0 %v1673
    %v1771 = vpop.f32.mrf.mxu0
    %v1772 = vadd.f32 0.0, %v1771
    %v1773 = vpop.f32.mrf.mxu0
    %v1774 = vadd.f32 0.0, %v1773
    %1775 = vmatmul.bf16.gmra.mxu0 %v1674
    %v1776 = vpop.f32.mrf.mxu0
    %v1777 = vadd.f32 0.0, %v1776
    %v1778 = vpop.f32.mrf.mxu0
    %v1779 = vadd.f32 0.0, %v1778
    %1780 = vmatmul.bf16.gmra.mxu0 %v1675
    %v1781 = vpop.f32.mrf.mxu0
    %v1782 = vadd.f32 0.0, %v1781
    %v1783 = vpop.f32.mrf.mxu0
    %v1784 = vadd.f32 0.0, %v1783
    %1785 = vmatmul.bf16.gmra.mxu0 %v1676
    %v1786 = vpop.f32.mrf.mxu0
    %v1787 = vadd.f32 0.0, %v1786
    %v1788 = vpop.f32.mrf.mxu0
    %v1789 = vadd.f32 0.0, %v1788
    %1790 = vdwg.mxu0
    %v1791 = vadd.f32 %v1523, %v1752
    %v1792 = vadd.f32 %v1524, %v1754
    %v1793 = vadd.f32 %v1525, %v1757
    %v1794 = vadd.f32 %v1526, %v1759
    %v1795 = vadd.f32 %v1527, %v1762
    %v1796 = vadd.f32 %v1528, %v1764
    %v1797 = vadd.f32 %v1529, %v1767
    %v1798 = vadd.f32 %v1530, %v1769
    %v1799 = vadd.f32 %v1531, %v1772
    %v1800 = vadd.f32 %v1532, %v1774
    %v1801 = vadd.f32 %v1533, %v1777
    %v1802 = vadd.f32 %v1534, %v1779
    %v1803 = vadd.f32 %v1535, %v1782
    %v1804 = vadd.f32 %v1536, %v1784
    %v1805 = vadd.f32 %v1537, %v1787
    %v1806 = vadd.f32 %v1538, %v1789
    %1807 = vset.pattern.permute.xlu0 6
    %1808 = vperm.xlu0 %1807, %v202
    %v1809 = vpop.permute.xlu0 %1808
    %1811 = vset.pattern.permute.xlu0 6
    %1812 = vperm.xlu0 %1811, %v203
    %v1813 = vpop.permute.xlu0 %1812
    %1815 = vset.pattern.permute.xlu0 6
    %1816 = vperm.xlu0 %1815, %v204
    %v1817 = vpop.permute.xlu0 %1816
    %1819 = vset.pattern.permute.xlu0 6
    %1820 = vperm.xlu0 %1819, %v205
    %v1821 = vpop.permute.xlu0 %1820
    %1823 = vset.pattern.permute.xlu0 6
    %1824 = vperm.xlu0 %1823, %v206
    %v1825 = vpop.permute.xlu0 %1824
    %1827 = vset.pattern.permute.xlu0 6
    %1828 = vperm.xlu0 %1827, %v207
    %v1829 = vpop.permute.xlu0 %1828
    %1831 = vset.pattern.permute.xlu0 6
    %1832 = vperm.xlu0 %1831, %v208
    %v1833 = vpop.permute.xlu0 %1832
    %1835 = vset.pattern.permute.xlu0 6
    %1836 = vperm.xlu0 %1835, %v209
    %v1837 = vpop.permute.xlu0 %1836
    %1839 = vset.pattern.permute.xlu0 6
    %1840 = vperm.xlu0 %1839, %v210
    %v1841 = vpop.permute.xlu0 %1840
    %1843 = vset.pattern.permute.xlu0 6
    %1844 = vperm.xlu0 %1843, %v211
    %v1845 = vpop.permute.xlu0 %1844
    %1847 = vset.pattern.permute.xlu0 6
    %1848 = vperm.xlu0 %1847, %v212
    %v1849 = vpop.permute.xlu0 %1848
    %1851 = vset.pattern.permute.xlu0 6
    %1852 = vperm.xlu0 %1851, %v213
    %v1853 = vpop.permute.xlu0 %1852
    %1855 = vset.pattern.permute.xlu0 6
    %1856 = vperm.xlu0 %1855, %v214
    %v1857 = vpop.permute.xlu0 %1856
    %1859 = vset.pattern.permute.xlu0 6
    %1860 = vperm.xlu0 %1859, %v215
    %v1861 = vpop.permute.xlu0 %1860
    %1863 = vset.pattern.permute.xlu0 6
    %1864 = vperm.xlu0 %1863, %v216
    %v1865 = vpop.permute.xlu0 %1864
    %1867 = vset.pattern.permute.xlu0 6
    %1868 = vperm.xlu0 %1867, %v217
    %v1869 = vpop.permute.xlu0 %1868
    %v1871 = vmul.f32 %v271, %v1809
    %v1872 = vmul.f32 %v273, %v1813
    %v1873 = vmul.f32 %v275, %v1817
    %v1874 = vmul.f32 %v277, %v1821
    %v1875 = vmul.f32 %v279, %v1825
    %v1876 = vmul.f32 %v281, %v1829
    %v1877 = vmul.f32 %v283, %v1833
    %v1878 = vmul.f32 %v285, %v1837
    %v1879 = vmul.f32 %v287, %v1841
    %v1880 = vmul.f32 %v289, %v1845
    %v1881 = vmul.f32 %v291, %v1849
    %v1882 = vmul.f32 %v293, %v1853
    %v1883 = vmul.f32 %v295, %v1857
    %v1884 = vmul.f32 %v297, %v1861
    %v1885 = vmul.f32 %v298, %v1865
    %v1886 = vmul.f32 %v315, %v1869
    %v1887 = vpack.c.bf16 %v1872, %v1871
    %v1888 = vpack.c.bf16 %v1874, %v1873
    %v1889 = vpack.c.bf16 %v1876, %v1875
    %v1890 = vpack.c.bf16 %v1878, %v1877
    %v1891 = vpack.c.bf16 %v1880, %v1879
    %v1892 = vpack.c.bf16 %v1882, %v1881
    %v1893 = vpack.c.bf16 %v1884, %v1883
    %v1894 = vpack.c.bf16 %v1886, %v1885
    %s1895 = scalar_lea.vmem [#allocation4], 384
    %v1896 = vld [vmem:[%s1895] sm:$0xf]
    %v1897 = vld [vmem:[%s1895 + $0x4] sm:$0xf]
    %v1898 = vld [vmem:[%s1895 + $0x8] sm:$0xf]
    %v1899 = vld [vmem:[%s1895 + $0xc] sm:$0xf]
    %v1900 = vld [vmem:[%s1895 + $0x10] sm:$0xf]
    %v1901 = vld [vmem:[%s1895 + $0x14] sm:$0xf]
    %v1902 = vld [vmem:[%s1895 + $0x18] sm:$0xf]
    %v1903 = vld [vmem:[%s1895 + $0x1c] sm:$0xf]
    %v1904 = vld [vmem:[%s1895 + $0x20] sm:$0xf]
    %v1905 = vld [vmem:[%s1895 + $0x24] sm:$0xf]
    %v1906 = vld [vmem:[%s1895 + $0x28] sm:$0xf]
    %v1907 = vld [vmem:[%s1895 + $0x2c] sm:$0xf]
    %v1908 = vld [vmem:[%s1895 + $0x30] sm:$0xf]
    %v1909 = vld [vmem:[%s1895 + $0x34] sm:$0xf]
    %v1910 = vld [vmem:[%s1895 + $0x38] sm:$0xf]
    %v1911 = vld [vmem:[%s1895 + $0x3c] sm:$0xf]
    %v1928 = vunpack.c.l.b16 %v1896
    %v1929 = vunpack.c.l.b16 %v1897
    %v1930 = vunpack.c.l.b16 %v1898
    %v1931 = vunpack.c.l.b16 %v1899
    %v1932 = vunpack.c.l.b16 %v1900
    %v1933 = vunpack.c.l.b16 %v1901
    %v1934 = vunpack.c.l.b16 %v1902
    %v1935 = vunpack.c.l.b16 %v1903
    %v1936 = vunpack.c.l.b16 %v1904
    %v1937 = vunpack.c.l.b16 %v1905
    %v1938 = vunpack.c.l.b16 %v1906
    %v1939 = vunpack.c.l.b16 %v1907
    %v1940 = vunpack.c.l.b16 %v1908
    %v1941 = vunpack.c.l.b16 %v1909
    %v1942 = vunpack.c.l.b16 %v1910
    %v1943 = vunpack.c.l.b16 %v1911
    %v1944 = vpack.c.b16 %v1929, %v1928
    %v1945 = vpack.c.b16 %v1931, %v1930
    %v1946 = vpack.c.b16 %v1933, %v1932
    %v1947 = vpack.c.b16 %v1935, %v1934
    %v1948 = vpack.c.b16 %v1937, %v1936
    %v1949 = vpack.c.b16 %v1939, %v1938
    %v1950 = vpack.c.b16 %v1941, %v1940
    %v1951 = vpack.c.b16 %v1943, %v1942
    %1960 = vmatpush.bf16.msra.mxu0 %v1951
    %1961 = vmatpush.bf16.msra.mxu0 %v1950
    %1962 = vmatpush.bf16.msra.mxu0 %v1949
    %1963 = vmatpush.bf16.msra.mxu0 %v1948
    %1964 = vmatpush.bf16.msra.mxu0 %v1947
    %1965 = vmatpush.bf16.msra.mxu0 %v1946
    %1966 = vmatpush.bf16.msra.mxu0 %v1945
    %1967 = vmatpush.bf16.msra.mxu0 %v1944
    %1968 = vmatmul.bf16.gmra.mxu0 %v1887
    %v1969 = vpop.f32.mrf.mxu0
    %v1970 = vadd.f32 0.0, %v1969
    %v1971 = vpop.f32.mrf.mxu0
    %v1972 = vadd.f32 0.0, %v1971
    %1973 = vmatmul.bf16.gmra.mxu0 %v1888
    %v1974 = vpop.f32.mrf.mxu0
    %v1975 = vadd.f32 0.0, %v1974
    %v1976 = vpop.f32.mrf.mxu0
    %v1977 = vadd.f32 0.0, %v1976
    %1978 = vmatmul.bf16.gmra.mxu0 %v1889
    %v1979 = vpop.f32.mrf.mxu0
    %v1980 = vadd.f32 0.0, %v1979
    %v1981 = vpop.f32.mrf.mxu0
    %v1982 = vadd.f32 0.0, %v1981
    %1983 = vmatmul.bf16.gmra.mxu0 %v1890
    %v1984 = vpop.f32.mrf.mxu0
    %v1985 = vadd.f32 0.0, %v1984
    %v1986 = vpop.f32.mrf.mxu0
    %v1987 = vadd.f32 0.0, %v1986
    %1988 = vmatmul.bf16.gmra.mxu0 %v1891
    %v1989 = vpop.f32.mrf.mxu0
    %v1990 = vadd.f32 0.0, %v1989
    %v1991 = vpop.f32.mrf.mxu0
    %v1992 = vadd.f32 0.0, %v1991
    %1993 = vmatmul.bf16.gmra.mxu0 %v1892
    %v1994 = vpop.f32.mrf.mxu0
    %v1995 = vadd.f32 0.0, %v1994
    %v1996 = vpop.f32.mrf.mxu0
    %v1997 = vadd.f32 0.0, %v1996
    %1998 = vmatmul.bf16.gmra.mxu0 %v1893
    %v1999 = vpop.f32.mrf.mxu0
    %v2000 = vadd.f32 0.0, %v1999
    %v2001 = vpop.f32.mrf.mxu0
    %v2002 = vadd.f32 0.0, %v2001
    %2003 = vmatmul.bf16.gmra.mxu0 %v1894
    %v2004 = vpop.f32.mrf.mxu0
    %v2005 = vadd.f32 0.0, %v2004
    %v2006 = vpop.f32.mrf.mxu0
    %v2007 = vadd.f32 0.0, %v2006
    %2008 = vdwg.mxu0
    %v2009 = vadd.f32 %v1791, %v1970
    %v2010 = vadd.f32 %v1792, %v1972
    %v2011 = vadd.f32 %v1793, %v1975
    %v2012 = vadd.f32 %v1794, %v1977
    %v2013 = vadd.f32 %v1795, %v1980
    %v2014 = vadd.f32 %v1796, %v1982
    %v2015 = vadd.f32 %v1797, %v1985
    %v2016 = vadd.f32 %v1798, %v1987
    %v2017 = vadd.f32 %v1799, %v1990
    %v2018 = vadd.f32 %v1800, %v1992
    %v2019 = vadd.f32 %v1801, %v1995
    %v2020 = vadd.f32 %v1802, %v1997
    %v2021 = vadd.f32 %v1803, %v2000
    %v2022 = vadd.f32 %v1804, %v2002
    %v2023 = vadd.f32 %v1805, %v2005
    %v2024 = vadd.f32 %v1806, %v2007
    %2025 = vset.pattern.permute.xlu0 7
    %2026 = vperm.xlu0 %2025, %v202
    %v2027 = vpop.permute.xlu0 %2026
    %2029 = vset.pattern.permute.xlu0 7
    %2030 = vperm.xlu0 %2029, %v203
    %v2031 = vpop.permute.xlu0 %2030
    %2033 = vset.pattern.permute.xlu0 7
    %2034 = vperm.xlu0 %2033, %v204
    %v2035 = vpop.permute.xlu0 %2034
    %2037 = vset.pattern.permute.xlu0 7
    %2038 = vperm.xlu0 %2037, %v205
    %v2039 = vpop.permute.xlu0 %2038
    %2041 = vset.pattern.permute.xlu0 7
    %2042 = vperm.xlu0 %2041, %v206
    %v2043 = vpop.permute.xlu0 %2042
    %2045 = vset.pattern.permute.xlu0 7
    %2046 = vperm.xlu0 %2045, %v207
    %v2047 = vpop.permute.xlu0 %2046
    %2049 = vset.pattern.permute.xlu0 7
    %2050 = vperm.xlu0 %2049, %v208
    %v2051 = vpop.permute.xlu0 %2050
    %2053 = vset.pattern.permute.xlu0 7
    %2054 = vperm.xlu0 %2053, %v209
    %v2055 = vpop.permute.xlu0 %2054
    %2057 = vset.pattern.permute.xlu0 7
    %2058 = vperm.xlu0 %2057, %v210
    %v2059 = vpop.permute.xlu0 %2058
    %2061 = vset.pattern.permute.xlu0 7
    %2062 = vperm.xlu0 %2061, %v211
    %v2063 = vpop.permute.xlu0 %2062
    %2065 = vset.pattern.permute.xlu0 7
    %2066 = vperm.xlu0 %2065, %v212
    %v2067 = vpop.permute.xlu0 %2066
    %2069 = vset.pattern.permute.xlu0 7
    %2070 = vperm.xlu0 %2069, %v213
    %v2071 = vpop.permute.xlu0 %2070
    %2073 = vset.pattern.permute.xlu0 7
    %2074 = vperm.xlu0 %2073, %v214
    %v2075 = vpop.permute.xlu0 %2074
    %2077 = vset.pattern.permute.xlu0 7
    %2078 = vperm.xlu0 %2077, %v215
    %v2079 = vpop.permute.xlu0 %2078
    %2081 = vset.pattern.permute.xlu0 7
    %2082 = vperm.xlu0 %2081, %v216
    %v2083 = vpop.permute.xlu0 %2082
    %2085 = vset.pattern.permute.xlu0 7
    %2086 = vperm.xlu0 %2085, %v217
    %v2087 = vpop.permute.xlu0 %2086
    %v2089 = vmul.f32 %v441, %v2027
    %v2090 = vmul.f32 %v443, %v2031
    %v2091 = vmul.f32 %v445, %v2035
    %v2092 = vmul.f32 %v447, %v2039
    %v2093 = vmul.f32 %v449, %v2043
    %v2094 = vmul.f32 %v451, %v2047
    %v2095 = vmul.f32 %v453, %v2051
    %v2096 = vmul.f32 %v455, %v2055
    %v2097 = vmul.f32 %v457, %v2059
    %v2098 = vmul.f32 %v459, %v2063
    %v2099 = vmul.f32 %v461, %v2067
    %v2100 = vmul.f32 %v463, %v2071
    %v2101 = vmul.f32 %v465, %v2075
    %v2102 = vmul.f32 %v467, %v2079
    %v2103 = vmul.f32 %v468, %v2083
    %v2104 = vmul.f32 %v485, %v2087
    %v2105 = vpack.c.bf16 %v2090, %v2089
    %v2106 = vpack.c.bf16 %v2092, %v2091
    %v2107 = vpack.c.bf16 %v2094, %v2093
    %v2108 = vpack.c.bf16 %v2096, %v2095
    %v2109 = vpack.c.bf16 %v2098, %v2097
    %v2110 = vpack.c.bf16 %v2100, %v2099
    %v2111 = vpack.c.bf16 %v2102, %v2101
    %v2112 = vpack.c.bf16 %v2104, %v2103
    %s2113 = scalar_lea.vmem [#allocation4], 448
    %v2114 = vld [vmem:[%s2113] sm:$0xf]
    %v2115 = vld [vmem:[%s2113 + $0x4] sm:$0xf]
    %v2116 = vld [vmem:[%s2113 + $0x8] sm:$0xf]
    %v2117 = vld [vmem:[%s2113 + $0xc] sm:$0xf]
    %v2118 = vld [vmem:[%s2113 + $0x10] sm:$0xf]
    %v2119 = vld [vmem:[%s2113 + $0x14] sm:$0xf]
    %v2120 = vld [vmem:[%s2113 + $0x18] sm:$0xf]
    %v2121 = vld [vmem:[%s2113 + $0x1c] sm:$0xf]
    %v2122 = vld [vmem:[%s2113 + $0x20] sm:$0xf]
    %v2123 = vld [vmem:[%s2113 + $0x24] sm:$0xf]
    %v2124 = vld [vmem:[%s2113 + $0x28] sm:$0xf]
    %v2125 = vld [vmem:[%s2113 + $0x2c] sm:$0xf]
    %v2126 = vld [vmem:[%s2113 + $0x30] sm:$0xf]
    %v2127 = vld [vmem:[%s2113 + $0x34] sm:$0xf]
    %v2128 = vld [vmem:[%s2113 + $0x38] sm:$0xf]
    %v2129 = vld [vmem:[%s2113 + $0x3c] sm:$0xf]
    %v2146 = vunpack.c.l.b16 %v2114
    %v2147 = vunpack.c.l.b16 %v2115
    %v2148 = vunpack.c.l.b16 %v2116
    %v2149 = vunpack.c.l.b16 %v2117
    %v2150 = vunpack.c.l.b16 %v2118
    %v2151 = vunpack.c.l.b16 %v2119
    %v2152 = vunpack.c.l.b16 %v2120
    %v2153 = vunpack.c.l.b16 %v2121
    %v2154 = vunpack.c.l.b16 %v2122
    %v2155 = vunpack.c.l.b16 %v2123
    %v2156 = vunpack.c.l.b16 %v2124
    %v2157 = vunpack.c.l.b16 %v2125
    %v2158 = vunpack.c.l.b16 %v2126
    %v2159 = vunpack.c.l.b16 %v2127
    %v2160 = vunpack.c.l.b16 %v2128
    %v2161 = vunpack.c.l.b16 %v2129
    %v2162 = vpack.c.b16 %v2147, %v2146
    %v2163 = vpack.c.b16 %v2149, %v2148
    %v2164 = vpack.c.b16 %v2151, %v2150
    %v2165 = vpack.c.b16 %v2153, %v2152
    %v2166 = vpack.c.b16 %v2155, %v2154
    %v2167 = vpack.c.b16 %v2157, %v2156
    %v2168 = vpack.c.b16 %v2159, %v2158
    %v2169 = vpack.c.b16 %v2161, %v2160
    %2178 = vmatpush.bf16.msra.mxu0 %v2169
    %2179 = vmatpush.bf16.msra.mxu0 %v2168
    %2180 = vmatpush.bf16.msra.mxu0 %v2167
    %2181 = vmatpush.bf16.msra.mxu0 %v2166
    %2182 = vmatpush.bf16.msra.mxu0 %v2165
    %2183 = vmatpush.bf16.msra.mxu0 %v2164
    %2184 = vmatpush.bf16.msra.mxu0 %v2163
    %2185 = vmatpush.bf16.msra.mxu0 %v2162
    %2186 = vmatmul.bf16.gmra.mxu0 %v2105
    %v2187 = vpop.f32.mrf.mxu0
    %v2188 = vadd.f32 0.0, %v2187
    %v2189 = vpop.f32.mrf.mxu0
    %v2190 = vadd.f32 0.0, %v2189
    %2191 = vmatmul.bf16.gmra.mxu0 %v2106
    %v2192 = vpop.f32.mrf.mxu0
    %v2193 = vadd.f32 0.0, %v2192
    %v2194 = vpop.f32.mrf.mxu0
    %v2195 = vadd.f32 0.0, %v2194
    %2196 = vmatmul.bf16.gmra.mxu0 %v2107
    %v2197 = vpop.f32.mrf.mxu0
    %v2198 = vadd.f32 0.0, %v2197
    %v2199 = vpop.f32.mrf.mxu0
    %v2200 = vadd.f32 0.0, %v2199
    %2201 = vmatmul.bf16.gmra.mxu0 %v2108
    %v2202 = vpop.f32.mrf.mxu0
    %v2203 = vadd.f32 0.0, %v2202
    %v2204 = vpop.f32.mrf.mxu0
    %v2205 = vadd.f32 0.0, %v2204
    %2206 = vmatmul.bf16.gmra.mxu0 %v2109
    %v2207 = vpop.f32.mrf.mxu0
    %v2208 = vadd.f32 0.0, %v2207
    %v2209 = vpop.f32.mrf.mxu0
    %v2210 = vadd.f32 0.0, %v2209
    %2211 = vmatmul.bf16.gmra.mxu0 %v2110
    %v2212 = vpop.f32.mrf.mxu0
    %v2213 = vadd.f32 0.0, %v2212
    %v2214 = vpop.f32.mrf.mxu0
    %v2215 = vadd.f32 0.0, %v2214
    %2216 = vmatmul.bf16.gmra.mxu0 %v2111
    %v2217 = vpop.f32.mrf.mxu0
    %v2218 = vadd.f32 0.0, %v2217
    %v2219 = vpop.f32.mrf.mxu0
    %v2220 = vadd.f32 0.0, %v2219
    %2221 = vmatmul.bf16.gmra.mxu0 %v2112
    %v2222 = vpop.f32.mrf.mxu0
    %v2223 = vadd.f32 0.0, %v2222
    %v2224 = vpop.f32.mrf.mxu0
    %v2225 = vadd.f32 0.0, %v2224
    %2226 = vdwg.mxu0
    %v2227 = vadd.f32 %v2009, %v2188
    %v2228 = vadd.f32 %v2010, %v2190
    %v2229 = vadd.f32 %v2011, %v2193
    %v2230 = vadd.f32 %v2012, %v2195
    %v2231 = vadd.f32 %v2013, %v2198
    %v2232 = vadd.f32 %v2014, %v2200
    %v2233 = vadd.f32 %v2015, %v2203
    %v2234 = vadd.f32 %v2016, %v2205
    %v2235 = vadd.f32 %v2017, %v2208
    %v2236 = vadd.f32 %v2018, %v2210
    %v2237 = vadd.f32 %v2019, %v2213
    %v2238 = vadd.f32 %v2020, %v2215
    %v2239 = vadd.f32 %v2021, %v2218
    %v2240 = vadd.f32 %v2022, %v2220
    %v2241 = vadd.f32 %v2023, %v2223
    %v2242 = vadd.f32 %v2024, %v2225
    %2243 = vset.pattern.permute.xlu0 8
    %2244 = vperm.xlu0 %2243, %v202
    %v2245 = vpop.permute.xlu0 %2244
    %2247 = vset.pattern.permute.xlu0 8
    %2248 = vperm.xlu0 %2247, %v203
    %v2249 = vpop.permute.xlu0 %2248
    %2251 = vset.pattern.permute.xlu0 8
    %2252 = vperm.xlu0 %2251, %v204
    %v2253 = vpop.permute.xlu0 %2252
    %2255 = vset.pattern.permute.xlu0 8
    %2256 = vperm.xlu0 %2255, %v205
    %v2257 = vpop.permute.xlu0 %2256
    %2259 = vset.pattern.permute.xlu0 8
    %2260 = vperm.xlu0 %2259, %v206
    %v2261 = vpop.permute.xlu0 %2260
    %2263 = vset.pattern.permute.xlu0 8
    %2264 = vperm.xlu0 %2263, %v207
    %v2265 = vpop.permute.xlu0 %2264
    %2267 = vset.pattern.permute.xlu0 8
    %2268 = vperm.xlu0 %2267, %v208
    %v2269 = vpop.permute.xlu0 %2268
    %2271 = vset.pattern.permute.xlu0 8
    %2272 = vperm.xlu0 %2271, %v209
    %v2273 = vpop.permute.xlu0 %2272
    %2275 = vset.pattern.permute.xlu0 8
    %2276 = vperm.xlu0 %2275, %v210
    %v2277 = vpop.permute.xlu0 %2276
    %2279 = vset.pattern.permute.xlu0 8
    %2280 = vperm.xlu0 %2279, %v211
    %v2281 = vpop.permute.xlu0 %2280
    %2283 = vset.pattern.permute.xlu0 8
    %2284 = vperm.xlu0 %2283, %v212
    %v2285 = vpop.permute.xlu0 %2284
    %2287 = vset.pattern.permute.xlu0 8
    %2288 = vperm.xlu0 %2287, %v213
    %v2289 = vpop.permute.xlu0 %2288
    %2291 = vset.pattern.permute.xlu0 8
    %2292 = vperm.xlu0 %2291, %v214
    %v2293 = vpop.permute.xlu0 %2292
    %2295 = vset.pattern.permute.xlu0 8
    %2296 = vperm.xlu0 %2295, %v215
    %v2297 = vpop.permute.xlu0 %2296
    %2299 = vset.pattern.permute.xlu0 8
    %2300 = vperm.xlu0 %2299, %v216
    %v2301 = vpop.permute.xlu0 %2300
    %2303 = vset.pattern.permute.xlu0 8
    %2304 = vperm.xlu0 %2303, %v217
    %v2305 = vpop.permute.xlu0 %2304
    %v2307 = vmul.f32 %v790, %v2245
    %v2308 = vmul.f32 %v792, %v2249
    %v2309 = vmul.f32 %v794, %v2253
    %v2310 = vmul.f32 %v796, %v2257
    %v2311 = vmul.f32 %v798, %v2261
    %v2312 = vmul.f32 %v800, %v2265
    %v2313 = vmul.f32 %v802, %v2269
    %v2314 = vmul.f32 %v804, %v2273
    %v2315 = vmul.f32 %v806, %v2277
    %v2316 = vmul.f32 %v808, %v2281
    %v2317 = vmul.f32 %v810, %v2285
    %v2318 = vmul.f32 %v812, %v2289
    %v2319 = vmul.f32 %v814, %v2293
    %v2320 = vmul.f32 %v816, %v2297
    %v2321 = vmul.f32 %v817, %v2301
    %v2322 = vmul.f32 %v834, %v2305
    %v2323 = vpack.c.bf16 %v2308, %v2307
    %v2324 = vpack.c.bf16 %v2310, %v2309
    %v2325 = vpack.c.bf16 %v2312, %v2311
    %v2326 = vpack.c.bf16 %v2314, %v2313
    %v2327 = vpack.c.bf16 %v2316, %v2315
    %v2328 = vpack.c.bf16 %v2318, %v2317
    %v2329 = vpack.c.bf16 %v2320, %v2319
    %v2330 = vpack.c.bf16 %v2322, %v2321
    %s2331 = scalar_lea.vmem [#allocation4], 512
    %v2332 = vld [vmem:[%s2331] sm:$0xf]
    %v2333 = vld [vmem:[%s2331 + $0x4] sm:$0xf]
    %v2334 = vld [vmem:[%s2331 + $0x8] sm:$0xf]
    %v2335 = vld [vmem:[%s2331 + $0xc] sm:$0xf]
    %v2336 = vld [vmem:[%s2331 + $0x10] sm:$0xf]
    %v2337 = vld [vmem:[%s2331 + $0x14] sm:$0xf]
    %v2338 = vld [vmem:[%s2331 + $0x18] sm:$0xf]
    %v2339 = vld [vmem:[%s2331 + $0x1c] sm:$0xf]
    %v2340 = vld [vmem:[%s2331 + $0x20] sm:$0xf]
    %v2341 = vld [vmem:[%s2331 + $0x24] sm:$0xf]
    %v2342 = vld [vmem:[%s2331 + $0x28] sm:$0xf]
    %v2343 = vld [vmem:[%s2331 + $0x2c] sm:$0xf]
    %v2344 = vld [vmem:[%s2331 + $0x30] sm:$0xf]
    %v2345 = vld [vmem:[%s2331 + $0x34] sm:$0xf]
    %v2346 = vld [vmem:[%s2331 + $0x38] sm:$0xf]
    %v2347 = vld [vmem:[%s2331 + $0x3c] sm:$0xf]
    %v2364 = vunpack.c.l.b16 %v2332
    %v2365 = vunpack.c.l.b16 %v2333
    %v2366 = vunpack.c.l.b16 %v2334
    %v2367 = vunpack.c.l.b16 %v2335
    %v2368 = vunpack.c.l.b16 %v2336
    %v2369 = vunpack.c.l.b16 %v2337
    %v2370 = vunpack.c.l.b16 %v2338
    %v2371 = vunpack.c.l.b16 %v2339
    %v2372 = vunpack.c.l.b16 %v2340
    %v2373 = vunpack.c.l.b16 %v2341
    %v2374 = vunpack.c.l.b16 %v2342
    %v2375 = vunpack.c.l.b16 %v2343
    %v2376 = vunpack.c.l.b16 %v2344
    %v2377 = vunpack.c.l.b16 %v2345
    %v2378 = vunpack.c.l.b16 %v2346
    %v2379 = vunpack.c.l.b16 %v2347
    %v2380 = vpack.c.b16 %v2365, %v2364
    %v2381 = vpack.c.b16 %v2367, %v2366
    %v2382 = vpack.c.b16 %v2369, %v2368
    %v2383 = vpack.c.b16 %v2371, %v2370
    %v2384 = vpack.c.b16 %v2373, %v2372
    %v2385 = vpack.c.b16 %v2375, %v2374
    %v2386 = vpack.c.b16 %v2377, %v2376
    %v2387 = vpack.c.b16 %v2379, %v2378
    %2396 = vmatpush.bf16.msra.mxu0 %v2387
    %2397 = vmatpush.bf16.msra.mxu0 %v2386
    %2398 = vmatpush.bf16.msra.mxu0 %v2385
    %2399 = vmatpush.bf16.msra.mxu0 %v2384
    %2400 = vmatpush.bf16.msra.mxu0 %v2383
    %2401 = vmatpush.bf16.msra.mxu0 %v2382
    %2402 = vmatpush.bf16.msra.mxu0 %v2381
    %2403 = vmatpush.bf16.msra.mxu0 %v2380
    %2404 = vmatmul.bf16.gmra.mxu0 %v2323
    %v2405 = vpop.f32.mrf.mxu0
    %v2406 = vadd.f32 0.0, %v2405
    %v2407 = vpop.f32.mrf.mxu0
    %v2408 = vadd.f32 0.0, %v2407
    %2409 = vmatmul.bf16.gmra.mxu0 %v2324
    %v2410 = vpop.f32.mrf.mxu0
    %v2411 = vadd.f32 0.0, %v2410
    %v2412 = vpop.f32.mrf.mxu0
    %v2413 = vadd.f32 0.0, %v2412
    %2414 = vmatmul.bf16.gmra.mxu0 %v2325
    %v2415 = vpop.f32.mrf.mxu0
    %v2416 = vadd.f32 0.0, %v2415
    %v2417 = vpop.f32.mrf.mxu0
    %v2418 = vadd.f32 0.0, %v2417
    %2419 = vmatmul.bf16.gmra.mxu0 %v2326
    %v2420 = vpop.f32.mrf.mxu0
    %v2421 = vadd.f32 0.0, %v2420
    %v2422 = vpop.f32.mrf.mxu0
    %v2423 = vadd.f32 0.0, %v2422
    %2424 = vmatmul.bf16.gmra.mxu0 %v2327
    %v2425 = vpop.f32.mrf.mxu0
    %v2426 = vadd.f32 0.0, %v2425
    %v2427 = vpop.f32.mrf.mxu0
    %v2428 = vadd.f32 0.0, %v2427
    %2429 = vmatmul.bf16.gmra.mxu0 %v2328
    %v2430 = vpop.f32.mrf.mxu0
    %v2431 = vadd.f32 0.0, %v2430
    %v2432 = vpop.f32.mrf.mxu0
    %v2433 = vadd.f32 0.0, %v2432
    %2434 = vmatmul.bf16.gmra.mxu0 %v2329
    %v2435 = vpop.f32.mrf.mxu0
    %v2436 = vadd.f32 0.0, %v2435
    %v2437 = vpop.f32.mrf.mxu0
    %v2438 = vadd.f32 0.0, %v2437
    %2439 = vmatmul.bf16.gmra.mxu0 %v2330
    %v2440 = vpop.f32.mrf.mxu0
    %v2441 = vadd.f32 0.0, %v2440
    %v2442 = vpop.f32.mrf.mxu0
    %v2443 = vadd.f32 0.0, %v2442
    %2444 = vdwg.mxu0
    %v2445 = vadd.f32 %v2227, %v2406
    %v2446 = vadd.f32 %v2228, %v2408
    %v2447 = vadd.f32 %v2229, %v2411
    %v2448 = vadd.f32 %v2230, %v2413
    %v2449 = vadd.f32 %v2231, %v2416
    %v2450 = vadd.f32 %v2232, %v2418
    %v2451 = vadd.f32 %v2233, %v2421
    %v2452 = vadd.f32 %v2234, %v2423
    %v2453 = vadd.f32 %v2235, %v2426
    %v2454 = vadd.f32 %v2236, %v2428
    %v2455 = vadd.f32 %v2237, %v2431
    %v2456 = vadd.f32 %v2238, %v2433
    %v2457 = vadd.f32 %v2239, %v2436
    %v2458 = vadd.f32 %v2240, %v2438
    %v2459 = vadd.f32 %v2241, %v2441
    %v2460 = vadd.f32 %v2242, %v2443
    %v2461 = vld [vmem:[#allocation6] sm:$0x1]
    %v2463 = vperm.slane %v2461, 0
    %v2465 = vadd.f32 %v2445, %v2463
    %v2466 = vadd.f32 %v2446, %v2463
    %v2467 = vadd.f32 %v2447, %v2463
    %v2468 = vadd.f32 %v2448, %v2463
    %v2469 = vadd.f32 %v2449, %v2463
    %v2470 = vadd.f32 %v2450, %v2463
    %v2471 = vadd.f32 %v2451, %v2463
    %v2472 = vadd.f32 %v2452, %v2463
    %v2473 = vadd.f32 %v2453, %v2463
    %v2474 = vadd.f32 %v2454, %v2463
    %v2475 = vadd.f32 %v2455, %v2463
    %v2476 = vadd.f32 %v2456, %v2463
    %v2477 = vadd.f32 %v2457, %v2463
    %v2478 = vadd.f32 %v2458, %v2463
    %v2479 = vadd.f32 %v2459, %v2463
    %v2480 = vadd.f32 %v2460, %v2463
    %v2481 = vmax.f32 %v2465, 0.0
    %v2482 = vmax.f32 %v2466, 0.0
    %v2483 = vmax.f32 %v2467, 0.0
    %v2484 = vmax.f32 %v2468, 0.0
    %v2485 = vmax.f32 %v2469, 0.0
    %v2486 = vmax.f32 %v2470, 0.0
    %v2487 = vmax.f32 %v2471, 0.0
    %v2488 = vmax.f32 %v2472, 0.0
    %v2489 = vmax.f32 %v2473, 0.0
    %v2490 = vmax.f32 %v2474, 0.0
    %v2491 = vmax.f32 %v2475, 0.0
    %v2492 = vmax.f32 %v2476, 0.0
    %v2493 = vmax.f32 %v2477, 0.0
    %v2494 = vmax.f32 %v2478, 0.0
    %v2495 = vmax.f32 %v2479, 0.0
    %v2496 = vmax.f32 %v2480, 0.0
    %v2498 = vrot.slane %v2496, 3
    %v2515 = vrot.slane %v2481, 3
    %v2516 = vrot.slane %v2482, 3
    %v2517 = vsel %vm268, %v2515, %v2516
    %v2518 = vrot.slane %v2483, 3
    %v2519 = vsel %vm268, %v2516, %v2518
    %v2520 = vrot.slane %v2484, 3
    %v2521 = vsel %vm268, %v2518, %v2520
    %v2522 = vrot.slane %v2485, 3
    %v2523 = vsel %vm268, %v2520, %v2522
    %v2524 = vrot.slane %v2486, 3
    %v2525 = vsel %vm268, %v2522, %v2524
    %v2526 = vrot.slane %v2487, 3
    %v2527 = vsel %vm268, %v2524, %v2526
    %v2528 = vrot.slane %v2488, 3
    %v2529 = vsel %vm268, %v2526, %v2528
    %v2530 = vrot.slane %v2489, 3
    %v2531 = vsel %vm268, %v2528, %v2530
    %v2532 = vrot.slane %v2490, 3
    %v2533 = vsel %vm268, %v2530, %v2532
    %v2534 = vrot.slane %v2491, 3
    %v2535 = vsel %vm268, %v2532, %v2534
    %v2536 = vrot.slane %v2492, 3
    %v2537 = vsel %vm268, %v2534, %v2536
    %v2538 = vrot.slane %v2493, 3
    %v2539 = vsel %vm268, %v2536, %v2538
    %v2540 = vrot.slane %v2494, 3
    %v2541 = vsel %vm268, %v2538, %v2540
    %v2542 = vrot.slane %v2495, 3
    %v2543 = vsel %vm268, %v2540, %v2542
    %v2544 = vsel %vm268, %v2542, %v2498
    %v2561 = vsel %vm268, %v2498, %v2515
    %v2562 = vmul.f32 %v2561, %v319
    %v2563 = vmul.f32 %v2517, %v324
    %v2564 = vmul.f32 %v2519, %v329
    %v2565 = vmul.f32 %v2521, %v334
    %v2566 = vmul.f32 %v2523, %v339
    %v2567 = vmul.f32 %v2525, %v344
    %v2568 = vmul.f32 %v2527, %v349
    %v2569 = vmul.f32 %v2529, %v354
    %v2570 = vmul.f32 %v2531, %v359
    %v2571 = vmul.f32 %v2533, %v364
    %v2572 = vmul.f32 %v2535, %v369
    %v2573 = vmul.f32 %v2537, %v374
    %v2574 = vmul.f32 %v2539, %v379
    %v2575 = vmul.f32 %v2541, %v384
    %v2576 = vmul.f32 %v2543, %v389
    %v2577 = vmul.f32 %v2544, %v394
    %v2578 = vpack.c.bf16 %v2563, %v2562
    %v2579 = vpack.c.bf16 %v2565, %v2564
    %v2580 = vpack.c.bf16 %v2567, %v2566
    %v2581 = vpack.c.bf16 %v2569, %v2568
    %v2582 = vpack.c.bf16 %v2571, %v2570
    %v2583 = vpack.c.bf16 %v2573, %v2572
    %v2584 = vpack.c.bf16 %v2575, %v2574
    %v2585 = vpack.c.bf16 %v2577, %v2576
    %v2586 = vld [vmem:[#allocation7] sm:$0xf]
    %v2587 = vld [vmem:[#allocation7 + $0x4] sm:$0xf]
    %v2588 = vld [vmem:[#allocation7 + $0x8] sm:$0xf]
    %v2589 = vld [vmem:[#allocation7 + $0xc] sm:$0xf]
    %v2590 = vld [vmem:[#allocation7 + $0x10] sm:$0xf]
    %v2591 = vld [vmem:[#allocation7 + $0x14] sm:$0xf]
    %v2592 = vld [vmem:[#allocation7 + $0x18] sm:$0xf]
    %v2593 = vld [vmem:[#allocation7 + $0x1c] sm:$0xf]
    %v2594 = vld [vmem:[#allocation7 + $0x20] sm:$0xf]
    %v2595 = vld [vmem:[#allocation7 + $0x24] sm:$0xf]
    %v2596 = vld [vmem:[#allocation7 + $0x28] sm:$0xf]
    %v2597 = vld [vmem:[#allocation7 + $0x2c] sm:$0xf]
    %v2598 = vld [vmem:[#allocation7 + $0x30] sm:$0xf]
    %v2599 = vld [vmem:[#allocation7 + $0x34] sm:$0xf]
    %v2600 = vld [vmem:[#allocation7 + $0x38] sm:$0xf]
    %v2601 = vld [vmem:[#allocation7 + $0x3c] sm:$0xf]
    %v2602 = vrot.slane %v2496, 4
    %v2604 = vrot.slane %v2481, 4
    %v2605 = vrot.slane %v2482, 4
    %v2606 = vsel %vm438, %v2604, %v2605
    %v2607 = vrot.slane %v2483, 4
    %v2608 = vsel %vm438, %v2605, %v2607
    %v2609 = vrot.slane %v2484, 4
    %v2610 = vsel %vm438, %v2607, %v2609
    %v2611 = vrot.slane %v2485, 4
    %v2612 = vsel %vm438, %v2609, %v2611
    %v2613 = vrot.slane %v2486, 4
    %v2614 = vsel %vm438, %v2611, %v2613
    %v2615 = vrot.slane %v2487, 4
    %v2616 = vsel %vm438, %v2613, %v2615
    %v2617 = vrot.slane %v2488, 4
    %v2618 = vsel %vm438, %v2615, %v2617
    %v2619 = vrot.slane %v2489, 4
    %v2620 = vsel %vm438, %v2617, %v2619
    %v2621 = vrot.slane %v2490, 4
    %v2622 = vsel %vm438, %v2619, %v2621
    %v2623 = vrot.slane %v2491, 4
    %v2624 = vsel %vm438, %v2621, %v2623
    %v2625 = vrot.slane %v2492, 4
    %v2626 = vsel %vm438, %v2623, %v2625
    %v2627 = vrot.slane %v2493, 4
    %v2628 = vsel %vm438, %v2625, %v2627
    %v2629 = vrot.slane %v2494, 4
    %v2630 = vsel %vm438, %v2627, %v2629
    %v2631 = vrot.slane %v2495, 4
    %v2632 = vsel %vm438, %v2629, %v2631
    %v2633 = vsel %vm438, %v2631, %v2602
    %v2650 = vsel %vm438, %v2602, %v2604
    %v2651 = vmul.f32 %v2650, %v488
    %v2652 = vmul.f32 %v2606, %v492
    %v2653 = vmul.f32 %v2608, %v496
    %v2654 = vmul.f32 %v2610, %v500
    %v2655 = vmul.f32 %v2612, %v504
    %v2656 = vmul.f32 %v2614, %v508
    %v2657 = vmul.f32 %v2616, %v512
    %v2658 = vmul.f32 %v2618, %v516
    %v2659 = vmul.f32 %v2620, %v520
    %v2660 = vmul.f32 %v2622, %v524
    %v2661 = vmul.f32 %v2624, %v528
    %v2662 = vmul.f32 %v2626, %v532
    %v2663 = vmul.f32 %v2628, %v536
    %v2664 = vmul.f32 %v2630, %v540
    %v2665 = vmul.f32 %v2632, %v544
    %v2666 = vmul.f32 %v2633, %v548
    %v2667 = vpack.c.bf16 %v2652, %v2651
    %v2668 = vpack.c.bf16 %v2654, %v2653
    %v2669 = vpack.c.bf16 %v2656, %v2655
    %v2670 = vpack.c.bf16 %v2658, %v2657
    %v2671 = vpack.c.bf16 %v2660, %v2659
    %v2672 = vpack.c.bf16 %v2662, %v2661
    %v2673 = vpack.c.bf16 %v2664, %v2663
    %v2674 = vpack.c.bf16 %v2666, %v2665
    %s2675 = scalar_lea.vmem [#allocation7], 64
    %v2676 = vld [vmem:[%s2675] sm:$0xf]
    %v2677 = vld [vmem:[%s2675 + $0x4] sm:$0xf]
    %v2678 = vld [vmem:[%s2675 + $0x8] sm:$0xf]
    %v2679 = vld [vmem:[%s2675 + $0xc] sm:$0xf]
    %v2680 = vld [vmem:[%s2675 + $0x10] sm:$0xf]
    %v2681 = vld [vmem:[%s2675 + $0x14] sm:$0xf]
    %v2682 = vld [vmem:[%s2675 + $0x18] sm:$0xf]
    %v2683 = vld [vmem:[%s2675 + $0x1c] sm:$0xf]
    %v2684 = vld [vmem:[%s2675 + $0x20] sm:$0xf]
    %v2685 = vld [vmem:[%s2675 + $0x24] sm:$0xf]
    %v2686 = vld [vmem:[%s2675 + $0x28] sm:$0xf]
    %v2687 = vld [vmem:[%s2675 + $0x2c] sm:$0xf]
    %v2688 = vld [vmem:[%s2675 + $0x30] sm:$0xf]
    %v2689 = vld [vmem:[%s2675 + $0x34] sm:$0xf]
    %v2690 = vld [vmem:[%s2675 + $0x38] sm:$0xf]
    %v2691 = vld [vmem:[%s2675 + $0x3c] sm:$0xf]
    %v2708 = vunpack.c.l.b16 %v2676
    %v2709 = vunpack.c.l.b16 %v2677
    %v2710 = vunpack.c.l.b16 %v2678
    %v2711 = vunpack.c.l.b16 %v2679
    %v2712 = vunpack.c.l.b16 %v2680
    %v2713 = vunpack.c.l.b16 %v2681
    %v2714 = vunpack.c.l.b16 %v2682
    %v2715 = vunpack.c.l.b16 %v2683
    %v2716 = vunpack.c.l.b16 %v2684
    %v2717 = vunpack.c.l.b16 %v2685
    %v2718 = vunpack.c.l.b16 %v2686
    %v2719 = vunpack.c.l.b16 %v2687
    %v2720 = vunpack.c.l.b16 %v2688
    %v2721 = vunpack.c.l.b16 %v2689
    %v2722 = vunpack.c.l.b16 %v2690
    %v2723 = vunpack.c.l.b16 %v2691
    %v2724 = vpack.c.b16 %v2709, %v2708
    %v2725 = vpack.c.b16 %v2711, %v2710
    %v2726 = vpack.c.b16 %v2713, %v2712
    %v2727 = vpack.c.b16 %v2715, %v2714
    %v2728 = vpack.c.b16 %v2717, %v2716
    %v2729 = vpack.c.b16 %v2719, %v2718
    %v2730 = vpack.c.b16 %v2721, %v2720
    %v2731 = vpack.c.b16 %v2723, %v2722
    %2740 = vmatpush.bf16.msra.mxu0 %v2731
    %2741 = vmatpush.bf16.msra.mxu0 %v2730
    %2742 = vmatpush.bf16.msra.mxu0 %v2729
    %2743 = vmatpush.bf16.msra.mxu0 %v2728
    %2744 = vmatpush.bf16.msra.mxu0 %v2727
    %2745 = vmatpush.bf16.msra.mxu0 %v2726
    %2746 = vmatpush.bf16.msra.mxu0 %v2725
    %2747 = vmatpush.bf16.msra.mxu0 %v2724
    %2748 = vmatmul.bf16.gmra.mxu0 %v2667
    %v2749 = vpop.f32.mrf.mxu0
    %v2750 = vadd.f32 0.0, %v2749
    %v2751 = vpop.f32.mrf.mxu0
    %v2752 = vadd.f32 0.0, %v2751
    %2753 = vmatmul.bf16.gmra.mxu0 %v2668
    %v2754 = vpop.f32.mrf.mxu0
    %v2755 = vadd.f32 0.0, %v2754
    %v2756 = vpop.f32.mrf.mxu0
    %v2757 = vadd.f32 0.0, %v2756
    %2758 = vmatmul.bf16.gmra.mxu0 %v2669
    %v2759 = vpop.f32.mrf.mxu0
    %v2760 = vadd.f32 0.0, %v2759
    %v2761 = vpop.f32.mrf.mxu0
    %v2762 = vadd.f32 0.0, %v2761
    %2763 = vmatmul.bf16.gmra.mxu0 %v2670
    %v2764 = vpop.f32.mrf.mxu0
    %v2765 = vadd.f32 0.0, %v2764
    %v2766 = vpop.f32.mrf.mxu0
    %v2767 = vadd.f32 0.0, %v2766
    %2768 = vmatmul.bf16.gmra.mxu0 %v2671
    %v2769 = vpop.f32.mrf.mxu0
    %v2770 = vadd.f32 0.0, %v2769
    %v2771 = vpop.f32.mrf.mxu0
    %v2772 = vadd.f32 0.0, %v2771
    %2773 = vmatmul.bf16.gmra.mxu0 %v2672
    %v2774 = vpop.f32.mrf.mxu0
    %v2775 = vadd.f32 0.0, %v2774
    %v2776 = vpop.f32.mrf.mxu0
    %v2777 = vadd.f32 0.0, %v2776
    %2778 = vmatmul.bf16.gmra.mxu0 %v2673
    %v2779 = vpop.f32.mrf.mxu0
    %v2780 = vadd.f32 0.0, %v2779
    %v2781 = vpop.f32.mrf.mxu0
    %v2782 = vadd.f32 0.0, %v2781
    %2783 = vmatmul.bf16.gmra.mxu0 %v2674
    %v2784 = vpop.f32.mrf.mxu0
    %v2785 = vadd.f32 0.0, %v2784
    %v2786 = vpop.f32.mrf.mxu0
    %v2787 = vadd.f32 0.0, %v2786
    %2788 = vdwg.mxu0
    %v2805 = vunpack.c.l.b16 %v2586
    %v2806 = vunpack.c.l.b16 %v2587
    %v2807 = vunpack.c.l.b16 %v2588
    %v2808 = vunpack.c.l.b16 %v2589
    %v2809 = vunpack.c.l.b16 %v2590
    %v2810 = vunpack.c.l.b16 %v2591
    %v2811 = vunpack.c.l.b16 %v2592
    %v2812 = vunpack.c.l.b16 %v2593
    %v2813 = vunpack.c.l.b16 %v2594
    %v2814 = vunpack.c.l.b16 %v2595
    %v2815 = vunpack.c.l.b16 %v2596
    %v2816 = vunpack.c.l.b16 %v2597
    %v2817 = vunpack.c.l.b16 %v2598
    %v2818 = vunpack.c.l.b16 %v2599
    %v2819 = vunpack.c.l.b16 %v2600
    %v2820 = vunpack.c.l.b16 %v2601
    %v2821 = vpack.c.b16 %v2806, %v2805
    %v2822 = vpack.c.b16 %v2808, %v2807
    %v2823 = vpack.c.b16 %v2810, %v2809
    %v2824 = vpack.c.b16 %v2812, %v2811
    %v2825 = vpack.c.b16 %v2814, %v2813
    %v2826 = vpack.c.b16 %v2816, %v2815
    %v2827 = vpack.c.b16 %v2818, %v2817
    %v2828 = vpack.c.b16 %v2820, %v2819
    %2837 = vmatpush.bf16.msra.mxu0 %v2828
    %2838 = vmatpush.bf16.msra.mxu0 %v2827
    %2839 = vmatpush.bf16.msra.mxu0 %v2826
    %2840 = vmatpush.bf16.msra.mxu0 %v2825
    %2841 = vmatpush.bf16.msra.mxu0 %v2824
    %2842 = vmatpush.bf16.msra.mxu0 %v2823
    %2843 = vmatpush.bf16.msra.mxu0 %v2822
    %2844 = vmatpush.bf16.msra.mxu0 %v2821
    %2845 = vmatmul.bf16.gmra.mxu0 %v2578
    %v2846 = vpop.f32.mrf.mxu0
    %v2847 = vadd.f32 %v2750, %v2846
    %v2848 = vpop.f32.mrf.mxu0
    %v2849 = vadd.f32 %v2752, %v2848
    %2850 = vmatmul.bf16.gmra.mxu0 %v2579
    %v2851 = vpop.f32.mrf.mxu0
    %v2852 = vadd.f32 %v2755, %v2851
    %v2853 = vpop.f32.mrf.mxu0
    %v2854 = vadd.f32 %v2757, %v2853
    %2855 = vmatmul.bf16.gmra.mxu0 %v2580
    %v2856 = vpop.f32.mrf.mxu0
    %v2857 = vadd.f32 %v2760, %v2856
    %v2858 = vpop.f32.mrf.mxu0
    %v2859 = vadd.f32 %v2762, %v2858
    %2860 = vmatmul.bf16.gmra.mxu0 %v2581
    %v2861 = vpop.f32.mrf.mxu0
    %v2862 = vadd.f32 %v2765, %v2861
    %v2863 = vpop.f32.mrf.mxu0
    %v2864 = vadd.f32 %v2767, %v2863
    %2865 = vmatmul.bf16.gmra.mxu0 %v2582
    %v2866 = vpop.f32.mrf.mxu0
    %v2867 = vadd.f32 %v2770, %v2866
    %v2868 = vpop.f32.mrf.mxu0
    %v2869 = vadd.f32 %v2772, %v2868
    %2870 = vmatmul.bf16.gmra.mxu0 %v2583
    %v2871 = vpop.f32.mrf.mxu0
    %v2872 = vadd.f32 %v2775, %v2871
    %v2873 = vpop.f32.mrf.mxu0
    %v2874 = vadd.f32 %v2777, %v2873
    %2875 = vmatmul.bf16.gmra.mxu0 %v2584
    %v2876 = vpop.f32.mrf.mxu0
    %v2877 = vadd.f32 %v2780, %v2876
    %v2878 = vpop.f32.mrf.mxu0
    %v2879 = vadd.f32 %v2782, %v2878
    %2880 = vmatmul.bf16.gmra.mxu0 %v2585
    %v2881 = vpop.f32.mrf.mxu0
    %v2882 = vadd.f32 %v2785, %v2881
    %v2883 = vpop.f32.mrf.mxu0
    %v2884 = vadd.f32 %v2787, %v2883
    %2885 = vdwg.mxu0
    %v2886 = vrot.slane %v2496, 5
    %v2888 = vrot.slane %v2481, 5
    %v2889 = vrot.slane %v2482, 5
    %v2890 = vsel %vm787, %v2888, %v2889
    %v2891 = vrot.slane %v2483, 5
    %v2892 = vsel %vm787, %v2889, %v2891
    %v2893 = vrot.slane %v2484, 5
    %v2894 = vsel %vm787, %v2891, %v2893
    %v2895 = vrot.slane %v2485, 5
    %v2896 = vsel %vm787, %v2893, %v2895
    %v2897 = vrot.slane %v2486, 5
    %v2898 = vsel %vm787, %v2895, %v2897
    %v2899 = vrot.slane %v2487, 5
    %v2900 = vsel %vm787, %v2897, %v2899
    %v2901 = vrot.slane %v2488, 5
    %v2902 = vsel %vm787, %v2899, %v2901
    %v2903 = vrot.slane %v2489, 5
    %v2904 = vsel %vm787, %v2901, %v2903
    %v2905 = vrot.slane %v2490, 5
    %v2906 = vsel %vm787, %v2903, %v2905
    %v2907 = vrot.slane %v2491, 5
    %v2908 = vsel %vm787, %v2905, %v2907
    %v2909 = vrot.slane %v2492, 5
    %v2910 = vsel %vm787, %v2907, %v2909
    %v2911 = vrot.slane %v2493, 5
    %v2912 = vsel %vm787, %v2909, %v2911
    %v2913 = vrot.slane %v2494, 5
    %v2914 = vsel %vm787, %v2911, %v2913
    %v2915 = vrot.slane %v2495, 5
    %v2916 = vsel %vm787, %v2913, %v2915
    %v2917 = vsel %vm787, %v2915, %v2886
    %v2934 = vsel %vm787, %v2886, %v2888
    %v2935 = vmul.f32 %v2934, %v837
    %v2936 = vmul.f32 %v2890, %v841
    %v2937 = vmul.f32 %v2892, %v845
    %v2938 = vmul.f32 %v2894, %v849
    %v2939 = vmul.f32 %v2896, %v853
    %v2940 = vmul.f32 %v2898, %v857
    %v2941 = vmul.f32 %v2900, %v861
    %v2942 = vmul.f32 %v2902, %v865
    %v2943 = vmul.f32 %v2904, %v869
    %v2944 = vmul.f32 %v2906, %v873
    %v2945 = vmul.f32 %v2908, %v877
    %v2946 = vmul.f32 %v2910, %v881
    %v2947 = vmul.f32 %v2912, %v885
    %v2948 = vmul.f32 %v2914, %v889
    %v2949 = vmul.f32 %v2916, %v893
    %v2950 = vmul.f32 %v2917, %v897
    %v2951 = vpack.c.bf16 %v2936, %v2935
    %v2952 = vpack.c.bf16 %v2938, %v2937
    %v2953 = vpack.c.bf16 %v2940, %v2939
    %v2954 = vpack.c.bf16 %v2942, %v2941
    %v2955 = vpack.c.bf16 %v2944, %v2943
    %v2956 = vpack.c.bf16 %v2946, %v2945
    %v2957 = vpack.c.bf16 %v2948, %v2947
    %v2958 = vpack.c.bf16 %v2950, %v2949
    %s2959 = scalar_lea.vmem [#allocation7], 128
    %v2960 = vld [vmem:[%s2959] sm:$0xf]
    %v2961 = vld [vmem:[%s2959 + $0x4] sm:$0xf]
    %v2962 = vld [vmem:[%s2959 + $0x8] sm:$0xf]
    %v2963 = vld [vmem:[%s2959 + $0xc] sm:$0xf]
    %v2964 = vld [vmem:[%s2959 + $0x10] sm:$0xf]
    %v2965 = vld [vmem:[%s2959 + $0x14] sm:$0xf]
    %v2966 = vld [vmem:[%s2959 + $0x18] sm:$0xf]
    %v2967 = vld [vmem:[%s2959 + $0x1c] sm:$0xf]
    %v2968 = vld [vmem:[%s2959 + $0x20] sm:$0xf]
    %v2969 = vld [vmem:[%s2959 + $0x24] sm:$0xf]
    %v2970 = vld [vmem:[%s2959 + $0x28] sm:$0xf]
    %v2971 = vld [vmem:[%s2959 + $0x2c] sm:$0xf]
    %v2972 = vld [vmem:[%s2959 + $0x30] sm:$0xf]
    %v2973 = vld [vmem:[%s2959 + $0x34] sm:$0xf]
    %v2974 = vld [vmem:[%s2959 + $0x38] sm:$0xf]
    %v2975 = vld [vmem:[%s2959 + $0x3c] sm:$0xf]
    %v2992 = vunpack.c.l.b16 %v2960
    %v2993 = vunpack.c.l.b16 %v2961
    %v2994 = vunpack.c.l.b16 %v2962
    %v2995 = vunpack.c.l.b16 %v2963
    %v2996 = vunpack.c.l.b16 %v2964
    %v2997 = vunpack.c.l.b16 %v2965
    %v2998 = vunpack.c.l.b16 %v2966
    %v2999 = vunpack.c.l.b16 %v2967
    %v3000 = vunpack.c.l.b16 %v2968
    %v3001 = vunpack.c.l.b16 %v2969
    %v3002 = vunpack.c.l.b16 %v2970
    %v3003 = vunpack.c.l.b16 %v2971
    %v3004 = vunpack.c.l.b16 %v2972
    %v3005 = vunpack.c.l.b16 %v2973
    %v3006 = vunpack.c.l.b16 %v2974
    %v3007 = vunpack.c.l.b16 %v2975
    %v3008 = vpack.c.b16 %v2993, %v2992
    %v3009 = vpack.c.b16 %v2995, %v2994
    %v3010 = vpack.c.b16 %v2997, %v2996
    %v3011 = vpack.c.b16 %v2999, %v2998
    %v3012 = vpack.c.b16 %v3001, %v3000
    %v3013 = vpack.c.b16 %v3003, %v3002
    %v3014 = vpack.c.b16 %v3005, %v3004
    %v3015 = vpack.c.b16 %v3007, %v3006
    %3024 = vmatpush.bf16.msra.mxu0 %v3015
    %3025 = vmatpush.bf16.msra.mxu0 %v3014
    %3026 = vmatpush.bf16.msra.mxu0 %v3013
    %3027 = vmatpush.bf16.msra.mxu0 %v3012
    %3028 = vmatpush.bf16.msra.mxu0 %v3011
    %3029 = vmatpush.bf16.msra.mxu0 %v3010
    %3030 = vmatpush.bf16.msra.mxu0 %v3009
    %3031 = vmatpush.bf16.msra.mxu0 %v3008
    %3032 = vmatmul.bf16.gmra.mxu0 %v2951
    %v3033 = vpop.f32.mrf.mxu0
    %v3034 = vadd.f32 0.0, %v3033
    %v3035 = vpop.f32.mrf.mxu0
    %v3036 = vadd.f32 0.0, %v3035
    %3037 = vmatmul.bf16.gmra.mxu0 %v2952
    %v3038 = vpop.f32.mrf.mxu0
    %v3039 = vadd.f32 0.0, %v3038
    %v3040 = vpop.f32.mrf.mxu0
    %v3041 = vadd.f32 0.0, %v3040
    %3042 = vmatmul.bf16.gmra.mxu0 %v2953
    %v3043 = vpop.f32.mrf.mxu0
    %v3044 = vadd.f32 0.0, %v3043
    %v3045 = vpop.f32.mrf.mxu0
    %v3046 = vadd.f32 0.0, %v3045
    %3047 = vmatmul.bf16.gmra.mxu0 %v2954
    %v3048 = vpop.f32.mrf.mxu0
    %v3049 = vadd.f32 0.0, %v3048
    %v3050 = vpop.f32.mrf.mxu0
    %v3051 = vadd.f32 0.0, %v3050
    %3052 = vmatmul.bf16.gmra.mxu0 %v2955
    %v3053 = vpop.f32.mrf.mxu0
    %v3054 = vadd.f32 0.0, %v3053
    %v3055 = vpop.f32.mrf.mxu0
    %v3056 = vadd.f32 0.0, %v3055
    %3057 = vmatmul.bf16.gmra.mxu0 %v2956
    %v3058 = vpop.f32.mrf.mxu0
    %v3059 = vadd.f32 0.0, %v3058
    %v3060 = vpop.f32.mrf.mxu0
    %v3061 = vadd.f32 0.0, %v3060
    %3062 = vmatmul.bf16.gmra.mxu0 %v2957
    %v3063 = vpop.f32.mrf.mxu0
    %v3064 = vadd.f32 0.0, %v3063
    %v3065 = vpop.f32.mrf.mxu0
    %v3066 = vadd.f32 0.0, %v3065
    %3067 = vmatmul.bf16.gmra.mxu0 %v2958
    %v3068 = vpop.f32.mrf.mxu0
    %v3069 = vadd.f32 0.0, %v3068
    %v3070 = vpop.f32.mrf.mxu0
    %v3071 = vadd.f32 0.0, %v3070
    %3072 = vdwg.mxu0
    %v3073 = vadd.f32 %v2847, %v3034
    %v3074 = vadd.f32 %v2849, %v3036
    %v3075 = vadd.f32 %v2852, %v3039
    %v3076 = vadd.f32 %v2854, %v3041
    %v3077 = vadd.f32 %v2857, %v3044
    %v3078 = vadd.f32 %v2859, %v3046
    %v3079 = vadd.f32 %v2862, %v3049
    %v3080 = vadd.f32 %v2864, %v3051
    %v3081 = vadd.f32 %v2867, %v3054
    %v3082 = vadd.f32 %v2869, %v3056
    %v3083 = vadd.f32 %v2872, %v3059
    %v3084 = vadd.f32 %v2874, %v3061
    %v3085 = vadd.f32 %v2877, %v3064
    %v3086 = vadd.f32 %v2879, %v3066
    %v3087 = vadd.f32 %v2882, %v3069
    %v3088 = vadd.f32 %v2884, %v3071
    %v3089 = vrot.slane %v2496, 7
    %v3091 = vrot.slane %v2481, 7
    %v3092 = vrot.slane %v2482, 7
    %v3093 = vsel %vm1055, %v3091, %v3092
    %v3094 = vrot.slane %v2483, 7
    %v3095 = vsel %vm1055, %v3092, %v3094
    %v3096 = vrot.slane %v2484, 7
    %v3097 = vsel %vm1055, %v3094, %v3096
    %v3098 = vrot.slane %v2485, 7
    %v3099 = vsel %vm1055, %v3096, %v3098
    %v3100 = vrot.slane %v2486, 7
    %v3101 = vsel %vm1055, %v3098, %v3100
    %v3102 = vrot.slane %v2487, 7
    %v3103 = vsel %vm1055, %v3100, %v3102
    %v3104 = vrot.slane %v2488, 7
    %v3105 = vsel %vm1055, %v3102, %v3104
    %v3106 = vrot.slane %v2489, 7
    %v3107 = vsel %vm1055, %v3104, %v3106
    %v3108 = vrot.slane %v2490, 7
    %v3109 = vsel %vm1055, %v3106, %v3108
    %v3110 = vrot.slane %v2491, 7
    %v3111 = vsel %vm1055, %v3108, %v3110
    %v3112 = vrot.slane %v2492, 7
    %v3113 = vsel %vm1055, %v3110, %v3112
    %v3114 = vrot.slane %v2493, 7
    %v3115 = vsel %vm1055, %v3112, %v3114
    %v3116 = vrot.slane %v2494, 7
    %v3117 = vsel %vm1055, %v3114, %v3116
    %v3118 = vrot.slane %v2495, 7
    %v3119 = vsel %vm1055, %v3116, %v3118
    %v3120 = vsel %vm1055, %v3118, %v3089
    %v3137 = vsel %vm1055, %v3089, %v3091
    %v3138 = vmul.f32 %v3137, %v1105
    %v3139 = vmul.f32 %v3093, %v1109
    %v3140 = vmul.f32 %v3095, %v1113
    %v3141 = vmul.f32 %v3097, %v1117
    %v3142 = vmul.f32 %v3099, %v1121
    %v3143 = vmul.f32 %v3101, %v1125
    %v3144 = vmul.f32 %v3103, %v1129
    %v3145 = vmul.f32 %v3105, %v1133
    %v3146 = vmul.f32 %v3107, %v1137
    %v3147 = vmul.f32 %v3109, %v1141
    %v3148 = vmul.f32 %v3111, %v1145
    %v3149 = vmul.f32 %v3113, %v1149
    %v3150 = vmul.f32 %v3115, %v1153
    %v3151 = vmul.f32 %v3117, %v1157
    %v3152 = vmul.f32 %v3119, %v1161
    %v3153 = vmul.f32 %v3120, %v1165
    %v3154 = vpack.c.bf16 %v3139, %v3138
    %v3155 = vpack.c.bf16 %v3141, %v3140
    %v3156 = vpack.c.bf16 %v3143, %v3142
    %v3157 = vpack.c.bf16 %v3145, %v3144
    %v3158 = vpack.c.bf16 %v3147, %v3146
    %v3159 = vpack.c.bf16 %v3149, %v3148
    %v3160 = vpack.c.bf16 %v3151, %v3150
    %v3161 = vpack.c.bf16 %v3153, %v3152
    %s3162 = scalar_lea.vmem [#allocation7], 192
    %v3163 = vld [vmem:[%s3162] sm:$0xf]
    %v3164 = vld [vmem:[%s3162 + $0x4] sm:$0xf]
    %v3165 = vld [vmem:[%s3162 + $0x8] sm:$0xf]
    %v3166 = vld [vmem:[%s3162 + $0xc] sm:$0xf]
    %v3167 = vld [vmem:[%s3162 + $0x10] sm:$0xf]
    %v3168 = vld [vmem:[%s3162 + $0x14] sm:$0xf]
    %v3169 = vld [vmem:[%s3162 + $0x18] sm:$0xf]
    %v3170 = vld [vmem:[%s3162 + $0x1c] sm:$0xf]
    %v3171 = vld [vmem:[%s3162 + $0x20] sm:$0xf]
    %v3172 = vld [vmem:[%s3162 + $0x24] sm:$0xf]
    %v3173 = vld [vmem:[%s3162 + $0x28] sm:$0xf]
    %v3174 = vld [vmem:[%s3162 + $0x2c] sm:$0xf]
    %v3175 = vld [vmem:[%s3162 + $0x30] sm:$0xf]
    %v3176 = vld [vmem:[%s3162 + $0x34] sm:$0xf]
    %v3177 = vld [vmem:[%s3162 + $0x38] sm:$0xf]
    %v3178 = vld [vmem:[%s3162 + $0x3c] sm:$0xf]
    %v3195 = vunpack.c.l.b16 %v3163
    %v3196 = vunpack.c.l.b16 %v3164
    %v3197 = vunpack.c.l.b16 %v3165
    %v3198 = vunpack.c.l.b16 %v3166
    %v3199 = vunpack.c.l.b16 %v3167
    %v3200 = vunpack.c.l.b16 %v3168
    %v3201 = vunpack.c.l.b16 %v3169
    %v3202 = vunpack.c.l.b16 %v3170
    %v3203 = vunpack.c.l.b16 %v3171
    %v3204 = vunpack.c.l.b16 %v3172
    %v3205 = vunpack.c.l.b16 %v3173
    %v3206 = vunpack.c.l.b16 %v3174
    %v3207 = vunpack.c.l.b16 %v3175
    %v3208 = vunpack.c.l.b16 %v3176
    %v3209 = vunpack.c.l.b16 %v3177
    %v3210 = vunpack.c.l.b16 %v3178
    %v3211 = vpack.c.b16 %v3196, %v3195
    %v3212 = vpack.c.b16 %v3198, %v3197
    %v3213 = vpack.c.b16 %v3200, %v3199
    %v3214 = vpack.c.b16 %v3202, %v3201
    %v3215 = vpack.c.b16 %v3204, %v3203
    %v3216 = vpack.c.b16 %v3206, %v3205
    %v3217 = vpack.c.b16 %v3208, %v3207
    %v3218 = vpack.c.b16 %v3210, %v3209
    %3227 = vmatpush.bf16.msra.mxu0 %v3218
    %3228 = vmatpush.bf16.msra.mxu0 %v3217
    %3229 = vmatpush.bf16.msra.mxu0 %v3216
    %3230 = vmatpush.bf16.msra.mxu0 %v3215
    %3231 = vmatpush.bf16.msra.mxu0 %v3214
    %3232 = vmatpush.bf16.msra.mxu0 %v3213
    %3233 = vmatpush.bf16.msra.mxu0 %v3212
    %3234 = vmatpush.bf16.msra.mxu0 %v3211
    %3235 = vmatmul.bf16.gmra.mxu0 %v3154
    %v3236 = vpop.f32.mrf.mxu0
    %v3237 = vadd.f32 0.0, %v3236
    %v3238 = vpop.f32.mrf.mxu0
    %v3239 = vadd.f32 0.0, %v3238
    %3240 = vmatmul.bf16.gmra.mxu0 %v3155
    %v3241 = vpop.f32.mrf.mxu0
    %v3242 = vadd.f32 0.0, %v3241
    %v3243 = vpop.f32.mrf.mxu0
    %v3244 = vadd.f32 0.0, %v3243
    %3245 = vmatmul.bf16.gmra.mxu0 %v3156
    %v3246 = vpop.f32.mrf.mxu0
    %v3247 = vadd.f32 0.0, %v3246
    %v3248 = vpop.f32.mrf.mxu0
    %v3249 = vadd.f32 0.0, %v3248
    %3250 = vmatmul.bf16.gmra.mxu0 %v3157
    %v3251 = vpop.f32.mrf.mxu0
    %v3252 = vadd.f32 0.0, %v3251
    %v3253 = vpop.f32.mrf.mxu0
    %v3254 = vadd.f32 0.0, %v3253
    %3255 = vmatmul.bf16.gmra.mxu0 %v3158
    %v3256 = vpop.f32.mrf.mxu0
    %v3257 = vadd.f32 0.0, %v3256
    %v3258 = vpop.f32.mrf.mxu0
    %v3259 = vadd.f32 0.0, %v3258
    %3260 = vmatmul.bf16.gmra.mxu0 %v3159
    %v3261 = vpop.f32.mrf.mxu0
    %v3262 = vadd.f32 0.0, %v3261
    %v3263 = vpop.f32.mrf.mxu0
    %v3264 = vadd.f32 0.0, %v3263
    %3265 = vmatmul.bf16.gmra.mxu0 %v3160
    %v3266 = vpop.f32.mrf.mxu0
    %v3267 = vadd.f32 0.0, %v3266
    %v3268 = vpop.f32.mrf.mxu0
    %v3269 = vadd.f32 0.0, %v3268
    %3270 = vmatmul.bf16.gmra.mxu0 %v3161
    %v3271 = vpop.f32.mrf.mxu0
    %v3272 = vadd.f32 0.0, %v3271
    %v3273 = vpop.f32.mrf.mxu0
    %v3274 = vadd.f32 0.0, %v3273
    %3275 = vdwg.mxu0
    %v3276 = vadd.f32 %v3073, %v3237
    %v3277 = vadd.f32 %v3074, %v3239
    %v3278 = vadd.f32 %v3075, %v3242
    %v3279 = vadd.f32 %v3076, %v3244
    %v3280 = vadd.f32 %v3077, %v3247
    %v3281 = vadd.f32 %v3078, %v3249
    %v3282 = vadd.f32 %v3079, %v3252
    %v3283 = vadd.f32 %v3080, %v3254
    %v3284 = vadd.f32 %v3081, %v3257
    %v3285 = vadd.f32 %v3082, %v3259
    %v3286 = vadd.f32 %v3083, %v3262
    %v3287 = vadd.f32 %v3084, %v3264
    %v3288 = vadd.f32 %v3085, %v3267
    %v3289 = vadd.f32 %v3086, %v3269
    %v3290 = vadd.f32 %v3087, %v3272
    %v3291 = vadd.f32 %v3088, %v3274
    %v3292 = vmul.f32 %v2481, %v1323
    %v3293 = vmul.f32 %v2482, %v1327
    %v3294 = vmul.f32 %v2483, %v1331
    %v3295 = vmul.f32 %v2484, %v1335
    %v3296 = vmul.f32 %v2485, %v1339
    %v3297 = vmul.f32 %v2486, %v1343
    %v3298 = vmul.f32 %v2487, %v1347
    %v3299 = vmul.f32 %v2488, %v1351
    %v3300 = vmul.f32 %v2489, %v1355
    %v3301 = vmul.f32 %v2490, %v1359
    %v3302 = vmul.f32 %v2491, %v1363
    %v3303 = vmul.f32 %v2492, %v1367
    %v3304 = vmul.f32 %v2493, %v1371
    %v3305 = vmul.f32 %v2494, %v1375
    %v3306 = vmul.f32 %v2495, %v1379
    %v3307 = vmul.f32 %v2496, %v1383
    %v3308 = vpack.c.bf16 %v3293, %v3292
    %v3309 = vpack.c.bf16 %v3295, %v3294
    %v3310 = vpack.c.bf16 %v3297, %v3296
    %v3311 = vpack.c.bf16 %v3299, %v3298
    %v3312 = vpack.c.bf16 %v3301, %v3300
    %v3313 = vpack.c.bf16 %v3303, %v3302
    %v3314 = vpack.c.bf16 %v3305, %v3304
    %v3315 = vpack.c.bf16 %v3307, %v3306
    %s3316 = scalar_lea.vmem [#allocation7], 256
    %v3317 = vld [vmem:[%s3316] sm:$0xf]
    %v3318 = vld [vmem:[%s3316 + $0x4] sm:$0xf]
    %v3319 = vld [vmem:[%s3316 + $0x8] sm:$0xf]
    %v3320 = vld [vmem:[%s3316 + $0xc] sm:$0xf]
    %v3321 = vld [vmem:[%s3316 + $0x10] sm:$0xf]
    %v3322 = vld [vmem:[%s3316 + $0x14] sm:$0xf]
    %v3323 = vld [vmem:[%s3316 + $0x18] sm:$0xf]
    %v3324 = vld [vmem:[%s3316 + $0x1c] sm:$0xf]
    %v3325 = vld [vmem:[%s3316 + $0x20] sm:$0xf]
    %v3326 = vld [vmem:[%s3316 + $0x24] sm:$0xf]
    %v3327 = vld [vmem:[%s3316 + $0x28] sm:$0xf]
    %v3328 = vld [vmem:[%s3316 + $0x2c] sm:$0xf]
    %v3329 = vld [vmem:[%s3316 + $0x30] sm:$0xf]
    %v3330 = vld [vmem:[%s3316 + $0x34] sm:$0xf]
    %v3331 = vld [vmem:[%s3316 + $0x38] sm:$0xf]
    %v3332 = vld [vmem:[%s3316 + $0x3c] sm:$0xf]
    %v3349 = vunpack.c.l.b16 %v3317
    %v3350 = vunpack.c.l.b16 %v3318
    %v3351 = vunpack.c.l.b16 %v3319
    %v3352 = vunpack.c.l.b16 %v3320
    %v3353 = vunpack.c.l.b16 %v3321
    %v3354 = vunpack.c.l.b16 %v3322
    %v3355 = vunpack.c.l.b16 %v3323
    %v3356 = vunpack.c.l.b16 %v3324
    %v3357 = vunpack.c.l.b16 %v3325
    %v3358 = vunpack.c.l.b16 %v3326
    %v3359 = vunpack.c.l.b16 %v3327
    %v3360 = vunpack.c.l.b16 %v3328
    %v3361 = vunpack.c.l.b16 %v3329
    %v3362 = vunpack.c.l.b16 %v3330
    %v3363 = vunpack.c.l.b16 %v3331
    %v3364 = vunpack.c.l.b16 %v3332
    %v3365 = vpack.c.b16 %v3350, %v3349
    %v3366 = vpack.c.b16 %v3352, %v3351
    %v3367 = vpack.c.b16 %v3354, %v3353
    %v3368 = vpack.c.b16 %v3356, %v3355
    %v3369 = vpack.c.b16 %v3358, %v3357
    %v3370 = vpack.c.b16 %v3360, %v3359
    %v3371 = vpack.c.b16 %v3362, %v3361
    %v3372 = vpack.c.b16 %v3364, %v3363
    %3381 = vmatpush.bf16.msra.mxu0 %v3372
    %3382 = vmatpush.bf16.msra.mxu0 %v3371
    %3383 = vmatpush.bf16.msra.mxu0 %v3370
    %3384 = vmatpush.bf16.msra.mxu0 %v3369
    %3385 = vmatpush.bf16.msra.mxu0 %v3368
    %3386 = vmatpush.bf16.msra.mxu0 %v3367
    %3387 = vmatpush.bf16.msra.mxu0 %v3366
    %3388 = vmatpush.bf16.msra.mxu0 %v3365
    %3389 = vmatmul.bf16.gmra.mxu0 %v3308
    %v3390 = vpop.f32.mrf.mxu0
    %v3391 = vadd.f32 0.0, %v3390
    %v3392 = vpop.f32.mrf.mxu0
    %v3393 = vadd.f32 0.0, %v3392
    %3394 = vmatmul.bf16.gmra.mxu0 %v3309
    %v3395 = vpop.f32.mrf.mxu0
    %v3396 = vadd.f32 0.0, %v3395
    %v3397 = vpop.f32.mrf.mxu0
    %v3398 = vadd.f32 0.0, %v3397
    %3399 = vmatmul.bf16.gmra.mxu0 %v3310
    %v3400 = vpop.f32.mrf.mxu0
    %v3401 = vadd.f32 0.0, %v3400
    %v3402 = vpop.f32.mrf.mxu0
    %v3403 = vadd.f32 0.0, %v3402
    %3404 = vmatmul.bf16.gmra.mxu0 %v3311
    %v3405 = vpop.f32.mrf.mxu0
    %v3406 = vadd.f32 0.0, %v3405
    %v3407 = vpop.f32.mrf.mxu0
    %v3408 = vadd.f32 0.0, %v3407
    %3409 = vmatmul.bf16.gmra.mxu0 %v3312
    %v3410 = vpop.f32.mrf.mxu0
    %v3411 = vadd.f32 0.0, %v3410
    %v3412 = vpop.f32.mrf.mxu0
    %v3413 = vadd.f32 0.0, %v3412
    %3414 = vmatmul.bf16.gmra.mxu0 %v3313
    %v3415 = vpop.f32.mrf.mxu0
    %v3416 = vadd.f32 0.0, %v3415
    %v3417 = vpop.f32.mrf.mxu0
    %v3418 = vadd.f32 0.0, %v3417
    %3419 = vmatmul.bf16.gmra.mxu0 %v3314
    %v3420 = vpop.f32.mrf.mxu0
    %v3421 = vadd.f32 0.0, %v3420
    %v3422 = vpop.f32.mrf.mxu0
    %v3423 = vadd.f32 0.0, %v3422
    %3424 = vmatmul.bf16.gmra.mxu0 %v3315
    %v3425 = vpop.f32.mrf.mxu0
    %v3426 = vadd.f32 0.0, %v3425
    %v3427 = vpop.f32.mrf.mxu0
    %v3428 = vadd.f32 0.0, %v3427
    %3429 = vdwg.mxu0
    %v3430 = vadd.f32 %v3276, %v3391
    %v3431 = vadd.f32 %v3277, %v3393
    %v3432 = vadd.f32 %v3278, %v3396
    %v3433 = vadd.f32 %v3279, %v3398
    %v3434 = vadd.f32 %v3280, %v3401
    %v3435 = vadd.f32 %v3281, %v3403
    %v3436 = vadd.f32 %v3282, %v3406
    %v3437 = vadd.f32 %v3283, %v3408
    %v3438 = vadd.f32 %v3284, %v3411
    %v3439 = vadd.f32 %v3285, %v3413
    %v3440 = vadd.f32 %v3286, %v3416
    %v3441 = vadd.f32 %v3287, %v3418
    %v3442 = vadd.f32 %v3288, %v3421
    %v3443 = vadd.f32 %v3289, %v3423
    %v3444 = vadd.f32 %v3290, %v3426
    %v3445 = vadd.f32 %v3291, %v3428
    %v3446 = vrot.slane %v2481, 1
    %v3447 = vrot.slane %v2482, 1
    %v3448 = vsel %vm1539, %v3446, %v3447
    %v3449 = vrot.slane %v2483, 1
    %v3450 = vsel %vm1539, %v3447, %v3449
    %v3451 = vrot.slane %v2484, 1
    %v3452 = vsel %vm1539, %v3449, %v3451
    %v3453 = vrot.slane %v2485, 1
    %v3454 = vsel %vm1539, %v3451, %v3453
    %v3455 = vrot.slane %v2486, 1
    %v3456 = vsel %vm1539, %v3453, %v3455
    %v3457 = vrot.slane %v2487, 1
    %v3458 = vsel %vm1539, %v3455, %v3457
    %v3459 = vrot.slane %v2488, 1
    %v3460 = vsel %vm1539, %v3457, %v3459
    %v3461 = vrot.slane %v2489, 1
    %v3462 = vsel %vm1539, %v3459, %v3461
    %v3463 = vrot.slane %v2490, 1
    %v3464 = vsel %vm1539, %v3461, %v3463
    %v3465 = vrot.slane %v2491, 1
    %v3466 = vsel %vm1539, %v3463, %v3465
    %v3467 = vrot.slane %v2492, 1
    %v3468 = vsel %vm1539, %v3465, %v3467
    %v3469 = vrot.slane %v2493, 1
    %v3470 = vsel %vm1539, %v3467, %v3469
    %v3471 = vrot.slane %v2494, 1
    %v3472 = vsel %vm1539, %v3469, %v3471
    %v3473 = vrot.slane %v2495, 1
    %v3474 = vsel %vm1539, %v3471, %v3473
    %v3475 = vrot.slane %v2496, 1
    %v3476 = vsel %vm1539, %v3473, %v3475
    %v3494 = vsel %vm1539, %v3475, %v3446
    %v3495 = vmul.f32 %v3448, %v1591
    %v3496 = vmul.f32 %v3450, %v1595
    %v3497 = vmul.f32 %v3452, %v1599
    %v3498 = vmul.f32 %v3454, %v1603
    %v3499 = vmul.f32 %v3456, %v1607
    %v3500 = vmul.f32 %v3458, %v1611
    %v3501 = vmul.f32 %v3460, %v1615
    %v3502 = vmul.f32 %v3462, %v1619
    %v3503 = vmul.f32 %v3464, %v1623
    %v3504 = vmul.f32 %v3466, %v1627
    %v3505 = vmul.f32 %v3468, %v1631
    %v3506 = vmul.f32 %v3470, %v1635
    %v3507 = vmul.f32 %v3472, %v1639
    %v3508 = vmul.f32 %v3474, %v1643
    %v3509 = vmul.f32 %v3476, %v1647
    %v3510 = vmul.f32 %v3494, %v1651
    %v3511 = vpack.c.bf16 %v3496, %v3495
    %v3512 = vpack.c.bf16 %v3498, %v3497
    %v3513 = vpack.c.bf16 %v3500, %v3499
    %v3514 = vpack.c.bf16 %v3502, %v3501
    %v3515 = vpack.c.bf16 %v3504, %v3503
    %v3516 = vpack.c.bf16 %v3506, %v3505
    %v3517 = vpack.c.bf16 %v3508, %v3507
    %v3518 = vpack.c.bf16 %v3510, %v3509
    %s3519 = scalar_lea.vmem [#allocation7], 320
    %v3520 = vld [vmem:[%s3519] sm:$0xf]
    %v3521 = vld [vmem:[%s3519 + $0x4] sm:$0xf]
    %v3522 = vld [vmem:[%s3519 + $0x8] sm:$0xf]
    %v3523 = vld [vmem:[%s3519 + $0xc] sm:$0xf]
    %v3524 = vld [vmem:[%s3519 + $0x10] sm:$0xf]
    %v3525 = vld [vmem:[%s3519 + $0x14] sm:$0xf]
    %v3526 = vld [vmem:[%s3519 + $0x18] sm:$0xf]
    %v3527 = vld [vmem:[%s3519 + $0x1c] sm:$0xf]
    %v3528 = vld [vmem:[%s3519 + $0x20] sm:$0xf]
    %v3529 = vld [vmem:[%s3519 + $0x24] sm:$0xf]
    %v3530 = vld [vmem:[%s3519 + $0x28] sm:$0xf]
    %v3531 = vld [vmem:[%s3519 + $0x2c] sm:$0xf]
    %v3532 = vld [vmem:[%s3519 + $0x30] sm:$0xf]
    %v3533 = vld [vmem:[%s3519 + $0x34] sm:$0xf]
    %v3534 = vld [vmem:[%s3519 + $0x38] sm:$0xf]
    %v3535 = vld [vmem:[%s3519 + $0x3c] sm:$0xf]
    %v3552 = vunpack.c.l.b16 %v3520
    %v3553 = vunpack.c.l.b16 %v3521
    %v3554 = vunpack.c.l.b16 %v3522
    %v3555 = vunpack.c.l.b16 %v3523
    %v3556 = vunpack.c.l.b16 %v3524
    %v3557 = vunpack.c.l.b16 %v3525
    %v3558 = vunpack.c.l.b16 %v3526
    %v3559 = vunpack.c.l.b16 %v3527
    %v3560 = vunpack.c.l.b16 %v3528
    %v3561 = vunpack.c.l.b16 %v3529
    %v3562 = vunpack.c.l.b16 %v3530
    %v3563 = vunpack.c.l.b16 %v3531
    %v3564 = vunpack.c.l.b16 %v3532
    %v3565 = vunpack.c.l.b16 %v3533
    %v3566 = vunpack.c.l.b16 %v3534
    %v3567 = vunpack.c.l.b16 %v3535
    %v3568 = vpack.c.b16 %v3553, %v3552
    %v3569 = vpack.c.b16 %v3555, %v3554
    %v3570 = vpack.c.b16 %v3557, %v3556
    %v3571 = vpack.c.b16 %v3559, %v3558
    %v3572 = vpack.c.b16 %v3561, %v3560
    %v3573 = vpack.c.b16 %v3563, %v3562
    %v3574 = vpack.c.b16 %v3565, %v3564
    %v3575 = vpack.c.b16 %v3567, %v3566
    %3584 = vmatpush.bf16.msra.mxu0 %v3575
    %3585 = vmatpush.bf16.msra.mxu0 %v3574
    %3586 = vmatpush.bf16.msra.mxu0 %v3573
    %3587 = vmatpush.bf16.msra.mxu0 %v3572
    %3588 = vmatpush.bf16.msra.mxu0 %v3571
    %3589 = vmatpush.bf16.msra.mxu0 %v3570
    %3590 = vmatpush.bf16.msra.mxu0 %v3569
    %3591 = vmatpush.bf16.msra.mxu0 %v3568
    %3592 = vmatmul.bf16.gmra.mxu0 %v3511
    %v3593 = vpop.f32.mrf.mxu0
    %v3594 = vadd.f32 0.0, %v3593
    %v3595 = vpop.f32.mrf.mxu0
    %v3596 = vadd.f32 0.0, %v3595
    %3597 = vmatmul.bf16.gmra.mxu0 %v3512
    %v3598 = vpop.f32.mrf.mxu0
    %v3599 = vadd.f32 0.0, %v3598
    %v3600 = vpop.f32.mrf.mxu0
    %v3601 = vadd.f32 0.0, %v3600
    %3602 = vmatmul.bf16.gmra.mxu0 %v3513
    %v3603 = vpop.f32.mrf.mxu0
    %v3604 = vadd.f32 0.0, %v3603
    %v3605 = vpop.f32.mrf.mxu0
    %v3606 = vadd.f32 0.0, %v3605
    %3607 = vmatmul.bf16.gmra.mxu0 %v3514
    %v3608 = vpop.f32.mrf.mxu0
    %v3609 = vadd.f32 0.0, %v3608
    %v3610 = vpop.f32.mrf.mxu0
    %v3611 = vadd.f32 0.0, %v3610
    %3612 = vmatmul.bf16.gmra.mxu0 %v3515
    %v3613 = vpop.f32.mrf.mxu0
    %v3614 = vadd.f32 0.0, %v3613
    %v3615 = vpop.f32.mrf.mxu0
    %v3616 = vadd.f32 0.0, %v3615
    %3617 = vmatmul.bf16.gmra.mxu0 %v3516
    %v3618 = vpop.f32.mrf.mxu0
    %v3619 = vadd.f32 0.0, %v3618
    %v3620 = vpop.f32.mrf.mxu0
    %v3621 = vadd.f32 0.0, %v3620
    %3622 = vmatmul.bf16.gmra.mxu0 %v3517
    %v3623 = vpop.f32.mrf.mxu0
    %v3624 = vadd.f32 0.0, %v3623
    %v3625 = vpop.f32.mrf.mxu0
    %v3626 = vadd.f32 0.0, %v3625
    %3627 = vmatmul.bf16.gmra.mxu0 %v3518
    %v3628 = vpop.f32.mrf.mxu0
    %v3629 = vadd.f32 0.0, %v3628
    %v3630 = vpop.f32.mrf.mxu0
    %v3631 = vadd.f32 0.0, %v3630
    %3632 = vdwg.mxu0
    %v3633 = vadd.f32 %v3430, %v3594
    %v3634 = vadd.f32 %v3431, %v3596
    %v3635 = vadd.f32 %v3432, %v3599
    %v3636 = vadd.f32 %v3433, %v3601
    %v3637 = vadd.f32 %v3434, %v3604
    %v3638 = vadd.f32 %v3435, %v3606
    %v3639 = vadd.f32 %v3436, %v3609
    %v3640 = vadd.f32 %v3437, %v3611
    %v3641 = vadd.f32 %v3438, %v3614
    %v3642 = vadd.f32 %v3439, %v3616
    %v3643 = vadd.f32 %v3440, %v3619
    %v3644 = vadd.f32 %v3441, %v3621
    %v3645 = vadd.f32 %v3442, %v3624
    %v3646 = vadd.f32 %v3443, %v3626
    %v3647 = vadd.f32 %v3444, %v3629
    %v3648 = vadd.f32 %v3445, %v3631
    %v3649 = vmul.f32 %v2517, %v1809
    %v3650 = vmul.f32 %v2519, %v1813
    %v3651 = vmul.f32 %v2521, %v1817
    %v3652 = vmul.f32 %v2523, %v1821
    %v3653 = vmul.f32 %v2525, %v1825
    %v3654 = vmul.f32 %v2527, %v1829
    %v3655 = vmul.f32 %v2529, %v1833
    %v3656 = vmul.f32 %v2531, %v1837
    %v3657 = vmul.f32 %v2533, %v1841
    %v3658 = vmul.f32 %v2535, %v1845
    %v3659 = vmul.f32 %v2537, %v1849
    %v3660 = vmul.f32 %v2539, %v1853
    %v3661 = vmul.f32 %v2541, %v1857
    %v3662 = vmul.f32 %v2543, %v1861
    %v3663 = vmul.f32 %v2544, %v1865
    %v3664 = vmul.f32 %v2561, %v1869
    %v3665 = vpack.c.bf16 %v3650, %v3649
    %v3666 = vpack.c.bf16 %v3652, %v3651
    %v3667 = vpack.c.bf16 %v3654, %v3653
    %v3668 = vpack.c.bf16 %v3656, %v3655
    %v3669 = vpack.c.bf16 %v3658, %v3657
    %v3670 = vpack.c.bf16 %v3660, %v3659
    %v3671 = vpack.c.bf16 %v3662, %v3661
    %v3672 = vpack.c.bf16 %v3664, %v3663
    %s3673 = scalar_lea.vmem [#allocation7], 384
    %v3674 = vld [vmem:[%s3673] sm:$0xf]
    %v3675 = vld [vmem:[%s3673 + $0x4] sm:$0xf]
    %v3676 = vld [vmem:[%s3673 + $0x8] sm:$0xf]
    %v3677 = vld [vmem:[%s3673 + $0xc] sm:$0xf]
    %v3678 = vld [vmem:[%s3673 + $0x10] sm:$0xf]
    %v3679 = vld [vmem:[%s3673 + $0x14] sm:$0xf]
    %v3680 = vld [vmem:[%s3673 + $0x18] sm:$0xf]
    %v3681 = vld [vmem:[%s3673 + $0x1c] sm:$0xf]
    %v3682 = vld [vmem:[%s3673 + $0x20] sm:$0xf]
    %v3683 = vld [vmem:[%s3673 + $0x24] sm:$0xf]
    %v3684 = vld [vmem:[%s3673 + $0x28] sm:$0xf]
    %v3685 = vld [vmem:[%s3673 + $0x2c] sm:$0xf]
    %v3686 = vld [vmem:[%s3673 + $0x30] sm:$0xf]
    %v3687 = vld [vmem:[%s3673 + $0x34] sm:$0xf]
    %v3688 = vld [vmem:[%s3673 + $0x38] sm:$0xf]
    %v3689 = vld [vmem:[%s3673 + $0x3c] sm:$0xf]
    %v3706 = vunpack.c.l.b16 %v3674
    %v3707 = vunpack.c.l.b16 %v3675
    %v3708 = vunpack.c.l.b16 %v3676
    %v3709 = vunpack.c.l.b16 %v3677
    %v3710 = vunpack.c.l.b16 %v3678
    %v3711 = vunpack.c.l.b16 %v3679
    %v3712 = vunpack.c.l.b16 %v3680
    %v3713 = vunpack.c.l.b16 %v3681
    %v3714 = vunpack.c.l.b16 %v3682
    %v3715 = vunpack.c.l.b16 %v3683
    %v3716 = vunpack.c.l.b16 %v3684
    %v3717 = vunpack.c.l.b16 %v3685
    %v3718 = vunpack.c.l.b16 %v3686
    %v3719 = vunpack.c.l.b16 %v3687
    %v3720 = vunpack.c.l.b16 %v3688
    %v3721 = vunpack.c.l.b16 %v3689
    %v3722 = vpack.c.b16 %v3707, %v3706
    %v3723 = vpack.c.b16 %v3709, %v3708
    %v3724 = vpack.c.b16 %v3711, %v3710
    %v3725 = vpack.c.b16 %v3713, %v3712
    %v3726 = vpack.c.b16 %v3715, %v3714
    %v3727 = vpack.c.b16 %v3717, %v3716
    %v3728 = vpack.c.b16 %v3719, %v3718
    %v3729 = vpack.c.b16 %v3721, %v3720
    %3738 = vmatpush.bf16.msra.mxu0 %v3729
    %3739 = vmatpush.bf16.msra.mxu0 %v3728
    %3740 = vmatpush.bf16.msra.mxu0 %v3727
    %3741 = vmatpush.bf16.msra.mxu0 %v3726
    %3742 = vmatpush.bf16.msra.mxu0 %v3725
    %3743 = vmatpush.bf16.msra.mxu0 %v3724
    %3744 = vmatpush.bf16.msra.mxu0 %v3723
    %3745 = vmatpush.bf16.msra.mxu0 %v3722
    %3746 = vmatmul.bf16.gmra.mxu0 %v3665
    %v3747 = vpop.f32.mrf.mxu0
    %v3748 = vadd.f32 0.0, %v3747
    %v3749 = vpop.f32.mrf.mxu0
    %v3750 = vadd.f32 0.0, %v3749
    %3751 = vmatmul.bf16.gmra.mxu0 %v3666
    %v3752 = vpop.f32.mrf.mxu0
    %v3753 = vadd.f32 0.0, %v3752
    %v3754 = vpop.f32.mrf.mxu0
    %v3755 = vadd.f32 0.0, %v3754
    %3756 = vmatmul.bf16.gmra.mxu0 %v3667
    %v3757 = vpop.f32.mrf.mxu0
    %v3758 = vadd.f32 0.0, %v3757
    %v3759 = vpop.f32.mrf.mxu0
    %v3760 = vadd.f32 0.0, %v3759
    %3761 = vmatmul.bf16.gmra.mxu0 %v3668
    %v3762 = vpop.f32.mrf.mxu0
    %v3763 = vadd.f32 0.0, %v3762
    %v3764 = vpop.f32.mrf.mxu0
    %v3765 = vadd.f32 0.0, %v3764
    %3766 = vmatmul.bf16.gmra.mxu0 %v3669
    %v3767 = vpop.f32.mrf.mxu0
    %v3768 = vadd.f32 0.0, %v3767
    %v3769 = vpop.f32.mrf.mxu0
    %v3770 = vadd.f32 0.0, %v3769
    %3771 = vmatmul.bf16.gmra.mxu0 %v3670
    %v3772 = vpop.f32.mrf.mxu0
    %v3773 = vadd.f32 0.0, %v3772
    %v3774 = vpop.f32.mrf.mxu0
    %v3775 = vadd.f32 0.0, %v3774
    %3776 = vmatmul.bf16.gmra.mxu0 %v3671
    %v3777 = vpop.f32.mrf.mxu0
    %v3778 = vadd.f32 0.0, %v3777
    %v3779 = vpop.f32.mrf.mxu0
    %v3780 = vadd.f32 0.0, %v3779
    %3781 = vmatmul.bf16.gmra.mxu0 %v3672
    %v3782 = vpop.f32.mrf.mxu0
    %v3783 = vadd.f32 0.0, %v3782
    %v3784 = vpop.f32.mrf.mxu0
    %v3785 = vadd.f32 0.0, %v3784
    %3786 = vdwg.mxu0
    %v3787 = vadd.f32 %v3633, %v3748
    %v3788 = vadd.f32 %v3634, %v3750
    %v3789 = vadd.f32 %v3635, %v3753
    %v3790 = vadd.f32 %v3636, %v3755
    %v3791 = vadd.f32 %v3637, %v3758
    %v3792 = vadd.f32 %v3638, %v3760
    %v3793 = vadd.f32 %v3639, %v3763
    %v3794 = vadd.f32 %v3640, %v3765
    %v3795 = vadd.f32 %v3641, %v3768
    %v3796 = vadd.f32 %v3642, %v3770
    %v3797 = vadd.f32 %v3643, %v3773
    %v3798 = vadd.f32 %v3644, %v3775
    %v3799 = vadd.f32 %v3645, %v3778
    %v3800 = vadd.f32 %v3646, %v3780
    %v3801 = vadd.f32 %v3647, %v3783
    %v3802 = vadd.f32 %v3648, %v3785
    %v3803 = vmul.f32 %v2606, %v2027
    %v3804 = vmul.f32 %v2608, %v2031
    %v3805 = vmul.f32 %v2610, %v2035
    %v3806 = vmul.f32 %v2612, %v2039
    %v3807 = vmul.f32 %v2614, %v2043
    %v3808 = vmul.f32 %v2616, %v2047
    %v3809 = vmul.f32 %v2618, %v2051
    %v3810 = vmul.f32 %v2620, %v2055
    %v3811 = vmul.f32 %v2622, %v2059
    %v3812 = vmul.f32 %v2624, %v2063
    %v3813 = vmul.f32 %v2626, %v2067
    %v3814 = vmul.f32 %v2628, %v2071
    %v3815 = vmul.f32 %v2630, %v2075
    %v3816 = vmul.f32 %v2632, %v2079
    %v3817 = vmul.f32 %v2633, %v2083
    %v3818 = vmul.f32 %v2650, %v2087
    %v3819 = vpack.c.bf16 %v3804, %v3803
    %v3820 = vpack.c.bf16 %v3806, %v3805
    %v3821 = vpack.c.bf16 %v3808, %v3807
    %v3822 = vpack.c.bf16 %v3810, %v3809
    %v3823 = vpack.c.bf16 %v3812, %v3811
    %v3824 = vpack.c.bf16 %v3814, %v3813
    %v3825 = vpack.c.bf16 %v3816, %v3815
    %v3826 = vpack.c.bf16 %v3818, %v3817
    %s3827 = scalar_lea.vmem [#allocation7], 448
    %v3828 = vld [vmem:[%s3827] sm:$0xf]
    %v3829 = vld [vmem:[%s3827 + $0x4] sm:$0xf]
    %v3830 = vld [vmem:[%s3827 + $0x8] sm:$0xf]
    %v3831 = vld [vmem:[%s3827 + $0xc] sm:$0xf]
    %v3832 = vld [vmem:[%s3827 + $0x10] sm:$0xf]
    %v3833 = vld [vmem:[%s3827 + $0x14] sm:$0xf]
    %v3834 = vld [vmem:[%s3827 + $0x18] sm:$0xf]
    %v3835 = vld [vmem:[%s3827 + $0x1c] sm:$0xf]
    %v3836 = vld [vmem:[%s3827 + $0x20] sm:$0xf]
    %v3837 = vld [vmem:[%s3827 + $0x24] sm:$0xf]
    %v3838 = vld [vmem:[%s3827 + $0x28] sm:$0xf]
    %v3839 = vld [vmem:[%s3827 + $0x2c] sm:$0xf]
    %v3840 = vld [vmem:[%s3827 + $0x30] sm:$0xf]
    %v3841 = vld [vmem:[%s3827 + $0x34] sm:$0xf]
    %v3842 = vld [vmem:[%s3827 + $0x38] sm:$0xf]
    %v3843 = vld [vmem:[%s3827 + $0x3c] sm:$0xf]
    %v3860 = vunpack.c.l.b16 %v3828
    %v3861 = vunpack.c.l.b16 %v3829
    %v3862 = vunpack.c.l.b16 %v3830
    %v3863 = vunpack.c.l.b16 %v3831
    %v3864 = vunpack.c.l.b16 %v3832
    %v3865 = vunpack.c.l.b16 %v3833
    %v3866 = vunpack.c.l.b16 %v3834
    %v3867 = vunpack.c.l.b16 %v3835
    %v3868 = vunpack.c.l.b16 %v3836
    %v3869 = vunpack.c.l.b16 %v3837
    %v3870 = vunpack.c.l.b16 %v3838
    %v3871 = vunpack.c.l.b16 %v3839
    %v3872 = vunpack.c.l.b16 %v3840
    %v3873 = vunpack.c.l.b16 %v3841
    %v3874 = vunpack.c.l.b16 %v3842
    %v3875 = vunpack.c.l.b16 %v3843
    %v3876 = vpack.c.b16 %v3861, %v3860
    %v3877 = vpack.c.b16 %v3863, %v3862
    %v3878 = vpack.c.b16 %v3865, %v3864
    %v3879 = vpack.c.b16 %v3867, %v3866
    %v3880 = vpack.c.b16 %v3869, %v3868
    %v3881 = vpack.c.b16 %v3871, %v3870
    %v3882 = vpack.c.b16 %v3873, %v3872
    %v3883 = vpack.c.b16 %v3875, %v3874
    %3892 = vmatpush.bf16.msra.mxu0 %v3883
    %3893 = vmatpush.bf16.msra.mxu0 %v3882
    %3894 = vmatpush.bf16.msra.mxu0 %v3881
    %3895 = vmatpush.bf16.msra.mxu0 %v3880
    %3896 = vmatpush.bf16.msra.mxu0 %v3879
    %3897 = vmatpush.bf16.msra.mxu0 %v3878
    %3898 = vmatpush.bf16.msra.mxu0 %v3877
    %3899 = vmatpush.bf16.msra.mxu0 %v3876
    %3900 = vmatmul.bf16.gmra.mxu0 %v3819
    %v3901 = vpop.f32.mrf.mxu0
    %v3902 = vadd.f32 0.0, %v3901
    %v3903 = vpop.f32.mrf.mxu0
    %v3904 = vadd.f32 0.0, %v3903
    %3905 = vmatmul.bf16.gmra.mxu0 %v3820
    %v3906 = vpop.f32.mrf.mxu0
    %v3907 = vadd.f32 0.0, %v3906
    %v3908 = vpop.f32.mrf.mxu0
    %v3909 = vadd.f32 0.0, %v3908
    %3910 = vmatmul.bf16.gmra.mxu0 %v3821
    %v3911 = vpop.f32.mrf.mxu0
    %v3912 = vadd.f32 0.0, %v3911
    %v3913 = vpop.f32.mrf.mxu0
    %v3914 = vadd.f32 0.0, %v3913
    %3915 = vmatmul.bf16.gmra.mxu0 %v3822
    %v3916 = vpop.f32.mrf.mxu0
    %v3917 = vadd.f32 0.0, %v3916
    %v3918 = vpop.f32.mrf.mxu0
    %v3919 = vadd.f32 0.0, %v3918
    %3920 = vmatmul.bf16.gmra.mxu0 %v3823
    %v3921 = vpop.f32.mrf.mxu0
    %v3922 = vadd.f32 0.0, %v3921
    %v3923 = vpop.f32.mrf.mxu0
    %v3924 = vadd.f32 0.0, %v3923
    %3925 = vmatmul.bf16.gmra.mxu0 %v3824
    %v3926 = vpop.f32.mrf.mxu0
    %v3927 = vadd.f32 0.0, %v3926
    %v3928 = vpop.f32.mrf.mxu0
    %v3929 = vadd.f32 0.0, %v3928
    %3930 = vmatmul.bf16.gmra.mxu0 %v3825
    %v3931 = vpop.f32.mrf.mxu0
    %v3932 = vadd.f32 0.0, %v3931
    %v3933 = vpop.f32.mrf.mxu0
    %v3934 = vadd.f32 0.0, %v3933
    %3935 = vmatmul.bf16.gmra.mxu0 %v3826
    %v3936 = vpop.f32.mrf.mxu0
    %v3937 = vadd.f32 0.0, %v3936
    %v3938 = vpop.f32.mrf.mxu0
    %v3939 = vadd.f32 0.0, %v3938
    %3940 = vdwg.mxu0
    %v3941 = vadd.f32 %v3787, %v3902
    %v3942 = vadd.f32 %v3788, %v3904
    %v3943 = vadd.f32 %v3789, %v3907
    %v3944 = vadd.f32 %v3790, %v3909
    %v3945 = vadd.f32 %v3791, %v3912
    %v3946 = vadd.f32 %v3792, %v3914
    %v3947 = vadd.f32 %v3793, %v3917
    %v3948 = vadd.f32 %v3794, %v3919
    %v3949 = vadd.f32 %v3795, %v3922
    %v3950 = vadd.f32 %v3796, %v3924
    %v3951 = vadd.f32 %v3797, %v3927
    %v3952 = vadd.f32 %v3798, %v3929
    %v3953 = vadd.f32 %v3799, %v3932
    %v3954 = vadd.f32 %v3800, %v3934
    %v3955 = vadd.f32 %v3801, %v3937
    %v3956 = vadd.f32 %v3802, %v3939
    %v3957 = vmul.f32 %v2890, %v2245
    %v3958 = vmul.f32 %v2892, %v2249
    %v3959 = vmul.f32 %v2894, %v2253
    %v3960 = vmul.f32 %v2896, %v2257
    %v3961 = vmul.f32 %v2898, %v2261
    %v3962 = vmul.f32 %v2900, %v2265
    %v3963 = vmul.f32 %v2902, %v2269
    %v3964 = vmul.f32 %v2904, %v2273
    %v3965 = vmul.f32 %v2906, %v2277
    %v3966 = vmul.f32 %v2908, %v2281
    %v3967 = vmul.f32 %v2910, %v2285
    %v3968 = vmul.f32 %v2912, %v2289
    %v3969 = vmul.f32 %v2914, %v2293
    %v3970 = vmul.f32 %v2916, %v2297
    %v3971 = vmul.f32 %v2917, %v2301
    %v3972 = vmul.f32 %v2934, %v2305
    %v3973 = vpack.c.bf16 %v3958, %v3957
    %v3974 = vpack.c.bf16 %v3960, %v3959
    %v3975 = vpack.c.bf16 %v3962, %v3961
    %v3976 = vpack.c.bf16 %v3964, %v3963
    %v3977 = vpack.c.bf16 %v3966, %v3965
    %v3978 = vpack.c.bf16 %v3968, %v3967
    %v3979 = vpack.c.bf16 %v3970, %v3969
    %v3980 = vpack.c.bf16 %v3972, %v3971
    %s3981 = scalar_lea.vmem [#allocation7], 512
    %v3982 = vld [vmem:[%s3981] sm:$0xf]
    %v3983 = vld [vmem:[%s3981 + $0x4] sm:$0xf]
    %v3984 = vld [vmem:[%s3981 + $0x8] sm:$0xf]
    %v3985 = vld [vmem:[%s3981 + $0xc] sm:$0xf]
    %v3986 = vld [vmem:[%s3981 + $0x10] sm:$0xf]
    %v3987 = vld [vmem:[%s3981 + $0x14] sm:$0xf]
    %v3988 = vld [vmem:[%s3981 + $0x18] sm:$0xf]
    %v3989 = vld [vmem:[%s3981 + $0x1c] sm:$0xf]
    %v3990 = vld [vmem:[%s3981 + $0x20] sm:$0xf]
    %v3991 = vld [vmem:[%s3981 + $0x24] sm:$0xf]
    %v3992 = vld [vmem:[%s3981 + $0x28] sm:$0xf]
    %v3993 = vld [vmem:[%s3981 + $0x2c] sm:$0xf]
    %v3994 = vld [vmem:[%s3981 + $0x30] sm:$0xf]
    %v3995 = vld [vmem:[%s3981 + $0x34] sm:$0xf]
    %v3996 = vld [vmem:[%s3981 + $0x38] sm:$0xf]
    %v3997 = vld [vmem:[%s3981 + $0x3c] sm:$0xf]
    %v4014 = vunpack.c.l.b16 %v3982
    %v4015 = vunpack.c.l.b16 %v3983
    %v4016 = vunpack.c.l.b16 %v3984
    %v4017 = vunpack.c.l.b16 %v3985
    %v4018 = vunpack.c.l.b16 %v3986
    %v4019 = vunpack.c.l.b16 %v3987
    %v4020 = vunpack.c.l.b16 %v3988
    %v4021 = vunpack.c.l.b16 %v3989
    %v4022 = vunpack.c.l.b16 %v3990
    %v4023 = vunpack.c.l.b16 %v3991
    %v4024 = vunpack.c.l.b16 %v3992
    %v4025 = vunpack.c.l.b16 %v3993
    %v4026 = vunpack.c.l.b16 %v3994
    %v4027 = vunpack.c.l.b16 %v3995
    %v4028 = vunpack.c.l.b16 %v3996
    %v4029 = vunpack.c.l.b16 %v3997
    %v4030 = vpack.c.b16 %v4015, %v4014
    %v4031 = vpack.c.b16 %v4017, %v4016
    %v4032 = vpack.c.b16 %v4019, %v4018
    %v4033 = vpack.c.b16 %v4021, %v4020
    %v4034 = vpack.c.b16 %v4023, %v4022
    %v4035 = vpack.c.b16 %v4025, %v4024
    %v4036 = vpack.c.b16 %v4027, %v4026
    %v4037 = vpack.c.b16 %v4029, %v4028
    %4046 = vmatpush.bf16.msra.mxu0 %v4037
    %4047 = vmatpush.bf16.msra.mxu0 %v4036
    %4048 = vmatpush.bf16.msra.mxu0 %v4035
    %4049 = vmatpush.bf16.msra.mxu0 %v4034
    %4050 = vmatpush.bf16.msra.mxu0 %v4033
    %4051 = vmatpush.bf16.msra.mxu0 %v4032
    %4052 = vmatpush.bf16.msra.mxu0 %v4031
    %4053 = vmatpush.bf16.msra.mxu0 %v4030
    %4054 = vmatmul.bf16.gmra.mxu0 %v3973
    %v4055 = vpop.f32.mrf.mxu0
    %v4056 = vadd.f32 0.0, %v4055
    %v4057 = vpop.f32.mrf.mxu0
    %v4058 = vadd.f32 0.0, %v4057
    %4059 = vmatmul.bf16.gmra.mxu0 %v3974
    %v4060 = vpop.f32.mrf.mxu0
    %v4061 = vadd.f32 0.0, %v4060
    %v4062 = vpop.f32.mrf.mxu0
    %v4063 = vadd.f32 0.0, %v4062
    %4064 = vmatmul.bf16.gmra.mxu0 %v3975
    %v4065 = vpop.f32.mrf.mxu0
    %v4066 = vadd.f32 0.0, %v4065
    %v4067 = vpop.f32.mrf.mxu0
    %v4068 = vadd.f32 0.0, %v4067
    %4069 = vmatmul.bf16.gmra.mxu0 %v3976
    %v4070 = vpop.f32.mrf.mxu0
    %v4071 = vadd.f32 0.0, %v4070
    %v4072 = vpop.f32.mrf.mxu0
    %v4073 = vadd.f32 0.0, %v4072
    %4074 = vmatmul.bf16.gmra.mxu0 %v3977
    %v4075 = vpop.f32.mrf.mxu0
    %v4076 = vadd.f32 0.0, %v4075
    %v4077 = vpop.f32.mrf.mxu0
    %v4078 = vadd.f32 0.0, %v4077
    %4079 = vmatmul.bf16.gmra.mxu0 %v3978
    %v4080 = vpop.f32.mrf.mxu0
    %v4081 = vadd.f32 0.0, %v4080
    %v4082 = vpop.f32.mrf.mxu0
    %v4083 = vadd.f32 0.0, %v4082
    %4084 = vmatmul.bf16.gmra.mxu0 %v3979
    %v4085 = vpop.f32.mrf.mxu0
    %v4086 = vadd.f32 0.0, %v4085
    %v4087 = vpop.f32.mrf.mxu0
    %v4088 = vadd.f32 0.0, %v4087
    %4089 = vmatmul.bf16.gmra.mxu0 %v3980
    %v4090 = vpop.f32.mrf.mxu0
    %v4091 = vadd.f32 0.0, %v4090
    %v4092 = vpop.f32.mrf.mxu0
    %v4093 = vadd.f32 0.0, %v4092
    %4094 = vdwg.mxu0
    %v4095 = vadd.f32 %v3941, %v4056
    %v4096 = vadd.f32 %v3942, %v4058
    %v4097 = vadd.f32 %v3943, %v4061
    %v4098 = vadd.f32 %v3944, %v4063
    %v4099 = vadd.f32 %v3945, %v4066
    %v4100 = vadd.f32 %v3946, %v4068
    %v4101 = vadd.f32 %v3947, %v4071
    %v4102 = vadd.f32 %v3948, %v4073
    %v4103 = vadd.f32 %v3949, %v4076
    %v4104 = vadd.f32 %v3950, %v4078
    %v4105 = vadd.f32 %v3951, %v4081
    %v4106 = vadd.f32 %v3952, %v4083
    %v4107 = vadd.f32 %v3953, %v4086
    %v4108 = vadd.f32 %v3954, %v4088
    %v4109 = vadd.f32 %v3955, %v4091
    %v4110 = vadd.f32 %v3956, %v4093
    %v4111 = vld [vmem:[#allocation9] sm:$0x1]
    %v4113 = vperm.slane %v4111, 0
    %v4115 = vadd.f32 %v4095, %v4113
    %v4116 = vadd.f32 %v4096, %v4113
    %v4117 = vadd.f32 %v4097, %v4113
    %v4118 = vadd.f32 %v4098, %v4113
    %v4119 = vadd.f32 %v4099, %v4113
    %v4120 = vadd.f32 %v4100, %v4113
    %v4121 = vadd.f32 %v4101, %v4113
    %v4122 = vadd.f32 %v4102, %v4113
    %v4123 = vadd.f32 %v4103, %v4113
    %v4124 = vadd.f32 %v4104, %v4113
    %v4125 = vadd.f32 %v4105, %v4113
    %v4126 = vadd.f32 %v4106, %v4113
    %v4127 = vadd.f32 %v4107, %v4113
    %v4128 = vadd.f32 %v4108, %v4113
    %v4129 = vadd.f32 %v4109, %v4113
    %v4130 = vadd.f32 %v4110, %v4113
    %v4131 = vmax.f32 %v4115, 0.0
    %v4132 = vmax.f32 %v4116, 0.0
    %v4133 = vmax.f32 %v4117, 0.0
    %v4134 = vmax.f32 %v4118, 0.0
    %v4135 = vmax.f32 %v4119, 0.0
    %v4136 = vmax.f32 %v4120, 0.0
    %v4137 = vmax.f32 %v4121, 0.0
    %v4138 = vmax.f32 %v4122, 0.0
    %v4139 = vmax.f32 %v4123, 0.0
    %v4140 = vmax.f32 %v4124, 0.0
    %v4141 = vmax.f32 %v4125, 0.0
    %v4142 = vmax.f32 %v4126, 0.0
    %v4143 = vmax.f32 %v4127, 0.0
    %v4144 = vmax.f32 %v4128, 0.0
    %v4145 = vmax.f32 %v4129, 0.0
    %v4146 = vmax.f32 %v4130, 0.0
    %v4147 = vpack.c.bf16 %v4132, %v4131
    %v4148 = vpack.c.bf16 %v4134, %v4133
    %v4149 = vpack.c.bf16 %v4136, %v4135
    %v4150 = vpack.c.bf16 %v4138, %v4137
    %v4151 = vpack.c.bf16 %v4140, %v4139
    %v4152 = vpack.c.bf16 %v4142, %v4141
    %v4153 = vpack.c.bf16 %v4144, %v4143
    %v4154 = vpack.c.bf16 %v4146, %v4145
    %v4155 = vld [vmem:[#allocation10] sm:$0xf]
    %v4156 = vld [vmem:[#allocation10 + $0x4] sm:$0xf]
    %v4157 = vld [vmem:[#allocation10 + $0x8] sm:$0xf]
    %v4158 = vld [vmem:[#allocation10 + $0xc] sm:$0xf]
    %v4159 = vld [vmem:[#allocation10 + $0x10] sm:$0xf]
    %v4160 = vld [vmem:[#allocation10 + $0x14] sm:$0xf]
    %v4161 = vld [vmem:[#allocation10 + $0x18] sm:$0xf]
    %v4162 = vld [vmem:[#allocation10 + $0x1c] sm:$0xf]
    %v4163 = vld [vmem:[#allocation10 + $0x20] sm:$0xf]
    %v4164 = vld [vmem:[#allocation10 + $0x24] sm:$0xf]
    %v4165 = vld [vmem:[#allocation10 + $0x28] sm:$0xf]
    %v4166 = vld [vmem:[#allocation10 + $0x2c] sm:$0xf]
    %v4167 = vld [vmem:[#allocation10 + $0x30] sm:$0xf]
    %v4168 = vld [vmem:[#allocation10 + $0x34] sm:$0xf]
    %v4169 = vld [vmem:[#allocation10 + $0x38] sm:$0xf]
    %v4170 = vld [vmem:[#allocation10 + $0x3c] sm:$0xf]
    %v4171 = vld [vmem:[#allocation12] sm:$0x1]
    %v4173 = vperm.slane %v4171, 0
    %v4191 = vunpack.c.l.b16 %v4155
    %v4192 = vunpack.c.l.b16 %v4156
    %v4193 = vunpack.c.l.b16 %v4157
    %v4194 = vunpack.c.l.b16 %v4158
    %v4195 = vunpack.c.l.b16 %v4159
    %v4196 = vunpack.c.l.b16 %v4160
    %v4197 = vunpack.c.l.b16 %v4161
    %v4198 = vunpack.c.l.b16 %v4162
    %v4199 = vunpack.c.l.b16 %v4163
    %v4200 = vunpack.c.l.b16 %v4164
    %v4201 = vunpack.c.l.b16 %v4165
    %v4202 = vunpack.c.l.b16 %v4166
    %v4203 = vunpack.c.l.b16 %v4167
    %v4204 = vunpack.c.l.b16 %v4168
    %v4205 = vunpack.c.l.b16 %v4169
    %v4206 = vunpack.c.l.b16 %v4170
    %v4207 = vpack.c.b16 %v4192, %v4191
    %v4208 = vpack.c.b16 %v4194, %v4193
    %v4209 = vpack.c.b16 %v4196, %v4195
    %v4210 = vpack.c.b16 %v4198, %v4197
    %v4211 = vpack.c.b16 %v4200, %v4199
    %v4212 = vpack.c.b16 %v4202, %v4201
    %v4213 = vpack.c.b16 %v4204, %v4203
    %v4214 = vpack.c.b16 %v4206, %v4205
    %4223 = vmatpush.bf16.msra.mxu0 %v4214
    %4224 = vmatpush.bf16.msra.mxu0 %v4213
    %4225 = vmatpush.bf16.msra.mxu0 %v4212
    %4226 = vmatpush.bf16.msra.mxu0 %v4211
    %4227 = vmatpush.bf16.msra.mxu0 %v4210
    %4228 = vmatpush.bf16.msra.mxu0 %v4209
    %4229 = vmatpush.bf16.msra.mxu0 %v4208
    %4230 = vmatpush.bf16.msra.mxu0 %v4207
    %4231 = vmatmul.bf16.gmra.mxu0 %v4147
    %v4232 = vpop.f32.mrf.mxu0
    %v4233 = vadd.f32 %v4173, %v4232
    %v4234 = vpop.f32.mrf.mxu0
    %v4235 = vadd.f32 %v4173, %v4234
    %4236 = vmatmul.bf16.gmra.mxu0 %v4148
    %v4237 = vpop.f32.mrf.mxu0
    %v4238 = vadd.f32 %v4173, %v4237
    %v4239 = vpop.f32.mrf.mxu0
    %v4240 = vadd.f32 %v4173, %v4239
    %4241 = vmatmul.bf16.gmra.mxu0 %v4149
    %v4242 = vpop.f32.mrf.mxu0
    %v4243 = vadd.f32 %v4173, %v4242
    %v4244 = vpop.f32.mrf.mxu0
    %v4245 = vadd.f32 %v4173, %v4244
    %4246 = vmatmul.bf16.gmra.mxu0 %v4150
    %v4247 = vpop.f32.mrf.mxu0
    %v4248 = vadd.f32 %v4173, %v4247
    %v4249 = vpop.f32.mrf.mxu0
    %v4250 = vadd.f32 %v4173, %v4249
    %4251 = vmatmul.bf16.gmra.mxu0 %v4151
    %v4252 = vpop.f32.mrf.mxu0
    %v4253 = vadd.f32 %v4173, %v4252
    %v4254 = vpop.f32.mrf.mxu0
    %v4255 = vadd.f32 %v4173, %v4254
    %4256 = vmatmul.bf16.gmra.mxu0 %v4152
    %v4257 = vpop.f32.mrf.mxu0
    %v4258 = vadd.f32 %v4173, %v4257
    %v4259 = vpop.f32.mrf.mxu0
    %v4260 = vadd.f32 %v4173, %v4259
    %4261 = vmatmul.bf16.gmra.mxu0 %v4153
    %v4262 = vpop.f32.mrf.mxu0
    %v4263 = vadd.f32 %v4173, %v4262
    %v4264 = vpop.f32.mrf.mxu0
    %v4265 = vadd.f32 %v4173, %v4264
    %4266 = vmatmul.bf16.gmra.mxu0 %v4154
    %v4267 = vpop.f32.mrf.mxu0
    %v4268 = vadd.f32 %v4173, %v4267
    %v4269 = vpop.f32.mrf.mxu0
    %v4270 = vadd.f32 %v4173, %v4269
    %4271 = vdwg.mxu0
    %v4272 = vmax.f32 %v4233, 0.0
    %v4273 = vmax.f32 %v4235, 0.0
    %v4274 = vmax.f32 %v4238, 0.0
    %v4275 = vmax.f32 %v4240, 0.0
    %v4276 = vmax.f32 %v4243, 0.0
    %v4277 = vmax.f32 %v4245, 0.0
    %v4278 = vmax.f32 %v4248, 0.0
    %v4279 = vmax.f32 %v4250, 0.0
    %v4280 = vmax.f32 %v4253, 0.0
    %v4281 = vmax.f32 %v4255, 0.0
    %v4282 = vmax.f32 %v4258, 0.0
    %v4283 = vmax.f32 %v4260, 0.0
    %v4284 = vmax.f32 %v4263, 0.0
    %v4285 = vmax.f32 %v4265, 0.0
    %v4286 = vmax.f32 %v4268, 0.0
    %v4287 = vmax.f32 %v4270, 0.0
    %v4288 = vpack.c.bf16 %v4272, %v4272
    %v4289 = vpack.c.bf16 %v4274, %v4274
    %v4290 = vpack.c.bf16 %v4276, %v4276
    %v4291 = vpack.c.bf16 %v4278, %v4278
    %v4292 = vpack.c.bf16 %v4280, %v4280
    %v4293 = vpack.c.bf16 %v4282, %v4282
    %v4294 = vpack.c.bf16 %v4284, %v4284
    %v4295 = vpack.c.bf16 %v4286, %v4286
    %v4296 = vld [vmem:[#allocation13] sm:$0xff]
    %v4297 = vld [vmem:[#allocation13 + $0x8] sm:$0xff]
    %v4298 = vld [vmem:[#allocation13 + $0x10] sm:$0xff]
    %v4299 = vld [vmem:[#allocation13 + $0x18] sm:$0xff]
    %v4300 = vld [vmem:[#allocation13 + $0x20] sm:$0xff]
    %v4301 = vld [vmem:[#allocation13 + $0x28] sm:$0xff]
    %v4302 = vld [vmem:[#allocation13 + $0x30] sm:$0xff]
    %v4303 = vld [vmem:[#allocation13 + $0x38] sm:$0xff]
    %v4304 = vld [vmem:[#allocation13 + $0x40] sm:$0xff]
    %v4305 = vld [vmem:[#allocation13 + $0x48] sm:$0xff]
    %v4306 = vld [vmem:[#allocation13 + $0x50] sm:$0xff]
    %v4307 = vld [vmem:[#allocation13 + $0x58] sm:$0xff]
    %v4308 = vld [vmem:[#allocation13 + $0x60] sm:$0xff]
    %v4309 = vld [vmem:[#allocation13 + $0x68] sm:$0xff]
    %v4310 = vld [vmem:[#allocation13 + $0x70] sm:$0xff]
    %v4311 = vld [vmem:[#allocation13 + $0x78] sm:$0xff]
    %v4312 = vld [vmem:[#allocation13 + $0x80] sm:$0xff]
    %v4313 = vld [vmem:[#allocation13 + $0x88] sm:$0xff]
    %v4314 = vld [vmem:[#allocation13 + $0x90] sm:$0xff]
    %v4315 = vld [vmem:[#allocation13 + $0x98] sm:$0xff]
    %v4316 = vld [vmem:[#allocation13 + $0xa0] sm:$0xff]
    %v4317 = vld [vmem:[#allocation13 + $0xa8] sm:$0xff]
    %v4318 = vld [vmem:[#allocation13 + $0xb0] sm:$0xff]
    %v4319 = vld [vmem:[#allocation13 + $0xb8] sm:$0xff]
    %v4320 = vld [vmem:[#allocation13 + $0xc0] sm:$0xff]
    %v4321 = vld [vmem:[#allocation13 + $0xc8] sm:$0xff]
    %v4322 = vld [vmem:[#allocation13 + $0xd0] sm:$0xff]
    %v4323 = vld [vmem:[#allocation13 + $0xd8] sm:$0xff]
    %v4324 = vld [vmem:[#allocation13 + $0xe0] sm:$0xff]
    %v4325 = vld [vmem:[#allocation13 + $0xe8] sm:$0xff]
    %v4326 = vld [vmem:[#allocation13 + $0xf0] sm:$0xff]
    %v4327 = vld [vmem:[#allocation13 + $0xf8] sm:$0xff]
    %v4328 = vld [vmem:[#allocation13 + $0x100] sm:$0xff]
    %v4329 = vld [vmem:[#allocation13 + $0x108] sm:$0xff]
    %v4330 = vld [vmem:[#allocation13 + $0x110] sm:$0xff]
    %v4331 = vld [vmem:[#allocation13 + $0x118] sm:$0xff]
    %v4332 = vld [vmem:[#allocation13 + $0x120] sm:$0xff]
    %v4333 = vld [vmem:[#allocation13 + $0x128] sm:$0xff]
    %v4334 = vld [vmem:[#allocation13 + $0x130] sm:$0xff]
    %v4335 = vld [vmem:[#allocation13 + $0x138] sm:$0xff]
    %v4336 = vld [vmem:[#allocation13 + $0x140] sm:$0xff]
    %v4337 = vld [vmem:[#allocation13 + $0x148] sm:$0xff]
    %v4338 = vld [vmem:[#allocation13 + $0x150] sm:$0xff]
    %v4339 = vld [vmem:[#allocation13 + $0x158] sm:$0xff]
    %v4340 = vld [vmem:[#allocation13 + $0x160] sm:$0xff]
    %v4341 = vld [vmem:[#allocation13 + $0x168] sm:$0xff]
    %v4342 = vld [vmem:[#allocation13 + $0x170] sm:$0xff]
    %v4343 = vld [vmem:[#allocation13 + $0x178] sm:$0xff]
    %v4344 = vld [vmem:[#allocation13 + $0x180] sm:$0xff]
    %v4345 = vld [vmem:[#allocation13 + $0x188] sm:$0xff]
    %v4346 = vld [vmem:[#allocation13 + $0x190] sm:$0xff]
    %v4347 = vld [vmem:[#allocation13 + $0x198] sm:$0xff]
    %v4348 = vld [vmem:[#allocation13 + $0x1a0] sm:$0xff]
    %v4349 = vld [vmem:[#allocation13 + $0x1a8] sm:$0xff]
    %v4350 = vld [vmem:[#allocation13 + $0x1b0] sm:$0xff]
    %v4351 = vld [vmem:[#allocation13 + $0x1b8] sm:$0xff]
    %v4352 = vld [vmem:[#allocation13 + $0x1c0] sm:$0xff]
    %v4353 = vld [vmem:[#allocation13 + $0x1c8] sm:$0xff]
    %v4354 = vld [vmem:[#allocation13 + $0x1d0] sm:$0xff]
    %v4355 = vld [vmem:[#allocation13 + $0x1d8] sm:$0xff]
    %v4356 = vld [vmem:[#allocation13 + $0x1e0] sm:$0xff]
    %v4357 = vld [vmem:[#allocation13 + $0x1e8] sm:$0xff]
    %v4358 = vld [vmem:[#allocation13 + $0x1f0] sm:$0xff]
    %v4359 = vld [vmem:[#allocation13 + $0x1f8] sm:$0xff]
    %s4360 = scalar_lea.vmem [#allocation13], 512
    %v4361 = vld [vmem:[%s4360] sm:$0xff]
    %v4362 = vld [vmem:[%s4360 + $0x8] sm:$0xff]
    %v4363 = vld [vmem:[%s4360 + $0x10] sm:$0xff]
    %v4364 = vld [vmem:[%s4360 + $0x18] sm:$0xff]
    %v4365 = vld [vmem:[%s4360 + $0x20] sm:$0xff]
    %v4366 = vld [vmem:[%s4360 + $0x28] sm:$0xff]
    %v4367 = vld [vmem:[%s4360 + $0x30] sm:$0xff]
    %v4368 = vld [vmem:[%s4360 + $0x38] sm:$0xff]
    %v4369 = vld [vmem:[%s4360 + $0x40] sm:$0xff]
    %v4370 = vld [vmem:[%s4360 + $0x48] sm:$0xff]
    %v4371 = vld [vmem:[%s4360 + $0x50] sm:$0xff]
    %v4372 = vld [vmem:[%s4360 + $0x58] sm:$0xff]
    %v4373 = vld [vmem:[%s4360 + $0x60] sm:$0xff]
    %v4374 = vld [vmem:[%s4360 + $0x68] sm:$0xff]
    %v4375 = vld [vmem:[%s4360 + $0x70] sm:$0xff]
    %v4376 = vld [vmem:[%s4360 + $0x78] sm:$0xff]
    %v4377 = vld [vmem:[%s4360 + $0x80] sm:$0xff]
    %v4378 = vld [vmem:[%s4360 + $0x88] sm:$0xff]
    %v4379 = vld [vmem:[%s4360 + $0x90] sm:$0xff]
    %v4380 = vld [vmem:[%s4360 + $0x98] sm:$0xff]
    %v4381 = vld [vmem:[%s4360 + $0xa0] sm:$0xff]
    %v4382 = vld [vmem:[%s4360 + $0xa8] sm:$0xff]
    %v4383 = vld [vmem:[%s4360 + $0xb0] sm:$0xff]
    %v4384 = vld [vmem:[%s4360 + $0xb8] sm:$0xff]
    %v4385 = vld [vmem:[%s4360 + $0xc0] sm:$0xff]
    %v4386 = vld [vmem:[%s4360 + $0xc8] sm:$0xff]
    %v4387 = vld [vmem:[%s4360 + $0xd0] sm:$0xff]
    %v4388 = vld [vmem:[%s4360 + $0xd8] sm:$0xff]
    %v4389 = vld [vmem:[%s4360 + $0xe0] sm:$0xff]
    %v4390 = vld [vmem:[%s4360 + $0xe8] sm:$0xff]
    %v4391 = vld [vmem:[%s4360 + $0xf0] sm:$0xff]
    %v4392 = vld [vmem:[%s4360 + $0xf8] sm:$0xff]
    %v4393 = vld [vmem:[%s4360 + $0x100] sm:$0xff]
    %v4394 = vld [vmem:[%s4360 + $0x108] sm:$0xff]
    %v4395 = vld [vmem:[%s4360 + $0x110] sm:$0xff]
    %v4396 = vld [vmem:[%s4360 + $0x118] sm:$0xff]
    %v4397 = vld [vmem:[%s4360 + $0x120] sm:$0xff]
    %v4398 = vld [vmem:[%s4360 + $0x128] sm:$0xff]
    %v4399 = vld [vmem:[%s4360 + $0x130] sm:$0xff]
    %v4400 = vld [vmem:[%s4360 + $0x138] sm:$0xff]
    %v4401 = vld [vmem:[%s4360 + $0x140] sm:$0xff]
    %v4402 = vld [vmem:[%s4360 + $0x148] sm:$0xff]
    %v4403 = vld [vmem:[%s4360 + $0x150] sm:$0xff]
    %v4404 = vld [vmem:[%s4360 + $0x158] sm:$0xff]
    %v4405 = vld [vmem:[%s4360 + $0x160] sm:$0xff]
    %v4406 = vld [vmem:[%s4360 + $0x168] sm:$0xff]
    %v4407 = vld [vmem:[%s4360 + $0x170] sm:$0xff]
    %v4408 = vld [vmem:[%s4360 + $0x178] sm:$0xff]
    %v4409 = vld [vmem:[%s4360 + $0x180] sm:$0xff]
    %v4410 = vld [vmem:[%s4360 + $0x188] sm:$0xff]
    %v4411 = vld [vmem:[%s4360 + $0x190] sm:$0xff]
    %v4412 = vld [vmem:[%s4360 + $0x198] sm:$0xff]
    %v4413 = vld [vmem:[%s4360 + $0x1a0] sm:$0xff]
    %v4414 = vld [vmem:[%s4360 + $0x1a8] sm:$0xff]
    %v4415 = vld [vmem:[%s4360 + $0x1b0] sm:$0xff]
    %v4416 = vld [vmem:[%s4360 + $0x1b8] sm:$0xff]
    %v4417 = vld [vmem:[%s4360 + $0x1c0] sm:$0xff]
    %v4418 = vld [vmem:[%s4360 + $0x1c8] sm:$0xff]
    %v4419 = vld [vmem:[%s4360 + $0x1d0] sm:$0xff]
    %v4420 = vld [vmem:[%s4360 + $0x1d8] sm:$0xff]
    %v4421 = vld [vmem:[%s4360 + $0x1e0] sm:$0xff]
    %v4422 = vld [vmem:[%s4360 + $0x1e8] sm:$0xff]
    %v4423 = vld [vmem:[%s4360 + $0x1f0] sm:$0xff]
    %v4424 = vld [vmem:[%s4360 + $0x1f8] sm:$0xff]
    %v4433 = vunpack.c.l.b16 %v4288
    %v4434 = vunpack.c.l.b16 %v4289
    %v4435 = vunpack.c.l.b16 %v4290
    %v4436 = vunpack.c.l.b16 %v4291
    %v4437 = vunpack.c.l.b16 %v4292
    %v4438 = vunpack.c.l.b16 %v4293
    %v4439 = vunpack.c.l.b16 %v4294
    %v4440 = vunpack.c.l.b16 %v4295
    %v4441 = vrot.slane %v4433, 1
    %vm4442 = vcmask 1041409
    %v4443 = vsel %vm4442, %v4434, %v4441
    %v4444 = vrot.slane %v4435, 7
    %vm4445 = vcmask 1042434
    %v4446 = vsel %vm4445, %v4444, %v4443
    %v4447 = vrot.slane %v4436, 6
    %vm4448 = vcmask 1043459
    %v4449 = vsel %vm4448, %v4447, %v4446
    %v4450 = vrot.slane %v4437, 5
    %vm4451 = vcmask 1044484
    %v4452 = vsel %vm4451, %v4450, %v4449
    %v4453 = vrot.slane %v4438, 4
    %vm4454 = vcmask 1045509
    %v4455 = vsel %vm4454, %v4453, %v4452
    %v4456 = vrot.slane %v4439, 3
    %vm4457 = vcmask 1046534
    %v4458 = vsel %vm4457, %v4456, %v4455
    %v4459 = vrot.slane %v4440, 2
    %vm4460 = vcmask 1047559
    %v4461 = vsel %vm4460, %v4459, %v4458
    %v4462 = vpack.c.b16 %v4461, %v4461
    %v4528 = vunpack.c.l.b16 %v4361
    %v4529 = vunpack.c.h.b16 %v4361
    %v4530 = vunpack.c.l.b16 %v4362
    %v4531 = vunpack.c.h.b16 %v4362
    %v4532 = vunpack.c.l.b16 %v4363
    %v4533 = vunpack.c.h.b16 %v4363
    %v4534 = vunpack.c.l.b16 %v4364
    %v4535 = vunpack.c.h.b16 %v4364
    %v4536 = vunpack.c.l.b16 %v4365
    %v4537 = vunpack.c.h.b16 %v4365
    %v4538 = vunpack.c.l.b16 %v4366
    %v4539 = vunpack.c.h.b16 %v4366
    %v4540 = vunpack.c.l.b16 %v4367
    %v4541 = vunpack.c.h.b16 %v4367
    %v4542 = vunpack.c.l.b16 %v4368
    %v4543 = vunpack.c.h.b16 %v4368
    %v4544 = vunpack.c.l.b16 %v4369
    %v4545 = vunpack.c.h.b16 %v4369
    %v4546 = vunpack.c.l.b16 %v4370
    %v4547 = vunpack.c.h.b16 %v4370
    %v4548 = vunpack.c.l.b16 %v4371
    %v4549 = vunpack.c.h.b16 %v4371
    %v4550 = vunpack.c.l.b16 %v4372
    %v4551 = vunpack.c.h.b16 %v4372
    %v4552 = vunpack.c.l.b16 %v4373
    %v4553 = vunpack.c.h.b16 %v4373
    %v4554 = vunpack.c.l.b16 %v4374
    %v4555 = vunpack.c.h.b16 %v4374
    %v4556 = vunpack.c.l.b16 %v4375
    %v4557 = vunpack.c.h.b16 %v4375
    %v4558 = vunpack.c.l.b16 %v4376
    %v4559 = vunpack.c.h.b16 %v4376
    %v4560 = vunpack.c.l.b16 %v4377
    %v4561 = vunpack.c.h.b16 %v4377
    %v4562 = vunpack.c.l.b16 %v4378
    %v4563 = vunpack.c.h.b16 %v4378
    %v4564 = vunpack.c.l.b16 %v4379
    %v4565 = vunpack.c.h.b16 %v4379
    %v4566 = vunpack.c.l.b16 %v4380
    %v4567 = vunpack.c.h.b16 %v4380
    %v4568 = vunpack.c.l.b16 %v4381
    %v4569 = vunpack.c.h.b16 %v4381
    %v4570 = vunpack.c.l.b16 %v4382
    %v4571 = vunpack.c.h.b16 %v4382
    %v4572 = vunpack.c.l.b16 %v4383
    %v4573 = vunpack.c.h.b16 %v4383
    %v4574 = vunpack.c.l.b16 %v4384
    %v4575 = vunpack.c.h.b16 %v4384
    %v4576 = vunpack.c.l.b16 %v4385
    %v4577 = vunpack.c.h.b16 %v4385
    %v4578 = vunpack.c.l.b16 %v4386
    %v4579 = vunpack.c.h.b16 %v4386
    %v4580 = vunpack.c.l.b16 %v4387
    %v4581 = vunpack.c.h.b16 %v4387
    %v4582 = vunpack.c.l.b16 %v4388
    %v4583 = vunpack.c.h.b16 %v4388
    %v4584 = vunpack.c.l.b16 %v4389
    %v4585 = vunpack.c.h.b16 %v4389
    %v4586 = vunpack.c.l.b16 %v4390
    %v4587 = vunpack.c.h.b16 %v4390
    %v4588 = vunpack.c.l.b16 %v4391
    %v4589 = vunpack.c.h.b16 %v4391
    %v4590 = vunpack.c.l.b16 %v4392
    %v4591 = vunpack.c.h.b16 %v4392
    %v4592 = vunpack.c.l.b16 %v4393
    %v4593 = vunpack.c.h.b16 %v4393
    %v4594 = vunpack.c.l.b16 %v4394
    %v4595 = vunpack.c.h.b16 %v4394
    %v4596 = vunpack.c.l.b16 %v4395
    %v4597 = vunpack.c.h.b16 %v4395
    %v4598 = vunpack.c.l.b16 %v4396
    %v4599 = vunpack.c.h.b16 %v4396
    %v4600 = vunpack.c.l.b16 %v4397
    %v4601 = vunpack.c.h.b16 %v4397
    %v4602 = vunpack.c.l.b16 %v4398
    %v4603 = vunpack.c.h.b16 %v4398
    %v4604 = vunpack.c.l.b16 %v4399
    %v4605 = vunpack.c.h.b16 %v4399
    %v4606 = vunpack.c.l.b16 %v4400
    %v4607 = vunpack.c.h.b16 %v4400
    %v4608 = vunpack.c.l.b16 %v4401
    %v4609 = vunpack.c.h.b16 %v4401
    %v4610 = vunpack.c.l.b16 %v4402
    %v4611 = vunpack.c.h.b16 %v4402
    %v4612 = vunpack.c.l.b16 %v4403
    %v4613 = vunpack.c.h.b16 %v4403
    %v4614 = vunpack.c.l.b16 %v4404
    %v4615 = vunpack.c.h.b16 %v4404
    %v4616 = vunpack.c.l.b16 %v4405
    %v4617 = vunpack.c.h.b16 %v4405
    %v4618 = vunpack.c.l.b16 %v4406
    %v4619 = vunpack.c.h.b16 %v4406
    %v4620 = vunpack.c.l.b16 %v4407
    %v4621 = vunpack.c.h.b16 %v4407
    %v4622 = vunpack.c.l.b16 %v4408
    %v4623 = vunpack.c.h.b16 %v4408
    %v4624 = vunpack.c.l.b16 %v4409
    %v4625 = vunpack.c.h.b16 %v4409
    %v4626 = vunpack.c.l.b16 %v4410
    %v4627 = vunpack.c.h.b16 %v4410
    %v4628 = vunpack.c.l.b16 %v4411
    %v4629 = vunpack.c.h.b16 %v4411
    %v4630 = vunpack.c.l.b16 %v4412
    %v4631 = vunpack.c.h.b16 %v4412
    %v4632 = vunpack.c.l.b16 %v4413
    %v4633 = vunpack.c.h.b16 %v4413
    %v4634 = vunpack.c.l.b16 %v4414
    %v4635 = vunpack.c.h.b16 %v4414
    %v4636 = vunpack.c.l.b16 %v4415
    %v4637 = vunpack.c.h.b16 %v4415
    %v4638 = vunpack.c.l.b16 %v4416
    %v4639 = vunpack.c.h.b16 %v4416
    %v4640 = vunpack.c.l.b16 %v4417
    %v4641 = vunpack.c.h.b16 %v4417
    %v4642 = vunpack.c.l.b16 %v4418
    %v4643 = vunpack.c.h.b16 %v4418
    %v4644 = vunpack.c.l.b16 %v4419
    %v4645 = vunpack.c.h.b16 %v4419
    %v4646 = vunpack.c.l.b16 %v4420
    %v4647 = vunpack.c.h.b16 %v4420
    %v4648 = vunpack.c.l.b16 %v4421
    %v4649 = vunpack.c.h.b16 %v4421
    %v4650 = vunpack.c.l.b16 %v4422
    %v4651 = vunpack.c.h.b16 %v4422
    %v4652 = vunpack.c.l.b16 %v4423
    %v4653 = vunpack.c.h.b16 %v4423
    %v4654 = vunpack.c.l.b16 %v4424
    %v4655 = vunpack.c.h.b16 %v4424
    %v4656 = vpack.c.b16 %v4536, %v4528
    %v4657 = vpack.c.b16 %v4537, %v4529
    %v4658 = vpack.c.b16 %v4538, %v4530
    %v4659 = vpack.c.b16 %v4539, %v4531
    %v4660 = vpack.c.b16 %v4540, %v4532
    %v4661 = vpack.c.b16 %v4541, %v4533
    %v4662 = vpack.c.b16 %v4542, %v4534
    %v4663 = vpack.c.b16 %v4543, %v4535
    %v4664 = vpack.c.b16 %v4552, %v4544
    %v4665 = vpack.c.b16 %v4553, %v4545
    %v4666 = vpack.c.b16 %v4554, %v4546
    %v4667 = vpack.c.b16 %v4555, %v4547
    %v4668 = vpack.c.b16 %v4556, %v4548
    %v4669 = vpack.c.b16 %v4557, %v4549
    %v4670 = vpack.c.b16 %v4558, %v4550
    %v4671 = vpack.c.b16 %v4559, %v4551
    %v4672 = vpack.c.b16 %v4568, %v4560
    %v4673 = vpack.c.b16 %v4569, %v4561
    %v4674 = vpack.c.b16 %v4570, %v4562
    %v4675 = vpack.c.b16 %v4571, %v4563
    %v4676 = vpack.c.b16 %v4572, %v4564
    %v4677 = vpack.c.b16 %v4573, %v4565
    %v4678 = vpack.c.b16 %v4574, %v4566
    %v4679 = vpack.c.b16 %v4575, %v4567
    %v4680 = vpack.c.b16 %v4584, %v4576
    %v4681 = vpack.c.b16 %v4585, %v4577
    %v4682 = vpack.c.b16 %v4586, %v4578
    %v4683 = vpack.c.b16 %v4587, %v4579
    %v4684 = vpack.c.b16 %v4588, %v4580
    %v4685 = vpack.c.b16 %v4589, %v4581
    %v4686 = vpack.c.b16 %v4590, %v4582
    %v4687 = vpack.c.b16 %v4591, %v4583
    %v4688 = vpack.c.b16 %v4600, %v4592
    %v4689 = vpack.c.b16 %v4601, %v4593
    %v4690 = vpack.c.b16 %v4602, %v4594
    %v4691 = vpack.c.b16 %v4603, %v4595
    %v4692 = vpack.c.b16 %v4604, %v4596
    %v4693 = vpack.c.b16 %v4605, %v4597
    %v4694 = vpack.c.b16 %v4606, %v4598
    %v4695 = vpack.c.b16 %v4607, %v4599
    %v4696 = vpack.c.b16 %v4616, %v4608
    %v4697 = vpack.c.b16 %v4617, %v4609
    %v4698 = vpack.c.b16 %v4618, %v4610
    %v4699 = vpack.c.b16 %v4619, %v4611
    %v4700 = vpack.c.b16 %v4620, %v4612
    %v4701 = vpack.c.b16 %v4621, %v4613
    %v4702 = vpack.c.b16 %v4622, %v4614
    %v4703 = vpack.c.b16 %v4623, %v4615
    %v4704 = vpack.c.b16 %v4632, %v4624
    %v4705 = vpack.c.b16 %v4633, %v4625
    %v4706 = vpack.c.b16 %v4634, %v4626
    %v4707 = vpack.c.b16 %v4635, %v4627
    %v4708 = vpack.c.b16 %v4636, %v4628
    %v4709 = vpack.c.b16 %v4637, %v4629
    %v4710 = vpack.c.b16 %v4638, %v4630
    %v4711 = vpack.c.b16 %v4639, %v4631
    %v4712 = vpack.c.b16 %v4648, %v4640
    %v4713 = vpack.c.b16 %v4649, %v4641
    %v4714 = vpack.c.b16 %v4650, %v4642
    %v4715 = vpack.c.b16 %v4651, %v4643
    %v4716 = vpack.c.b16 %v4652, %v4644
    %v4717 = vpack.c.b16 %v4653, %v4645
    %v4718 = vpack.c.b16 %v4654, %v4646
    %v4719 = vpack.c.b16 %v4655, %v4647
    %4784 = vmatpush.bf16.msra.mxu0 %v4712
    %4785 = vmatpush.bf16.msra.mxu0 %v4704
    %4786 = vmatpush.bf16.msra.mxu0 %v4696
    %4787 = vmatpush.bf16.msra.mxu0 %v4688
    %4788 = vmatpush.bf16.msra.mxu0 %v4680
    %4789 = vmatpush.bf16.msra.mxu0 %v4672
    %4790 = vmatpush.bf16.msra.mxu0 %v4664
    %4791 = vmatpush.bf16.msra.mxu0 %v4656
    %4792 = vmatmul.bf16.gmra.mxu0 %v4462
    %v4793 = vpop.f32.mrf.mxu0
    %v4794 = vadd.f32 0.0, %v4793
    %v4795 = vpop.f32.mrf.mxu0
    %4796 = vdwg.mxu0
    %4797 = vmatpush.bf16.msra.mxu0 %v4713
    %4798 = vmatpush.bf16.msra.mxu0 %v4705
    %4799 = vmatpush.bf16.msra.mxu0 %v4697
    %4800 = vmatpush.bf16.msra.mxu0 %v4689
    %4801 = vmatpush.bf16.msra.mxu0 %v4681
    %4802 = vmatpush.bf16.msra.mxu0 %v4673
    %4803 = vmatpush.bf16.msra.mxu0 %v4665
    %4804 = vmatpush.bf16.msra.mxu0 %v4657
    %4805 = vmatmul.bf16.gmra.mxu0 %v4462
    %v4806 = vpop.f32.mrf.mxu0
    %v4807 = vadd.f32 0.0, %v4806
    %v4808 = vpop.f32.mrf.mxu0
    %4809 = vdwg.mxu0
    %4810 = vmatpush.bf16.msra.mxu0 %v4714
    %4811 = vmatpush.bf16.msra.mxu0 %v4706
    %4812 = vmatpush.bf16.msra.mxu0 %v4698
    %4813 = vmatpush.bf16.msra.mxu0 %v4690
    %4814 = vmatpush.bf16.msra.mxu0 %v4682
    %4815 = vmatpush.bf16.msra.mxu0 %v4674
    %4816 = vmatpush.bf16.msra.mxu0 %v4666
    %4817 = vmatpush.bf16.msra.mxu0 %v4658
    %4818 = vmatmul.bf16.gmra.mxu0 %v4462
    %v4819 = vpop.f32.mrf.mxu0
    %v4820 = vadd.f32 0.0, %v4819
    %v4821 = vpop.f32.mrf.mxu0
    %4822 = vdwg.mxu0
    %4823 = vmatpush.bf16.msra.mxu0 %v4715
    %4824 = vmatpush.bf16.msra.mxu0 %v4707
    %4825 = vmatpush.bf16.msra.mxu0 %v4699
    %4826 = vmatpush.bf16.msra.mxu0 %v4691
    %4827 = vmatpush.bf16.msra.mxu0 %v4683
    %4828 = vmatpush.bf16.msra.mxu0 %v4675
    %4829 = vmatpush.bf16.msra.mxu0 %v4667
    %4830 = vmatpush.bf16.msra.mxu0 %v4659
    %4831 = vmatmul.bf16.gmra.mxu0 %v4462
    %v4832 = vpop.f32.mrf.mxu0
    %v4833 = vadd.f32 0.0, %v4832
    %v4834 = vpop.f32.mrf.mxu0
    %4835 = vdwg.mxu0
    %4836 = vmatpush.bf16.msra.mxu0 %v4716
    %4837 = vmatpush.bf16.msra.mxu0 %v4708
    %4838 = vmatpush.bf16.msra.mxu0 %v4700
    %4839 = vmatpush.bf16.msra.mxu0 %v4692
    %4840 = vmatpush.bf16.msra.mxu0 %v4684
    %4841 = vmatpush.bf16.msra.mxu0 %v4676
    %4842 = vmatpush.bf16.msra.mxu0 %v4668
    %4843 = vmatpush.bf16.msra.mxu0 %v4660
    %4844 = vmatmul.bf16.gmra.mxu0 %v4462
    %v4845 = vpop.f32.mrf.mxu0
    %v4846 = vadd.f32 0.0, %v4845
    %v4847 = vpop.f32.mrf.mxu0
    %4848 = vdwg.mxu0
    %4849 = vmatpush.bf16.msra.mxu0 %v4717
    %4850 = vmatpush.bf16.msra.mxu0 %v4709
    %4851 = vmatpush.bf16.msra.mxu0 %v4701
    %4852 = vmatpush.bf16.msra.mxu0 %v4693
    %4853 = vmatpush.bf16.msra.mxu0 %v4685
    %4854 = vmatpush.bf16.msra.mxu0 %v4677
    %4855 = vmatpush.bf16.msra.mxu0 %v4669
    %4856 = vmatpush.bf16.msra.mxu0 %v4661
    %4857 = vmatmul.bf16.gmra.mxu0 %v4462
    %v4858 = vpop.f32.mrf.mxu0
    %v4859 = vadd.f32 0.0, %v4858
    %v4860 = vpop.f32.mrf.mxu0
    %4861 = vdwg.mxu0
    %4862 = vmatpush.bf16.msra.mxu0 %v4718
    %4863 = vmatpush.bf16.msra.mxu0 %v4710
    %4864 = vmatpush.bf16.msra.mxu0 %v4702
    %4865 = vmatpush.bf16.msra.mxu0 %v4694
    %4866 = vmatpush.bf16.msra.mxu0 %v4686
    %4867 = vmatpush.bf16.msra.mxu0 %v4678
    %4868 = vmatpush.bf16.msra.mxu0 %v4670
    %4869 = vmatpush.bf16.msra.mxu0 %v4662
    %4870 = vmatmul.bf16.gmra.mxu0 %v4462
    %v4871 = vpop.f32.mrf.mxu0
    %v4872 = vadd.f32 0.0, %v4871
    %v4873 = vpop.f32.mrf.mxu0
    %4874 = vdwg.mxu0
    %4875 = vmatpush.bf16.msra.mxu0 %v4719
    %4876 = vmatpush.bf16.msra.mxu0 %v4711
    %4877 = vmatpush.bf16.msra.mxu0 %v4703
    %4878 = vmatpush.bf16.msra.mxu0 %v4695
    %4879 = vmatpush.bf16.msra.mxu0 %v4687
    %4880 = vmatpush.bf16.msra.mxu0 %v4679
    %4881 = vmatpush.bf16.msra.mxu0 %v4671
    %4882 = vmatpush.bf16.msra.mxu0 %v4663
    %4883 = vmatmul.bf16.gmra.mxu0 %v4462
    %v4884 = vpop.f32.mrf.mxu0
    %v4885 = vadd.f32 0.0, %v4884
    %v4886 = vpop.f32.mrf.mxu0
    %4887 = vdwg.mxu0
    %v4888 = vrot.slane %v4434, 7
    %v4889 = vsel %vm4442, %v4888, %v4433
    %v4890 = vrot.slane %v4435, 6
    %v4891 = vsel %vm4445, %v4890, %v4889
    %v4892 = vrot.slane %v4436, 5
    %v4893 = vsel %vm4448, %v4892, %v4891
    %v4894 = vrot.slane %v4437, 4
    %v4895 = vsel %vm4451, %v4894, %v4893
    %v4896 = vrot.slane %v4438, 3
    %v4897 = vsel %vm4454, %v4896, %v4895
    %v4898 = vrot.slane %v4439, 2
    %v4899 = vsel %vm4457, %v4898, %v4897
    %v4900 = vrot.slane %v4440, 1
    %v4901 = vsel %vm4460, %v4900, %v4899
    %v4902 = vpack.c.b16 %v4901, %v4901
    %v4968 = vunpack.c.l.b16 %v4296
    %v4969 = vunpack.c.h.b16 %v4296
    %v4970 = vunpack.c.l.b16 %v4297
    %v4971 = vunpack.c.h.b16 %v4297
    %v4972 = vunpack.c.l.b16 %v4298
    %v4973 = vunpack.c.h.b16 %v4298
    %v4974 = vunpack.c.l.b16 %v4299
    %v4975 = vunpack.c.h.b16 %v4299
    %v4976 = vunpack.c.l.b16 %v4300
    %v4977 = vunpack.c.h.b16 %v4300
    %v4978 = vunpack.c.l.b16 %v4301
    %v4979 = vunpack.c.h.b16 %v4301
    %v4980 = vunpack.c.l.b16 %v4302
    %v4981 = vunpack.c.h.b16 %v4302
    %v4982 = vunpack.c.l.b16 %v4303
    %v4983 = vunpack.c.h.b16 %v4303
    %v4984 = vunpack.c.l.b16 %v4304
    %v4985 = vunpack.c.h.b16 %v4304
    %v4986 = vunpack.c.l.b16 %v4305
    %v4987 = vunpack.c.h.b16 %v4305
    %v4988 = vunpack.c.l.b16 %v4306
    %v4989 = vunpack.c.h.b16 %v4306
    %v4990 = vunpack.c.l.b16 %v4307
    %v4991 = vunpack.c.h.b16 %v4307
    %v4992 = vunpack.c.l.b16 %v4308
    %v4993 = vunpack.c.h.b16 %v4308
    %v4994 = vunpack.c.l.b16 %v4309
    %v4995 = vunpack.c.h.b16 %v4309
    %v4996 = vunpack.c.l.b16 %v4310
    %v4997 = vunpack.c.h.b16 %v4310
    %v4998 = vunpack.c.l.b16 %v4311
    %v4999 = vunpack.c.h.b16 %v4311
    %v5000 = vunpack.c.l.b16 %v4312
    %v5001 = vunpack.c.h.b16 %v4312
    %v5002 = vunpack.c.l.b16 %v4313
    %v5003 = vunpack.c.h.b16 %v4313
    %v5004 = vunpack.c.l.b16 %v4314
    %v5005 = vunpack.c.h.b16 %v4314
    %v5006 = vunpack.c.l.b16 %v4315
    %v5007 = vunpack.c.h.b16 %v4315
    %v5008 = vunpack.c.l.b16 %v4316
    %v5009 = vunpack.c.h.b16 %v4316
    %v5010 = vunpack.c.l.b16 %v4317
    %v5011 = vunpack.c.h.b16 %v4317
    %v5012 = vunpack.c.l.b16 %v4318
    %v5013 = vunpack.c.h.b16 %v4318
    %v5014 = vunpack.c.l.b16 %v4319
    %v5015 = vunpack.c.h.b16 %v4319
    %v5016 = vunpack.c.l.b16 %v4320
    %v5017 = vunpack.c.h.b16 %v4320
    %v5018 = vunpack.c.l.b16 %v4321
    %v5019 = vunpack.c.h.b16 %v4321
    %v5020 = vunpack.c.l.b16 %v4322
    %v5021 = vunpack.c.h.b16 %v4322
    %v5022 = vunpack.c.l.b16 %v4323
    %v5023 = vunpack.c.h.b16 %v4323
    %v5024 = vunpack.c.l.b16 %v4324
    %v5025 = vunpack.c.h.b16 %v4324
    %v5026 = vunpack.c.l.b16 %v4325
    %v5027 = vunpack.c.h.b16 %v4325
    %v5028 = vunpack.c.l.b16 %v4326
    %v5029 = vunpack.c.h.b16 %v4326
    %v5030 = vunpack.c.l.b16 %v4327
    %v5031 = vunpack.c.h.b16 %v4327
    %v5032 = vunpack.c.l.b16 %v4328
    %v5033 = vunpack.c.h.b16 %v4328
    %v5034 = vunpack.c.l.b16 %v4329
    %v5035 = vunpack.c.h.b16 %v4329
    %v5036 = vunpack.c.l.b16 %v4330
    %v5037 = vunpack.c.h.b16 %v4330
    %v5038 = vunpack.c.l.b16 %v4331
    %v5039 = vunpack.c.h.b16 %v4331
    %v5040 = vunpack.c.l.b16 %v4332
    %v5041 = vunpack.c.h.b16 %v4332
    %v5042 = vunpack.c.l.b16 %v4333
    %v5043 = vunpack.c.h.b16 %v4333
    %v5044 = vunpack.c.l.b16 %v4334
    %v5045 = vunpack.c.h.b16 %v4334
    %v5046 = vunpack.c.l.b16 %v4335
    %v5047 = vunpack.c.h.b16 %v4335
    %v5048 = vunpack.c.l.b16 %v4336
    %v5049 = vunpack.c.h.b16 %v4336
    %v5050 = vunpack.c.l.b16 %v4337
    %v5051 = vunpack.c.h.b16 %v4337
    %v5052 = vunpack.c.l.b16 %v4338
    %v5053 = vunpack.c.h.b16 %v4338
    %v5054 = vunpack.c.l.b16 %v4339
    %v5055 = vunpack.c.h.b16 %v4339
    %v5056 = vunpack.c.l.b16 %v4340
    %v5057 = vunpack.c.h.b16 %v4340
    %v5058 = vunpack.c.l.b16 %v4341
    %v5059 = vunpack.c.h.b16 %v4341
    %v5060 = vunpack.c.l.b16 %v4342
    %v5061 = vunpack.c.h.b16 %v4342
    %v5062 = vunpack.c.l.b16 %v4343
    %v5063 = vunpack.c.h.b16 %v4343
    %v5064 = vunpack.c.l.b16 %v4344
    %v5065 = vunpack.c.h.b16 %v4344
    %v5066 = vunpack.c.l.b16 %v4345
    %v5067 = vunpack.c.h.b16 %v4345
    %v5068 = vunpack.c.l.b16 %v4346
    %v5069 = vunpack.c.h.b16 %v4346
    %v5070 = vunpack.c.l.b16 %v4347
    %v5071 = vunpack.c.h.b16 %v4347
    %v5072 = vunpack.c.l.b16 %v4348
    %v5073 = vunpack.c.h.b16 %v4348
    %v5074 = vunpack.c.l.b16 %v4349
    %v5075 = vunpack.c.h.b16 %v4349
    %v5076 = vunpack.c.l.b16 %v4350
    %v5077 = vunpack.c.h.b16 %v4350
    %v5078 = vunpack.c.l.b16 %v4351
    %v5079 = vunpack.c.h.b16 %v4351
    %v5080 = vunpack.c.l.b16 %v4352
    %v5081 = vunpack.c.h.b16 %v4352
    %v5082 = vunpack.c.l.b16 %v4353
    %v5083 = vunpack.c.h.b16 %v4353
    %v5084 = vunpack.c.l.b16 %v4354
    %v5085 = vunpack.c.h.b16 %v4354
    %v5086 = vunpack.c.l.b16 %v4355
    %v5087 = vunpack.c.h.b16 %v4355
    %v5088 = vunpack.c.l.b16 %v4356
    %v5089 = vunpack.c.h.b16 %v4356
    %v5090 = vunpack.c.l.b16 %v4357
    %v5091 = vunpack.c.h.b16 %v4357
    %v5092 = vunpack.c.l.b16 %v4358
    %v5093 = vunpack.c.h.b16 %v4358
    %v5094 = vunpack.c.l.b16 %v4359
    %v5095 = vunpack.c.h.b16 %v4359
    %v5096 = vpack.c.b16 %v4976, %v4968
    %v5097 = vpack.c.b16 %v4977, %v4969
    %v5098 = vpack.c.b16 %v4978, %v4970
    %v5099 = vpack.c.b16 %v4979, %v4971
    %v5100 = vpack.c.b16 %v4980, %v4972
    %v5101 = vpack.c.b16 %v4981, %v4973
    %v5102 = vpack.c.b16 %v4982, %v4974
    %v5103 = vpack.c.b16 %v4983, %v4975
    %v5104 = vpack.c.b16 %v4992, %v4984
    %v5105 = vpack.c.b16 %v4993, %v4985
    %v5106 = vpack.c.b16 %v4994, %v4986
    %v5107 = vpack.c.b16 %v4995, %v4987
    %v5108 = vpack.c.b16 %v4996, %v4988
    %v5109 = vpack.c.b16 %v4997, %v4989
    %v5110 = vpack.c.b16 %v4998, %v4990
    %v5111 = vpack.c.b16 %v4999, %v4991
    %v5112 = vpack.c.b16 %v5008, %v5000
    %v5113 = vpack.c.b16 %v5009, %v5001
    %v5114 = vpack.c.b16 %v5010, %v5002
    %v5115 = vpack.c.b16 %v5011, %v5003
    %v5116 = vpack.c.b16 %v5012, %v5004
    %v5117 = vpack.c.b16 %v5013, %v5005
    %v5118 = vpack.c.b16 %v5014, %v5006
    %v5119 = vpack.c.b16 %v5015, %v5007
    %v5120 = vpack.c.b16 %v5024, %v5016
    %v5121 = vpack.c.b16 %v5025, %v5017
    %v5122 = vpack.c.b16 %v5026, %v5018
    %v5123 = vpack.c.b16 %v5027, %v5019
    %v5124 = vpack.c.b16 %v5028, %v5020
    %v5125 = vpack.c.b16 %v5029, %v5021
    %v5126 = vpack.c.b16 %v5030, %v5022
    %v5127 = vpack.c.b16 %v5031, %v5023
    %v5128 = vpack.c.b16 %v5040, %v5032
    %v5129 = vpack.c.b16 %v5041, %v5033
    %v5130 = vpack.c.b16 %v5042, %v5034
    %v5131 = vpack.c.b16 %v5043, %v5035
    %v5132 = vpack.c.b16 %v5044, %v5036
    %v5133 = vpack.c.b16 %v5045, %v5037
    %v5134 = vpack.c.b16 %v5046, %v5038
    %v5135 = vpack.c.b16 %v5047, %v5039
    %v5136 = vpack.c.b16 %v5056, %v5048
    %v5137 = vpack.c.b16 %v5057, %v5049
    %v5138 = vpack.c.b16 %v5058, %v5050
    %v5139 = vpack.c.b16 %v5059, %v5051
    %v5140 = vpack.c.b16 %v5060, %v5052
    %v5141 = vpack.c.b16 %v5061, %v5053
    %v5142 = vpack.c.b16 %v5062, %v5054
    %v5143 = vpack.c.b16 %v5063, %v5055
    %v5144 = vpack.c.b16 %v5072, %v5064
    %v5145 = vpack.c.b16 %v5073, %v5065
    %v5146 = vpack.c.b16 %v5074, %v5066
    %v5147 = vpack.c.b16 %v5075, %v5067
    %v5148 = vpack.c.b16 %v5076, %v5068
    %v5149 = vpack.c.b16 %v5077, %v5069
    %v5150 = vpack.c.b16 %v5078, %v5070
    %v5151 = vpack.c.b16 %v5079, %v5071
    %v5152 = vpack.c.b16 %v5088, %v5080
    %v5153 = vpack.c.b16 %v5089, %v5081
    %v5154 = vpack.c.b16 %v5090, %v5082
    %v5155 = vpack.c.b16 %v5091, %v5083
    %v5156 = vpack.c.b16 %v5092, %v5084
    %v5157 = vpack.c.b16 %v5093, %v5085
    %v5158 = vpack.c.b16 %v5094, %v5086
    %v5159 = vpack.c.b16 %v5095, %v5087
    %5224 = vmatpush.bf16.msra.mxu0 %v5152
    %5225 = vmatpush.bf16.msra.mxu0 %v5144
    %5226 = vmatpush.bf16.msra.mxu0 %v5136
    %5227 = vmatpush.bf16.msra.mxu0 %v5128
    %5228 = vmatpush.bf16.msra.mxu0 %v5120
    %5229 = vmatpush.bf16.msra.mxu0 %v5112
    %5230 = vmatpush.bf16.msra.mxu0 %v5104
    %5231 = vmatpush.bf16.msra.mxu0 %v5096
    %5232 = vmatmul.bf16.gmra.mxu0 %v4902
    %v5233 = vpop.f32.mrf.mxu0
    %v5234 = vadd.f32 %v4794, %v5233
    %v5235 = vpop.f32.mrf.mxu0
    %5236 = vdwg.mxu0
    %5237 = vmatpush.bf16.msra.mxu0 %v5153
    %5238 = vmatpush.bf16.msra.mxu0 %v5145
    %5239 = vmatpush.bf16.msra.mxu0 %v5137
    %5240 = vmatpush.bf16.msra.mxu0 %v5129
    %5241 = vmatpush.bf16.msra.mxu0 %v5121
    %5242 = vmatpush.bf16.msra.mxu0 %v5113
    %5243 = vmatpush.bf16.msra.mxu0 %v5105
    %5244 = vmatpush.bf16.msra.mxu0 %v5097
    %5245 = vmatmul.bf16.gmra.mxu0 %v4902
    %v5246 = vpop.f32.mrf.mxu0
    %v5247 = vadd.f32 %v4807, %v5246
    %v5248 = vpop.f32.mrf.mxu0
    %5249 = vdwg.mxu0
    %5250 = vmatpush.bf16.msra.mxu0 %v5154
    %5251 = vmatpush.bf16.msra.mxu0 %v5146
    %5252 = vmatpush.bf16.msra.mxu0 %v5138
    %5253 = vmatpush.bf16.msra.mxu0 %v5130
    %5254 = vmatpush.bf16.msra.mxu0 %v5122
    %5255 = vmatpush.bf16.msra.mxu0 %v5114
    %5256 = vmatpush.bf16.msra.mxu0 %v5106
    %5257 = vmatpush.bf16.msra.mxu0 %v5098
    %5258 = vmatmul.bf16.gmra.mxu0 %v4902
    %v5259 = vpop.f32.mrf.mxu0
    %v5260 = vadd.f32 %v4820, %v5259
    %v5261 = vpop.f32.mrf.mxu0
    %5262 = vdwg.mxu0
    %5263 = vmatpush.bf16.msra.mxu0 %v5155
    %5264 = vmatpush.bf16.msra.mxu0 %v5147
    %5265 = vmatpush.bf16.msra.mxu0 %v5139
    %5266 = vmatpush.bf16.msra.mxu0 %v5131
    %5267 = vmatpush.bf16.msra.mxu0 %v5123
    %5268 = vmatpush.bf16.msra.mxu0 %v5115
    %5269 = vmatpush.bf16.msra.mxu0 %v5107
    %5270 = vmatpush.bf16.msra.mxu0 %v5099
    %5271 = vmatmul.bf16.gmra.mxu0 %v4902
    %v5272 = vpop.f32.mrf.mxu0
    %v5273 = vadd.f32 %v4833, %v5272
    %v5274 = vpop.f32.mrf.mxu0
    %5275 = vdwg.mxu0
    %5276 = vmatpush.bf16.msra.mxu0 %v5156
    %5277 = vmatpush.bf16.msra.mxu0 %v5148
    %5278 = vmatpush.bf16.msra.mxu0 %v5140
    %5279 = vmatpush.bf16.msra.mxu0 %v5132
    %5280 = vmatpush.bf16.msra.mxu0 %v5124
    %5281 = vmatpush.bf16.msra.mxu0 %v5116
    %5282 = vmatpush.bf16.msra.mxu0 %v5108
    %5283 = vmatpush.bf16.msra.mxu0 %v5100
    %5284 = vmatmul.bf16.gmra.mxu0 %v4902
    %v5285 = vpop.f32.mrf.mxu0
    %v5286 = vadd.f32 %v4846, %v5285
    %v5287 = vpop.f32.mrf.mxu0
    %5288 = vdwg.mxu0
    %5289 = vmatpush.bf16.msra.mxu0 %v5157
    %5290 = vmatpush.bf16.msra.mxu0 %v5149
    %5291 = vmatpush.bf16.msra.mxu0 %v5141
    %5292 = vmatpush.bf16.msra.mxu0 %v5133
    %5293 = vmatpush.bf16.msra.mxu0 %v5125
    %5294 = vmatpush.bf16.msra.mxu0 %v5117
    %5295 = vmatpush.bf16.msra.mxu0 %v5109
    %5296 = vmatpush.bf16.msra.mxu0 %v5101
    %5297 = vmatmul.bf16.gmra.mxu0 %v4902
    %v5298 = vpop.f32.mrf.mxu0
    %v5299 = vadd.f32 %v4859, %v5298
    %v5300 = vpop.f32.mrf.mxu0
    %5301 = vdwg.mxu0
    %5302 = vmatpush.bf16.msra.mxu0 %v5158
    %5303 = vmatpush.bf16.msra.mxu0 %v5150
    %5304 = vmatpush.bf16.msra.mxu0 %v5142
    %5305 = vmatpush.bf16.msra.mxu0 %v5134
    %5306 = vmatpush.bf16.msra.mxu0 %v5126
    %5307 = vmatpush.bf16.msra.mxu0 %v5118
    %5308 = vmatpush.bf16.msra.mxu0 %v5110
    %5309 = vmatpush.bf16.msra.mxu0 %v5102
    %5310 = vmatmul.bf16.gmra.mxu0 %v4902
    %v5311 = vpop.f32.mrf.mxu0
    %v5312 = vadd.f32 %v4872, %v5311
    %v5313 = vpop.f32.mrf.mxu0
    %5314 = vdwg.mxu0
    %5315 = vmatpush.bf16.msra.mxu0 %v5159
    %5316 = vmatpush.bf16.msra.mxu0 %v5151
    %5317 = vmatpush.bf16.msra.mxu0 %v5143
    %5318 = vmatpush.bf16.msra.mxu0 %v5135
    %5319 = vmatpush.bf16.msra.mxu0 %v5127
    %5320 = vmatpush.bf16.msra.mxu0 %v5119
    %5321 = vmatpush.bf16.msra.mxu0 %v5111
    %5322 = vmatpush.bf16.msra.mxu0 %v5103
    %5323 = vmatmul.bf16.gmra.mxu0 %v4902
    %v5324 = vpop.f32.mrf.mxu0
    %v5325 = vadd.f32 %v4885, %v5324
    %v5326 = vpop.f32.mrf.mxu0
    %5327 = vdwg.mxu0
    %s5328 = scalar_lea.vmem [#allocation13], 1024
    %v5329 = vld [vmem:[%s5328] sm:$0xff]
    %v5330 = vld [vmem:[%s5328 + $0x8] sm:$0xff]
    %v5331 = vld [vmem:[%s5328 + $0x10] sm:$0xff]
    %v5332 = vld [vmem:[%s5328 + $0x18] sm:$0xff]
    %v5333 = vld [vmem:[%s5328 + $0x20] sm:$0xff]
    %v5334 = vld [vmem:[%s5328 + $0x28] sm:$0xff]
    %v5335 = vld [vmem:[%s5328 + $0x30] sm:$0xff]
    %v5336 = vld [vmem:[%s5328 + $0x38] sm:$0xff]
    %v5337 = vld [vmem:[%s5328 + $0x40] sm:$0xff]
    %v5338 = vld [vmem:[%s5328 + $0x48] sm:$0xff]
    %v5339 = vld [vmem:[%s5328 + $0x50] sm:$0xff]
    %v5340 = vld [vmem:[%s5328 + $0x58] sm:$0xff]
    %v5341 = vld [vmem:[%s5328 + $0x60] sm:$0xff]
    %v5342 = vld [vmem:[%s5328 + $0x68] sm:$0xff]
    %v5343 = vld [vmem:[%s5328 + $0x70] sm:$0xff]
    %v5344 = vld [vmem:[%s5328 + $0x78] sm:$0xff]
    %v5345 = vld [vmem:[%s5328 + $0x80] sm:$0xff]
    %v5346 = vld [vmem:[%s5328 + $0x88] sm:$0xff]
    %v5347 = vld [vmem:[%s5328 + $0x90] sm:$0xff]
    %v5348 = vld [vmem:[%s5328 + $0x98] sm:$0xff]
    %v5349 = vld [vmem:[%s5328 + $0xa0] sm:$0xff]
    %v5350 = vld [vmem:[%s5328 + $0xa8] sm:$0xff]
    %v5351 = vld [vmem:[%s5328 + $0xb0] sm:$0xff]
    %v5352 = vld [vmem:[%s5328 + $0xb8] sm:$0xff]
    %v5353 = vld [vmem:[%s5328 + $0xc0] sm:$0xff]
    %v5354 = vld [vmem:[%s5328 + $0xc8] sm:$0xff]
    %v5355 = vld [vmem:[%s5328 + $0xd0] sm:$0xff]
    %v5356 = vld [vmem:[%s5328 + $0xd8] sm:$0xff]
    %v5357 = vld [vmem:[%s5328 + $0xe0] sm:$0xff]
    %v5358 = vld [vmem:[%s5328 + $0xe8] sm:$0xff]
    %v5359 = vld [vmem:[%s5328 + $0xf0] sm:$0xff]
    %v5360 = vld [vmem:[%s5328 + $0xf8] sm:$0xff]
    %v5361 = vld [vmem:[%s5328 + $0x100] sm:$0xff]
    %v5362 = vld [vmem:[%s5328 + $0x108] sm:$0xff]
    %v5363 = vld [vmem:[%s5328 + $0x110] sm:$0xff]
    %v5364 = vld [vmem:[%s5328 + $0x118] sm:$0xff]
    %v5365 = vld [vmem:[%s5328 + $0x120] sm:$0xff]
    %v5366 = vld [vmem:[%s5328 + $0x128] sm:$0xff]
    %v5367 = vld [vmem:[%s5328 + $0x130] sm:$0xff]
    %v5368 = vld [vmem:[%s5328 + $0x138] sm:$0xff]
    %v5369 = vld [vmem:[%s5328 + $0x140] sm:$0xff]
    %v5370 = vld [vmem:[%s5328 + $0x148] sm:$0xff]
    %v5371 = vld [vmem:[%s5328 + $0x150] sm:$0xff]
    %v5372 = vld [vmem:[%s5328 + $0x158] sm:$0xff]
    %v5373 = vld [vmem:[%s5328 + $0x160] sm:$0xff]
    %v5374 = vld [vmem:[%s5328 + $0x168] sm:$0xff]
    %v5375 = vld [vmem:[%s5328 + $0x170] sm:$0xff]
    %v5376 = vld [vmem:[%s5328 + $0x178] sm:$0xff]
    %v5377 = vld [vmem:[%s5328 + $0x180] sm:$0xff]
    %v5378 = vld [vmem:[%s5328 + $0x188] sm:$0xff]
    %v5379 = vld [vmem:[%s5328 + $0x190] sm:$0xff]
    %v5380 = vld [vmem:[%s5328 + $0x198] sm:$0xff]
    %v5381 = vld [vmem:[%s5328 + $0x1a0] sm:$0xff]
    %v5382 = vld [vmem:[%s5328 + $0x1a8] sm:$0xff]
    %v5383 = vld [vmem:[%s5328 + $0x1b0] sm:$0xff]
    %v5384 = vld [vmem:[%s5328 + $0x1b8] sm:$0xff]
    %v5385 = vld [vmem:[%s5328 + $0x1c0] sm:$0xff]
    %v5386 = vld [vmem:[%s5328 + $0x1c8] sm:$0xff]
    %v5387 = vld [vmem:[%s5328 + $0x1d0] sm:$0xff]
    %v5388 = vld [vmem:[%s5328 + $0x1d8] sm:$0xff]
    %v5389 = vld [vmem:[%s5328 + $0x1e0] sm:$0xff]
    %v5390 = vld [vmem:[%s5328 + $0x1e8] sm:$0xff]
    %v5391 = vld [vmem:[%s5328 + $0x1f0] sm:$0xff]
    %v5392 = vld [vmem:[%s5328 + $0x1f8] sm:$0xff]
    %v5393 = vrot.slane %v4433, 2
    %v5394 = vrot.slane %v4434, 1
    %v5395 = vsel %vm4442, %v5394, %v5393
    %v5396 = vsel %vm4445, %v4435, %v5395
    %v5397 = vrot.slane %v4436, 7
    %v5398 = vsel %vm4448, %v5397, %v5396
    %v5399 = vrot.slane %v4437, 6
    %v5400 = vsel %vm4451, %v5399, %v5398
    %v5401 = vrot.slane %v4438, 5
    %v5402 = vsel %vm4454, %v5401, %v5400
    %v5403 = vrot.slane %v4439, 4
    %v5404 = vsel %vm4457, %v5403, %v5402
    %v5405 = vrot.slane %v4440, 3
    %v5406 = vsel %vm4460, %v5405, %v5404
    %v5407 = vpack.c.b16 %v5406, %v5406
    %v5473 = vunpack.c.l.b16 %v5329
    %v5474 = vunpack.c.h.b16 %v5329
    %v5475 = vunpack.c.l.b16 %v5330
    %v5476 = vunpack.c.h.b16 %v5330
    %v5477 = vunpack.c.l.b16 %v5331
    %v5478 = vunpack.c.h.b16 %v5331
    %v5479 = vunpack.c.l.b16 %v5332
    %v5480 = vunpack.c.h.b16 %v5332
    %v5481 = vunpack.c.l.b16 %v5333
    %v5482 = vunpack.c.h.b16 %v5333
    %v5483 = vunpack.c.l.b16 %v5334
    %v5484 = vunpack.c.h.b16 %v5334
    %v5485 = vunpack.c.l.b16 %v5335
    %v5486 = vunpack.c.h.b16 %v5335
    %v5487 = vunpack.c.l.b16 %v5336
    %v5488 = vunpack.c.h.b16 %v5336
    %v5489 = vunpack.c.l.b16 %v5337
    %v5490 = vunpack.c.h.b16 %v5337
    %v5491 = vunpack.c.l.b16 %v5338
    %v5492 = vunpack.c.h.b16 %v5338
    %v5493 = vunpack.c.l.b16 %v5339
    %v5494 = vunpack.c.h.b16 %v5339
    %v5495 = vunpack.c.l.b16 %v5340
    %v5496 = vunpack.c.h.b16 %v5340
    %v5497 = vunpack.c.l.b16 %v5341
    %v5498 = vunpack.c.h.b16 %v5341
    %v5499 = vunpack.c.l.b16 %v5342
    %v5500 = vunpack.c.h.b16 %v5342
    %v5501 = vunpack.c.l.b16 %v5343
    %v5502 = vunpack.c.h.b16 %v5343
    %v5503 = vunpack.c.l.b16 %v5344
    %v5504 = vunpack.c.h.b16 %v5344
    %v5505 = vunpack.c.l.b16 %v5345
    %v5506 = vunpack.c.h.b16 %v5345
    %v5507 = vunpack.c.l.b16 %v5346
    %v5508 = vunpack.c.h.b16 %v5346
    %v5509 = vunpack.c.l.b16 %v5347
    %v5510 = vunpack.c.h.b16 %v5347
    %v5511 = vunpack.c.l.b16 %v5348
    %v5512 = vunpack.c.h.b16 %v5348
    %v5513 = vunpack.c.l.b16 %v5349
    %v5514 = vunpack.c.h.b16 %v5349
    %v5515 = vunpack.c.l.b16 %v5350
    %v5516 = vunpack.c.h.b16 %v5350
    %v5517 = vunpack.c.l.b16 %v5351
    %v5518 = vunpack.c.h.b16 %v5351
    %v5519 = vunpack.c.l.b16 %v5352
    %v5520 = vunpack.c.h.b16 %v5352
    %v5521 = vunpack.c.l.b16 %v5353
    %v5522 = vunpack.c.h.b16 %v5353
    %v5523 = vunpack.c.l.b16 %v5354
    %v5524 = vunpack.c.h.b16 %v5354
    %v5525 = vunpack.c.l.b16 %v5355
    %v5526 = vunpack.c.h.b16 %v5355
    %v5527 = vunpack.c.l.b16 %v5356
    %v5528 = vunpack.c.h.b16 %v5356
    %v5529 = vunpack.c.l.b16 %v5357
    %v5530 = vunpack.c.h.b16 %v5357
    %v5531 = vunpack.c.l.b16 %v5358
    %v5532 = vunpack.c.h.b16 %v5358
    %v5533 = vunpack.c.l.b16 %v5359
    %v5534 = vunpack.c.h.b16 %v5359
    %v5535 = vunpack.c.l.b16 %v5360
    %v5536 = vunpack.c.h.b16 %v5360
    %v5537 = vunpack.c.l.b16 %v5361
    %v5538 = vunpack.c.h.b16 %v5361
    %v5539 = vunpack.c.l.b16 %v5362
    %v5540 = vunpack.c.h.b16 %v5362
    %v5541 = vunpack.c.l.b16 %v5363
    %v5542 = vunpack.c.h.b16 %v5363
    %v5543 = vunpack.c.l.b16 %v5364
    %v5544 = vunpack.c.h.b16 %v5364
    %v5545 = vunpack.c.l.b16 %v5365
    %v5546 = vunpack.c.h.b16 %v5365
    %v5547 = vunpack.c.l.b16 %v5366
    %v5548 = vunpack.c.h.b16 %v5366
    %v5549 = vunpack.c.l.b16 %v5367
    %v5550 = vunpack.c.h.b16 %v5367
    %v5551 = vunpack.c.l.b16 %v5368
    %v5552 = vunpack.c.h.b16 %v5368
    %v5553 = vunpack.c.l.b16 %v5369
    %v5554 = vunpack.c.h.b16 %v5369
    %v5555 = vunpack.c.l.b16 %v5370
    %v5556 = vunpack.c.h.b16 %v5370
    %v5557 = vunpack.c.l.b16 %v5371
    %v5558 = vunpack.c.h.b16 %v5371
    %v5559 = vunpack.c.l.b16 %v5372
    %v5560 = vunpack.c.h.b16 %v5372
    %v5561 = vunpack.c.l.b16 %v5373
    %v5562 = vunpack.c.h.b16 %v5373
    %v5563 = vunpack.c.l.b16 %v5374
    %v5564 = vunpack.c.h.b16 %v5374
    %v5565 = vunpack.c.l.b16 %v5375
    %v5566 = vunpack.c.h.b16 %v5375
    %v5567 = vunpack.c.l.b16 %v5376
    %v5568 = vunpack.c.h.b16 %v5376
    %v5569 = vunpack.c.l.b16 %v5377
    %v5570 = vunpack.c.h.b16 %v5377
    %v5571 = vunpack.c.l.b16 %v5378
    %v5572 = vunpack.c.h.b16 %v5378
    %v5573 = vunpack.c.l.b16 %v5379
    %v5574 = vunpack.c.h.b16 %v5379
    %v5575 = vunpack.c.l.b16 %v5380
    %v5576 = vunpack.c.h.b16 %v5380
    %v5577 = vunpack.c.l.b16 %v5381
    %v5578 = vunpack.c.h.b16 %v5381
    %v5579 = vunpack.c.l.b16 %v5382
    %v5580 = vunpack.c.h.b16 %v5382
    %v5581 = vunpack.c.l.b16 %v5383
    %v5582 = vunpack.c.h.b16 %v5383
    %v5583 = vunpack.c.l.b16 %v5384
    %v5584 = vunpack.c.h.b16 %v5384
    %v5585 = vunpack.c.l.b16 %v5385
    %v5586 = vunpack.c.h.b16 %v5385
    %v5587 = vunpack.c.l.b16 %v5386
    %v5588 = vunpack.c.h.b16 %v5386
    %v5589 = vunpack.c.l.b16 %v5387
    %v5590 = vunpack.c.h.b16 %v5387
    %v5591 = vunpack.c.l.b16 %v5388
    %v5592 = vunpack.c.h.b16 %v5388
    %v5593 = vunpack.c.l.b16 %v5389
    %v5594 = vunpack.c.h.b16 %v5389
    %v5595 = vunpack.c.l.b16 %v5390
    %v5596 = vunpack.c.h.b16 %v5390
    %v5597 = vunpack.c.l.b16 %v5391
    %v5598 = vunpack.c.h.b16 %v5391
    %v5599 = vunpack.c.l.b16 %v5392
    %v5600 = vunpack.c.h.b16 %v5392
    %v5601 = vpack.c.b16 %v5481, %v5473
    %v5602 = vpack.c.b16 %v5482, %v5474
    %v5603 = vpack.c.b16 %v5483, %v5475
    %v5604 = vpack.c.b16 %v5484, %v5476
    %v5605 = vpack.c.b16 %v5485, %v5477
    %v5606 = vpack.c.b16 %v5486, %v5478
    %v5607 = vpack.c.b16 %v5487, %v5479
    %v5608 = vpack.c.b16 %v5488, %v5480
    %v5609 = vpack.c.b16 %v5497, %v5489
    %v5610 = vpack.c.b16 %v5498, %v5490
    %v5611 = vpack.c.b16 %v5499, %v5491
    %v5612 = vpack.c.b16 %v5500, %v5492
    %v5613 = vpack.c.b16 %v5501, %v5493
    %v5614 = vpack.c.b16 %v5502, %v5494
    %v5615 = vpack.c.b16 %v5503, %v5495
    %v5616 = vpack.c.b16 %v5504, %v5496
    %v5617 = vpack.c.b16 %v5513, %v5505
    %v5618 = vpack.c.b16 %v5514, %v5506
    %v5619 = vpack.c.b16 %v5515, %v5507
    %v5620 = vpack.c.b16 %v5516, %v5508
    %v5621 = vpack.c.b16 %v5517, %v5509
    %v5622 = vpack.c.b16 %v5518, %v5510
    %v5623 = vpack.c.b16 %v5519, %v5511
    %v5624 = vpack.c.b16 %v5520, %v5512
    %v5625 = vpack.c.b16 %v5529, %v5521
    %v5626 = vpack.c.b16 %v5530, %v5522
    %v5627 = vpack.c.b16 %v5531, %v5523
    %v5628 = vpack.c.b16 %v5532, %v5524
    %v5629 = vpack.c.b16 %v5533, %v5525
    %v5630 = vpack.c.b16 %v5534, %v5526
    %v5631 = vpack.c.b16 %v5535, %v5527
    %v5632 = vpack.c.b16 %v5536, %v5528
    %v5633 = vpack.c.b16 %v5545, %v5537
    %v5634 = vpack.c.b16 %v5546, %v5538
    %v5635 = vpack.c.b16 %v5547, %v5539
    %v5636 = vpack.c.b16 %v5548, %v5540
    %v5637 = vpack.c.b16 %v5549, %v5541
    %v5638 = vpack.c.b16 %v5550, %v5542
    %v5639 = vpack.c.b16 %v5551, %v5543
    %v5640 = vpack.c.b16 %v5552, %v5544
    %v5641 = vpack.c.b16 %v5561, %v5553
    %v5642 = vpack.c.b16 %v5562, %v5554
    %v5643 = vpack.c.b16 %v5563, %v5555
    %v5644 = vpack.c.b16 %v5564, %v5556
    %v5645 = vpack.c.b16 %v5565, %v5557
    %v5646 = vpack.c.b16 %v5566, %v5558
    %v5647 = vpack.c.b16 %v5567, %v5559
    %v5648 = vpack.c.b16 %v5568, %v5560
    %v5649 = vpack.c.b16 %v5577, %v5569
    %v5650 = vpack.c.b16 %v5578, %v5570
    %v5651 = vpack.c.b16 %v5579, %v5571
    %v5652 = vpack.c.b16 %v5580, %v5572
    %v5653 = vpack.c.b16 %v5581, %v5573
    %v5654 = vpack.c.b16 %v5582, %v5574
    %v5655 = vpack.c.b16 %v5583, %v5575
    %v5656 = vpack.c.b16 %v5584, %v5576
    %v5657 = vpack.c.b16 %v5593, %v5585
    %v5658 = vpack.c.b16 %v5594, %v5586
    %v5659 = vpack.c.b16 %v5595, %v5587
    %v5660 = vpack.c.b16 %v5596, %v5588
    %v5661 = vpack.c.b16 %v5597, %v5589
    %v5662 = vpack.c.b16 %v5598, %v5590
    %v5663 = vpack.c.b16 %v5599, %v5591
    %v5664 = vpack.c.b16 %v5600, %v5592
    %5729 = vmatpush.bf16.msra.mxu0 %v5657
    %5730 = vmatpush.bf16.msra.mxu0 %v5649
    %5731 = vmatpush.bf16.msra.mxu0 %v5641
    %5732 = vmatpush.bf16.msra.mxu0 %v5633
    %5733 = vmatpush.bf16.msra.mxu0 %v5625
    %5734 = vmatpush.bf16.msra.mxu0 %v5617
    %5735 = vmatpush.bf16.msra.mxu0 %v5609
    %5736 = vmatpush.bf16.msra.mxu0 %v5601
    %5737 = vmatmul.bf16.gmra.mxu0 %v5407
    %v5738 = vpop.f32.mrf.mxu0
    %v5739 = vadd.f32 0.0, %v5738
    %v5740 = vpop.f32.mrf.mxu0
    %5741 = vdwg.mxu0
    %5742 = vmatpush.bf16.msra.mxu0 %v5658
    %5743 = vmatpush.bf16.msra.mxu0 %v5650
    %5744 = vmatpush.bf16.msra.mxu0 %v5642
    %5745 = vmatpush.bf16.msra.mxu0 %v5634
    %5746 = vmatpush.bf16.msra.mxu0 %v5626
    %5747 = vmatpush.bf16.msra.mxu0 %v5618
    %5748 = vmatpush.bf16.msra.mxu0 %v5610
    %5749 = vmatpush.bf16.msra.mxu0 %v5602
    %5750 = vmatmul.bf16.gmra.mxu0 %v5407
    %v5751 = vpop.f32.mrf.mxu0
    %v5752 = vadd.f32 0.0, %v5751
    %v5753 = vpop.f32.mrf.mxu0
    %5754 = vdwg.mxu0
    %5755 = vmatpush.bf16.msra.mxu0 %v5659
    %5756 = vmatpush.bf16.msra.mxu0 %v5651
    %5757 = vmatpush.bf16.msra.mxu0 %v5643
    %5758 = vmatpush.bf16.msra.mxu0 %v5635
    %5759 = vmatpush.bf16.msra.mxu0 %v5627
    %5760 = vmatpush.bf16.msra.mxu0 %v5619
    %5761 = vmatpush.bf16.msra.mxu0 %v5611
    %5762 = vmatpush.bf16.msra.mxu0 %v5603
    %5763 = vmatmul.bf16.gmra.mxu0 %v5407
    %v5764 = vpop.f32.mrf.mxu0
    %v5765 = vadd.f32 0.0, %v5764
    %v5766 = vpop.f32.mrf.mxu0
    %5767 = vdwg.mxu0
    %5768 = vmatpush.bf16.msra.mxu0 %v5660
    %5769 = vmatpush.bf16.msra.mxu0 %v5652
    %5770 = vmatpush.bf16.msra.mxu0 %v5644
    %5771 = vmatpush.bf16.msra.mxu0 %v5636
    %5772 = vmatpush.bf16.msra.mxu0 %v5628
    %5773 = vmatpush.bf16.msra.mxu0 %v5620
    %5774 = vmatpush.bf16.msra.mxu0 %v5612
    %5775 = vmatpush.bf16.msra.mxu0 %v5604
    %5776 = vmatmul.bf16.gmra.mxu0 %v5407
    %v5777 = vpop.f32.mrf.mxu0
    %v5778 = vadd.f32 0.0, %v5777
    %v5779 = vpop.f32.mrf.mxu0
    %5780 = vdwg.mxu0
    %5781 = vmatpush.bf16.msra.mxu0 %v5661
    %5782 = vmatpush.bf16.msra.mxu0 %v5653
    %5783 = vmatpush.bf16.msra.mxu0 %v5645
    %5784 = vmatpush.bf16.msra.mxu0 %v5637
    %5785 = vmatpush.bf16.msra.mxu0 %v5629
    %5786 = vmatpush.bf16.msra.mxu0 %v5621
    %5787 = vmatpush.bf16.msra.mxu0 %v5613
    %5788 = vmatpush.bf16.msra.mxu0 %v5605
    %5789 = vmatmul.bf16.gmra.mxu0 %v5407
    %v5790 = vpop.f32.mrf.mxu0
    %v5791 = vadd.f32 0.0, %v5790
    %v5792 = vpop.f32.mrf.mxu0
    %5793 = vdwg.mxu0
    %5794 = vmatpush.bf16.msra.mxu0 %v5662
    %5795 = vmatpush.bf16.msra.mxu0 %v5654
    %5796 = vmatpush.bf16.msra.mxu0 %v5646
    %5797 = vmatpush.bf16.msra.mxu0 %v5638
    %5798 = vmatpush.bf16.msra.mxu0 %v5630
    %5799 = vmatpush.bf16.msra.mxu0 %v5622
    %5800 = vmatpush.bf16.msra.mxu0 %v5614
    %5801 = vmatpush.bf16.msra.mxu0 %v5606
    %5802 = vmatmul.bf16.gmra.mxu0 %v5407
    %v5803 = vpop.f32.mrf.mxu0
    %v5804 = vadd.f32 0.0, %v5803
    %v5805 = vpop.f32.mrf.mxu0
    %5806 = vdwg.mxu0
    %5807 = vmatpush.bf16.msra.mxu0 %v5663
    %5808 = vmatpush.bf16.msra.mxu0 %v5655
    %5809 = vmatpush.bf16.msra.mxu0 %v5647
    %5810 = vmatpush.bf16.msra.mxu0 %v5639
    %5811 = vmatpush.bf16.msra.mxu0 %v5631
    %5812 = vmatpush.bf16.msra.mxu0 %v5623
    %5813 = vmatpush.bf16.msra.mxu0 %v5615
    %5814 = vmatpush.bf16.msra.mxu0 %v5607
    %5815 = vmatmul.bf16.gmra.mxu0 %v5407
    %v5816 = vpop.f32.mrf.mxu0
    %v5817 = vadd.f32 0.0, %v5816
    %v5818 = vpop.f32.mrf.mxu0
    %5819 = vdwg.mxu0
    %5820 = vmatpush.bf16.msra.mxu0 %v5664
    %5821 = vmatpush.bf16.msra.mxu0 %v5656
    %5822 = vmatpush.bf16.msra.mxu0 %v5648
    %5823 = vmatpush.bf16.msra.mxu0 %v5640
    %5824 = vmatpush.bf16.msra.mxu0 %v5632
    %5825 = vmatpush.bf16.msra.mxu0 %v5624
    %5826 = vmatpush.bf16.msra.mxu0 %v5616
    %5827 = vmatpush.bf16.msra.mxu0 %v5608
    %5828 = vmatmul.bf16.gmra.mxu0 %v5407
    %v5829 = vpop.f32.mrf.mxu0
    %v5830 = vadd.f32 0.0, %v5829
    %v5831 = vpop.f32.mrf.mxu0
    %5832 = vdwg.mxu0
    %v5833 = vadd.f32 %v5234, %v5739
    %v5834 = vadd.f32 %v5247, %v5752
    %v5835 = vadd.f32 %v5260, %v5765
    %v5836 = vadd.f32 %v5273, %v5778
    %v5837 = vadd.f32 %v5286, %v5791
    %v5838 = vadd.f32 %v5299, %v5804
    %v5839 = vadd.f32 %v5312, %v5817
    %v5840 = vadd.f32 %v5325, %v5830
    %s5841 = scalar_lea.vmem [#allocation13], 1536
    %v5842 = vld [vmem:[%s5841] sm:$0xff]
    %v5843 = vld [vmem:[%s5841 + $0x8] sm:$0xff]
    %v5844 = vld [vmem:[%s5841 + $0x10] sm:$0xff]
    %v5845 = vld [vmem:[%s5841 + $0x18] sm:$0xff]
    %v5846 = vld [vmem:[%s5841 + $0x20] sm:$0xff]
    %v5847 = vld [vmem:[%s5841 + $0x28] sm:$0xff]
    %v5848 = vld [vmem:[%s5841 + $0x30] sm:$0xff]
    %v5849 = vld [vmem:[%s5841 + $0x38] sm:$0xff]
    %v5850 = vld [vmem:[%s5841 + $0x40] sm:$0xff]
    %v5851 = vld [vmem:[%s5841 + $0x48] sm:$0xff]
    %v5852 = vld [vmem:[%s5841 + $0x50] sm:$0xff]
    %v5853 = vld [vmem:[%s5841 + $0x58] sm:$0xff]
    %v5854 = vld [vmem:[%s5841 + $0x60] sm:$0xff]
    %v5855 = vld [vmem:[%s5841 + $0x68] sm:$0xff]
    %v5856 = vld [vmem:[%s5841 + $0x70] sm:$0xff]
    %v5857 = vld [vmem:[%s5841 + $0x78] sm:$0xff]
    %v5858 = vld [vmem:[%s5841 + $0x80] sm:$0xff]
    %v5859 = vld [vmem:[%s5841 + $0x88] sm:$0xff]
    %v5860 = vld [vmem:[%s5841 + $0x90] sm:$0xff]
    %v5861 = vld [vmem:[%s5841 + $0x98] sm:$0xff]
    %v5862 = vld [vmem:[%s5841 + $0xa0] sm:$0xff]
    %v5863 = vld [vmem:[%s5841 + $0xa8] sm:$0xff]
    %v5864 = vld [vmem:[%s5841 + $0xb0] sm:$0xff]
    %v5865 = vld [vmem:[%s5841 + $0xb8] sm:$0xff]
    %v5866 = vld [vmem:[%s5841 + $0xc0] sm:$0xff]
    %v5867 = vld [vmem:[%s5841 + $0xc8] sm:$0xff]
    %v5868 = vld [vmem:[%s5841 + $0xd0] sm:$0xff]
    %v5869 = vld [vmem:[%s5841 + $0xd8] sm:$0xff]
    %v5870 = vld [vmem:[%s5841 + $0xe0] sm:$0xff]
    %v5871 = vld [vmem:[%s5841 + $0xe8] sm:$0xff]
    %v5872 = vld [vmem:[%s5841 + $0xf0] sm:$0xff]
    %v5873 = vld [vmem:[%s5841 + $0xf8] sm:$0xff]
    %v5874 = vld [vmem:[%s5841 + $0x100] sm:$0xff]
    %v5875 = vld [vmem:[%s5841 + $0x108] sm:$0xff]
    %v5876 = vld [vmem:[%s5841 + $0x110] sm:$0xff]
    %v5877 = vld [vmem:[%s5841 + $0x118] sm:$0xff]
    %v5878 = vld [vmem:[%s5841 + $0x120] sm:$0xff]
    %v5879 = vld [vmem:[%s5841 + $0x128] sm:$0xff]
    %v5880 = vld [vmem:[%s5841 + $0x130] sm:$0xff]
    %v5881 = vld [vmem:[%s5841 + $0x138] sm:$0xff]
    %v5882 = vld [vmem:[%s5841 + $0x140] sm:$0xff]
    %v5883 = vld [vmem:[%s5841 + $0x148] sm:$0xff]
    %v5884 = vld [vmem:[%s5841 + $0x150] sm:$0xff]
    %v5885 = vld [vmem:[%s5841 + $0x158] sm:$0xff]
    %v5886 = vld [vmem:[%s5841 + $0x160] sm:$0xff]
    %v5887 = vld [vmem:[%s5841 + $0x168] sm:$0xff]
    %v5888 = vld [vmem:[%s5841 + $0x170] sm:$0xff]
    %v5889 = vld [vmem:[%s5841 + $0x178] sm:$0xff]
    %v5890 = vld [vmem:[%s5841 + $0x180] sm:$0xff]
    %v5891 = vld [vmem:[%s5841 + $0x188] sm:$0xff]
    %v5892 = vld [vmem:[%s5841 + $0x190] sm:$0xff]
    %v5893 = vld [vmem:[%s5841 + $0x198] sm:$0xff]
    %v5894 = vld [vmem:[%s5841 + $0x1a0] sm:$0xff]
    %v5895 = vld [vmem:[%s5841 + $0x1a8] sm:$0xff]
    %v5896 = vld [vmem:[%s5841 + $0x1b0] sm:$0xff]
    %v5897 = vld [vmem:[%s5841 + $0x1b8] sm:$0xff]
    %v5898 = vld [vmem:[%s5841 + $0x1c0] sm:$0xff]
    %v5899 = vld [vmem:[%s5841 + $0x1c8] sm:$0xff]
    %v5900 = vld [vmem:[%s5841 + $0x1d0] sm:$0xff]
    %v5901 = vld [vmem:[%s5841 + $0x1d8] sm:$0xff]
    %v5902 = vld [vmem:[%s5841 + $0x1e0] sm:$0xff]
    %v5903 = vld [vmem:[%s5841 + $0x1e8] sm:$0xff]
    %v5904 = vld [vmem:[%s5841 + $0x1f0] sm:$0xff]
    %v5905 = vld [vmem:[%s5841 + $0x1f8] sm:$0xff]
    %v5906 = vrot.slane %v4433, 3
    %v5907 = vrot.slane %v4434, 2
    %v5908 = vsel %vm4442, %v5907, %v5906
    %v5909 = vrot.slane %v4435, 1
    %v5910 = vsel %vm4445, %v5909, %v5908
    %v5911 = vsel %vm4448, %v4436, %v5910
    %v5912 = vrot.slane %v4437, 7
    %v5913 = vsel %vm4451, %v5912, %v5911
    %v5914 = vrot.slane %v4438, 6
    %v5915 = vsel %vm4454, %v5914, %v5913
    %v5916 = vrot.slane %v4439, 5
    %v5917 = vsel %vm4457, %v5916, %v5915
    %v5918 = vrot.slane %v4440, 4
    %v5919 = vsel %vm4460, %v5918, %v5917
    %v5920 = vpack.c.b16 %v5919, %v5919
    %v5986 = vunpack.c.l.b16 %v5842
    %v5987 = vunpack.c.h.b16 %v5842
    %v5988 = vunpack.c.l.b16 %v5843
    %v5989 = vunpack.c.h.b16 %v5843
    %v5990 = vunpack.c.l.b16 %v5844
    %v5991 = vunpack.c.h.b16 %v5844
    %v5992 = vunpack.c.l.b16 %v5845
    %v5993 = vunpack.c.h.b16 %v5845
    %v5994 = vunpack.c.l.b16 %v5846
    %v5995 = vunpack.c.h.b16 %v5846
    %v5996 = vunpack.c.l.b16 %v5847
    %v5997 = vunpack.c.h.b16 %v5847
    %v5998 = vunpack.c.l.b16 %v5848
    %v5999 = vunpack.c.h.b16 %v5848
    %v6000 = vunpack.c.l.b16 %v5849
    %v6001 = vunpack.c.h.b16 %v5849
    %v6002 = vunpack.c.l.b16 %v5850
    %v6003 = vunpack.c.h.b16 %v5850
    %v6004 = vunpack.c.l.b16 %v5851
    %v6005 = vunpack.c.h.b16 %v5851
    %v6006 = vunpack.c.l.b16 %v5852
    %v6007 = vunpack.c.h.b16 %v5852
    %v6008 = vunpack.c.l.b16 %v5853
    %v6009 = vunpack.c.h.b16 %v5853
    %v6010 = vunpack.c.l.b16 %v5854
    %v6011 = vunpack.c.h.b16 %v5854
    %v6012 = vunpack.c.l.b16 %v5855
    %v6013 = vunpack.c.h.b16 %v5855
    %v6014 = vunpack.c.l.b16 %v5856
    %v6015 = vunpack.c.h.b16 %v5856
    %v6016 = vunpack.c.l.b16 %v5857
    %v6017 = vunpack.c.h.b16 %v5857
    %v6018 = vunpack.c.l.b16 %v5858
    %v6019 = vunpack.c.h.b16 %v5858
    %v6020 = vunpack.c.l.b16 %v5859
    %v6021 = vunpack.c.h.b16 %v5859
    %v6022 = vunpack.c.l.b16 %v5860
    %v6023 = vunpack.c.h.b16 %v5860
    %v6024 = vunpack.c.l.b16 %v5861
    %v6025 = vunpack.c.h.b16 %v5861
    %v6026 = vunpack.c.l.b16 %v5862
    %v6027 = vunpack.c.h.b16 %v5862
    %v6028 = vunpack.c.l.b16 %v5863
    %v6029 = vunpack.c.h.b16 %v5863
    %v6030 = vunpack.c.l.b16 %v5864
    %v6031 = vunpack.c.h.b16 %v5864
    %v6032 = vunpack.c.l.b16 %v5865
    %v6033 = vunpack.c.h.b16 %v5865
    %v6034 = vunpack.c.l.b16 %v5866
    %v6035 = vunpack.c.h.b16 %v5866
    %v6036 = vunpack.c.l.b16 %v5867
    %v6037 = vunpack.c.h.b16 %v5867
    %v6038 = vunpack.c.l.b16 %v5868
    %v6039 = vunpack.c.h.b16 %v5868
    %v6040 = vunpack.c.l.b16 %v5869
    %v6041 = vunpack.c.h.b16 %v5869
    %v6042 = vunpack.c.l.b16 %v5870
    %v6043 = vunpack.c.h.b16 %v5870
    %v6044 = vunpack.c.l.b16 %v5871
    %v6045 = vunpack.c.h.b16 %v5871
    %v6046 = vunpack.c.l.b16 %v5872
    %v6047 = vunpack.c.h.b16 %v5872
    %v6048 = vunpack.c.l.b16 %v5873
    %v6049 = vunpack.c.h.b16 %v5873
    %v6050 = vunpack.c.l.b16 %v5874
    %v6051 = vunpack.c.h.b16 %v5874
    %v6052 = vunpack.c.l.b16 %v5875
    %v6053 = vunpack.c.h.b16 %v5875
    %v6054 = vunpack.c.l.b16 %v5876
    %v6055 = vunpack.c.h.b16 %v5876
    %v6056 = vunpack.c.l.b16 %v5877
    %v6057 = vunpack.c.h.b16 %v5877
    %v6058 = vunpack.c.l.b16 %v5878
    %v6059 = vunpack.c.h.b16 %v5878
    %v6060 = vunpack.c.l.b16 %v5879
    %v6061 = vunpack.c.h.b16 %v5879
    %v6062 = vunpack.c.l.b16 %v5880
    %v6063 = vunpack.c.h.b16 %v5880
    %v6064 = vunpack.c.l.b16 %v5881
    %v6065 = vunpack.c.h.b16 %v5881
    %v6066 = vunpack.c.l.b16 %v5882
    %v6067 = vunpack.c.h.b16 %v5882
    %v6068 = vunpack.c.l.b16 %v5883
    %v6069 = vunpack.c.h.b16 %v5883
    %v6070 = vunpack.c.l.b16 %v5884
    %v6071 = vunpack.c.h.b16 %v5884
    %v6072 = vunpack.c.l.b16 %v5885
    %v6073 = vunpack.c.h.b16 %v5885
    %v6074 = vunpack.c.l.b16 %v5886
    %v6075 = vunpack.c.h.b16 %v5886
    %v6076 = vunpack.c.l.b16 %v5887
    %v6077 = vunpack.c.h.b16 %v5887
    %v6078 = vunpack.c.l.b16 %v5888
    %v6079 = vunpack.c.h.b16 %v5888
    %v6080 = vunpack.c.l.b16 %v5889
    %v6081 = vunpack.c.h.b16 %v5889
    %v6082 = vunpack.c.l.b16 %v5890
    %v6083 = vunpack.c.h.b16 %v5890
    %v6084 = vunpack.c.l.b16 %v5891
    %v6085 = vunpack.c.h.b16 %v5891
    %v6086 = vunpack.c.l.b16 %v5892
    %v6087 = vunpack.c.h.b16 %v5892
    %v6088 = vunpack.c.l.b16 %v5893
    %v6089 = vunpack.c.h.b16 %v5893
    %v6090 = vunpack.c.l.b16 %v5894
    %v6091 = vunpack.c.h.b16 %v5894
    %v6092 = vunpack.c.l.b16 %v5895
    %v6093 = vunpack.c.h.b16 %v5895
    %v6094 = vunpack.c.l.b16 %v5896
    %v6095 = vunpack.c.h.b16 %v5896
    %v6096 = vunpack.c.l.b16 %v5897
    %v6097 = vunpack.c.h.b16 %v5897
    %v6098 = vunpack.c.l.b16 %v5898
    %v6099 = vunpack.c.h.b16 %v5898
    %v6100 = vunpack.c.l.b16 %v5899
    %v6101 = vunpack.c.h.b16 %v5899
    %v6102 = vunpack.c.l.b16 %v5900
    %v6103 = vunpack.c.h.b16 %v5900
    %v6104 = vunpack.c.l.b16 %v5901
    %v6105 = vunpack.c.h.b16 %v5901
    %v6106 = vunpack.c.l.b16 %v5902
    %v6107 = vunpack.c.h.b16 %v5902
    %v6108 = vunpack.c.l.b16 %v5903
    %v6109 = vunpack.c.h.b16 %v5903
    %v6110 = vunpack.c.l.b16 %v5904
    %v6111 = vunpack.c.h.b16 %v5904
    %v6112 = vunpack.c.l.b16 %v5905
    %v6113 = vunpack.c.h.b16 %v5905
    %v6114 = vpack.c.b16 %v5994, %v5986
    %v6115 = vpack.c.b16 %v5995, %v5987
    %v6116 = vpack.c.b16 %v5996, %v5988
    %v6117 = vpack.c.b16 %v5997, %v5989
    %v6118 = vpack.c.b16 %v5998, %v5990
    %v6119 = vpack.c.b16 %v5999, %v5991
    %v6120 = vpack.c.b16 %v6000, %v5992
    %v6121 = vpack.c.b16 %v6001, %v5993
    %v6122 = vpack.c.b16 %v6010, %v6002
    %v6123 = vpack.c.b16 %v6011, %v6003
    %v6124 = vpack.c.b16 %v6012, %v6004
    %v6125 = vpack.c.b16 %v6013, %v6005
    %v6126 = vpack.c.b16 %v6014, %v6006
    %v6127 = vpack.c.b16 %v6015, %v6007
    %v6128 = vpack.c.b16 %v6016, %v6008
    %v6129 = vpack.c.b16 %v6017, %v6009
    %v6130 = vpack.c.b16 %v6026, %v6018
    %v6131 = vpack.c.b16 %v6027, %v6019
    %v6132 = vpack.c.b16 %v6028, %v6020
    %v6133 = vpack.c.b16 %v6029, %v6021
    %v6134 = vpack.c.b16 %v6030, %v6022
    %v6135 = vpack.c.b16 %v6031, %v6023
    %v6136 = vpack.c.b16 %v6032, %v6024
    %v6137 = vpack.c.b16 %v6033, %v6025
    %v6138 = vpack.c.b16 %v6042, %v6034
    %v6139 = vpack.c.b16 %v6043, %v6035
    %v6140 = vpack.c.b16 %v6044, %v6036
    %v6141 = vpack.c.b16 %v6045, %v6037
    %v6142 = vpack.c.b16 %v6046, %v6038
    %v6143 = vpack.c.b16 %v6047, %v6039
    %v6144 = vpack.c.b16 %v6048, %v6040
    %v6145 = vpack.c.b16 %v6049, %v6041
    %v6146 = vpack.c.b16 %v6058, %v6050
    %v6147 = vpack.c.b16 %v6059, %v6051
    %v6148 = vpack.c.b16 %v6060, %v6052
    %v6149 = vpack.c.b16 %v6061, %v6053
    %v6150 = vpack.c.b16 %v6062, %v6054
    %v6151 = vpack.c.b16 %v6063, %v6055
    %v6152 = vpack.c.b16 %v6064, %v6056
    %v6153 = vpack.c.b16 %v6065, %v6057
    %v6154 = vpack.c.b16 %v6074, %v6066
    %v6155 = vpack.c.b16 %v6075, %v6067
    %v6156 = vpack.c.b16 %v6076, %v6068
    %v6157 = vpack.c.b16 %v6077, %v6069
    %v6158 = vpack.c.b16 %v6078, %v6070
    %v6159 = vpack.c.b16 %v6079, %v6071
    %v6160 = vpack.c.b16 %v6080, %v6072
    %v6161 = vpack.c.b16 %v6081, %v6073
    %v6162 = vpack.c.b16 %v6090, %v6082
    %v6163 = vpack.c.b16 %v6091, %v6083
    %v6164 = vpack.c.b16 %v6092, %v6084
    %v6165 = vpack.c.b16 %v6093, %v6085
    %v6166 = vpack.c.b16 %v6094, %v6086
    %v6167 = vpack.c.b16 %v6095, %v6087
    %v6168 = vpack.c.b16 %v6096, %v6088
    %v6169 = vpack.c.b16 %v6097, %v6089
    %v6170 = vpack.c.b16 %v6106, %v6098
    %v6171 = vpack.c.b16 %v6107, %v6099
    %v6172 = vpack.c.b16 %v6108, %v6100
    %v6173 = vpack.c.b16 %v6109, %v6101
    %v6174 = vpack.c.b16 %v6110, %v6102
    %v6175 = vpack.c.b16 %v6111, %v6103
    %v6176 = vpack.c.b16 %v6112, %v6104
    %v6177 = vpack.c.b16 %v6113, %v6105
    %6242 = vmatpush.bf16.msra.mxu0 %v6170
    %6243 = vmatpush.bf16.msra.mxu0 %v6162
    %6244 = vmatpush.bf16.msra.mxu0 %v6154
    %6245 = vmatpush.bf16.msra.mxu0 %v6146
    %6246 = vmatpush.bf16.msra.mxu0 %v6138
    %6247 = vmatpush.bf16.msra.mxu0 %v6130
    %6248 = vmatpush.bf16.msra.mxu0 %v6122
    %6249 = vmatpush.bf16.msra.mxu0 %v6114
    %6250 = vmatmul.bf16.gmra.mxu0 %v5920
    %v6251 = vpop.f32.mrf.mxu0
    %v6252 = vadd.f32 0.0, %v6251
    %v6253 = vpop.f32.mrf.mxu0
    %6254 = vdwg.mxu0
    %6255 = vmatpush.bf16.msra.mxu0 %v6171
    %6256 = vmatpush.bf16.msra.mxu0 %v6163
    %6257 = vmatpush.bf16.msra.mxu0 %v6155
    %6258 = vmatpush.bf16.msra.mxu0 %v6147
    %6259 = vmatpush.bf16.msra.mxu0 %v6139
    %6260 = vmatpush.bf16.msra.mxu0 %v6131
    %6261 = vmatpush.bf16.msra.mxu0 %v6123
    %6262 = vmatpush.bf16.msra.mxu0 %v6115
    %6263 = vmatmul.bf16.gmra.mxu0 %v5920
    %v6264 = vpop.f32.mrf.mxu0
    %v6265 = vadd.f32 0.0, %v6264
    %v6266 = vpop.f32.mrf.mxu0
    %6267 = vdwg.mxu0
    %6268 = vmatpush.bf16.msra.mxu0 %v6172
    %6269 = vmatpush.bf16.msra.mxu0 %v6164
    %6270 = vmatpush.bf16.msra.mxu0 %v6156
    %6271 = vmatpush.bf16.msra.mxu0 %v6148
    %6272 = vmatpush.bf16.msra.mxu0 %v6140
    %6273 = vmatpush.bf16.msra.mxu0 %v6132
    %6274 = vmatpush.bf16.msra.mxu0 %v6124
    %6275 = vmatpush.bf16.msra.mxu0 %v6116
    %6276 = vmatmul.bf16.gmra.mxu0 %v5920
    %v6277 = vpop.f32.mrf.mxu0
    %v6278 = vadd.f32 0.0, %v6277
    %v6279 = vpop.f32.mrf.mxu0
    %6280 = vdwg.mxu0
    %6281 = vmatpush.bf16.msra.mxu0 %v6173
    %6282 = vmatpush.bf16.msra.mxu0 %v6165
    %6283 = vmatpush.bf16.msra.mxu0 %v6157
    %6284 = vmatpush.bf16.msra.mxu0 %v6149
    %6285 = vmatpush.bf16.msra.mxu0 %v6141
    %6286 = vmatpush.bf16.msra.mxu0 %v6133
    %6287 = vmatpush.bf16.msra.mxu0 %v6125
    %6288 = vmatpush.bf16.msra.mxu0 %v6117
    %6289 = vmatmul.bf16.gmra.mxu0 %v5920
    %v6290 = vpop.f32.mrf.mxu0
    %v6291 = vadd.f32 0.0, %v6290
    %v6292 = vpop.f32.mrf.mxu0
    %6293 = vdwg.mxu0
    %6294 = vmatpush.bf16.msra.mxu0 %v6174
    %6295 = vmatpush.bf16.msra.mxu0 %v6166
    %6296 = vmatpush.bf16.msra.mxu0 %v6158
    %6297 = vmatpush.bf16.msra.mxu0 %v6150
    %6298 = vmatpush.bf16.msra.mxu0 %v6142
    %6299 = vmatpush.bf16.msra.mxu0 %v6134
    %6300 = vmatpush.bf16.msra.mxu0 %v6126
    %6301 = vmatpush.bf16.msra.mxu0 %v6118
    %6302 = vmatmul.bf16.gmra.mxu0 %v5920
    %v6303 = vpop.f32.mrf.mxu0
    %v6304 = vadd.f32 0.0, %v6303
    %v6305 = vpop.f32.mrf.mxu0
    %6306 = vdwg.mxu0
    %6307 = vmatpush.bf16.msra.mxu0 %v6175
    %6308 = vmatpush.bf16.msra.mxu0 %v6167
    %6309 = vmatpush.bf16.msra.mxu0 %v6159
    %6310 = vmatpush.bf16.msra.mxu0 %v6151
    %6311 = vmatpush.bf16.msra.mxu0 %v6143
    %6312 = vmatpush.bf16.msra.mxu0 %v6135
    %6313 = vmatpush.bf16.msra.mxu0 %v6127
    %6314 = vmatpush.bf16.msra.mxu0 %v6119
    %6315 = vmatmul.bf16.gmra.mxu0 %v5920
    %v6316 = vpop.f32.mrf.mxu0
    %v6317 = vadd.f32 0.0, %v6316
    %v6318 = vpop.f32.mrf.mxu0
    %6319 = vdwg.mxu0
    %6320 = vmatpush.bf16.msra.mxu0 %v6176
    %6321 = vmatpush.bf16.msra.mxu0 %v6168
    %6322 = vmatpush.bf16.msra.mxu0 %v6160
    %6323 = vmatpush.bf16.msra.mxu0 %v6152
    %6324 = vmatpush.bf16.msra.mxu0 %v6144
    %6325 = vmatpush.bf16.msra.mxu0 %v6136
    %6326 = vmatpush.bf16.msra.mxu0 %v6128
    %6327 = vmatpush.bf16.msra.mxu0 %v6120
    %6328 = vmatmul.bf16.gmra.mxu0 %v5920
    %v6329 = vpop.f32.mrf.mxu0
    %v6330 = vadd.f32 0.0, %v6329
    %v6331 = vpop.f32.mrf.mxu0
    %6332 = vdwg.mxu0
    %6333 = vmatpush.bf16.msra.mxu0 %v6177
    %6334 = vmatpush.bf16.msra.mxu0 %v6169
    %6335 = vmatpush.bf16.msra.mxu0 %v6161
    %6336 = vmatpush.bf16.msra.mxu0 %v6153
    %6337 = vmatpush.bf16.msra.mxu0 %v6145
    %6338 = vmatpush.bf16.msra.mxu0 %v6137
    %6339 = vmatpush.bf16.msra.mxu0 %v6129
    %6340 = vmatpush.bf16.msra.mxu0 %v6121
    %6341 = vmatmul.bf16.gmra.mxu0 %v5920
    %v6342 = vpop.f32.mrf.mxu0
    %v6343 = vadd.f32 0.0, %v6342
    %v6344 = vpop.f32.mrf.mxu0
    %6345 = vdwg.mxu0
    %v6346 = vadd.f32 %v5833, %v6252
    %v6347 = vadd.f32 %v5834, %v6265
    %v6348 = vadd.f32 %v5835, %v6278
    %v6349 = vadd.f32 %v5836, %v6291
    %v6350 = vadd.f32 %v5837, %v6304
    %v6351 = vadd.f32 %v5838, %v6317
    %v6352 = vadd.f32 %v5839, %v6330
    %v6353 = vadd.f32 %v5840, %v6343
    %s6354 = scalar_lea.vmem [#allocation13], 2048
    %v6355 = vld [vmem:[%s6354] sm:$0xff]
    %v6356 = vld [vmem:[%s6354 + $0x8] sm:$0xff]
    %v6357 = vld [vmem:[%s6354 + $0x10] sm:$0xff]
    %v6358 = vld [vmem:[%s6354 + $0x18] sm:$0xff]
    %v6359 = vld [vmem:[%s6354 + $0x20] sm:$0xff]
    %v6360 = vld [vmem:[%s6354 + $0x28] sm:$0xff]
    %v6361 = vld [vmem:[%s6354 + $0x30] sm:$0xff]
    %v6362 = vld [vmem:[%s6354 + $0x38] sm:$0xff]
    %v6363 = vld [vmem:[%s6354 + $0x40] sm:$0xff]
    %v6364 = vld [vmem:[%s6354 + $0x48] sm:$0xff]
    %v6365 = vld [vmem:[%s6354 + $0x50] sm:$0xff]
    %v6366 = vld [vmem:[%s6354 + $0x58] sm:$0xff]
    %v6367 = vld [vmem:[%s6354 + $0x60] sm:$0xff]
    %v6368 = vld [vmem:[%s6354 + $0x68] sm:$0xff]
    %v6369 = vld [vmem:[%s6354 + $0x70] sm:$0xff]
    %v6370 = vld [vmem:[%s6354 + $0x78] sm:$0xff]
    %v6371 = vld [vmem:[%s6354 + $0x80] sm:$0xff]
    %v6372 = vld [vmem:[%s6354 + $0x88] sm:$0xff]
    %v6373 = vld [vmem:[%s6354 + $0x90] sm:$0xff]
    %v6374 = vld [vmem:[%s6354 + $0x98] sm:$0xff]
    %v6375 = vld [vmem:[%s6354 + $0xa0] sm:$0xff]
    %v6376 = vld [vmem:[%s6354 + $0xa8] sm:$0xff]
    %v6377 = vld [vmem:[%s6354 + $0xb0] sm:$0xff]
    %v6378 = vld [vmem:[%s6354 + $0xb8] sm:$0xff]
    %v6379 = vld [vmem:[%s6354 + $0xc0] sm:$0xff]
    %v6380 = vld [vmem:[%s6354 + $0xc8] sm:$0xff]
    %v6381 = vld [vmem:[%s6354 + $0xd0] sm:$0xff]
    %v6382 = vld [vmem:[%s6354 + $0xd8] sm:$0xff]
    %v6383 = vld [vmem:[%s6354 + $0xe0] sm:$0xff]
    %v6384 = vld [vmem:[%s6354 + $0xe8] sm:$0xff]
    %v6385 = vld [vmem:[%s6354 + $0xf0] sm:$0xff]
    %v6386 = vld [vmem:[%s6354 + $0xf8] sm:$0xff]
    %v6387 = vld [vmem:[%s6354 + $0x100] sm:$0xff]
    %v6388 = vld [vmem:[%s6354 + $0x108] sm:$0xff]
    %v6389 = vld [vmem:[%s6354 + $0x110] sm:$0xff]
    %v6390 = vld [vmem:[%s6354 + $0x118] sm:$0xff]
    %v6391 = vld [vmem:[%s6354 + $0x120] sm:$0xff]
    %v6392 = vld [vmem:[%s6354 + $0x128] sm:$0xff]
    %v6393 = vld [vmem:[%s6354 + $0x130] sm:$0xff]
    %v6394 = vld [vmem:[%s6354 + $0x138] sm:$0xff]
    %v6395 = vld [vmem:[%s6354 + $0x140] sm:$0xff]
    %v6396 = vld [vmem:[%s6354 + $0x148] sm:$0xff]
    %v6397 = vld [vmem:[%s6354 + $0x150] sm:$0xff]
    %v6398 = vld [vmem:[%s6354 + $0x158] sm:$0xff]
    %v6399 = vld [vmem:[%s6354 + $0x160] sm:$0xff]
    %v6400 = vld [vmem:[%s6354 + $0x168] sm:$0xff]
    %v6401 = vld [vmem:[%s6354 + $0x170] sm:$0xff]
    %v6402 = vld [vmem:[%s6354 + $0x178] sm:$0xff]
    %v6403 = vld [vmem:[%s6354 + $0x180] sm:$0xff]
    %v6404 = vld [vmem:[%s6354 + $0x188] sm:$0xff]
    %v6405 = vld [vmem:[%s6354 + $0x190] sm:$0xff]
    %v6406 = vld [vmem:[%s6354 + $0x198] sm:$0xff]
    %v6407 = vld [vmem:[%s6354 + $0x1a0] sm:$0xff]
    %v6408 = vld [vmem:[%s6354 + $0x1a8] sm:$0xff]
    %v6409 = vld [vmem:[%s6354 + $0x1b0] sm:$0xff]
    %v6410 = vld [vmem:[%s6354 + $0x1b8] sm:$0xff]
    %v6411 = vld [vmem:[%s6354 + $0x1c0] sm:$0xff]
    %v6412 = vld [vmem:[%s6354 + $0x1c8] sm:$0xff]
    %v6413 = vld [vmem:[%s6354 + $0x1d0] sm:$0xff]
    %v6414 = vld [vmem:[%s6354 + $0x1d8] sm:$0xff]
    %v6415 = vld [vmem:[%s6354 + $0x1e0] sm:$0xff]
    %v6416 = vld [vmem:[%s6354 + $0x1e8] sm:$0xff]
    %v6417 = vld [vmem:[%s6354 + $0x1f0] sm:$0xff]
    %v6418 = vld [vmem:[%s6354 + $0x1f8] sm:$0xff]
    %v6419 = vrot.slane %v4433, 4
    %v6420 = vrot.slane %v4434, 3
    %v6421 = vsel %vm4442, %v6420, %v6419
    %v6422 = vrot.slane %v4435, 2
    %v6423 = vsel %vm4445, %v6422, %v6421
    %v6424 = vrot.slane %v4436, 1
    %v6425 = vsel %vm4448, %v6424, %v6423
    %v6426 = vsel %vm4451, %v4437, %v6425
    %v6427 = vrot.slane %v4438, 7
    %v6428 = vsel %vm4454, %v6427, %v6426
    %v6429 = vrot.slane %v4439, 6
    %v6430 = vsel %vm4457, %v6429, %v6428
    %v6431 = vrot.slane %v4440, 5
    %v6432 = vsel %vm4460, %v6431, %v6430
    %v6433 = vpack.c.b16 %v6432, %v6432
    %v6499 = vunpack.c.l.b16 %v6355
    %v6500 = vunpack.c.h.b16 %v6355
    %v6501 = vunpack.c.l.b16 %v6356
    %v6502 = vunpack.c.h.b16 %v6356
    %v6503 = vunpack.c.l.b16 %v6357
    %v6504 = vunpack.c.h.b16 %v6357
    %v6505 = vunpack.c.l.b16 %v6358
    %v6506 = vunpack.c.h.b16 %v6358
    %v6507 = vunpack.c.l.b16 %v6359
    %v6508 = vunpack.c.h.b16 %v6359
    %v6509 = vunpack.c.l.b16 %v6360
    %v6510 = vunpack.c.h.b16 %v6360
    %v6511 = vunpack.c.l.b16 %v6361
    %v6512 = vunpack.c.h.b16 %v6361
    %v6513 = vunpack.c.l.b16 %v6362
    %v6514 = vunpack.c.h.b16 %v6362
    %v6515 = vunpack.c.l.b16 %v6363
    %v6516 = vunpack.c.h.b16 %v6363
    %v6517 = vunpack.c.l.b16 %v6364
    %v6518 = vunpack.c.h.b16 %v6364
    %v6519 = vunpack.c.l.b16 %v6365
    %v6520 = vunpack.c.h.b16 %v6365
    %v6521 = vunpack.c.l.b16 %v6366
    %v6522 = vunpack.c.h.b16 %v6366
    %v6523 = vunpack.c.l.b16 %v6367
    %v6524 = vunpack.c.h.b16 %v6367
    %v6525 = vunpack.c.l.b16 %v6368
    %v6526 = vunpack.c.h.b16 %v6368
    %v6527 = vunpack.c.l.b16 %v6369
    %v6528 = vunpack.c.h.b16 %v6369
    %v6529 = vunpack.c.l.b16 %v6370
    %v6530 = vunpack.c.h.b16 %v6370
    %v6531 = vunpack.c.l.b16 %v6371
    %v6532 = vunpack.c.h.b16 %v6371
    %v6533 = vunpack.c.l.b16 %v6372
    %v6534 = vunpack.c.h.b16 %v6372
    %v6535 = vunpack.c.l.b16 %v6373
    %v6536 = vunpack.c.h.b16 %v6373
    %v6537 = vunpack.c.l.b16 %v6374
    %v6538 = vunpack.c.h.b16 %v6374
    %v6539 = vunpack.c.l.b16 %v6375
    %v6540 = vunpack.c.h.b16 %v6375
    %v6541 = vunpack.c.l.b16 %v6376
    %v6542 = vunpack.c.h.b16 %v6376
    %v6543 = vunpack.c.l.b16 %v6377
    %v6544 = vunpack.c.h.b16 %v6377
    %v6545 = vunpack.c.l.b16 %v6378
    %v6546 = vunpack.c.h.b16 %v6378
    %v6547 = vunpack.c.l.b16 %v6379
    %v6548 = vunpack.c.h.b16 %v6379
    %v6549 = vunpack.c.l.b16 %v6380
    %v6550 = vunpack.c.h.b16 %v6380
    %v6551 = vunpack.c.l.b16 %v6381
    %v6552 = vunpack.c.h.b16 %v6381
    %v6553 = vunpack.c.l.b16 %v6382
    %v6554 = vunpack.c.h.b16 %v6382
    %v6555 = vunpack.c.l.b16 %v6383
    %v6556 = vunpack.c.h.b16 %v6383
    %v6557 = vunpack.c.l.b16 %v6384
    %v6558 = vunpack.c.h.b16 %v6384
    %v6559 = vunpack.c.l.b16 %v6385
    %v6560 = vunpack.c.h.b16 %v6385
    %v6561 = vunpack.c.l.b16 %v6386
    %v6562 = vunpack.c.h.b16 %v6386
    %v6563 = vunpack.c.l.b16 %v6387
    %v6564 = vunpack.c.h.b16 %v6387
    %v6565 = vunpack.c.l.b16 %v6388
    %v6566 = vunpack.c.h.b16 %v6388
    %v6567 = vunpack.c.l.b16 %v6389
    %v6568 = vunpack.c.h.b16 %v6389
    %v6569 = vunpack.c.l.b16 %v6390
    %v6570 = vunpack.c.h.b16 %v6390
    %v6571 = vunpack.c.l.b16 %v6391
    %v6572 = vunpack.c.h.b16 %v6391
    %v6573 = vunpack.c.l.b16 %v6392
    %v6574 = vunpack.c.h.b16 %v6392
    %v6575 = vunpack.c.l.b16 %v6393
    %v6576 = vunpack.c.h.b16 %v6393
    %v6577 = vunpack.c.l.b16 %v6394
    %v6578 = vunpack.c.h.b16 %v6394
    %v6579 = vunpack.c.l.b16 %v6395
    %v6580 = vunpack.c.h.b16 %v6395
    %v6581 = vunpack.c.l.b16 %v6396
    %v6582 = vunpack.c.h.b16 %v6396
    %v6583 = vunpack.c.l.b16 %v6397
    %v6584 = vunpack.c.h.b16 %v6397
    %v6585 = vunpack.c.l.b16 %v6398
    %v6586 = vunpack.c.h.b16 %v6398
    %v6587 = vunpack.c.l.b16 %v6399
    %v6588 = vunpack.c.h.b16 %v6399
    %v6589 = vunpack.c.l.b16 %v6400
    %v6590 = vunpack.c.h.b16 %v6400
    %v6591 = vunpack.c.l.b16 %v6401
    %v6592 = vunpack.c.h.b16 %v6401
    %v6593 = vunpack.c.l.b16 %v6402
    %v6594 = vunpack.c.h.b16 %v6402
    %v6595 = vunpack.c.l.b16 %v6403
    %v6596 = vunpack.c.h.b16 %v6403
    %v6597 = vunpack.c.l.b16 %v6404
    %v6598 = vunpack.c.h.b16 %v6404
    %v6599 = vunpack.c.l.b16 %v6405
    %v6600 = vunpack.c.h.b16 %v6405
    %v6601 = vunpack.c.l.b16 %v6406
    %v6602 = vunpack.c.h.b16 %v6406
    %v6603 = vunpack.c.l.b16 %v6407
    %v6604 = vunpack.c.h.b16 %v6407
    %v6605 = vunpack.c.l.b16 %v6408
    %v6606 = vunpack.c.h.b16 %v6408
    %v6607 = vunpack.c.l.b16 %v6409
    %v6608 = vunpack.c.h.b16 %v6409
    %v6609 = vunpack.c.l.b16 %v6410
    %v6610 = vunpack.c.h.b16 %v6410
    %v6611 = vunpack.c.l.b16 %v6411
    %v6612 = vunpack.c.h.b16 %v6411
    %v6613 = vunpack.c.l.b16 %v6412
    %v6614 = vunpack.c.h.b16 %v6412
    %v6615 = vunpack.c.l.b16 %v6413
    %v6616 = vunpack.c.h.b16 %v6413
    %v6617 = vunpack.c.l.b16 %v6414
    %v6618 = vunpack.c.h.b16 %v6414
    %v6619 = vunpack.c.l.b16 %v6415
    %v6620 = vunpack.c.h.b16 %v6415
    %v6621 = vunpack.c.l.b16 %v6416
    %v6622 = vunpack.c.h.b16 %v6416
    %v6623 = vunpack.c.l.b16 %v6417
    %v6624 = vunpack.c.h.b16 %v6417
    %v6625 = vunpack.c.l.b16 %v6418
    %v6626 = vunpack.c.h.b16 %v6418
    %v6627 = vpack.c.b16 %v6507, %v6499
    %v6628 = vpack.c.b16 %v6508, %v6500
    %v6629 = vpack.c.b16 %v6509, %v6501
    %v6630 = vpack.c.b16 %v6510, %v6502
    %v6631 = vpack.c.b16 %v6511, %v6503
    %v6632 = vpack.c.b16 %v6512, %v6504
    %v6633 = vpack.c.b16 %v6513, %v6505
    %v6634 = vpack.c.b16 %v6514, %v6506
    %v6635 = vpack.c.b16 %v6523, %v6515
    %v6636 = vpack.c.b16 %v6524, %v6516
    %v6637 = vpack.c.b16 %v6525, %v6517
    %v6638 = vpack.c.b16 %v6526, %v6518
    %v6639 = vpack.c.b16 %v6527, %v6519
    %v6640 = vpack.c.b16 %v6528, %v6520
    %v6641 = vpack.c.b16 %v6529, %v6521
    %v6642 = vpack.c.b16 %v6530, %v6522
    %v6643 = vpack.c.b16 %v6539, %v6531
    %v6644 = vpack.c.b16 %v6540, %v6532
    %v6645 = vpack.c.b16 %v6541, %v6533
    %v6646 = vpack.c.b16 %v6542, %v6534
    %v6647 = vpack.c.b16 %v6543, %v6535
    %v6648 = vpack.c.b16 %v6544, %v6536
    %v6649 = vpack.c.b16 %v6545, %v6537
    %v6650 = vpack.c.b16 %v6546, %v6538
    %v6651 = vpack.c.b16 %v6555, %v6547
    %v6652 = vpack.c.b16 %v6556, %v6548
    %v6653 = vpack.c.b16 %v6557, %v6549
    %v6654 = vpack.c.b16 %v6558, %v6550
    %v6655 = vpack.c.b16 %v6559, %v6551
    %v6656 = vpack.c.b16 %v6560, %v6552
    %v6657 = vpack.c.b16 %v6561, %v6553
    %v6658 = vpack.c.b16 %v6562, %v6554
    %v6659 = vpack.c.b16 %v6571, %v6563
    %v6660 = vpack.c.b16 %v6572, %v6564
    %v6661 = vpack.c.b16 %v6573, %v6565
    %v6662 = vpack.c.b16 %v6574, %v6566
    %v6663 = vpack.c.b16 %v6575, %v6567
    %v6664 = vpack.c.b16 %v6576, %v6568
    %v6665 = vpack.c.b16 %v6577, %v6569
    %v6666 = vpack.c.b16 %v6578, %v6570
    %v6667 = vpack.c.b16 %v6587, %v6579
    %v6668 = vpack.c.b16 %v6588, %v6580
    %v6669 = vpack.c.b16 %v6589, %v6581
    %v6670 = vpack.c.b16 %v6590, %v6582
    %v6671 = vpack.c.b16 %v6591, %v6583
    %v6672 = vpack.c.b16 %v6592, %v6584
    %v6673 = vpack.c.b16 %v6593, %v6585
    %v6674 = vpack.c.b16 %v6594, %v6586
    %v6675 = vpack.c.b16 %v6603, %v6595
    %v6676 = vpack.c.b16 %v6604, %v6596
    %v6677 = vpack.c.b16 %v6605, %v6597
    %v6678 = vpack.c.b16 %v6606, %v6598
    %v6679 = vpack.c.b16 %v6607, %v6599
    %v6680 = vpack.c.b16 %v6608, %v6600
    %v6681 = vpack.c.b16 %v6609, %v6601
    %v6682 = vpack.c.b16 %v6610, %v6602
    %v6683 = vpack.c.b16 %v6619, %v6611
    %v6684 = vpack.c.b16 %v6620, %v6612
    %v6685 = vpack.c.b16 %v6621, %v6613
    %v6686 = vpack.c.b16 %v6622, %v6614
    %v6687 = vpack.c.b16 %v6623, %v6615
    %v6688 = vpack.c.b16 %v6624, %v6616
    %v6689 = vpack.c.b16 %v6625, %v6617
    %v6690 = vpack.c.b16 %v6626, %v6618
    %6755 = vmatpush.bf16.msra.mxu0 %v6683
    %6756 = vmatpush.bf16.msra.mxu0 %v6675
    %6757 = vmatpush.bf16.msra.mxu0 %v6667
    %6758 = vmatpush.bf16.msra.mxu0 %v6659
    %6759 = vmatpush.bf16.msra.mxu0 %v6651
    %6760 = vmatpush.bf16.msra.mxu0 %v6643
    %6761 = vmatpush.bf16.msra.mxu0 %v6635
    %6762 = vmatpush.bf16.msra.mxu0 %v6627
    %6763 = vmatmul.bf16.gmra.mxu0 %v6433
    %v6764 = vpop.f32.mrf.mxu0
    %v6765 = vadd.f32 0.0, %v6764
    %v6766 = vpop.f32.mrf.mxu0
    %6767 = vdwg.mxu0
    %6768 = vmatpush.bf16.msra.mxu0 %v6684
    %6769 = vmatpush.bf16.msra.mxu0 %v6676
    %6770 = vmatpush.bf16.msra.mxu0 %v6668
    %6771 = vmatpush.bf16.msra.mxu0 %v6660
    %6772 = vmatpush.bf16.msra.mxu0 %v6652
    %6773 = vmatpush.bf16.msra.mxu0 %v6644
    %6774 = vmatpush.bf16.msra.mxu0 %v6636
    %6775 = vmatpush.bf16.msra.mxu0 %v6628
    %6776 = vmatmul.bf16.gmra.mxu0 %v6433
    %v6777 = vpop.f32.mrf.mxu0
    %v6778 = vadd.f32 0.0, %v6777
    %v6779 = vpop.f32.mrf.mxu0
    %6780 = vdwg.mxu0
    %6781 = vmatpush.bf16.msra.mxu0 %v6685
    %6782 = vmatpush.bf16.msra.mxu0 %v6677
    %6783 = vmatpush.bf16.msra.mxu0 %v6669
    %6784 = vmatpush.bf16.msra.mxu0 %v6661
    %6785 = vmatpush.bf16.msra.mxu0 %v6653
    %6786 = vmatpush.bf16.msra.mxu0 %v6645
    %6787 = vmatpush.bf16.msra.mxu0 %v6637
    %6788 = vmatpush.bf16.msra.mxu0 %v6629
    %6789 = vmatmul.bf16.gmra.mxu0 %v6433
    %v6790 = vpop.f32.mrf.mxu0
    %v6791 = vadd.f32 0.0, %v6790
    %v6792 = vpop.f32.mrf.mxu0
    %6793 = vdwg.mxu0
    %6794 = vmatpush.bf16.msra.mxu0 %v6686
    %6795 = vmatpush.bf16.msra.mxu0 %v6678
    %6796 = vmatpush.bf16.msra.mxu0 %v6670
    %6797 = vmatpush.bf16.msra.mxu0 %v6662
    %6798 = vmatpush.bf16.msra.mxu0 %v6654
    %6799 = vmatpush.bf16.msra.mxu0 %v6646
    %6800 = vmatpush.bf16.msra.mxu0 %v6638
    %6801 = vmatpush.bf16.msra.mxu0 %v6630
    %6802 = vmatmul.bf16.gmra.mxu0 %v6433
    %v6803 = vpop.f32.mrf.mxu0
    %v6804 = vadd.f32 0.0, %v6803
    %v6805 = vpop.f32.mrf.mxu0
    %6806 = vdwg.mxu0
    %6807 = vmatpush.bf16.msra.mxu0 %v6687
    %6808 = vmatpush.bf16.msra.mxu0 %v6679
    %6809 = vmatpush.bf16.msra.mxu0 %v6671
    %6810 = vmatpush.bf16.msra.mxu0 %v6663
    %6811 = vmatpush.bf16.msra.mxu0 %v6655
    %6812 = vmatpush.bf16.msra.mxu0 %v6647
    %6813 = vmatpush.bf16.msra.mxu0 %v6639
    %6814 = vmatpush.bf16.msra.mxu0 %v6631
    %6815 = vmatmul.bf16.gmra.mxu0 %v6433
    %v6816 = vpop.f32.mrf.mxu0
    %v6817 = vadd.f32 0.0, %v6816
    %v6818 = vpop.f32.mrf.mxu0
    %6819 = vdwg.mxu0
    %6820 = vmatpush.bf16.msra.mxu0 %v6688
    %6821 = vmatpush.bf16.msra.mxu0 %v6680
    %6822 = vmatpush.bf16.msra.mxu0 %v6672
    %6823 = vmatpush.bf16.msra.mxu0 %v6664
    %6824 = vmatpush.bf16.msra.mxu0 %v6656
    %6825 = vmatpush.bf16.msra.mxu0 %v6648
    %6826 = vmatpush.bf16.msra.mxu0 %v6640
    %6827 = vmatpush.bf16.msra.mxu0 %v6632
    %6828 = vmatmul.bf16.gmra.mxu0 %v6433
    %v6829 = vpop.f32.mrf.mxu0
    %v6830 = vadd.f32 0.0, %v6829
    %v6831 = vpop.f32.mrf.mxu0
    %6832 = vdwg.mxu0
    %6833 = vmatpush.bf16.msra.mxu0 %v6689
    %6834 = vmatpush.bf16.msra.mxu0 %v6681
    %6835 = vmatpush.bf16.msra.mxu0 %v6673
    %6836 = vmatpush.bf16.msra.mxu0 %v6665
    %6837 = vmatpush.bf16.msra.mxu0 %v6657
    %6838 = vmatpush.bf16.msra.mxu0 %v6649
    %6839 = vmatpush.bf16.msra.mxu0 %v6641
    %6840 = vmatpush.bf16.msra.mxu0 %v6633
    %6841 = vmatmul.bf16.gmra.mxu0 %v6433
    %v6842 = vpop.f32.mrf.mxu0
    %v6843 = vadd.f32 0.0, %v6842
    %v6844 = vpop.f32.mrf.mxu0
    %6845 = vdwg.mxu0
    %6846 = vmatpush.bf16.msra.mxu0 %v6690
    %6847 = vmatpush.bf16.msra.mxu0 %v6682
    %6848 = vmatpush.bf16.msra.mxu0 %v6674
    %6849 = vmatpush.bf16.msra.mxu0 %v6666
    %6850 = vmatpush.bf16.msra.mxu0 %v6658
    %6851 = vmatpush.bf16.msra.mxu0 %v6650
    %6852 = vmatpush.bf16.msra.mxu0 %v6642
    %6853 = vmatpush.bf16.msra.mxu0 %v6634
    %6854 = vmatmul.bf16.gmra.mxu0 %v6433
    %v6855 = vpop.f32.mrf.mxu0
    %v6856 = vadd.f32 0.0, %v6855
    %v6857 = vpop.f32.mrf.mxu0
    %6858 = vdwg.mxu0
    %v6859 = vadd.f32 %v6346, %v6765
    %v6860 = vadd.f32 %v6347, %v6778
    %v6861 = vadd.f32 %v6348, %v6791
    %v6862 = vadd.f32 %v6349, %v6804
    %v6863 = vadd.f32 %v6350, %v6817
    %v6864 = vadd.f32 %v6351, %v6830
    %v6865 = vadd.f32 %v6352, %v6843
    %v6866 = vadd.f32 %v6353, %v6856
    %s6867 = scalar_lea.vmem [#allocation13], 2560
    %v6868 = vld [vmem:[%s6867] sm:$0xff]
    %v6869 = vld [vmem:[%s6867 + $0x8] sm:$0xff]
    %v6870 = vld [vmem:[%s6867 + $0x10] sm:$0xff]
    %v6871 = vld [vmem:[%s6867 + $0x18] sm:$0xff]
    %v6872 = vld [vmem:[%s6867 + $0x20] sm:$0xff]
    %v6873 = vld [vmem:[%s6867 + $0x28] sm:$0xff]
    %v6874 = vld [vmem:[%s6867 + $0x30] sm:$0xff]
    %v6875 = vld [vmem:[%s6867 + $0x38] sm:$0xff]
    %v6876 = vld [vmem:[%s6867 + $0x40] sm:$0xff]
    %v6877 = vld [vmem:[%s6867 + $0x48] sm:$0xff]
    %v6878 = vld [vmem:[%s6867 + $0x50] sm:$0xff]
    %v6879 = vld [vmem:[%s6867 + $0x58] sm:$0xff]
    %v6880 = vld [vmem:[%s6867 + $0x60] sm:$0xff]
    %v6881 = vld [vmem:[%s6867 + $0x68] sm:$0xff]
    %v6882 = vld [vmem:[%s6867 + $0x70] sm:$0xff]
    %v6883 = vld [vmem:[%s6867 + $0x78] sm:$0xff]
    %v6884 = vld [vmem:[%s6867 + $0x80] sm:$0xff]
    %v6885 = vld [vmem:[%s6867 + $0x88] sm:$0xff]
    %v6886 = vld [vmem:[%s6867 + $0x90] sm:$0xff]
    %v6887 = vld [vmem:[%s6867 + $0x98] sm:$0xff]
    %v6888 = vld [vmem:[%s6867 + $0xa0] sm:$0xff]
    %v6889 = vld [vmem:[%s6867 + $0xa8] sm:$0xff]
    %v6890 = vld [vmem:[%s6867 + $0xb0] sm:$0xff]
    %v6891 = vld [vmem:[%s6867 + $0xb8] sm:$0xff]
    %v6892 = vld [vmem:[%s6867 + $0xc0] sm:$0xff]
    %v6893 = vld [vmem:[%s6867 + $0xc8] sm:$0xff]
    %v6894 = vld [vmem:[%s6867 + $0xd0] sm:$0xff]
    %v6895 = vld [vmem:[%s6867 + $0xd8] sm:$0xff]
    %v6896 = vld [vmem:[%s6867 + $0xe0] sm:$0xff]
    %v6897 = vld [vmem:[%s6867 + $0xe8] sm:$0xff]
    %v6898 = vld [vmem:[%s6867 + $0xf0] sm:$0xff]
    %v6899 = vld [vmem:[%s6867 + $0xf8] sm:$0xff]
    %v6900 = vld [vmem:[%s6867 + $0x100] sm:$0xff]
    %v6901 = vld [vmem:[%s6867 + $0x108] sm:$0xff]
    %v6902 = vld [vmem:[%s6867 + $0x110] sm:$0xff]
    %v6903 = vld [vmem:[%s6867 + $0x118] sm:$0xff]
    %v6904 = vld [vmem:[%s6867 + $0x120] sm:$0xff]
    %v6905 = vld [vmem:[%s6867 + $0x128] sm:$0xff]
    %v6906 = vld [vmem:[%s6867 + $0x130] sm:$0xff]
    %v6907 = vld [vmem:[%s6867 + $0x138] sm:$0xff]
    %v6908 = vld [vmem:[%s6867 + $0x140] sm:$0xff]
    %v6909 = vld [vmem:[%s6867 + $0x148] sm:$0xff]
    %v6910 = vld [vmem:[%s6867 + $0x150] sm:$0xff]
    %v6911 = vld [vmem:[%s6867 + $0x158] sm:$0xff]
    %v6912 = vld [vmem:[%s6867 + $0x160] sm:$0xff]
    %v6913 = vld [vmem:[%s6867 + $0x168] sm:$0xff]
    %v6914 = vld [vmem:[%s6867 + $0x170] sm:$0xff]
    %v6915 = vld [vmem:[%s6867 + $0x178] sm:$0xff]
    %v6916 = vld [vmem:[%s6867 + $0x180] sm:$0xff]
    %v6917 = vld [vmem:[%s6867 + $0x188] sm:$0xff]
    %v6918 = vld [vmem:[%s6867 + $0x190] sm:$0xff]
    %v6919 = vld [vmem:[%s6867 + $0x198] sm:$0xff]
    %v6920 = vld [vmem:[%s6867 + $0x1a0] sm:$0xff]
    %v6921 = vld [vmem:[%s6867 + $0x1a8] sm:$0xff]
    %v6922 = vld [vmem:[%s6867 + $0x1b0] sm:$0xff]
    %v6923 = vld [vmem:[%s6867 + $0x1b8] sm:$0xff]
    %v6924 = vld [vmem:[%s6867 + $0x1c0] sm:$0xff]
    %v6925 = vld [vmem:[%s6867 + $0x1c8] sm:$0xff]
    %v6926 = vld [vmem:[%s6867 + $0x1d0] sm:$0xff]
    %v6927 = vld [vmem:[%s6867 + $0x1d8] sm:$0xff]
    %v6928 = vld [vmem:[%s6867 + $0x1e0] sm:$0xff]
    %v6929 = vld [vmem:[%s6867 + $0x1e8] sm:$0xff]
    %v6930 = vld [vmem:[%s6867 + $0x1f0] sm:$0xff]
    %v6931 = vld [vmem:[%s6867 + $0x1f8] sm:$0xff]
    %v6932 = vrot.slane %v4433, 5
    %v6933 = vrot.slane %v4434, 4
    %v6934 = vsel %vm4442, %v6933, %v6932
    %v6935 = vrot.slane %v4435, 3
    %v6936 = vsel %vm4445, %v6935, %v6934
    %v6937 = vrot.slane %v4436, 2
    %v6938 = vsel %vm4448, %v6937, %v6936
    %v6939 = vrot.slane %v4437, 1
    %v6940 = vsel %vm4451, %v6939, %v6938
    %v6941 = vsel %vm4454, %v4438, %v6940
    %v6942 = vrot.slane %v4439, 7
    %v6943 = vsel %vm4457, %v6942, %v6941
    %v6944 = vrot.slane %v4440, 6
    %v6945 = vsel %vm4460, %v6944, %v6943
    %v6946 = vpack.c.b16 %v6945, %v6945
    %v7012 = vunpack.c.l.b16 %v6868
    %v7013 = vunpack.c.h.b16 %v6868
    %v7014 = vunpack.c.l.b16 %v6869
    %v7015 = vunpack.c.h.b16 %v6869
    %v7016 = vunpack.c.l.b16 %v6870
    %v7017 = vunpack.c.h.b16 %v6870
    %v7018 = vunpack.c.l.b16 %v6871
    %v7019 = vunpack.c.h.b16 %v6871
    %v7020 = vunpack.c.l.b16 %v6872
    %v7021 = vunpack.c.h.b16 %v6872
    %v7022 = vunpack.c.l.b16 %v6873
    %v7023 = vunpack.c.h.b16 %v6873
    %v7024 = vunpack.c.l.b16 %v6874
    %v7025 = vunpack.c.h.b16 %v6874
    %v7026 = vunpack.c.l.b16 %v6875
    %v7027 = vunpack.c.h.b16 %v6875
    %v7028 = vunpack.c.l.b16 %v6876
    %v7029 = vunpack.c.h.b16 %v6876
    %v7030 = vunpack.c.l.b16 %v6877
    %v7031 = vunpack.c.h.b16 %v6877
    %v7032 = vunpack.c.l.b16 %v6878
    %v7033 = vunpack.c.h.b16 %v6878
    %v7034 = vunpack.c.l.b16 %v6879
    %v7035 = vunpack.c.h.b16 %v6879
    %v7036 = vunpack.c.l.b16 %v6880
    %v7037 = vunpack.c.h.b16 %v6880
    %v7038 = vunpack.c.l.b16 %v6881
    %v7039 = vunpack.c.h.b16 %v6881
    %v7040 = vunpack.c.l.b16 %v6882
    %v7041 = vunpack.c.h.b16 %v6882
    %v7042 = vunpack.c.l.b16 %v6883
    %v7043 = vunpack.c.h.b16 %v6883
    %v7044 = vunpack.c.l.b16 %v6884
    %v7045 = vunpack.c.h.b16 %v6884
    %v7046 = vunpack.c.l.b16 %v6885
    %v7047 = vunpack.c.h.b16 %v6885
    %v7048 = vunpack.c.l.b16 %v6886
    %v7049 = vunpack.c.h.b16 %v6886
    %v7050 = vunpack.c.l.b16 %v6887
    %v7051 = vunpack.c.h.b16 %v6887
    %v7052 = vunpack.c.l.b16 %v6888
    %v7053 = vunpack.c.h.b16 %v6888
    %v7054 = vunpack.c.l.b16 %v6889
    %v7055 = vunpack.c.h.b16 %v6889
    %v7056 = vunpack.c.l.b16 %v6890
    %v7057 = vunpack.c.h.b16 %v6890
    %v7058 = vunpack.c.l.b16 %v6891
    %v7059 = vunpack.c.h.b16 %v6891
    %v7060 = vunpack.c.l.b16 %v6892
    %v7061 = vunpack.c.h.b16 %v6892
    %v7062 = vunpack.c.l.b16 %v6893
    %v7063 = vunpack.c.h.b16 %v6893
    %v7064 = vunpack.c.l.b16 %v6894
    %v7065 = vunpack.c.h.b16 %v6894
    %v7066 = vunpack.c.l.b16 %v6895
    %v7067 = vunpack.c.h.b16 %v6895
    %v7068 = vunpack.c.l.b16 %v6896
    %v7069 = vunpack.c.h.b16 %v6896
    %v7070 = vunpack.c.l.b16 %v6897
    %v7071 = vunpack.c.h.b16 %v6897
    %v7072 = vunpack.c.l.b16 %v6898
    %v7073 = vunpack.c.h.b16 %v6898
    %v7074 = vunpack.c.l.b16 %v6899
    %v7075 = vunpack.c.h.b16 %v6899
    %v7076 = vunpack.c.l.b16 %v6900
    %v7077 = vunpack.c.h.b16 %v6900
    %v7078 = vunpack.c.l.b16 %v6901
    %v7079 = vunpack.c.h.b16 %v6901
    %v7080 = vunpack.c.l.b16 %v6902
    %v7081 = vunpack.c.h.b16 %v6902
    %v7082 = vunpack.c.l.b16 %v6903
    %v7083 = vunpack.c.h.b16 %v6903
    %v7084 = vunpack.c.l.b16 %v6904
    %v7085 = vunpack.c.h.b16 %v6904
    %v7086 = vunpack.c.l.b16 %v6905
    %v7087 = vunpack.c.h.b16 %v6905
    %v7088 = vunpack.c.l.b16 %v6906
    %v7089 = vunpack.c.h.b16 %v6906
    %v7090 = vunpack.c.l.b16 %v6907
    %v7091 = vunpack.c.h.b16 %v6907
    %v7092 = vunpack.c.l.b16 %v6908
    %v7093 = vunpack.c.h.b16 %v6908
    %v7094 = vunpack.c.l.b16 %v6909
    %v7095 = vunpack.c.h.b16 %v6909
    %v7096 = vunpack.c.l.b16 %v6910
    %v7097 = vunpack.c.h.b16 %v6910
    %v7098 = vunpack.c.l.b16 %v6911
    %v7099 = vunpack.c.h.b16 %v6911
    %v7100 = vunpack.c.l.b16 %v6912
    %v7101 = vunpack.c.h.b16 %v6912
    %v7102 = vunpack.c.l.b16 %v6913
    %v7103 = vunpack.c.h.b16 %v6913
    %v7104 = vunpack.c.l.b16 %v6914
    %v7105 = vunpack.c.h.b16 %v6914
    %v7106 = vunpack.c.l.b16 %v6915
    %v7107 = vunpack.c.h.b16 %v6915
    %v7108 = vunpack.c.l.b16 %v6916
    %v7109 = vunpack.c.h.b16 %v6916
    %v7110 = vunpack.c.l.b16 %v6917
    %v7111 = vunpack.c.h.b16 %v6917
    %v7112 = vunpack.c.l.b16 %v6918
    %v7113 = vunpack.c.h.b16 %v6918
    %v7114 = vunpack.c.l.b16 %v6919
    %v7115 = vunpack.c.h.b16 %v6919
    %v7116 = vunpack.c.l.b16 %v6920
    %v7117 = vunpack.c.h.b16 %v6920
    %v7118 = vunpack.c.l.b16 %v6921
    %v7119 = vunpack.c.h.b16 %v6921
    %v7120 = vunpack.c.l.b16 %v6922
    %v7121 = vunpack.c.h.b16 %v6922
    %v7122 = vunpack.c.l.b16 %v6923
    %v7123 = vunpack.c.h.b16 %v6923
    %v7124 = vunpack.c.l.b16 %v6924
    %v7125 = vunpack.c.h.b16 %v6924
    %v7126 = vunpack.c.l.b16 %v6925
    %v7127 = vunpack.c.h.b16 %v6925
    %v7128 = vunpack.c.l.b16 %v6926
    %v7129 = vunpack.c.h.b16 %v6926
    %v7130 = vunpack.c.l.b16 %v6927
    %v7131 = vunpack.c.h.b16 %v6927
    %v7132 = vunpack.c.l.b16 %v6928
    %v7133 = vunpack.c.h.b16 %v6928
    %v7134 = vunpack.c.l.b16 %v6929
    %v7135 = vunpack.c.h.b16 %v6929
    %v7136 = vunpack.c.l.b16 %v6930
    %v7137 = vunpack.c.h.b16 %v6930
    %v7138 = vunpack.c.l.b16 %v6931
    %v7139 = vunpack.c.h.b16 %v6931
    %v7140 = vpack.c.b16 %v7020, %v7012
    %v7141 = vpack.c.b16 %v7021, %v7013
    %v7142 = vpack.c.b16 %v7022, %v7014
    %v7143 = vpack.c.b16 %v7023, %v7015
    %v7144 = vpack.c.b16 %v7024, %v7016
    %v7145 = vpack.c.b16 %v7025, %v7017
    %v7146 = vpack.c.b16 %v7026, %v7018
    %v7147 = vpack.c.b16 %v7027, %v7019
    %v7148 = vpack.c.b16 %v7036, %v7028
    %v7149 = vpack.c.b16 %v7037, %v7029
    %v7150 = vpack.c.b16 %v7038, %v7030
    %v7151 = vpack.c.b16 %v7039, %v7031
    %v7152 = vpack.c.b16 %v7040, %v7032
    %v7153 = vpack.c.b16 %v7041, %v7033
    %v7154 = vpack.c.b16 %v7042, %v7034
    %v7155 = vpack.c.b16 %v7043, %v7035
    %v7156 = vpack.c.b16 %v7052, %v7044
    %v7157 = vpack.c.b16 %v7053, %v7045
    %v7158 = vpack.c.b16 %v7054, %v7046
    %v7159 = vpack.c.b16 %v7055, %v7047
    %v7160 = vpack.c.b16 %v7056, %v7048
    %v7161 = vpack.c.b16 %v7057, %v7049
    %v7162 = vpack.c.b16 %v7058, %v7050
    %v7163 = vpack.c.b16 %v7059, %v7051
    %v7164 = vpack.c.b16 %v7068, %v7060
    %v7165 = vpack.c.b16 %v7069, %v7061
    %v7166 = vpack.c.b16 %v7070, %v7062
    %v7167 = vpack.c.b16 %v7071, %v7063
    %v7168 = vpack.c.b16 %v7072, %v7064
    %v7169 = vpack.c.b16 %v7073, %v7065
    %v7170 = vpack.c.b16 %v7074, %v7066
    %v7171 = vpack.c.b16 %v7075, %v7067
    %v7172 = vpack.c.b16 %v7084, %v7076
    %v7173 = vpack.c.b16 %v7085, %v7077
    %v7174 = vpack.c.b16 %v7086, %v7078
    %v7175 = vpack.c.b16 %v7087, %v7079
    %v7176 = vpack.c.b16 %v7088, %v7080
    %v7177 = vpack.c.b16 %v7089, %v7081
    %v7178 = vpack.c.b16 %v7090, %v7082
    %v7179 = vpack.c.b16 %v7091, %v7083
    %v7180 = vpack.c.b16 %v7100, %v7092
    %v7181 = vpack.c.b16 %v7101, %v7093
    %v7182 = vpack.c.b16 %v7102, %v7094
    %v7183 = vpack.c.b16 %v7103, %v7095
    %v7184 = vpack.c.b16 %v7104, %v7096
    %v7185 = vpack.c.b16 %v7105, %v7097
    %v7186 = vpack.c.b16 %v7106, %v7098
    %v7187 = vpack.c.b16 %v7107, %v7099
    %v7188 = vpack.c.b16 %v7116, %v7108
    %v7189 = vpack.c.b16 %v7117, %v7109
    %v7190 = vpack.c.b16 %v7118, %v7110
    %v7191 = vpack.c.b16 %v7119, %v7111
    %v7192 = vpack.c.b16 %v7120, %v7112
    %v7193 = vpack.c.b16 %v7121, %v7113
    %v7194 = vpack.c.b16 %v7122, %v7114
    %v7195 = vpack.c.b16 %v7123, %v7115
    %v7196 = vpack.c.b16 %v7132, %v7124
    %v7197 = vpack.c.b16 %v7133, %v7125
    %v7198 = vpack.c.b16 %v7134, %v7126
    %v7199 = vpack.c.b16 %v7135, %v7127
    %v7200 = vpack.c.b16 %v7136, %v7128
    %v7201 = vpack.c.b16 %v7137, %v7129
    %v7202 = vpack.c.b16 %v7138, %v7130
    %v7203 = vpack.c.b16 %v7139, %v7131
    %7268 = vmatpush.bf16.msra.mxu0 %v7196
    %7269 = vmatpush.bf16.msra.mxu0 %v7188
    %7270 = vmatpush.bf16.msra.mxu0 %v7180
    %7271 = vmatpush.bf16.msra.mxu0 %v7172
    %7272 = vmatpush.bf16.msra.mxu0 %v7164
    %7273 = vmatpush.bf16.msra.mxu0 %v7156
    %7274 = vmatpush.bf16.msra.mxu0 %v7148
    %7275 = vmatpush.bf16.msra.mxu0 %v7140
    %7276 = vmatmul.bf16.gmra.mxu0 %v6946
    %v7277 = vpop.f32.mrf.mxu0
    %v7278 = vadd.f32 0.0, %v7277
    %v7279 = vpop.f32.mrf.mxu0
    %7280 = vdwg.mxu0
    %7281 = vmatpush.bf16.msra.mxu0 %v7197
    %7282 = vmatpush.bf16.msra.mxu0 %v7189
    %7283 = vmatpush.bf16.msra.mxu0 %v7181
    %7284 = vmatpush.bf16.msra.mxu0 %v7173
    %7285 = vmatpush.bf16.msra.mxu0 %v7165
    %7286 = vmatpush.bf16.msra.mxu0 %v7157
    %7287 = vmatpush.bf16.msra.mxu0 %v7149
    %7288 = vmatpush.bf16.msra.mxu0 %v7141
    %7289 = vmatmul.bf16.gmra.mxu0 %v6946
    %v7290 = vpop.f32.mrf.mxu0
    %v7291 = vadd.f32 0.0, %v7290
    %v7292 = vpop.f32.mrf.mxu0
    %7293 = vdwg.mxu0
    %7294 = vmatpush.bf16.msra.mxu0 %v7198
    %7295 = vmatpush.bf16.msra.mxu0 %v7190
    %7296 = vmatpush.bf16.msra.mxu0 %v7182
    %7297 = vmatpush.bf16.msra.mxu0 %v7174
    %7298 = vmatpush.bf16.msra.mxu0 %v7166
    %7299 = vmatpush.bf16.msra.mxu0 %v7158
    %7300 = vmatpush.bf16.msra.mxu0 %v7150
    %7301 = vmatpush.bf16.msra.mxu0 %v7142
    %7302 = vmatmul.bf16.gmra.mxu0 %v6946
    %v7303 = vpop.f32.mrf.mxu0
    %v7304 = vadd.f32 0.0, %v7303
    %v7305 = vpop.f32.mrf.mxu0
    %7306 = vdwg.mxu0
    %7307 = vmatpush.bf16.msra.mxu0 %v7199
    %7308 = vmatpush.bf16.msra.mxu0 %v7191
    %7309 = vmatpush.bf16.msra.mxu0 %v7183
    %7310 = vmatpush.bf16.msra.mxu0 %v7175
    %7311 = vmatpush.bf16.msra.mxu0 %v7167
    %7312 = vmatpush.bf16.msra.mxu0 %v7159
    %7313 = vmatpush.bf16.msra.mxu0 %v7151
    %7314 = vmatpush.bf16.msra.mxu0 %v7143
    %7315 = vmatmul.bf16.gmra.mxu0 %v6946
    %v7316 = vpop.f32.mrf.mxu0
    %v7317 = vadd.f32 0.0, %v7316
    %v7318 = vpop.f32.mrf.mxu0
    %7319 = vdwg.mxu0
    %7320 = vmatpush.bf16.msra.mxu0 %v7200
    %7321 = vmatpush.bf16.msra.mxu0 %v7192
    %7322 = vmatpush.bf16.msra.mxu0 %v7184
    %7323 = vmatpush.bf16.msra.mxu0 %v7176
    %7324 = vmatpush.bf16.msra.mxu0 %v7168
    %7325 = vmatpush.bf16.msra.mxu0 %v7160
    %7326 = vmatpush.bf16.msra.mxu0 %v7152
    %7327 = vmatpush.bf16.msra.mxu0 %v7144
    %7328 = vmatmul.bf16.gmra.mxu0 %v6946
    %v7329 = vpop.f32.mrf.mxu0
    %v7330 = vadd.f32 0.0, %v7329
    %v7331 = vpop.f32.mrf.mxu0
    %7332 = vdwg.mxu0
    %7333 = vmatpush.bf16.msra.mxu0 %v7201
    %7334 = vmatpush.bf16.msra.mxu0 %v7193
    %7335 = vmatpush.bf16.msra.mxu0 %v7185
    %7336 = vmatpush.bf16.msra.mxu0 %v7177
    %7337 = vmatpush.bf16.msra.mxu0 %v7169
    %7338 = vmatpush.bf16.msra.mxu0 %v7161
    %7339 = vmatpush.bf16.msra.mxu0 %v7153
    %7340 = vmatpush.bf16.msra.mxu0 %v7145
    %7341 = vmatmul.bf16.gmra.mxu0 %v6946
    %v7342 = vpop.f32.mrf.mxu0
    %v7343 = vadd.f32 0.0, %v7342
    %v7344 = vpop.f32.mrf.mxu0
    %7345 = vdwg.mxu0
    %7346 = vmatpush.bf16.msra.mxu0 %v7202
    %7347 = vmatpush.bf16.msra.mxu0 %v7194
    %7348 = vmatpush.bf16.msra.mxu0 %v7186
    %7349 = vmatpush.bf16.msra.mxu0 %v7178
    %7350 = vmatpush.bf16.msra.mxu0 %v7170
    %7351 = vmatpush.bf16.msra.mxu0 %v7162
    %7352 = vmatpush.bf16.msra.mxu0 %v7154
    %7353 = vmatpush.bf16.msra.mxu0 %v7146
    %7354 = vmatmul.bf16.gmra.mxu0 %v6946
    %v7355 = vpop.f32.mrf.mxu0
    %v7356 = vadd.f32 0.0, %v7355
    %v7357 = vpop.f32.mrf.mxu0
    %7358 = vdwg.mxu0
    %7359 = vmatpush.bf16.msra.mxu0 %v7203
    %7360 = vmatpush.bf16.msra.mxu0 %v7195
    %7361 = vmatpush.bf16.msra.mxu0 %v7187
    %7362 = vmatpush.bf16.msra.mxu0 %v7179
    %7363 = vmatpush.bf16.msra.mxu0 %v7171
    %7364 = vmatpush.bf16.msra.mxu0 %v7163
    %7365 = vmatpush.bf16.msra.mxu0 %v7155
    %7366 = vmatpush.bf16.msra.mxu0 %v7147
    %7367 = vmatmul.bf16.gmra.mxu0 %v6946
    %v7368 = vpop.f32.mrf.mxu0
    %v7369 = vadd.f32 0.0, %v7368
    %v7370 = vpop.f32.mrf.mxu0
    %7371 = vdwg.mxu0
    %v7372 = vadd.f32 %v6859, %v7278
    %v7373 = vadd.f32 %v6860, %v7291
    %v7374 = vadd.f32 %v6861, %v7304
    %v7375 = vadd.f32 %v6862, %v7317
    %v7376 = vadd.f32 %v6863, %v7330
    %v7377 = vadd.f32 %v6864, %v7343
    %v7378 = vadd.f32 %v6865, %v7356
    %v7379 = vadd.f32 %v6866, %v7369
    %s7380 = scalar_lea.vmem [#allocation13], 3072
    %v7381 = vld [vmem:[%s7380] sm:$0xff]
    %v7382 = vld [vmem:[%s7380 + $0x8] sm:$0xff]
    %v7383 = vld [vmem:[%s7380 + $0x10] sm:$0xff]
    %v7384 = vld [vmem:[%s7380 + $0x18] sm:$0xff]
    %v7385 = vld [vmem:[%s7380 + $0x20] sm:$0xff]
    %v7386 = vld [vmem:[%s7380 + $0x28] sm:$0xff]
    %v7387 = vld [vmem:[%s7380 + $0x30] sm:$0xff]
    %v7388 = vld [vmem:[%s7380 + $0x38] sm:$0xff]
    %v7389 = vld [vmem:[%s7380 + $0x40] sm:$0xff]
    %v7390 = vld [vmem:[%s7380 + $0x48] sm:$0xff]
    %v7391 = vld [vmem:[%s7380 + $0x50] sm:$0xff]
    %v7392 = vld [vmem:[%s7380 + $0x58] sm:$0xff]
    %v7393 = vld [vmem:[%s7380 + $0x60] sm:$0xff]
    %v7394 = vld [vmem:[%s7380 + $0x68] sm:$0xff]
    %v7395 = vld [vmem:[%s7380 + $0x70] sm:$0xff]
    %v7396 = vld [vmem:[%s7380 + $0x78] sm:$0xff]
    %v7397 = vld [vmem:[%s7380 + $0x80] sm:$0xff]
    %v7398 = vld [vmem:[%s7380 + $0x88] sm:$0xff]
    %v7399 = vld [vmem:[%s7380 + $0x90] sm:$0xff]
    %v7400 = vld [vmem:[%s7380 + $0x98] sm:$0xff]
    %v7401 = vld [vmem:[%s7380 + $0xa0] sm:$0xff]
    %v7402 = vld [vmem:[%s7380 + $0xa8] sm:$0xff]
    %v7403 = vld [vmem:[%s7380 + $0xb0] sm:$0xff]
    %v7404 = vld [vmem:[%s7380 + $0xb8] sm:$0xff]
    %v7405 = vld [vmem:[%s7380 + $0xc0] sm:$0xff]
    %v7406 = vld [vmem:[%s7380 + $0xc8] sm:$0xff]
    %v7407 = vld [vmem:[%s7380 + $0xd0] sm:$0xff]
    %v7408 = vld [vmem:[%s7380 + $0xd8] sm:$0xff]
    %v7409 = vld [vmem:[%s7380 + $0xe0] sm:$0xff]
    %v7410 = vld [vmem:[%s7380 + $0xe8] sm:$0xff]
    %v7411 = vld [vmem:[%s7380 + $0xf0] sm:$0xff]
    %v7412 = vld [vmem:[%s7380 + $0xf8] sm:$0xff]
    %v7413 = vld [vmem:[%s7380 + $0x100] sm:$0xff]
    %v7414 = vld [vmem:[%s7380 + $0x108] sm:$0xff]
    %v7415 = vld [vmem:[%s7380 + $0x110] sm:$0xff]
    %v7416 = vld [vmem:[%s7380 + $0x118] sm:$0xff]
    %v7417 = vld [vmem:[%s7380 + $0x120] sm:$0xff]
    %v7418 = vld [vmem:[%s7380 + $0x128] sm:$0xff]
    %v7419 = vld [vmem:[%s7380 + $0x130] sm:$0xff]
    %v7420 = vld [vmem:[%s7380 + $0x138] sm:$0xff]
    %v7421 = vld [vmem:[%s7380 + $0x140] sm:$0xff]
    %v7422 = vld [vmem:[%s7380 + $0x148] sm:$0xff]
    %v7423 = vld [vmem:[%s7380 + $0x150] sm:$0xff]
    %v7424 = vld [vmem:[%s7380 + $0x158] sm:$0xff]
    %v7425 = vld [vmem:[%s7380 + $0x160] sm:$0xff]
    %v7426 = vld [vmem:[%s7380 + $0x168] sm:$0xff]
    %v7427 = vld [vmem:[%s7380 + $0x170] sm:$0xff]
    %v7428 = vld [vmem:[%s7380 + $0x178] sm:$0xff]
    %v7429 = vld [vmem:[%s7380 + $0x180] sm:$0xff]
    %v7430 = vld [vmem:[%s7380 + $0x188] sm:$0xff]
    %v7431 = vld [vmem:[%s7380 + $0x190] sm:$0xff]
    %v7432 = vld [vmem:[%s7380 + $0x198] sm:$0xff]
    %v7433 = vld [vmem:[%s7380 + $0x1a0] sm:$0xff]
    %v7434 = vld [vmem:[%s7380 + $0x1a8] sm:$0xff]
    %v7435 = vld [vmem:[%s7380 + $0x1b0] sm:$0xff]
    %v7436 = vld [vmem:[%s7380 + $0x1b8] sm:$0xff]
    %v7437 = vld [vmem:[%s7380 + $0x1c0] sm:$0xff]
    %v7438 = vld [vmem:[%s7380 + $0x1c8] sm:$0xff]
    %v7439 = vld [vmem:[%s7380 + $0x1d0] sm:$0xff]
    %v7440 = vld [vmem:[%s7380 + $0x1d8] sm:$0xff]
    %v7441 = vld [vmem:[%s7380 + $0x1e0] sm:$0xff]
    %v7442 = vld [vmem:[%s7380 + $0x1e8] sm:$0xff]
    %v7443 = vld [vmem:[%s7380 + $0x1f0] sm:$0xff]
    %v7444 = vld [vmem:[%s7380 + $0x1f8] sm:$0xff]
    %v7445 = vrot.slane %v4433, 6
    %v7446 = vrot.slane %v4434, 5
    %v7447 = vsel %vm4442, %v7446, %v7445
    %v7448 = vrot.slane %v4435, 4
    %v7449 = vsel %vm4445, %v7448, %v7447
    %v7450 = vrot.slane %v4436, 3
    %v7451 = vsel %vm4448, %v7450, %v7449
    %v7452 = vrot.slane %v4437, 2
    %v7453 = vsel %vm4451, %v7452, %v7451
    %v7454 = vrot.slane %v4438, 1
    %v7455 = vsel %vm4454, %v7454, %v7453
    %v7456 = vsel %vm4457, %v4439, %v7455
    %v7457 = vrot.slane %v4440, 7
    %v7458 = vsel %vm4460, %v7457, %v7456
    %v7459 = vpack.c.b16 %v7458, %v7458
    %v7525 = vunpack.c.l.b16 %v7381
    %v7526 = vunpack.c.h.b16 %v7381
    %v7527 = vunpack.c.l.b16 %v7382
    %v7528 = vunpack.c.h.b16 %v7382
    %v7529 = vunpack.c.l.b16 %v7383
    %v7530 = vunpack.c.h.b16 %v7383
    %v7531 = vunpack.c.l.b16 %v7384
    %v7532 = vunpack.c.h.b16 %v7384
    %v7533 = vunpack.c.l.b16 %v7385
    %v7534 = vunpack.c.h.b16 %v7385
    %v7535 = vunpack.c.l.b16 %v7386
    %v7536 = vunpack.c.h.b16 %v7386
    %v7537 = vunpack.c.l.b16 %v7387
    %v7538 = vunpack.c.h.b16 %v7387
    %v7539 = vunpack.c.l.b16 %v7388
    %v7540 = vunpack.c.h.b16 %v7388
    %v7541 = vunpack.c.l.b16 %v7389
    %v7542 = vunpack.c.h.b16 %v7389
    %v7543 = vunpack.c.l.b16 %v7390
    %v7544 = vunpack.c.h.b16 %v7390
    %v7545 = vunpack.c.l.b16 %v7391
    %v7546 = vunpack.c.h.b16 %v7391
    %v7547 = vunpack.c.l.b16 %v7392
    %v7548 = vunpack.c.h.b16 %v7392
    %v7549 = vunpack.c.l.b16 %v7393
    %v7550 = vunpack.c.h.b16 %v7393
    %v7551 = vunpack.c.l.b16 %v7394
    %v7552 = vunpack.c.h.b16 %v7394
    %v7553 = vunpack.c.l.b16 %v7395
    %v7554 = vunpack.c.h.b16 %v7395
    %v7555 = vunpack.c.l.b16 %v7396
    %v7556 = vunpack.c.h.b16 %v7396
    %v7557 = vunpack.c.l.b16 %v7397
    %v7558 = vunpack.c.h.b16 %v7397
    %v7559 = vunpack.c.l.b16 %v7398
    %v7560 = vunpack.c.h.b16 %v7398
    %v7561 = vunpack.c.l.b16 %v7399
    %v7562 = vunpack.c.h.b16 %v7399
    %v7563 = vunpack.c.l.b16 %v7400
    %v7564 = vunpack.c.h.b16 %v7400
    %v7565 = vunpack.c.l.b16 %v7401
    %v7566 = vunpack.c.h.b16 %v7401
    %v7567 = vunpack.c.l.b16 %v7402
    %v7568 = vunpack.c.h.b16 %v7402
    %v7569 = vunpack.c.l.b16 %v7403
    %v7570 = vunpack.c.h.b16 %v7403
    %v7571 = vunpack.c.l.b16 %v7404
    %v7572 = vunpack.c.h.b16 %v7404
    %v7573 = vunpack.c.l.b16 %v7405
    %v7574 = vunpack.c.h.b16 %v7405
    %v7575 = vunpack.c.l.b16 %v7406
    %v7576 = vunpack.c.h.b16 %v7406
    %v7577 = vunpack.c.l.b16 %v7407
    %v7578 = vunpack.c.h.b16 %v7407
    %v7579 = vunpack.c.l.b16 %v7408
    %v7580 = vunpack.c.h.b16 %v7408
    %v7581 = vunpack.c.l.b16 %v7409
    %v7582 = vunpack.c.h.b16 %v7409
    %v7583 = vunpack.c.l.b16 %v7410
    %v7584 = vunpack.c.h.b16 %v7410
    %v7585 = vunpack.c.l.b16 %v7411
    %v7586 = vunpack.c.h.b16 %v7411
    %v7587 = vunpack.c.l.b16 %v7412
    %v7588 = vunpack.c.h.b16 %v7412
    %v7589 = vunpack.c.l.b16 %v7413
    %v7590 = vunpack.c.h.b16 %v7413
    %v7591 = vunpack.c.l.b16 %v7414
    %v7592 = vunpack.c.h.b16 %v7414
    %v7593 = vunpack.c.l.b16 %v7415
    %v7594 = vunpack.c.h.b16 %v7415
    %v7595 = vunpack.c.l.b16 %v7416
    %v7596 = vunpack.c.h.b16 %v7416
    %v7597 = vunpack.c.l.b16 %v7417
    %v7598 = vunpack.c.h.b16 %v7417
    %v7599 = vunpack.c.l.b16 %v7418
    %v7600 = vunpack.c.h.b16 %v7418
    %v7601 = vunpack.c.l.b16 %v7419
    %v7602 = vunpack.c.h.b16 %v7419
    %v7603 = vunpack.c.l.b16 %v7420
    %v7604 = vunpack.c.h.b16 %v7420
    %v7605 = vunpack.c.l.b16 %v7421
    %v7606 = vunpack.c.h.b16 %v7421
    %v7607 = vunpack.c.l.b16 %v7422
    %v7608 = vunpack.c.h.b16 %v7422
    %v7609 = vunpack.c.l.b16 %v7423
    %v7610 = vunpack.c.h.b16 %v7423
    %v7611 = vunpack.c.l.b16 %v7424
    %v7612 = vunpack.c.h.b16 %v7424
    %v7613 = vunpack.c.l.b16 %v7425
    %v7614 = vunpack.c.h.b16 %v7425
    %v7615 = vunpack.c.l.b16 %v7426
    %v7616 = vunpack.c.h.b16 %v7426
    %v7617 = vunpack.c.l.b16 %v7427
    %v7618 = vunpack.c.h.b16 %v7427
    %v7619 = vunpack.c.l.b16 %v7428
    %v7620 = vunpack.c.h.b16 %v7428
    %v7621 = vunpack.c.l.b16 %v7429
    %v7622 = vunpack.c.h.b16 %v7429
    %v7623 = vunpack.c.l.b16 %v7430
    %v7624 = vunpack.c.h.b16 %v7430
    %v7625 = vunpack.c.l.b16 %v7431
    %v7626 = vunpack.c.h.b16 %v7431
    %v7627 = vunpack.c.l.b16 %v7432
    %v7628 = vunpack.c.h.b16 %v7432
    %v7629 = vunpack.c.l.b16 %v7433
    %v7630 = vunpack.c.h.b16 %v7433
    %v7631 = vunpack.c.l.b16 %v7434
    %v7632 = vunpack.c.h.b16 %v7434
    %v7633 = vunpack.c.l.b16 %v7435
    %v7634 = vunpack.c.h.b16 %v7435
    %v7635 = vunpack.c.l.b16 %v7436
    %v7636 = vunpack.c.h.b16 %v7436
    %v7637 = vunpack.c.l.b16 %v7437
    %v7638 = vunpack.c.h.b16 %v7437
    %v7639 = vunpack.c.l.b16 %v7438
    %v7640 = vunpack.c.h.b16 %v7438
    %v7641 = vunpack.c.l.b16 %v7439
    %v7642 = vunpack.c.h.b16 %v7439
    %v7643 = vunpack.c.l.b16 %v7440
    %v7644 = vunpack.c.h.b16 %v7440
    %v7645 = vunpack.c.l.b16 %v7441
    %v7646 = vunpack.c.h.b16 %v7441
    %v7647 = vunpack.c.l.b16 %v7442
    %v7648 = vunpack.c.h.b16 %v7442
    %v7649 = vunpack.c.l.b16 %v7443
    %v7650 = vunpack.c.h.b16 %v7443
    %v7651 = vunpack.c.l.b16 %v7444
    %v7652 = vunpack.c.h.b16 %v7444
    %v7653 = vpack.c.b16 %v7533, %v7525
    %v7654 = vpack.c.b16 %v7534, %v7526
    %v7655 = vpack.c.b16 %v7535, %v7527
    %v7656 = vpack.c.b16 %v7536, %v7528
    %v7657 = vpack.c.b16 %v7537, %v7529
    %v7658 = vpack.c.b16 %v7538, %v7530
    %v7659 = vpack.c.b16 %v7539, %v7531
    %v7660 = vpack.c.b16 %v7540, %v7532
    %v7661 = vpack.c.b16 %v7549, %v7541
    %v7662 = vpack.c.b16 %v7550, %v7542
    %v7663 = vpack.c.b16 %v7551, %v7543
    %v7664 = vpack.c.b16 %v7552, %v7544
    %v7665 = vpack.c.b16 %v7553, %v7545
    %v7666 = vpack.c.b16 %v7554, %v7546
    %v7667 = vpack.c.b16 %v7555, %v7547
    %v7668 = vpack.c.b16 %v7556, %v7548
    %v7669 = vpack.c.b16 %v7565, %v7557
    %v7670 = vpack.c.b16 %v7566, %v7558
    %v7671 = vpack.c.b16 %v7567, %v7559
    %v7672 = vpack.c.b16 %v7568, %v7560
    %v7673 = vpack.c.b16 %v7569, %v7561
    %v7674 = vpack.c.b16 %v7570, %v7562
    %v7675 = vpack.c.b16 %v7571, %v7563
    %v7676 = vpack.c.b16 %v7572, %v7564
    %v7677 = vpack.c.b16 %v7581, %v7573
    %v7678 = vpack.c.b16 %v7582, %v7574
    %v7679 = vpack.c.b16 %v7583, %v7575
    %v7680 = vpack.c.b16 %v7584, %v7576
    %v7681 = vpack.c.b16 %v7585, %v7577
    %v7682 = vpack.c.b16 %v7586, %v7578
    %v7683 = vpack.c.b16 %v7587, %v7579
    %v7684 = vpack.c.b16 %v7588, %v7580
    %v7685 = vpack.c.b16 %v7597, %v7589
    %v7686 = vpack.c.b16 %v7598, %v7590
    %v7687 = vpack.c.b16 %v7599, %v7591
    %v7688 = vpack.c.b16 %v7600, %v7592
    %v7689 = vpack.c.b16 %v7601, %v7593
    %v7690 = vpack.c.b16 %v7602, %v7594
    %v7691 = vpack.c.b16 %v7603, %v7595
    %v7692 = vpack.c.b16 %v7604, %v7596
    %v7693 = vpack.c.b16 %v7613, %v7605
    %v7694 = vpack.c.b16 %v7614, %v7606
    %v7695 = vpack.c.b16 %v7615, %v7607
    %v7696 = vpack.c.b16 %v7616, %v7608
    %v7697 = vpack.c.b16 %v7617, %v7609
    %v7698 = vpack.c.b16 %v7618, %v7610
    %v7699 = vpack.c.b16 %v7619, %v7611
    %v7700 = vpack.c.b16 %v7620, %v7612
    %v7701 = vpack.c.b16 %v7629, %v7621
    %v7702 = vpack.c.b16 %v7630, %v7622
    %v7703 = vpack.c.b16 %v7631, %v7623
    %v7704 = vpack.c.b16 %v7632, %v7624
    %v7705 = vpack.c.b16 %v7633, %v7625
    %v7706 = vpack.c.b16 %v7634, %v7626
    %v7707 = vpack.c.b16 %v7635, %v7627
    %v7708 = vpack.c.b16 %v7636, %v7628
    %v7709 = vpack.c.b16 %v7645, %v7637
    %v7710 = vpack.c.b16 %v7646, %v7638
    %v7711 = vpack.c.b16 %v7647, %v7639
    %v7712 = vpack.c.b16 %v7648, %v7640
    %v7713 = vpack.c.b16 %v7649, %v7641
    %v7714 = vpack.c.b16 %v7650, %v7642
    %v7715 = vpack.c.b16 %v7651, %v7643
    %v7716 = vpack.c.b16 %v7652, %v7644
    %7781 = vmatpush.bf16.msra.mxu0 %v7709
    %7782 = vmatpush.bf16.msra.mxu0 %v7701
    %7783 = vmatpush.bf16.msra.mxu0 %v7693
    %7784 = vmatpush.bf16.msra.mxu0 %v7685
    %7785 = vmatpush.bf16.msra.mxu0 %v7677
    %7786 = vmatpush.bf16.msra.mxu0 %v7669
    %7787 = vmatpush.bf16.msra.mxu0 %v7661
    %7788 = vmatpush.bf16.msra.mxu0 %v7653
    %7789 = vmatmul.bf16.gmra.mxu0 %v7459
    %v7790 = vpop.f32.mrf.mxu0
    %v7791 = vadd.f32 0.0, %v7790
    %v7792 = vpop.f32.mrf.mxu0
    %7793 = vdwg.mxu0
    %7794 = vmatpush.bf16.msra.mxu0 %v7710
    %7795 = vmatpush.bf16.msra.mxu0 %v7702
    %7796 = vmatpush.bf16.msra.mxu0 %v7694
    %7797 = vmatpush.bf16.msra.mxu0 %v7686
    %7798 = vmatpush.bf16.msra.mxu0 %v7678
    %7799 = vmatpush.bf16.msra.mxu0 %v7670
    %7800 = vmatpush.bf16.msra.mxu0 %v7662
    %7801 = vmatpush.bf16.msra.mxu0 %v7654
    %7802 = vmatmul.bf16.gmra.mxu0 %v7459
    %v7803 = vpop.f32.mrf.mxu0
    %v7804 = vadd.f32 0.0, %v7803
    %v7805 = vpop.f32.mrf.mxu0
    %7806 = vdwg.mxu0
    %7807 = vmatpush.bf16.msra.mxu0 %v7711
    %7808 = vmatpush.bf16.msra.mxu0 %v7703
    %7809 = vmatpush.bf16.msra.mxu0 %v7695
    %7810 = vmatpush.bf16.msra.mxu0 %v7687
    %7811 = vmatpush.bf16.msra.mxu0 %v7679
    %7812 = vmatpush.bf16.msra.mxu0 %v7671
    %7813 = vmatpush.bf16.msra.mxu0 %v7663
    %7814 = vmatpush.bf16.msra.mxu0 %v7655
    %7815 = vmatmul.bf16.gmra.mxu0 %v7459
    %v7816 = vpop.f32.mrf.mxu0
    %v7817 = vadd.f32 0.0, %v7816
    %v7818 = vpop.f32.mrf.mxu0
    %7819 = vdwg.mxu0
    %7820 = vmatpush.bf16.msra.mxu0 %v7712
    %7821 = vmatpush.bf16.msra.mxu0 %v7704
    %7822 = vmatpush.bf16.msra.mxu0 %v7696
    %7823 = vmatpush.bf16.msra.mxu0 %v7688
    %7824 = vmatpush.bf16.msra.mxu0 %v7680
    %7825 = vmatpush.bf16.msra.mxu0 %v7672
    %7826 = vmatpush.bf16.msra.mxu0 %v7664
    %7827 = vmatpush.bf16.msra.mxu0 %v7656
    %7828 = vmatmul.bf16.gmra.mxu0 %v7459
    %v7829 = vpop.f32.mrf.mxu0
    %v7830 = vadd.f32 0.0, %v7829
    %v7831 = vpop.f32.mrf.mxu0
    %7832 = vdwg.mxu0
    %7833 = vmatpush.bf16.msra.mxu0 %v7713
    %7834 = vmatpush.bf16.msra.mxu0 %v7705
    %7835 = vmatpush.bf16.msra.mxu0 %v7697
    %7836 = vmatpush.bf16.msra.mxu0 %v7689
    %7837 = vmatpush.bf16.msra.mxu0 %v7681
    %7838 = vmatpush.bf16.msra.mxu0 %v7673
    %7839 = vmatpush.bf16.msra.mxu0 %v7665
    %7840 = vmatpush.bf16.msra.mxu0 %v7657
    %7841 = vmatmul.bf16.gmra.mxu0 %v7459
    %v7842 = vpop.f32.mrf.mxu0
    %v7843 = vadd.f32 0.0, %v7842
    %v7844 = vpop.f32.mrf.mxu0
    %7845 = vdwg.mxu0
    %7846 = vmatpush.bf16.msra.mxu0 %v7714
    %7847 = vmatpush.bf16.msra.mxu0 %v7706
    %7848 = vmatpush.bf16.msra.mxu0 %v7698
    %7849 = vmatpush.bf16.msra.mxu0 %v7690
    %7850 = vmatpush.bf16.msra.mxu0 %v7682
    %7851 = vmatpush.bf16.msra.mxu0 %v7674
    %7852 = vmatpush.bf16.msra.mxu0 %v7666
    %7853 = vmatpush.bf16.msra.mxu0 %v7658
    %7854 = vmatmul.bf16.gmra.mxu0 %v7459
    %v7855 = vpop.f32.mrf.mxu0
    %v7856 = vadd.f32 0.0, %v7855
    %v7857 = vpop.f32.mrf.mxu0
    %7858 = vdwg.mxu0
    %7859 = vmatpush.bf16.msra.mxu0 %v7715
    %7860 = vmatpush.bf16.msra.mxu0 %v7707
    %7861 = vmatpush.bf16.msra.mxu0 %v7699
    %7862 = vmatpush.bf16.msra.mxu0 %v7691
    %7863 = vmatpush.bf16.msra.mxu0 %v7683
    %7864 = vmatpush.bf16.msra.mxu0 %v7675
    %7865 = vmatpush.bf16.msra.mxu0 %v7667
    %7866 = vmatpush.bf16.msra.mxu0 %v7659
    %7867 = vmatmul.bf16.gmra.mxu0 %v7459
    %v7868 = vpop.f32.mrf.mxu0
    %v7869 = vadd.f32 0.0, %v7868
    %v7870 = vpop.f32.mrf.mxu0
    %7871 = vdwg.mxu0
    %7872 = vmatpush.bf16.msra.mxu0 %v7716
    %7873 = vmatpush.bf16.msra.mxu0 %v7708
    %7874 = vmatpush.bf16.msra.mxu0 %v7700
    %7875 = vmatpush.bf16.msra.mxu0 %v7692
    %7876 = vmatpush.bf16.msra.mxu0 %v7684
    %7877 = vmatpush.bf16.msra.mxu0 %v7676
    %7878 = vmatpush.bf16.msra.mxu0 %v7668
    %7879 = vmatpush.bf16.msra.mxu0 %v7660
    %7880 = vmatmul.bf16.gmra.mxu0 %v7459
    %v7881 = vpop.f32.mrf.mxu0
    %v7882 = vadd.f32 0.0, %v7881
    %v7883 = vpop.f32.mrf.mxu0
    %7884 = vdwg.mxu0
    %v7885 = vadd.f32 %v7372, %v7791
    %v7886 = vadd.f32 %v7373, %v7804
    %v7887 = vadd.f32 %v7374, %v7817
    %v7888 = vadd.f32 %v7375, %v7830
    %v7889 = vadd.f32 %v7376, %v7843
    %v7890 = vadd.f32 %v7377, %v7856
    %v7891 = vadd.f32 %v7378, %v7869
    %v7892 = vadd.f32 %v7379, %v7882
    %s7893 = scalar_lea.vmem [#allocation13], 3584
    %v7894 = vld [vmem:[%s7893] sm:$0xff]
    %v7895 = vld [vmem:[%s7893 + $0x8] sm:$0xff]
    %v7896 = vld [vmem:[%s7893 + $0x10] sm:$0xff]
    %v7897 = vld [vmem:[%s7893 + $0x18] sm:$0xff]
    %v7898 = vld [vmem:[%s7893 + $0x20] sm:$0xff]
    %v7899 = vld [vmem:[%s7893 + $0x28] sm:$0xff]
    %v7900 = vld [vmem:[%s7893 + $0x30] sm:$0xff]
    %v7901 = vld [vmem:[%s7893 + $0x38] sm:$0xff]
    %v7902 = vld [vmem:[%s7893 + $0x40] sm:$0xff]
    %v7903 = vld [vmem:[%s7893 + $0x48] sm:$0xff]
    %v7904 = vld [vmem:[%s7893 + $0x50] sm:$0xff]
    %v7905 = vld [vmem:[%s7893 + $0x58] sm:$0xff]
    %v7906 = vld [vmem:[%s7893 + $0x60] sm:$0xff]
    %v7907 = vld [vmem:[%s7893 + $0x68] sm:$0xff]
    %v7908 = vld [vmem:[%s7893 + $0x70] sm:$0xff]
    %v7909 = vld [vmem:[%s7893 + $0x78] sm:$0xff]
    %v7910 = vld [vmem:[%s7893 + $0x80] sm:$0xff]
    %v7911 = vld [vmem:[%s7893 + $0x88] sm:$0xff]
    %v7912 = vld [vmem:[%s7893 + $0x90] sm:$0xff]
    %v7913 = vld [vmem:[%s7893 + $0x98] sm:$0xff]
    %v7914 = vld [vmem:[%s7893 + $0xa0] sm:$0xff]
    %v7915 = vld [vmem:[%s7893 + $0xa8] sm:$0xff]
    %v7916 = vld [vmem:[%s7893 + $0xb0] sm:$0xff]
    %v7917 = vld [vmem:[%s7893 + $0xb8] sm:$0xff]
    %v7918 = vld [vmem:[%s7893 + $0xc0] sm:$0xff]
    %v7919 = vld [vmem:[%s7893 + $0xc8] sm:$0xff]
    %v7920 = vld [vmem:[%s7893 + $0xd0] sm:$0xff]
    %v7921 = vld [vmem:[%s7893 + $0xd8] sm:$0xff]
    %v7922 = vld [vmem:[%s7893 + $0xe0] sm:$0xff]
    %v7923 = vld [vmem:[%s7893 + $0xe8] sm:$0xff]
    %v7924 = vld [vmem:[%s7893 + $0xf0] sm:$0xff]
    %v7925 = vld [vmem:[%s7893 + $0xf8] sm:$0xff]
    %v7926 = vld [vmem:[%s7893 + $0x100] sm:$0xff]
    %v7927 = vld [vmem:[%s7893 + $0x108] sm:$0xff]
    %v7928 = vld [vmem:[%s7893 + $0x110] sm:$0xff]
    %v7929 = vld [vmem:[%s7893 + $0x118] sm:$0xff]
    %v7930 = vld [vmem:[%s7893 + $0x120] sm:$0xff]
    %v7931 = vld [vmem:[%s7893 + $0x128] sm:$0xff]
    %v7932 = vld [vmem:[%s7893 + $0x130] sm:$0xff]
    %v7933 = vld [vmem:[%s7893 + $0x138] sm:$0xff]
    %v7934 = vld [vmem:[%s7893 + $0x140] sm:$0xff]
    %v7935 = vld [vmem:[%s7893 + $0x148] sm:$0xff]
    %v7936 = vld [vmem:[%s7893 + $0x150] sm:$0xff]
    %v7937 = vld [vmem:[%s7893 + $0x158] sm:$0xff]
    %v7938 = vld [vmem:[%s7893 + $0x160] sm:$0xff]
    %v7939 = vld [vmem:[%s7893 + $0x168] sm:$0xff]
    %v7940 = vld [vmem:[%s7893 + $0x170] sm:$0xff]
    %v7941 = vld [vmem:[%s7893 + $0x178] sm:$0xff]
    %v7942 = vld [vmem:[%s7893 + $0x180] sm:$0xff]
    %v7943 = vld [vmem:[%s7893 + $0x188] sm:$0xff]
    %v7944 = vld [vmem:[%s7893 + $0x190] sm:$0xff]
    %v7945 = vld [vmem:[%s7893 + $0x198] sm:$0xff]
    %v7946 = vld [vmem:[%s7893 + $0x1a0] sm:$0xff]
    %v7947 = vld [vmem:[%s7893 + $0x1a8] sm:$0xff]
    %v7948 = vld [vmem:[%s7893 + $0x1b0] sm:$0xff]
    %v7949 = vld [vmem:[%s7893 + $0x1b8] sm:$0xff]
    %v7950 = vld [vmem:[%s7893 + $0x1c0] sm:$0xff]
    %v7951 = vld [vmem:[%s7893 + $0x1c8] sm:$0xff]
    %v7952 = vld [vmem:[%s7893 + $0x1d0] sm:$0xff]
    %v7953 = vld [vmem:[%s7893 + $0x1d8] sm:$0xff]
    %v7954 = vld [vmem:[%s7893 + $0x1e0] sm:$0xff]
    %v7955 = vld [vmem:[%s7893 + $0x1e8] sm:$0xff]
    %v7956 = vld [vmem:[%s7893 + $0x1f0] sm:$0xff]
    %v7957 = vld [vmem:[%s7893 + $0x1f8] sm:$0xff]
    %v7958 = vrot.slane %v4433, 7
    %v7959 = vrot.slane %v4434, 6
    %v7960 = vsel %vm4442, %v7959, %v7958
    %v7961 = vrot.slane %v4435, 5
    %v7962 = vsel %vm4445, %v7961, %v7960
    %v7963 = vrot.slane %v4436, 4
    %v7964 = vsel %vm4448, %v7963, %v7962
    %v7965 = vrot.slane %v4437, 3
    %v7966 = vsel %vm4451, %v7965, %v7964
    %v7967 = vrot.slane %v4438, 2
    %v7968 = vsel %vm4454, %v7967, %v7966
    %v7969 = vrot.slane %v4439, 1
    %v7970 = vsel %vm4457, %v7969, %v7968
    %v7971 = vsel %vm4460, %v4440, %v7970
    %v7972 = vpack.c.b16 %v7971, %v7971
    %v8038 = vunpack.c.l.b16 %v7894
    %v8039 = vunpack.c.h.b16 %v7894
    %v8040 = vunpack.c.l.b16 %v7895
    %v8041 = vunpack.c.h.b16 %v7895
    %v8042 = vunpack.c.l.b16 %v7896
    %v8043 = vunpack.c.h.b16 %v7896
    %v8044 = vunpack.c.l.b16 %v7897
    %v8045 = vunpack.c.h.b16 %v7897
    %v8046 = vunpack.c.l.b16 %v7898
    %v8047 = vunpack.c.h.b16 %v7898
    %v8048 = vunpack.c.l.b16 %v7899
    %v8049 = vunpack.c.h.b16 %v7899
    %v8050 = vunpack.c.l.b16 %v7900
    %v8051 = vunpack.c.h.b16 %v7900
    %v8052 = vunpack.c.l.b16 %v7901
    %v8053 = vunpack.c.h.b16 %v7901
    %v8054 = vunpack.c.l.b16 %v7902
    %v8055 = vunpack.c.h.b16 %v7902
    %v8056 = vunpack.c.l.b16 %v7903
    %v8057 = vunpack.c.h.b16 %v7903
    %v8058 = vunpack.c.l.b16 %v7904
    %v8059 = vunpack.c.h.b16 %v7904
    %v8060 = vunpack.c.l.b16 %v7905
    %v8061 = vunpack.c.h.b16 %v7905
    %v8062 = vunpack.c.l.b16 %v7906
    %v8063 = vunpack.c.h.b16 %v7906
    %v8064 = vunpack.c.l.b16 %v7907
    %v8065 = vunpack.c.h.b16 %v7907
    %v8066 = vunpack.c.l.b16 %v7908
    %v8067 = vunpack.c.h.b16 %v7908
    %v8068 = vunpack.c.l.b16 %v7909
    %v8069 = vunpack.c.h.b16 %v7909
    %v8070 = vunpack.c.l.b16 %v7910
    %v8071 = vunpack.c.h.b16 %v7910
    %v8072 = vunpack.c.l.b16 %v7911
    %v8073 = vunpack.c.h.b16 %v7911
    %v8074 = vunpack.c.l.b16 %v7912
    %v8075 = vunpack.c.h.b16 %v7912
    %v8076 = vunpack.c.l.b16 %v7913
    %v8077 = vunpack.c.h.b16 %v7913
    %v8078 = vunpack.c.l.b16 %v7914
    %v8079 = vunpack.c.h.b16 %v7914
    %v8080 = vunpack.c.l.b16 %v7915
    %v8081 = vunpack.c.h.b16 %v7915
    %v8082 = vunpack.c.l.b16 %v7916
    %v8083 = vunpack.c.h.b16 %v7916
    %v8084 = vunpack.c.l.b16 %v7917
    %v8085 = vunpack.c.h.b16 %v7917
    %v8086 = vunpack.c.l.b16 %v7918
    %v8087 = vunpack.c.h.b16 %v7918
    %v8088 = vunpack.c.l.b16 %v7919
    %v8089 = vunpack.c.h.b16 %v7919
    %v8090 = vunpack.c.l.b16 %v7920
    %v8091 = vunpack.c.h.b16 %v7920
    %v8092 = vunpack.c.l.b16 %v7921
    %v8093 = vunpack.c.h.b16 %v7921
    %v8094 = vunpack.c.l.b16 %v7922
    %v8095 = vunpack.c.h.b16 %v7922
    %v8096 = vunpack.c.l.b16 %v7923
    %v8097 = vunpack.c.h.b16 %v7923
    %v8098 = vunpack.c.l.b16 %v7924
    %v8099 = vunpack.c.h.b16 %v7924
    %v8100 = vunpack.c.l.b16 %v7925
    %v8101 = vunpack.c.h.b16 %v7925
    %v8102 = vunpack.c.l.b16 %v7926
    %v8103 = vunpack.c.h.b16 %v7926
    %v8104 = vunpack.c.l.b16 %v7927
    %v8105 = vunpack.c.h.b16 %v7927
    %v8106 = vunpack.c.l.b16 %v7928
    %v8107 = vunpack.c.h.b16 %v7928
    %v8108 = vunpack.c.l.b16 %v7929
    %v8109 = vunpack.c.h.b16 %v7929
    %v8110 = vunpack.c.l.b16 %v7930
    %v8111 = vunpack.c.h.b16 %v7930
    %v8112 = vunpack.c.l.b16 %v7931
    %v8113 = vunpack.c.h.b16 %v7931
    %v8114 = vunpack.c.l.b16 %v7932
    %v8115 = vunpack.c.h.b16 %v7932
    %v8116 = vunpack.c.l.b16 %v7933
    %v8117 = vunpack.c.h.b16 %v7933
    %v8118 = vunpack.c.l.b16 %v7934
    %v8119 = vunpack.c.h.b16 %v7934
    %v8120 = vunpack.c.l.b16 %v7935
    %v8121 = vunpack.c.h.b16 %v7935
    %v8122 = vunpack.c.l.b16 %v7936
    %v8123 = vunpack.c.h.b16 %v7936
    %v8124 = vunpack.c.l.b16 %v7937
    %v8125 = vunpack.c.h.b16 %v7937
    %v8126 = vunpack.c.l.b16 %v7938
    %v8127 = vunpack.c.h.b16 %v7938
    %v8128 = vunpack.c.l.b16 %v7939
    %v8129 = vunpack.c.h.b16 %v7939
    %v8130 = vunpack.c.l.b16 %v7940
    %v8131 = vunpack.c.h.b16 %v7940
    %v8132 = vunpack.c.l.b16 %v7941
    %v8133 = vunpack.c.h.b16 %v7941
    %v8134 = vunpack.c.l.b16 %v7942
    %v8135 = vunpack.c.h.b16 %v7942
    %v8136 = vunpack.c.l.b16 %v7943
    %v8137 = vunpack.c.h.b16 %v7943
    %v8138 = vunpack.c.l.b16 %v7944
    %v8139 = vunpack.c.h.b16 %v7944
    %v8140 = vunpack.c.l.b16 %v7945
    %v8141 = vunpack.c.h.b16 %v7945
    %v8142 = vunpack.c.l.b16 %v7946
    %v8143 = vunpack.c.h.b16 %v7946
    %v8144 = vunpack.c.l.b16 %v7947
    %v8145 = vunpack.c.h.b16 %v7947
    %v8146 = vunpack.c.l.b16 %v7948
    %v8147 = vunpack.c.h.b16 %v7948
    %v8148 = vunpack.c.l.b16 %v7949
    %v8149 = vunpack.c.h.b16 %v7949
    %v8150 = vunpack.c.l.b16 %v7950
    %v8151 = vunpack.c.h.b16 %v7950
    %v8152 = vunpack.c.l.b16 %v7951
    %v8153 = vunpack.c.h.b16 %v7951
    %v8154 = vunpack.c.l.b16 %v7952
    %v8155 = vunpack.c.h.b16 %v7952
    %v8156 = vunpack.c.l.b16 %v7953
    %v8157 = vunpack.c.h.b16 %v7953
    %v8158 = vunpack.c.l.b16 %v7954
    %v8159 = vunpack.c.h.b16 %v7954
    %v8160 = vunpack.c.l.b16 %v7955
    %v8161 = vunpack.c.h.b16 %v7955
    %v8162 = vunpack.c.l.b16 %v7956
    %v8163 = vunpack.c.h.b16 %v7956
    %v8164 = vunpack.c.l.b16 %v7957
    %v8165 = vunpack.c.h.b16 %v7957
    %v8166 = vpack.c.b16 %v8046, %v8038
    %v8167 = vpack.c.b16 %v8047, %v8039
    %v8168 = vpack.c.b16 %v8048, %v8040
    %v8169 = vpack.c.b16 %v8049, %v8041
    %v8170 = vpack.c.b16 %v8050, %v8042
    %v8171 = vpack.c.b16 %v8051, %v8043
    %v8172 = vpack.c.b16 %v8052, %v8044
    %v8173 = vpack.c.b16 %v8053, %v8045
    %v8174 = vpack.c.b16 %v8062, %v8054
    %v8175 = vpack.c.b16 %v8063, %v8055
    %v8176 = vpack.c.b16 %v8064, %v8056
    %v8177 = vpack.c.b16 %v8065, %v8057
    %v8178 = vpack.c.b16 %v8066, %v8058
    %v8179 = vpack.c.b16 %v8067, %v8059
    %v8180 = vpack.c.b16 %v8068, %v8060
    %v8181 = vpack.c.b16 %v8069, %v8061
    %v8182 = vpack.c.b16 %v8078, %v8070
    %v8183 = vpack.c.b16 %v8079, %v8071
    %v8184 = vpack.c.b16 %v8080, %v8072
    %v8185 = vpack.c.b16 %v8081, %v8073
    %v8186 = vpack.c.b16 %v8082, %v8074
    %v8187 = vpack.c.b16 %v8083, %v8075
    %v8188 = vpack.c.b16 %v8084, %v8076
    %v8189 = vpack.c.b16 %v8085, %v8077
    %v8190 = vpack.c.b16 %v8094, %v8086
    %v8191 = vpack.c.b16 %v8095, %v8087
    %v8192 = vpack.c.b16 %v8096, %v8088
    %v8193 = vpack.c.b16 %v8097, %v8089
    %v8194 = vpack.c.b16 %v8098, %v8090
    %v8195 = vpack.c.b16 %v8099, %v8091
    %v8196 = vpack.c.b16 %v8100, %v8092
    %v8197 = vpack.c.b16 %v8101, %v8093
    %v8198 = vpack.c.b16 %v8110, %v8102
    %v8199 = vpack.c.b16 %v8111, %v8103
    %v8200 = vpack.c.b16 %v8112, %v8104
    %v8201 = vpack.c.b16 %v8113, %v8105
    %v8202 = vpack.c.b16 %v8114, %v8106
    %v8203 = vpack.c.b16 %v8115, %v8107
    %v8204 = vpack.c.b16 %v8116, %v8108
    %v8205 = vpack.c.b16 %v8117, %v8109
    %v8206 = vpack.c.b16 %v8126, %v8118
    %v8207 = vpack.c.b16 %v8127, %v8119
    %v8208 = vpack.c.b16 %v8128, %v8120
    %v8209 = vpack.c.b16 %v8129, %v8121
    %v8210 = vpack.c.b16 %v8130, %v8122
    %v8211 = vpack.c.b16 %v8131, %v8123
    %v8212 = vpack.c.b16 %v8132, %v8124
    %v8213 = vpack.c.b16 %v8133, %v8125
    %v8214 = vpack.c.b16 %v8142, %v8134
    %v8215 = vpack.c.b16 %v8143, %v8135
    %v8216 = vpack.c.b16 %v8144, %v8136
    %v8217 = vpack.c.b16 %v8145, %v8137
    %v8218 = vpack.c.b16 %v8146, %v8138
    %v8219 = vpack.c.b16 %v8147, %v8139
    %v8220 = vpack.c.b16 %v8148, %v8140
    %v8221 = vpack.c.b16 %v8149, %v8141
    %v8222 = vpack.c.b16 %v8158, %v8150
    %v8223 = vpack.c.b16 %v8159, %v8151
    %v8224 = vpack.c.b16 %v8160, %v8152
    %v8225 = vpack.c.b16 %v8161, %v8153
    %v8226 = vpack.c.b16 %v8162, %v8154
    %v8227 = vpack.c.b16 %v8163, %v8155
    %v8228 = vpack.c.b16 %v8164, %v8156
    %v8229 = vpack.c.b16 %v8165, %v8157
    %8294 = vmatpush.bf16.msra.mxu0 %v8222
    %8295 = vmatpush.bf16.msra.mxu0 %v8214
    %8296 = vmatpush.bf16.msra.mxu0 %v8206
    %8297 = vmatpush.bf16.msra.mxu0 %v8198
    %8298 = vmatpush.bf16.msra.mxu0 %v8190
    %8299 = vmatpush.bf16.msra.mxu0 %v8182
    %8300 = vmatpush.bf16.msra.mxu0 %v8174
    %8301 = vmatpush.bf16.msra.mxu0 %v8166
    %8302 = vmatmul.bf16.gmra.mxu0 %v7972
    %v8303 = vpop.f32.mrf.mxu0
    %v8304 = vadd.f32 0.0, %v8303
    %v8305 = vpop.f32.mrf.mxu0
    %8306 = vdwg.mxu0
    %8307 = vmatpush.bf16.msra.mxu0 %v8223
    %8308 = vmatpush.bf16.msra.mxu0 %v8215
    %8309 = vmatpush.bf16.msra.mxu0 %v8207
    %8310 = vmatpush.bf16.msra.mxu0 %v8199
    %8311 = vmatpush.bf16.msra.mxu0 %v8191
    %8312 = vmatpush.bf16.msra.mxu0 %v8183
    %8313 = vmatpush.bf16.msra.mxu0 %v8175
    %8314 = vmatpush.bf16.msra.mxu0 %v8167
    %8315 = vmatmul.bf16.gmra.mxu0 %v7972
    %v8316 = vpop.f32.mrf.mxu0
    %v8317 = vadd.f32 0.0, %v8316
    %v8318 = vpop.f32.mrf.mxu0
    %8319 = vdwg.mxu0
    %8320 = vmatpush.bf16.msra.mxu0 %v8224
    %8321 = vmatpush.bf16.msra.mxu0 %v8216
    %8322 = vmatpush.bf16.msra.mxu0 %v8208
    %8323 = vmatpush.bf16.msra.mxu0 %v8200
    %8324 = vmatpush.bf16.msra.mxu0 %v8192
    %8325 = vmatpush.bf16.msra.mxu0 %v8184
    %8326 = vmatpush.bf16.msra.mxu0 %v8176
    %8327 = vmatpush.bf16.msra.mxu0 %v8168
    %8328 = vmatmul.bf16.gmra.mxu0 %v7972
    %v8329 = vpop.f32.mrf.mxu0
    %v8330 = vadd.f32 0.0, %v8329
    %v8331 = vpop.f32.mrf.mxu0
    %8332 = vdwg.mxu0
    %8333 = vmatpush.bf16.msra.mxu0 %v8225
    %8334 = vmatpush.bf16.msra.mxu0 %v8217
    %8335 = vmatpush.bf16.msra.mxu0 %v8209
    %8336 = vmatpush.bf16.msra.mxu0 %v8201
    %8337 = vmatpush.bf16.msra.mxu0 %v8193
    %8338 = vmatpush.bf16.msra.mxu0 %v8185
    %8339 = vmatpush.bf16.msra.mxu0 %v8177
    %8340 = vmatpush.bf16.msra.mxu0 %v8169
    %8341 = vmatmul.bf16.gmra.mxu0 %v7972
    %v8342 = vpop.f32.mrf.mxu0
    %v8343 = vadd.f32 0.0, %v8342
    %v8344 = vpop.f32.mrf.mxu0
    %8345 = vdwg.mxu0
    %8346 = vmatpush.bf16.msra.mxu0 %v8226
    %8347 = vmatpush.bf16.msra.mxu0 %v8218
    %8348 = vmatpush.bf16.msra.mxu0 %v8210
    %8349 = vmatpush.bf16.msra.mxu0 %v8202
    %8350 = vmatpush.bf16.msra.mxu0 %v8194
    %8351 = vmatpush.bf16.msra.mxu0 %v8186
    %8352 = vmatpush.bf16.msra.mxu0 %v8178
    %8353 = vmatpush.bf16.msra.mxu0 %v8170
    %8354 = vmatmul.bf16.gmra.mxu0 %v7972
    %v8355 = vpop.f32.mrf.mxu0
    %v8356 = vadd.f32 0.0, %v8355
    %v8357 = vpop.f32.mrf.mxu0
    %8358 = vdwg.mxu0
    %8359 = vmatpush.bf16.msra.mxu0 %v8227
    %8360 = vmatpush.bf16.msra.mxu0 %v8219
    %8361 = vmatpush.bf16.msra.mxu0 %v8211
    %8362 = vmatpush.bf16.msra.mxu0 %v8203
    %8363 = vmatpush.bf16.msra.mxu0 %v8195
    %8364 = vmatpush.bf16.msra.mxu0 %v8187
    %8365 = vmatpush.bf16.msra.mxu0 %v8179
    %8366 = vmatpush.bf16.msra.mxu0 %v8171
    %8367 = vmatmul.bf16.gmra.mxu0 %v7972
    %v8368 = vpop.f32.mrf.mxu0
    %v8369 = vadd.f32 0.0, %v8368
    %v8370 = vpop.f32.mrf.mxu0
    %8371 = vdwg.mxu0
    %8372 = vmatpush.bf16.msra.mxu0 %v8228
    %8373 = vmatpush.bf16.msra.mxu0 %v8220
    %8374 = vmatpush.bf16.msra.mxu0 %v8212
    %8375 = vmatpush.bf16.msra.mxu0 %v8204
    %8376 = vmatpush.bf16.msra.mxu0 %v8196
    %8377 = vmatpush.bf16.msra.mxu0 %v8188
    %8378 = vmatpush.bf16.msra.mxu0 %v8180
    %8379 = vmatpush.bf16.msra.mxu0 %v8172
    %8380 = vmatmul.bf16.gmra.mxu0 %v7972
    %v8381 = vpop.f32.mrf.mxu0
    %v8382 = vadd.f32 0.0, %v8381
    %v8383 = vpop.f32.mrf.mxu0
    %8384 = vdwg.mxu0
    %8385 = vmatpush.bf16.msra.mxu0 %v8229
    %8386 = vmatpush.bf16.msra.mxu0 %v8221
    %8387 = vmatpush.bf16.msra.mxu0 %v8213
    %8388 = vmatpush.bf16.msra.mxu0 %v8205
    %8389 = vmatpush.bf16.msra.mxu0 %v8197
    %8390 = vmatpush.bf16.msra.mxu0 %v8189
    %8391 = vmatpush.bf16.msra.mxu0 %v8181
    %8392 = vmatpush.bf16.msra.mxu0 %v8173
    %8393 = vmatmul.bf16.gmra.mxu0 %v7972
    %v8394 = vpop.f32.mrf.mxu0
    %v8395 = vadd.f32 0.0, %v8394
    %v8396 = vpop.f32.mrf.mxu0
    %8397 = vdwg.mxu0
    %v8398 = vadd.f32 %v7885, %v8304
    %v8399 = vadd.f32 %v7886, %v8317
    %v8400 = vadd.f32 %v7887, %v8330
    %v8401 = vadd.f32 %v7888, %v8343
    %v8402 = vadd.f32 %v7889, %v8356
    %v8403 = vadd.f32 %v7890, %v8369
    %v8404 = vadd.f32 %v7891, %v8382
    %v8405 = vadd.f32 %v7892, %v8395
    %v8406 = vpack.c.bf16 %v4273, %v4273
    %v8407 = vpack.c.bf16 %v4275, %v4275
    %v8408 = vpack.c.bf16 %v4277, %v4277
    %v8409 = vpack.c.bf16 %v4279, %v4279
    %v8410 = vpack.c.bf16 %v4281, %v4281
    %v8411 = vpack.c.bf16 %v4283, %v4283
    %v8412 = vpack.c.bf16 %v4285, %v4285
    %v8413 = vpack.c.bf16 %v4287, %v4287
    %s8414 = scalar_lea.vmem [#allocation13], 4096
    %v8415 = vld [vmem:[%s8414] sm:$0xff]
    %v8416 = vld [vmem:[%s8414 + $0x8] sm:$0xff]
    %v8417 = vld [vmem:[%s8414 + $0x10] sm:$0xff]
    %v8418 = vld [vmem:[%s8414 + $0x18] sm:$0xff]
    %v8419 = vld [vmem:[%s8414 + $0x20] sm:$0xff]
    %v8420 = vld [vmem:[%s8414 + $0x28] sm:$0xff]
    %v8421 = vld [vmem:[%s8414 + $0x30] sm:$0xff]
    %v8422 = vld [vmem:[%s8414 + $0x38] sm:$0xff]
    %v8423 = vld [vmem:[%s8414 + $0x40] sm:$0xff]
    %v8424 = vld [vmem:[%s8414 + $0x48] sm:$0xff]
    %v8425 = vld [vmem:[%s8414 + $0x50] sm:$0xff]
    %v8426 = vld [vmem:[%s8414 + $0x58] sm:$0xff]
    %v8427 = vld [vmem:[%s8414 + $0x60] sm:$0xff]
    %v8428 = vld [vmem:[%s8414 + $0x68] sm:$0xff]
    %v8429 = vld [vmem:[%s8414 + $0x70] sm:$0xff]
    %v8430 = vld [vmem:[%s8414 + $0x78] sm:$0xff]
    %v8431 = vld [vmem:[%s8414 + $0x80] sm:$0xff]
    %v8432 = vld [vmem:[%s8414 + $0x88] sm:$0xff]
    %v8433 = vld [vmem:[%s8414 + $0x90] sm:$0xff]
    %v8434 = vld [vmem:[%s8414 + $0x98] sm:$0xff]
    %v8435 = vld [vmem:[%s8414 + $0xa0] sm:$0xff]
    %v8436 = vld [vmem:[%s8414 + $0xa8] sm:$0xff]
    %v8437 = vld [vmem:[%s8414 + $0xb0] sm:$0xff]
    %v8438 = vld [vmem:[%s8414 + $0xb8] sm:$0xff]
    %v8439 = vld [vmem:[%s8414 + $0xc0] sm:$0xff]
    %v8440 = vld [vmem:[%s8414 + $0xc8] sm:$0xff]
    %v8441 = vld [vmem:[%s8414 + $0xd0] sm:$0xff]
    %v8442 = vld [vmem:[%s8414 + $0xd8] sm:$0xff]
    %v8443 = vld [vmem:[%s8414 + $0xe0] sm:$0xff]
    %v8444 = vld [vmem:[%s8414 + $0xe8] sm:$0xff]
    %v8445 = vld [vmem:[%s8414 + $0xf0] sm:$0xff]
    %v8446 = vld [vmem:[%s8414 + $0xf8] sm:$0xff]
    %v8447 = vld [vmem:[%s8414 + $0x100] sm:$0xff]
    %v8448 = vld [vmem:[%s8414 + $0x108] sm:$0xff]
    %v8449 = vld [vmem:[%s8414 + $0x110] sm:$0xff]
    %v8450 = vld [vmem:[%s8414 + $0x118] sm:$0xff]
    %v8451 = vld [vmem:[%s8414 + $0x120] sm:$0xff]
    %v8452 = vld [vmem:[%s8414 + $0x128] sm:$0xff]
    %v8453 = vld [vmem:[%s8414 + $0x130] sm:$0xff]
    %v8454 = vld [vmem:[%s8414 + $0x138] sm:$0xff]
    %v8455 = vld [vmem:[%s8414 + $0x140] sm:$0xff]
    %v8456 = vld [vmem:[%s8414 + $0x148] sm:$0xff]
    %v8457 = vld [vmem:[%s8414 + $0x150] sm:$0xff]
    %v8458 = vld [vmem:[%s8414 + $0x158] sm:$0xff]
    %v8459 = vld [vmem:[%s8414 + $0x160] sm:$0xff]
    %v8460 = vld [vmem:[%s8414 + $0x168] sm:$0xff]
    %v8461 = vld [vmem:[%s8414 + $0x170] sm:$0xff]
    %v8462 = vld [vmem:[%s8414 + $0x178] sm:$0xff]
    %v8463 = vld [vmem:[%s8414 + $0x180] sm:$0xff]
    %v8464 = vld [vmem:[%s8414 + $0x188] sm:$0xff]
    %v8465 = vld [vmem:[%s8414 + $0x190] sm:$0xff]
    %v8466 = vld [vmem:[%s8414 + $0x198] sm:$0xff]
    %v8467 = vld [vmem:[%s8414 + $0x1a0] sm:$0xff]
    %v8468 = vld [vmem:[%s8414 + $0x1a8] sm:$0xff]
    %v8469 = vld [vmem:[%s8414 + $0x1b0] sm:$0xff]
    %v8470 = vld [vmem:[%s8414 + $0x1b8] sm:$0xff]
    %v8471 = vld [vmem:[%s8414 + $0x1c0] sm:$0xff]
    %v8472 = vld [vmem:[%s8414 + $0x1c8] sm:$0xff]
    %v8473 = vld [vmem:[%s8414 + $0x1d0] sm:$0xff]
    %v8474 = vld [vmem:[%s8414 + $0x1d8] sm:$0xff]
    %v8475 = vld [vmem:[%s8414 + $0x1e0] sm:$0xff]
    %v8476 = vld [vmem:[%s8414 + $0x1e8] sm:$0xff]
    %v8477 = vld [vmem:[%s8414 + $0x1f0] sm:$0xff]
    %v8478 = vld [vmem:[%s8414 + $0x1f8] sm:$0xff]
    %v8487 = vunpack.c.l.b16 %v8406
    %v8488 = vunpack.c.l.b16 %v8407
    %v8489 = vunpack.c.l.b16 %v8408
    %v8490 = vunpack.c.l.b16 %v8409
    %v8491 = vunpack.c.l.b16 %v8410
    %v8492 = vunpack.c.l.b16 %v8411
    %v8493 = vunpack.c.l.b16 %v8412
    %v8494 = vunpack.c.l.b16 %v8413
    %v8495 = vrot.slane %v8488, 7
    %v8496 = vsel %vm4442, %v8495, %v8487
    %v8497 = vrot.slane %v8489, 6
    %v8498 = vsel %vm4445, %v8497, %v8496
    %v8499 = vrot.slane %v8490, 5
    %v8500 = vsel %vm4448, %v8499, %v8498
    %v8501 = vrot.slane %v8491, 4
    %v8502 = vsel %vm4451, %v8501, %v8500
    %v8503 = vrot.slane %v8492, 3
    %v8504 = vsel %vm4454, %v8503, %v8502
    %v8505 = vrot.slane %v8493, 2
    %v8506 = vsel %vm4457, %v8505, %v8504
    %v8507 = vrot.slane %v8494, 1
    %v8508 = vsel %vm4460, %v8507, %v8506
    %v8509 = vpack.c.b16 %v8508, %v8508
    %v8575 = vunpack.c.l.b16 %v8415
    %v8576 = vunpack.c.h.b16 %v8415
    %v8577 = vunpack.c.l.b16 %v8416
    %v8578 = vunpack.c.h.b16 %v8416
    %v8579 = vunpack.c.l.b16 %v8417
    %v8580 = vunpack.c.h.b16 %v8417
    %v8581 = vunpack.c.l.b16 %v8418
    %v8582 = vunpack.c.h.b16 %v8418
    %v8583 = vunpack.c.l.b16 %v8419
    %v8584 = vunpack.c.h.b16 %v8419
    %v8585 = vunpack.c.l.b16 %v8420
    %v8586 = vunpack.c.h.b16 %v8420
    %v8587 = vunpack.c.l.b16 %v8421
    %v8588 = vunpack.c.h.b16 %v8421
    %v8589 = vunpack.c.l.b16 %v8422
    %v8590 = vunpack.c.h.b16 %v8422
    %v8591 = vunpack.c.l.b16 %v8423
    %v8592 = vunpack.c.h.b16 %v8423
    %v8593 = vunpack.c.l.b16 %v8424
    %v8594 = vunpack.c.h.b16 %v8424
    %v8595 = vunpack.c.l.b16 %v8425
    %v8596 = vunpack.c.h.b16 %v8425
    %v8597 = vunpack.c.l.b16 %v8426
    %v8598 = vunpack.c.h.b16 %v8426
    %v8599 = vunpack.c.l.b16 %v8427
    %v8600 = vunpack.c.h.b16 %v8427
    %v8601 = vunpack.c.l.b16 %v8428
    %v8602 = vunpack.c.h.b16 %v8428
    %v8603 = vunpack.c.l.b16 %v8429
    %v8604 = vunpack.c.h.b16 %v8429
    %v8605 = vunpack.c.l.b16 %v8430
    %v8606 = vunpack.c.h.b16 %v8430
    %v8607 = vunpack.c.l.b16 %v8431
    %v8608 = vunpack.c.h.b16 %v8431
    %v8609 = vunpack.c.l.b16 %v8432
    %v8610 = vunpack.c.h.b16 %v8432
    %v8611 = vunpack.c.l.b16 %v8433
    %v8612 = vunpack.c.h.b16 %v8433
    %v8613 = vunpack.c.l.b16 %v8434
    %v8614 = vunpack.c.h.b16 %v8434
    %v8615 = vunpack.c.l.b16 %v8435
    %v8616 = vunpack.c.h.b16 %v8435
    %v8617 = vunpack.c.l.b16 %v8436
    %v8618 = vunpack.c.h.b16 %v8436
    %v8619 = vunpack.c.l.b16 %v8437
    %v8620 = vunpack.c.h.b16 %v8437
    %v8621 = vunpack.c.l.b16 %v8438
    %v8622 = vunpack.c.h.b16 %v8438
    %v8623 = vunpack.c.l.b16 %v8439
    %v8624 = vunpack.c.h.b16 %v8439
    %v8625 = vunpack.c.l.b16 %v8440
    %v8626 = vunpack.c.h.b16 %v8440
    %v8627 = vunpack.c.l.b16 %v8441
    %v8628 = vunpack.c.h.b16 %v8441
    %v8629 = vunpack.c.l.b16 %v8442
    %v8630 = vunpack.c.h.b16 %v8442
    %v8631 = vunpack.c.l.b16 %v8443
    %v8632 = vunpack.c.h.b16 %v8443
    %v8633 = vunpack.c.l.b16 %v8444
    %v8634 = vunpack.c.h.b16 %v8444
    %v8635 = vunpack.c.l.b16 %v8445
    %v8636 = vunpack.c.h.b16 %v8445
    %v8637 = vunpack.c.l.b16 %v8446
    %v8638 = vunpack.c.h.b16 %v8446
    %v8639 = vunpack.c.l.b16 %v8447
    %v8640 = vunpack.c.h.b16 %v8447
    %v8641 = vunpack.c.l.b16 %v8448
    %v8642 = vunpack.c.h.b16 %v8448
    %v8643 = vunpack.c.l.b16 %v8449
    %v8644 = vunpack.c.h.b16 %v8449
    %v8645 = vunpack.c.l.b16 %v8450
    %v8646 = vunpack.c.h.b16 %v8450
    %v8647 = vunpack.c.l.b16 %v8451
    %v8648 = vunpack.c.h.b16 %v8451
    %v8649 = vunpack.c.l.b16 %v8452
    %v8650 = vunpack.c.h.b16 %v8452
    %v8651 = vunpack.c.l.b16 %v8453
    %v8652 = vunpack.c.h.b16 %v8453
    %v8653 = vunpack.c.l.b16 %v8454
    %v8654 = vunpack.c.h.b16 %v8454
    %v8655 = vunpack.c.l.b16 %v8455
    %v8656 = vunpack.c.h.b16 %v8455
    %v8657 = vunpack.c.l.b16 %v8456
    %v8658 = vunpack.c.h.b16 %v8456
    %v8659 = vunpack.c.l.b16 %v8457
    %v8660 = vunpack.c.h.b16 %v8457
    %v8661 = vunpack.c.l.b16 %v8458
    %v8662 = vunpack.c.h.b16 %v8458
    %v8663 = vunpack.c.l.b16 %v8459
    %v8664 = vunpack.c.h.b16 %v8459
    %v8665 = vunpack.c.l.b16 %v8460
    %v8666 = vunpack.c.h.b16 %v8460
    %v8667 = vunpack.c.l.b16 %v8461
    %v8668 = vunpack.c.h.b16 %v8461
    %v8669 = vunpack.c.l.b16 %v8462
    %v8670 = vunpack.c.h.b16 %v8462
    %v8671 = vunpack.c.l.b16 %v8463
    %v8672 = vunpack.c.h.b16 %v8463
    %v8673 = vunpack.c.l.b16 %v8464
    %v8674 = vunpack.c.h.b16 %v8464
    %v8675 = vunpack.c.l.b16 %v8465
    %v8676 = vunpack.c.h.b16 %v8465
    %v8677 = vunpack.c.l.b16 %v8466
    %v8678 = vunpack.c.h.b16 %v8466
    %v8679 = vunpack.c.l.b16 %v8467
    %v8680 = vunpack.c.h.b16 %v8467
    %v8681 = vunpack.c.l.b16 %v8468
    %v8682 = vunpack.c.h.b16 %v8468
    %v8683 = vunpack.c.l.b16 %v8469
    %v8684 = vunpack.c.h.b16 %v8469
    %v8685 = vunpack.c.l.b16 %v8470
    %v8686 = vunpack.c.h.b16 %v8470
    %v8687 = vunpack.c.l.b16 %v8471
    %v8688 = vunpack.c.h.b16 %v8471
    %v8689 = vunpack.c.l.b16 %v8472
    %v8690 = vunpack.c.h.b16 %v8472
    %v8691 = vunpack.c.l.b16 %v8473
    %v8692 = vunpack.c.h.b16 %v8473
    %v8693 = vunpack.c.l.b16 %v8474
    %v8694 = vunpack.c.h.b16 %v8474
    %v8695 = vunpack.c.l.b16 %v8475
    %v8696 = vunpack.c.h.b16 %v8475
    %v8697 = vunpack.c.l.b16 %v8476
    %v8698 = vunpack.c.h.b16 %v8476
    %v8699 = vunpack.c.l.b16 %v8477
    %v8700 = vunpack.c.h.b16 %v8477
    %v8701 = vunpack.c.l.b16 %v8478
    %v8702 = vunpack.c.h.b16 %v8478
    %v8703 = vpack.c.b16 %v8583, %v8575
    %v8704 = vpack.c.b16 %v8584, %v8576
    %v8705 = vpack.c.b16 %v8585, %v8577
    %v8706 = vpack.c.b16 %v8586, %v8578
    %v8707 = vpack.c.b16 %v8587, %v8579
    %v8708 = vpack.c.b16 %v8588, %v8580
    %v8709 = vpack.c.b16 %v8589, %v8581
    %v8710 = vpack.c.b16 %v8590, %v8582
    %v8711 = vpack.c.b16 %v8599, %v8591
    %v8712 = vpack.c.b16 %v8600, %v8592
    %v8713 = vpack.c.b16 %v8601, %v8593
    %v8714 = vpack.c.b16 %v8602, %v8594
    %v8715 = vpack.c.b16 %v8603, %v8595
    %v8716 = vpack.c.b16 %v8604, %v8596
    %v8717 = vpack.c.b16 %v8605, %v8597
    %v8718 = vpack.c.b16 %v8606, %v8598
    %v8719 = vpack.c.b16 %v8615, %v8607
    %v8720 = vpack.c.b16 %v8616, %v8608
    %v8721 = vpack.c.b16 %v8617, %v8609
    %v8722 = vpack.c.b16 %v8618, %v8610
    %v8723 = vpack.c.b16 %v8619, %v8611
    %v8724 = vpack.c.b16 %v8620, %v8612
    %v8725 = vpack.c.b16 %v8621, %v8613
    %v8726 = vpack.c.b16 %v8622, %v8614
    %v8727 = vpack.c.b16 %v8631, %v8623
    %v8728 = vpack.c.b16 %v8632, %v8624
    %v8729 = vpack.c.b16 %v8633, %v8625
    %v8730 = vpack.c.b16 %v8634, %v8626
    %v8731 = vpack.c.b16 %v8635, %v8627
    %v8732 = vpack.c.b16 %v8636, %v8628
    %v8733 = vpack.c.b16 %v8637, %v8629
    %v8734 = vpack.c.b16 %v8638, %v8630
    %v8735 = vpack.c.b16 %v8647, %v8639
    %v8736 = vpack.c.b16 %v8648, %v8640
    %v8737 = vpack.c.b16 %v8649, %v8641
    %v8738 = vpack.c.b16 %v8650, %v8642
    %v8739 = vpack.c.b16 %v8651, %v8643
    %v8740 = vpack.c.b16 %v8652, %v8644
    %v8741 = vpack.c.b16 %v8653, %v8645
    %v8742 = vpack.c.b16 %v8654, %v8646
    %v8743 = vpack.c.b16 %v8663, %v8655
    %v8744 = vpack.c.b16 %v8664, %v8656
    %v8745 = vpack.c.b16 %v8665, %v8657
    %v8746 = vpack.c.b16 %v8666, %v8658
    %v8747 = vpack.c.b16 %v8667, %v8659
    %v8748 = vpack.c.b16 %v8668, %v8660
    %v8749 = vpack.c.b16 %v8669, %v8661
    %v8750 = vpack.c.b16 %v8670, %v8662
    %v8751 = vpack.c.b16 %v8679, %v8671
    %v8752 = vpack.c.b16 %v8680, %v8672
    %v8753 = vpack.c.b16 %v8681, %v8673
    %v8754 = vpack.c.b16 %v8682, %v8674
    %v8755 = vpack.c.b16 %v8683, %v8675
    %v8756 = vpack.c.b16 %v8684, %v8676
    %v8757 = vpack.c.b16 %v8685, %v8677
    %v8758 = vpack.c.b16 %v8686, %v8678
    %v8759 = vpack.c.b16 %v8695, %v8687
    %v8760 = vpack.c.b16 %v8696, %v8688
    %v8761 = vpack.c.b16 %v8697, %v8689
    %v8762 = vpack.c.b16 %v8698, %v8690
    %v8763 = vpack.c.b16 %v8699, %v8691
    %v8764 = vpack.c.b16 %v8700, %v8692
    %v8765 = vpack.c.b16 %v8701, %v8693
    %v8766 = vpack.c.b16 %v8702, %v8694
    %8831 = vmatpush.bf16.msra.mxu0 %v8759
    %8832 = vmatpush.bf16.msra.mxu0 %v8751
    %8833 = vmatpush.bf16.msra.mxu0 %v8743
    %8834 = vmatpush.bf16.msra.mxu0 %v8735
    %8835 = vmatpush.bf16.msra.mxu0 %v8727
    %8836 = vmatpush.bf16.msra.mxu0 %v8719
    %8837 = vmatpush.bf16.msra.mxu0 %v8711
    %8838 = vmatpush.bf16.msra.mxu0 %v8703
    %8839 = vmatmul.bf16.gmra.mxu0 %v8509
    %v8840 = vpop.f32.mrf.mxu0
    %v8841 = vadd.f32 0.0, %v8840
    %v8842 = vpop.f32.mrf.mxu0
    %8843 = vdwg.mxu0
    %8844 = vmatpush.bf16.msra.mxu0 %v8760
    %8845 = vmatpush.bf16.msra.mxu0 %v8752
    %8846 = vmatpush.bf16.msra.mxu0 %v8744
    %8847 = vmatpush.bf16.msra.mxu0 %v8736
    %8848 = vmatpush.bf16.msra.mxu0 %v8728
    %8849 = vmatpush.bf16.msra.mxu0 %v8720
    %8850 = vmatpush.bf16.msra.mxu0 %v8712
    %8851 = vmatpush.bf16.msra.mxu0 %v8704
    %8852 = vmatmul.bf16.gmra.mxu0 %v8509
    %v8853 = vpop.f32.mrf.mxu0
    %v8854 = vadd.f32 0.0, %v8853
    %v8855 = vpop.f32.mrf.mxu0
    %8856 = vdwg.mxu0
    %8857 = vmatpush.bf16.msra.mxu0 %v8761
    %8858 = vmatpush.bf16.msra.mxu0 %v8753
    %8859 = vmatpush.bf16.msra.mxu0 %v8745
    %8860 = vmatpush.bf16.msra.mxu0 %v8737
    %8861 = vmatpush.bf16.msra.mxu0 %v8729
    %8862 = vmatpush.bf16.msra.mxu0 %v8721
    %8863 = vmatpush.bf16.msra.mxu0 %v8713
    %8864 = vmatpush.bf16.msra.mxu0 %v8705
    %8865 = vmatmul.bf16.gmra.mxu0 %v8509
    %v8866 = vpop.f32.mrf.mxu0
    %v8867 = vadd.f32 0.0, %v8866
    %v8868 = vpop.f32.mrf.mxu0
    %8869 = vdwg.mxu0
    %8870 = vmatpush.bf16.msra.mxu0 %v8762
    %8871 = vmatpush.bf16.msra.mxu0 %v8754
    %8872 = vmatpush.bf16.msra.mxu0 %v8746
    %8873 = vmatpush.bf16.msra.mxu0 %v8738
    %8874 = vmatpush.bf16.msra.mxu0 %v8730
    %8875 = vmatpush.bf16.msra.mxu0 %v8722
    %8876 = vmatpush.bf16.msra.mxu0 %v8714
    %8877 = vmatpush.bf16.msra.mxu0 %v8706
    %8878 = vmatmul.bf16.gmra.mxu0 %v8509
    %v8879 = vpop.f32.mrf.mxu0
    %v8880 = vadd.f32 0.0, %v8879
    %v8881 = vpop.f32.mrf.mxu0
    %8882 = vdwg.mxu0
    %8883 = vmatpush.bf16.msra.mxu0 %v8763
    %8884 = vmatpush.bf16.msra.mxu0 %v8755
    %8885 = vmatpush.bf16.msra.mxu0 %v8747
    %8886 = vmatpush.bf16.msra.mxu0 %v8739
    %8887 = vmatpush.bf16.msra.mxu0 %v8731
    %8888 = vmatpush.bf16.msra.mxu0 %v8723
    %8889 = vmatpush.bf16.msra.mxu0 %v8715
    %8890 = vmatpush.bf16.msra.mxu0 %v8707
    %8891 = vmatmul.bf16.gmra.mxu0 %v8509
    %v8892 = vpop.f32.mrf.mxu0
    %v8893 = vadd.f32 0.0, %v8892
    %v8894 = vpop.f32.mrf.mxu0
    %8895 = vdwg.mxu0
    %8896 = vmatpush.bf16.msra.mxu0 %v8764
    %8897 = vmatpush.bf16.msra.mxu0 %v8756
    %8898 = vmatpush.bf16.msra.mxu0 %v8748
    %8899 = vmatpush.bf16.msra.mxu0 %v8740
    %8900 = vmatpush.bf16.msra.mxu0 %v8732
    %8901 = vmatpush.bf16.msra.mxu0 %v8724
    %8902 = vmatpush.bf16.msra.mxu0 %v8716
    %8903 = vmatpush.bf16.msra.mxu0 %v8708
    %8904 = vmatmul.bf16.gmra.mxu0 %v8509
    %v8905 = vpop.f32.mrf.mxu0
    %v8906 = vadd.f32 0.0, %v8905
    %v8907 = vpop.f32.mrf.mxu0
    %8908 = vdwg.mxu0
    %8909 = vmatpush.bf16.msra.mxu0 %v8765
    %8910 = vmatpush.bf16.msra.mxu0 %v8757
    %8911 = vmatpush.bf16.msra.mxu0 %v8749
    %8912 = vmatpush.bf16.msra.mxu0 %v8741
    %8913 = vmatpush.bf16.msra.mxu0 %v8733
    %8914 = vmatpush.bf16.msra.mxu0 %v8725
    %8915 = vmatpush.bf16.msra.mxu0 %v8717
    %8916 = vmatpush.bf16.msra.mxu0 %v8709
    %8917 = vmatmul.bf16.gmra.mxu0 %v8509
    %v8918 = vpop.f32.mrf.mxu0
    %v8919 = vadd.f32 0.0, %v8918
    %v8920 = vpop.f32.mrf.mxu0
    %8921 = vdwg.mxu0
    %8922 = vmatpush.bf16.msra.mxu0 %v8766
    %8923 = vmatpush.bf16.msra.mxu0 %v8758
    %8924 = vmatpush.bf16.msra.mxu0 %v8750
    %8925 = vmatpush.bf16.msra.mxu0 %v8742
    %8926 = vmatpush.bf16.msra.mxu0 %v8734
    %8927 = vmatpush.bf16.msra.mxu0 %v8726
    %8928 = vmatpush.bf16.msra.mxu0 %v8718
    %8929 = vmatpush.bf16.msra.mxu0 %v8710
    %8930 = vmatmul.bf16.gmra.mxu0 %v8509
    %v8931 = vpop.f32.mrf.mxu0
    %v8932 = vadd.f32 0.0, %v8931
    %v8933 = vpop.f32.mrf.mxu0
    %8934 = vdwg.mxu0
    %v8935 = vadd.f32 %v8398, %v8841
    %v8936 = vadd.f32 %v8399, %v8854
    %v8937 = vadd.f32 %v8400, %v8867
    %v8938 = vadd.f32 %v8401, %v8880
    %v8939 = vadd.f32 %v8402, %v8893
    %v8940 = vadd.f32 %v8403, %v8906
    %v8941 = vadd.f32 %v8404, %v8919
    %v8942 = vadd.f32 %v8405, %v8932
    %s8943 = scalar_lea.vmem [#allocation13], 4608
    %v8944 = vld [vmem:[%s8943] sm:$0xff]
    %v8945 = vld [vmem:[%s8943 + $0x8] sm:$0xff]
    %v8946 = vld [vmem:[%s8943 + $0x10] sm:$0xff]
    %v8947 = vld [vmem:[%s8943 + $0x18] sm:$0xff]
    %v8948 = vld [vmem:[%s8943 + $0x20] sm:$0xff]
    %v8949 = vld [vmem:[%s8943 + $0x28] sm:$0xff]
    %v8950 = vld [vmem:[%s8943 + $0x30] sm:$0xff]
    %v8951 = vld [vmem:[%s8943 + $0x38] sm:$0xff]
    %v8952 = vld [vmem:[%s8943 + $0x40] sm:$0xff]
    %v8953 = vld [vmem:[%s8943 + $0x48] sm:$0xff]
    %v8954 = vld [vmem:[%s8943 + $0x50] sm:$0xff]
    %v8955 = vld [vmem:[%s8943 + $0x58] sm:$0xff]
    %v8956 = vld [vmem:[%s8943 + $0x60] sm:$0xff]
    %v8957 = vld [vmem:[%s8943 + $0x68] sm:$0xff]
    %v8958 = vld [vmem:[%s8943 + $0x70] sm:$0xff]
    %v8959 = vld [vmem:[%s8943 + $0x78] sm:$0xff]
    %v8960 = vld [vmem:[%s8943 + $0x80] sm:$0xff]
    %v8961 = vld [vmem:[%s8943 + $0x88] sm:$0xff]
    %v8962 = vld [vmem:[%s8943 + $0x90] sm:$0xff]
    %v8963 = vld [vmem:[%s8943 + $0x98] sm:$0xff]
    %v8964 = vld [vmem:[%s8943 + $0xa0] sm:$0xff]
    %v8965 = vld [vmem:[%s8943 + $0xa8] sm:$0xff]
    %v8966 = vld [vmem:[%s8943 + $0xb0] sm:$0xff]
    %v8967 = vld [vmem:[%s8943 + $0xb8] sm:$0xff]
    %v8968 = vld [vmem:[%s8943 + $0xc0] sm:$0xff]
    %v8969 = vld [vmem:[%s8943 + $0xc8] sm:$0xff]
    %v8970 = vld [vmem:[%s8943 + $0xd0] sm:$0xff]
    %v8971 = vld [vmem:[%s8943 + $0xd8] sm:$0xff]
    %v8972 = vld [vmem:[%s8943 + $0xe0] sm:$0xff]
    %v8973 = vld [vmem:[%s8943 + $0xe8] sm:$0xff]
    %v8974 = vld [vmem:[%s8943 + $0xf0] sm:$0xff]
    %v8975 = vld [vmem:[%s8943 + $0xf8] sm:$0xff]
    %v8976 = vld [vmem:[%s8943 + $0x100] sm:$0xff]
    %v8977 = vld [vmem:[%s8943 + $0x108] sm:$0xff]
    %v8978 = vld [vmem:[%s8943 + $0x110] sm:$0xff]
    %v8979 = vld [vmem:[%s8943 + $0x118] sm:$0xff]
    %v8980 = vld [vmem:[%s8943 + $0x120] sm:$0xff]
    %v8981 = vld [vmem:[%s8943 + $0x128] sm:$0xff]
    %v8982 = vld [vmem:[%s8943 + $0x130] sm:$0xff]
    %v8983 = vld [vmem:[%s8943 + $0x138] sm:$0xff]
    %v8984 = vld [vmem:[%s8943 + $0x140] sm:$0xff]
    %v8985 = vld [vmem:[%s8943 + $0x148] sm:$0xff]
    %v8986 = vld [vmem:[%s8943 + $0x150] sm:$0xff]
    %v8987 = vld [vmem:[%s8943 + $0x158] sm:$0xff]
    %v8988 = vld [vmem:[%s8943 + $0x160] sm:$0xff]
    %v8989 = vld [vmem:[%s8943 + $0x168] sm:$0xff]
    %v8990 = vld [vmem:[%s8943 + $0x170] sm:$0xff]
    %v8991 = vld [vmem:[%s8943 + $0x178] sm:$0xff]
    %v8992 = vld [vmem:[%s8943 + $0x180] sm:$0xff]
    %v8993 = vld [vmem:[%s8943 + $0x188] sm:$0xff]
    %v8994 = vld [vmem:[%s8943 + $0x190] sm:$0xff]
    %v8995 = vld [vmem:[%s8943 + $0x198] sm:$0xff]
    %v8996 = vld [vmem:[%s8943 + $0x1a0] sm:$0xff]
    %v8997 = vld [vmem:[%s8943 + $0x1a8] sm:$0xff]
    %v8998 = vld [vmem:[%s8943 + $0x1b0] sm:$0xff]
    %v8999 = vld [vmem:[%s8943 + $0x1b8] sm:$0xff]
    %v9000 = vld [vmem:[%s8943 + $0x1c0] sm:$0xff]
    %v9001 = vld [vmem:[%s8943 + $0x1c8] sm:$0xff]
    %v9002 = vld [vmem:[%s8943 + $0x1d0] sm:$0xff]
    %v9003 = vld [vmem:[%s8943 + $0x1d8] sm:$0xff]
    %v9004 = vld [vmem:[%s8943 + $0x1e0] sm:$0xff]
    %v9005 = vld [vmem:[%s8943 + $0x1e8] sm:$0xff]
    %v9006 = vld [vmem:[%s8943 + $0x1f0] sm:$0xff]
    %v9007 = vld [vmem:[%s8943 + $0x1f8] sm:$0xff]
    %v9008 = vrot.slane %v8487, 1
    %v9009 = vsel %vm4442, %v8488, %v9008
    %v9010 = vrot.slane %v8489, 7
    %v9011 = vsel %vm4445, %v9010, %v9009
    %v9012 = vrot.slane %v8490, 6
    %v9013 = vsel %vm4448, %v9012, %v9011
    %v9014 = vrot.slane %v8491, 5
    %v9015 = vsel %vm4451, %v9014, %v9013
    %v9016 = vrot.slane %v8492, 4
    %v9017 = vsel %vm4454, %v9016, %v9015
    %v9018 = vrot.slane %v8493, 3
    %v9019 = vsel %vm4457, %v9018, %v9017
    %v9020 = vrot.slane %v8494, 2
    %v9021 = vsel %vm4460, %v9020, %v9019
    %v9022 = vpack.c.b16 %v9021, %v9021
    %v9088 = vunpack.c.l.b16 %v8944
    %v9089 = vunpack.c.h.b16 %v8944
    %v9090 = vunpack.c.l.b16 %v8945
    %v9091 = vunpack.c.h.b16 %v8945
    %v9092 = vunpack.c.l.b16 %v8946
    %v9093 = vunpack.c.h.b16 %v8946
    %v9094 = vunpack.c.l.b16 %v8947
    %v9095 = vunpack.c.h.b16 %v8947
    %v9096 = vunpack.c.l.b16 %v8948
    %v9097 = vunpack.c.h.b16 %v8948
    %v9098 = vunpack.c.l.b16 %v8949
    %v9099 = vunpack.c.h.b16 %v8949
    %v9100 = vunpack.c.l.b16 %v8950
    %v9101 = vunpack.c.h.b16 %v8950
    %v9102 = vunpack.c.l.b16 %v8951
    %v9103 = vunpack.c.h.b16 %v8951
    %v9104 = vunpack.c.l.b16 %v8952
    %v9105 = vunpack.c.h.b16 %v8952
    %v9106 = vunpack.c.l.b16 %v8953
    %v9107 = vunpack.c.h.b16 %v8953
    %v9108 = vunpack.c.l.b16 %v8954
    %v9109 = vunpack.c.h.b16 %v8954
    %v9110 = vunpack.c.l.b16 %v8955
    %v9111 = vunpack.c.h.b16 %v8955
    %v9112 = vunpack.c.l.b16 %v8956
    %v9113 = vunpack.c.h.b16 %v8956
    %v9114 = vunpack.c.l.b16 %v8957
    %v9115 = vunpack.c.h.b16 %v8957
    %v9116 = vunpack.c.l.b16 %v8958
    %v9117 = vunpack.c.h.b16 %v8958
    %v9118 = vunpack.c.l.b16 %v8959
    %v9119 = vunpack.c.h.b16 %v8959
    %v9120 = vunpack.c.l.b16 %v8960
    %v9121 = vunpack.c.h.b16 %v8960
    %v9122 = vunpack.c.l.b16 %v8961
    %v9123 = vunpack.c.h.b16 %v8961
    %v9124 = vunpack.c.l.b16 %v8962
    %v9125 = vunpack.c.h.b16 %v8962
    %v9126 = vunpack.c.l.b16 %v8963
    %v9127 = vunpack.c.h.b16 %v8963
    %v9128 = vunpack.c.l.b16 %v8964
    %v9129 = vunpack.c.h.b16 %v8964
    %v9130 = vunpack.c.l.b16 %v8965
    %v9131 = vunpack.c.h.b16 %v8965
    %v9132 = vunpack.c.l.b16 %v8966
    %v9133 = vunpack.c.h.b16 %v8966
    %v9134 = vunpack.c.l.b16 %v8967
    %v9135 = vunpack.c.h.b16 %v8967
    %v9136 = vunpack.c.l.b16 %v8968
    %v9137 = vunpack.c.h.b16 %v8968
    %v9138 = vunpack.c.l.b16 %v8969
    %v9139 = vunpack.c.h.b16 %v8969
    %v9140 = vunpack.c.l.b16 %v8970
    %v9141 = vunpack.c.h.b16 %v8970
    %v9142 = vunpack.c.l.b16 %v8971
    %v9143 = vunpack.c.h.b16 %v8971
    %v9144 = vunpack.c.l.b16 %v8972
    %v9145 = vunpack.c.h.b16 %v8972
    %v9146 = vunpack.c.l.b16 %v8973
    %v9147 = vunpack.c.h.b16 %v8973
    %v9148 = vunpack.c.l.b16 %v8974
    %v9149 = vunpack.c.h.b16 %v8974
    %v9150 = vunpack.c.l.b16 %v8975
    %v9151 = vunpack.c.h.b16 %v8975
    %v9152 = vunpack.c.l.b16 %v8976
    %v9153 = vunpack.c.h.b16 %v8976
    %v9154 = vunpack.c.l.b16 %v8977
    %v9155 = vunpack.c.h.b16 %v8977
    %v9156 = vunpack.c.l.b16 %v8978
    %v9157 = vunpack.c.h.b16 %v8978
    %v9158 = vunpack.c.l.b16 %v8979
    %v9159 = vunpack.c.h.b16 %v8979
    %v9160 = vunpack.c.l.b16 %v8980
    %v9161 = vunpack.c.h.b16 %v8980
    %v9162 = vunpack.c.l.b16 %v8981
    %v9163 = vunpack.c.h.b16 %v8981
    %v9164 = vunpack.c.l.b16 %v8982
    %v9165 = vunpack.c.h.b16 %v8982
    %v9166 = vunpack.c.l.b16 %v8983
    %v9167 = vunpack.c.h.b16 %v8983
    %v9168 = vunpack.c.l.b16 %v8984
    %v9169 = vunpack.c.h.b16 %v8984
    %v9170 = vunpack.c.l.b16 %v8985
    %v9171 = vunpack.c.h.b16 %v8985
    %v9172 = vunpack.c.l.b16 %v8986
    %v9173 = vunpack.c.h.b16 %v8986
    %v9174 = vunpack.c.l.b16 %v8987
    %v9175 = vunpack.c.h.b16 %v8987
    %v9176 = vunpack.c.l.b16 %v8988
    %v9177 = vunpack.c.h.b16 %v8988
    %v9178 = vunpack.c.l.b16 %v8989
    %v9179 = vunpack.c.h.b16 %v8989
    %v9180 = vunpack.c.l.b16 %v8990
    %v9181 = vunpack.c.h.b16 %v8990
    %v9182 = vunpack.c.l.b16 %v8991
    %v9183 = vunpack.c.h.b16 %v8991
    %v9184 = vunpack.c.l.b16 %v8992
    %v9185 = vunpack.c.h.b16 %v8992
    %v9186 = vunpack.c.l.b16 %v8993
    %v9187 = vunpack.c.h.b16 %v8993
    %v9188 = vunpack.c.l.b16 %v8994
    %v9189 = vunpack.c.h.b16 %v8994
    %v9190 = vunpack.c.l.b16 %v8995
    %v9191 = vunpack.c.h.b16 %v8995
    %v9192 = vunpack.c.l.b16 %v8996
    %v9193 = vunpack.c.h.b16 %v8996
    %v9194 = vunpack.c.l.b16 %v8997
    %v9195 = vunpack.c.h.b16 %v8997
    %v9196 = vunpack.c.l.b16 %v8998
    %v9197 = vunpack.c.h.b16 %v8998
    %v9198 = vunpack.c.l.b16 %v8999
    %v9199 = vunpack.c.h.b16 %v8999
    %v9200 = vunpack.c.l.b16 %v9000
    %v9201 = vunpack.c.h.b16 %v9000
    %v9202 = vunpack.c.l.b16 %v9001
    %v9203 = vunpack.c.h.b16 %v9001
    %v9204 = vunpack.c.l.b16 %v9002
    %v9205 = vunpack.c.h.b16 %v9002
    %v9206 = vunpack.c.l.b16 %v9003
    %v9207 = vunpack.c.h.b16 %v9003
    %v9208 = vunpack.c.l.b16 %v9004
    %v9209 = vunpack.c.h.b16 %v9004
    %v9210 = vunpack.c.l.b16 %v9005
    %v9211 = vunpack.c.h.b16 %v9005
    %v9212 = vunpack.c.l.b16 %v9006
    %v9213 = vunpack.c.h.b16 %v9006
    %v9214 = vunpack.c.l.b16 %v9007
    %v9215 = vunpack.c.h.b16 %v9007
    %v9216 = vpack.c.b16 %v9096, %v9088
    %v9217 = vpack.c.b16 %v9097, %v9089
    %v9218 = vpack.c.b16 %v9098, %v9090
    %v9219 = vpack.c.b16 %v9099, %v9091
    %v9220 = vpack.c.b16 %v9100, %v9092
    %v9221 = vpack.c.b16 %v9101, %v9093
    %v9222 = vpack.c.b16 %v9102, %v9094
    %v9223 = vpack.c.b16 %v9103, %v9095
    %v9224 = vpack.c.b16 %v9112, %v9104
    %v9225 = vpack.c.b16 %v9113, %v9105
    %v9226 = vpack.c.b16 %v9114, %v9106
    %v9227 = vpack.c.b16 %v9115, %v9107
    %v9228 = vpack.c.b16 %v9116, %v9108
    %v9229 = vpack.c.b16 %v9117, %v9109
    %v9230 = vpack.c.b16 %v9118, %v9110
    %v9231 = vpack.c.b16 %v9119, %v9111
    %v9232 = vpack.c.b16 %v9128, %v9120
    %v9233 = vpack.c.b16 %v9129, %v9121
    %v9234 = vpack.c.b16 %v9130, %v9122
    %v9235 = vpack.c.b16 %v9131, %v9123
    %v9236 = vpack.c.b16 %v9132, %v9124
    %v9237 = vpack.c.b16 %v9133, %v9125
    %v9238 = vpack.c.b16 %v9134, %v9126
    %v9239 = vpack.c.b16 %v9135, %v9127
    %v9240 = vpack.c.b16 %v9144, %v9136
    %v9241 = vpack.c.b16 %v9145, %v9137
    %v9242 = vpack.c.b16 %v9146, %v9138
    %v9243 = vpack.c.b16 %v9147, %v9139
    %v9244 = vpack.c.b16 %v9148, %v9140
    %v9245 = vpack.c.b16 %v9149, %v9141
    %v9246 = vpack.c.b16 %v9150, %v9142
    %v9247 = vpack.c.b16 %v9151, %v9143
    %v9248 = vpack.c.b16 %v9160, %v9152
    %v9249 = vpack.c.b16 %v9161, %v9153
    %v9250 = vpack.c.b16 %v9162, %v9154
    %v9251 = vpack.c.b16 %v9163, %v9155
    %v9252 = vpack.c.b16 %v9164, %v9156
    %v9253 = vpack.c.b16 %v9165, %v9157
    %v9254 = vpack.c.b16 %v9166, %v9158
    %v9255 = vpack.c.b16 %v9167, %v9159
    %v9256 = vpack.c.b16 %v9176, %v9168
    %v9257 = vpack.c.b16 %v9177, %v9169
    %v9258 = vpack.c.b16 %v9178, %v9170
    %v9259 = vpack.c.b16 %v9179, %v9171
    %v9260 = vpack.c.b16 %v9180, %v9172
    %v9261 = vpack.c.b16 %v9181, %v9173
    %v9262 = vpack.c.b16 %v9182, %v9174
    %v9263 = vpack.c.b16 %v9183, %v9175
    %v9264 = vpack.c.b16 %v9192, %v9184
    %v9265 = vpack.c.b16 %v9193, %v9185
    %v9266 = vpack.c.b16 %v9194, %v9186
    %v9267 = vpack.c.b16 %v9195, %v9187
    %v9268 = vpack.c.b16 %v9196, %v9188
    %v9269 = vpack.c.b16 %v9197, %v9189
    %v9270 = vpack.c.b16 %v9198, %v9190
    %v9271 = vpack.c.b16 %v9199, %v9191
    %v9272 = vpack.c.b16 %v9208, %v9200
    %v9273 = vpack.c.b16 %v9209, %v9201
    %v9274 = vpack.c.b16 %v9210, %v9202
    %v9275 = vpack.c.b16 %v9211, %v9203
    %v9276 = vpack.c.b16 %v9212, %v9204
    %v9277 = vpack.c.b16 %v9213, %v9205
    %v9278 = vpack.c.b16 %v9214, %v9206
    %v9279 = vpack.c.b16 %v9215, %v9207
    %9344 = vmatpush.bf16.msra.mxu0 %v9272
    %9345 = vmatpush.bf16.msra.mxu0 %v9264
    %9346 = vmatpush.bf16.msra.mxu0 %v9256
    %9347 = vmatpush.bf16.msra.mxu0 %v9248
    %9348 = vmatpush.bf16.msra.mxu0 %v9240
    %9349 = vmatpush.bf16.msra.mxu0 %v9232
    %9350 = vmatpush.bf16.msra.mxu0 %v9224
    %9351 = vmatpush.bf16.msra.mxu0 %v9216
    %9352 = vmatmul.bf16.gmra.mxu0 %v9022
    %v9353 = vpop.f32.mrf.mxu0
    %v9354 = vadd.f32 0.0, %v9353
    %v9355 = vpop.f32.mrf.mxu0
    %9356 = vdwg.mxu0
    %9357 = vmatpush.bf16.msra.mxu0 %v9273
    %9358 = vmatpush.bf16.msra.mxu0 %v9265
    %9359 = vmatpush.bf16.msra.mxu0 %v9257
    %9360 = vmatpush.bf16.msra.mxu0 %v9249
    %9361 = vmatpush.bf16.msra.mxu0 %v9241
    %9362 = vmatpush.bf16.msra.mxu0 %v9233
    %9363 = vmatpush.bf16.msra.mxu0 %v9225
    %9364 = vmatpush.bf16.msra.mxu0 %v9217
    %9365 = vmatmul.bf16.gmra.mxu0 %v9022
    %v9366 = vpop.f32.mrf.mxu0
    %v9367 = vadd.f32 0.0, %v9366
    %v9368 = vpop.f32.mrf.mxu0
    %9369 = vdwg.mxu0
    %9370 = vmatpush.bf16.msra.mxu0 %v9274
    %9371 = vmatpush.bf16.msra.mxu0 %v9266
    %9372 = vmatpush.bf16.msra.mxu0 %v9258
    %9373 = vmatpush.bf16.msra.mxu0 %v9250
    %9374 = vmatpush.bf16.msra.mxu0 %v9242
    %9375 = vmatpush.bf16.msra.mxu0 %v9234
    %9376 = vmatpush.bf16.msra.mxu0 %v9226
    %9377 = vmatpush.bf16.msra.mxu0 %v9218
    %9378 = vmatmul.bf16.gmra.mxu0 %v9022
    %v9379 = vpop.f32.mrf.mxu0
    %v9380 = vadd.f32 0.0, %v9379
    %v9381 = vpop.f32.mrf.mxu0
    %9382 = vdwg.mxu0
    %9383 = vmatpush.bf16.msra.mxu0 %v9275
    %9384 = vmatpush.bf16.msra.mxu0 %v9267
    %9385 = vmatpush.bf16.msra.mxu0 %v9259
    %9386 = vmatpush.bf16.msra.mxu0 %v9251
    %9387 = vmatpush.bf16.msra.mxu0 %v9243
    %9388 = vmatpush.bf16.msra.mxu0 %v9235
    %9389 = vmatpush.bf16.msra.mxu0 %v9227
    %9390 = vmatpush.bf16.msra.mxu0 %v9219
    %9391 = vmatmul.bf16.gmra.mxu0 %v9022
    %v9392 = vpop.f32.mrf.mxu0
    %v9393 = vadd.f32 0.0, %v9392
    %v9394 = vpop.f32.mrf.mxu0
    %9395 = vdwg.mxu0
    %9396 = vmatpush.bf16.msra.mxu0 %v9276
    %9397 = vmatpush.bf16.msra.mxu0 %v9268
    %9398 = vmatpush.bf16.msra.mxu0 %v9260
    %9399 = vmatpush.bf16.msra.mxu0 %v9252
    %9400 = vmatpush.bf16.msra.mxu0 %v9244
    %9401 = vmatpush.bf16.msra.mxu0 %v9236
    %9402 = vmatpush.bf16.msra.mxu0 %v9228
    %9403 = vmatpush.bf16.msra.mxu0 %v9220
    %9404 = vmatmul.bf16.gmra.mxu0 %v9022
    %v9405 = vpop.f32.mrf.mxu0
    %v9406 = vadd.f32 0.0, %v9405
    %v9407 = vpop.f32.mrf.mxu0
    %9408 = vdwg.mxu0
    %9409 = vmatpush.bf16.msra.mxu0 %v9277
    %9410 = vmatpush.bf16.msra.mxu0 %v9269
    %9411 = vmatpush.bf16.msra.mxu0 %v9261
    %9412 = vmatpush.bf16.msra.mxu0 %v9253
    %9413 = vmatpush.bf16.msra.mxu0 %v9245
    %9414 = vmatpush.bf16.msra.mxu0 %v9237
    %9415 = vmatpush.bf16.msra.mxu0 %v9229
    %9416 = vmatpush.bf16.msra.mxu0 %v9221
    %9417 = vmatmul.bf16.gmra.mxu0 %v9022
    %v9418 = vpop.f32.mrf.mxu0
    %v9419 = vadd.f32 0.0, %v9418
    %v9420 = vpop.f32.mrf.mxu0
    %9421 = vdwg.mxu0
    %9422 = vmatpush.bf16.msra.mxu0 %v9278
    %9423 = vmatpush.bf16.msra.mxu0 %v9270
    %9424 = vmatpush.bf16.msra.mxu0 %v9262
    %9425 = vmatpush.bf16.msra.mxu0 %v9254
    %9426 = vmatpush.bf16.msra.mxu0 %v9246
    %9427 = vmatpush.bf16.msra.mxu0 %v9238
    %9428 = vmatpush.bf16.msra.mxu0 %v9230
    %9429 = vmatpush.bf16.msra.mxu0 %v9222
    %9430 = vmatmul.bf16.gmra.mxu0 %v9022
    %v9431 = vpop.f32.mrf.mxu0
    %v9432 = vadd.f32 0.0, %v9431
    %v9433 = vpop.f32.mrf.mxu0
    %9434 = vdwg.mxu0
    %9435 = vmatpush.bf16.msra.mxu0 %v9279
    %9436 = vmatpush.bf16.msra.mxu0 %v9271
    %9437 = vmatpush.bf16.msra.mxu0 %v9263
    %9438 = vmatpush.bf16.msra.mxu0 %v9255
    %9439 = vmatpush.bf16.msra.mxu0 %v9247
    %9440 = vmatpush.bf16.msra.mxu0 %v9239
    %9441 = vmatpush.bf16.msra.mxu0 %v9231
    %9442 = vmatpush.bf16.msra.mxu0 %v9223
    %9443 = vmatmul.bf16.gmra.mxu0 %v9022
    %v9444 = vpop.f32.mrf.mxu0
    %v9445 = vadd.f32 0.0, %v9444
    %v9446 = vpop.f32.mrf.mxu0
    %9447 = vdwg.mxu0
    %v9448 = vadd.f32 %v8935, %v9354
    %v9449 = vadd.f32 %v8936, %v9367
    %v9450 = vadd.f32 %v8937, %v9380
    %v9451 = vadd.f32 %v8938, %v9393
    %v9452 = vadd.f32 %v8939, %v9406
    %v9453 = vadd.f32 %v8940, %v9419
    %v9454 = vadd.f32 %v8941, %v9432
    %v9455 = vadd.f32 %v8942, %v9445
    %s9456 = scalar_lea.vmem [#allocation13], 5120
    %v9457 = vld [vmem:[%s9456] sm:$0xff]
    %v9458 = vld [vmem:[%s9456 + $0x8] sm:$0xff]
    %v9459 = vld [vmem:[%s9456 + $0x10] sm:$0xff]
    %v9460 = vld [vmem:[%s9456 + $0x18] sm:$0xff]
    %v9461 = vld [vmem:[%s9456 + $0x20] sm:$0xff]
    %v9462 = vld [vmem:[%s9456 + $0x28] sm:$0xff]
    %v9463 = vld [vmem:[%s9456 + $0x30] sm:$0xff]
    %v9464 = vld [vmem:[%s9456 + $0x38] sm:$0xff]
    %v9465 = vld [vmem:[%s9456 + $0x40] sm:$0xff]
    %v9466 = vld [vmem:[%s9456 + $0x48] sm:$0xff]
    %v9467 = vld [vmem:[%s9456 + $0x50] sm:$0xff]
    %v9468 = vld [vmem:[%s9456 + $0x58] sm:$0xff]
    %v9469 = vld [vmem:[%s9456 + $0x60] sm:$0xff]
    %v9470 = vld [vmem:[%s9456 + $0x68] sm:$0xff]
    %v9471 = vld [vmem:[%s9456 + $0x70] sm:$0xff]
    %v9472 = vld [vmem:[%s9456 + $0x78] sm:$0xff]
    %v9473 = vld [vmem:[%s9456 + $0x80] sm:$0xff]
    %v9474 = vld [vmem:[%s9456 + $0x88] sm:$0xff]
    %v9475 = vld [vmem:[%s9456 + $0x90] sm:$0xff]
    %v9476 = vld [vmem:[%s9456 + $0x98] sm:$0xff]
    %v9477 = vld [vmem:[%s9456 + $0xa0] sm:$0xff]
    %v9478 = vld [vmem:[%s9456 + $0xa8] sm:$0xff]
    %v9479 = vld [vmem:[%s9456 + $0xb0] sm:$0xff]
    %v9480 = vld [vmem:[%s9456 + $0xb8] sm:$0xff]
    %v9481 = vld [vmem:[%s9456 + $0xc0] sm:$0xff]
    %v9482 = vld [vmem:[%s9456 + $0xc8] sm:$0xff]
    %v9483 = vld [vmem:[%s9456 + $0xd0] sm:$0xff]
    %v9484 = vld [vmem:[%s9456 + $0xd8] sm:$0xff]
    %v9485 = vld [vmem:[%s9456 + $0xe0] sm:$0xff]
    %v9486 = vld [vmem:[%s9456 + $0xe8] sm:$0xff]
    %v9487 = vld [vmem:[%s9456 + $0xf0] sm:$0xff]
    %v9488 = vld [vmem:[%s9456 + $0xf8] sm:$0xff]
    %v9489 = vld [vmem:[%s9456 + $0x100] sm:$0xff]
    %v9490 = vld [vmem:[%s9456 + $0x108] sm:$0xff]
    %v9491 = vld [vmem:[%s9456 + $0x110] sm:$0xff]
    %v9492 = vld [vmem:[%s9456 + $0x118] sm:$0xff]
    %v9493 = vld [vmem:[%s9456 + $0x120] sm:$0xff]
    %v9494 = vld [vmem:[%s9456 + $0x128] sm:$0xff]
    %v9495 = vld [vmem:[%s9456 + $0x130] sm:$0xff]
    %v9496 = vld [vmem:[%s9456 + $0x138] sm:$0xff]
    %v9497 = vld [vmem:[%s9456 + $0x140] sm:$0xff]
    %v9498 = vld [vmem:[%s9456 + $0x148] sm:$0xff]
    %v9499 = vld [vmem:[%s9456 + $0x150] sm:$0xff]
    %v9500 = vld [vmem:[%s9456 + $0x158] sm:$0xff]
    %v9501 = vld [vmem:[%s9456 + $0x160] sm:$0xff]
    %v9502 = vld [vmem:[%s9456 + $0x168] sm:$0xff]
    %v9503 = vld [vmem:[%s9456 + $0x170] sm:$0xff]
    %v9504 = vld [vmem:[%s9456 + $0x178] sm:$0xff]
    %v9505 = vld [vmem:[%s9456 + $0x180] sm:$0xff]
    %v9506 = vld [vmem:[%s9456 + $0x188] sm:$0xff]
    %v9507 = vld [vmem:[%s9456 + $0x190] sm:$0xff]
    %v9508 = vld [vmem:[%s9456 + $0x198] sm:$0xff]
    %v9509 = vld [vmem:[%s9456 + $0x1a0] sm:$0xff]
    %v9510 = vld [vmem:[%s9456 + $0x1a8] sm:$0xff]
    %v9511 = vld [vmem:[%s9456 + $0x1b0] sm:$0xff]
    %v9512 = vld [vmem:[%s9456 + $0x1b8] sm:$0xff]
    %v9513 = vld [vmem:[%s9456 + $0x1c0] sm:$0xff]
    %v9514 = vld [vmem:[%s9456 + $0x1c8] sm:$0xff]
    %v9515 = vld [vmem:[%s9456 + $0x1d0] sm:$0xff]
    %v9516 = vld [vmem:[%s9456 + $0x1d8] sm:$0xff]
    %v9517 = vld [vmem:[%s9456 + $0x1e0] sm:$0xff]
    %v9518 = vld [vmem:[%s9456 + $0x1e8] sm:$0xff]
    %v9519 = vld [vmem:[%s9456 + $0x1f0] sm:$0xff]
    %v9520 = vld [vmem:[%s9456 + $0x1f8] sm:$0xff]
    %v9521 = vrot.slane %v8487, 2
    %v9522 = vrot.slane %v8488, 1
    %v9523 = vsel %vm4442, %v9522, %v9521
    %v9524 = vsel %vm4445, %v8489, %v9523
    %v9525 = vrot.slane %v8490, 7
    %v9526 = vsel %vm4448, %v9525, %v9524
    %v9527 = vrot.slane %v8491, 6
    %v9528 = vsel %vm4451, %v9527, %v9526
    %v9529 = vrot.slane %v8492, 5
    %v9530 = vsel %vm4454, %v9529, %v9528
    %v9531 = vrot.slane %v8493, 4
    %v9532 = vsel %vm4457, %v9531, %v9530
    %v9533 = vrot.slane %v8494, 3
    %v9534 = vsel %vm4460, %v9533, %v9532
    %v9535 = vpack.c.b16 %v9534, %v9534
    %v9601 = vunpack.c.l.b16 %v9457
    %v9602 = vunpack.c.h.b16 %v9457
    %v9603 = vunpack.c.l.b16 %v9458
    %v9604 = vunpack.c.h.b16 %v9458
    %v9605 = vunpack.c.l.b16 %v9459
    %v9606 = vunpack.c.h.b16 %v9459
    %v9607 = vunpack.c.l.b16 %v9460
    %v9608 = vunpack.c.h.b16 %v9460
    %v9609 = vunpack.c.l.b16 %v9461
    %v9610 = vunpack.c.h.b16 %v9461
    %v9611 = vunpack.c.l.b16 %v9462
    %v9612 = vunpack.c.h.b16 %v9462
    %v9613 = vunpack.c.l.b16 %v9463
    %v9614 = vunpack.c.h.b16 %v9463
    %v9615 = vunpack.c.l.b16 %v9464
    %v9616 = vunpack.c.h.b16 %v9464
    %v9617 = vunpack.c.l.b16 %v9465
    %v9618 = vunpack.c.h.b16 %v9465
    %v9619 = vunpack.c.l.b16 %v9466
    %v9620 = vunpack.c.h.b16 %v9466
    %v9621 = vunpack.c.l.b16 %v9467
    %v9622 = vunpack.c.h.b16 %v9467
    %v9623 = vunpack.c.l.b16 %v9468
    %v9624 = vunpack.c.h.b16 %v9468
    %v9625 = vunpack.c.l.b16 %v9469
    %v9626 = vunpack.c.h.b16 %v9469
    %v9627 = vunpack.c.l.b16 %v9470
    %v9628 = vunpack.c.h.b16 %v9470
    %v9629 = vunpack.c.l.b16 %v9471
    %v9630 = vunpack.c.h.b16 %v9471
    %v9631 = vunpack.c.l.b16 %v9472
    %v9632 = vunpack.c.h.b16 %v9472
    %v9633 = vunpack.c.l.b16 %v9473
    %v9634 = vunpack.c.h.b16 %v9473
    %v9635 = vunpack.c.l.b16 %v9474
    %v9636 = vunpack.c.h.b16 %v9474
    %v9637 = vunpack.c.l.b16 %v9475
    %v9638 = vunpack.c.h.b16 %v9475
    %v9639 = vunpack.c.l.b16 %v9476
    %v9640 = vunpack.c.h.b16 %v9476
    %v9641 = vunpack.c.l.b16 %v9477
    %v9642 = vunpack.c.h.b16 %v9477
    %v9643 = vunpack.c.l.b16 %v9478
    %v9644 = vunpack.c.h.b16 %v9478
    %v9645 = vunpack.c.l.b16 %v9479
    %v9646 = vunpack.c.h.b16 %v9479
    %v9647 = vunpack.c.l.b16 %v9480
    %v9648 = vunpack.c.h.b16 %v9480
    %v9649 = vunpack.c.l.b16 %v9481
    %v9650 = vunpack.c.h.b16 %v9481
    %v9651 = vunpack.c.l.b16 %v9482
    %v9652 = vunpack.c.h.b16 %v9482
    %v9653 = vunpack.c.l.b16 %v9483
    %v9654 = vunpack.c.h.b16 %v9483
    %v9655 = vunpack.c.l.b16 %v9484
    %v9656 = vunpack.c.h.b16 %v9484
    %v9657 = vunpack.c.l.b16 %v9485
    %v9658 = vunpack.c.h.b16 %v9485
    %v9659 = vunpack.c.l.b16 %v9486
    %v9660 = vunpack.c.h.b16 %v9486
    %v9661 = vunpack.c.l.b16 %v9487
    %v9662 = vunpack.c.h.b16 %v9487
    %v9663 = vunpack.c.l.b16 %v9488
    %v9664 = vunpack.c.h.b16 %v9488
    %v9665 = vunpack.c.l.b16 %v9489
    %v9666 = vunpack.c.h.b16 %v9489
    %v9667 = vunpack.c.l.b16 %v9490
    %v9668 = vunpack.c.h.b16 %v9490
    %v9669 = vunpack.c.l.b16 %v9491
    %v9670 = vunpack.c.h.b16 %v9491
    %v9671 = vunpack.c.l.b16 %v9492
    %v9672 = vunpack.c.h.b16 %v9492
    %v9673 = vunpack.c.l.b16 %v9493
    %v9674 = vunpack.c.h.b16 %v9493
    %v9675 = vunpack.c.l.b16 %v9494
    %v9676 = vunpack.c.h.b16 %v9494
    %v9677 = vunpack.c.l.b16 %v9495
    %v9678 = vunpack.c.h.b16 %v9495
    %v9679 = vunpack.c.l.b16 %v9496
    %v9680 = vunpack.c.h.b16 %v9496
    %v9681 = vunpack.c.l.b16 %v9497
    %v9682 = vunpack.c.h.b16 %v9497
    %v9683 = vunpack.c.l.b16 %v9498
    %v9684 = vunpack.c.h.b16 %v9498
    %v9685 = vunpack.c.l.b16 %v9499
    %v9686 = vunpack.c.h.b16 %v9499
    %v9687 = vunpack.c.l.b16 %v9500
    %v9688 = vunpack.c.h.b16 %v9500
    %v9689 = vunpack.c.l.b16 %v9501
    %v9690 = vunpack.c.h.b16 %v9501
    %v9691 = vunpack.c.l.b16 %v9502
    %v9692 = vunpack.c.h.b16 %v9502
    %v9693 = vunpack.c.l.b16 %v9503
    %v9694 = vunpack.c.h.b16 %v9503
    %v9695 = vunpack.c.l.b16 %v9504
    %v9696 = vunpack.c.h.b16 %v9504
    %v9697 = vunpack.c.l.b16 %v9505
    %v9698 = vunpack.c.h.b16 %v9505
    %v9699 = vunpack.c.l.b16 %v9506
    %v9700 = vunpack.c.h.b16 %v9506
    %v9701 = vunpack.c.l.b16 %v9507
    %v9702 = vunpack.c.h.b16 %v9507
    %v9703 = vunpack.c.l.b16 %v9508
    %v9704 = vunpack.c.h.b16 %v9508
    %v9705 = vunpack.c.l.b16 %v9509
    %v9706 = vunpack.c.h.b16 %v9509
    %v9707 = vunpack.c.l.b16 %v9510
    %v9708 = vunpack.c.h.b16 %v9510
    %v9709 = vunpack.c.l.b16 %v9511
    %v9710 = vunpack.c.h.b16 %v9511
    %v9711 = vunpack.c.l.b16 %v9512
    %v9712 = vunpack.c.h.b16 %v9512
    %v9713 = vunpack.c.l.b16 %v9513
    %v9714 = vunpack.c.h.b16 %v9513
    %v9715 = vunpack.c.l.b16 %v9514
    %v9716 = vunpack.c.h.b16 %v9514
    %v9717 = vunpack.c.l.b16 %v9515
    %v9718 = vunpack.c.h.b16 %v9515
    %v9719 = vunpack.c.l.b16 %v9516
    %v9720 = vunpack.c.h.b16 %v9516
    %v9721 = vunpack.c.l.b16 %v9517
    %v9722 = vunpack.c.h.b16 %v9517
    %v9723 = vunpack.c.l.b16 %v9518
    %v9724 = vunpack.c.h.b16 %v9518
    %v9725 = vunpack.c.l.b16 %v9519
    %v9726 = vunpack.c.h.b16 %v9519
    %v9727 = vunpack.c.l.b16 %v9520
    %v9728 = vunpack.c.h.b16 %v9520
    %v9729 = vpack.c.b16 %v9609, %v9601
    %v9730 = vpack.c.b16 %v9610, %v9602
    %v9731 = vpack.c.b16 %v9611, %v9603
    %v9732 = vpack.c.b16 %v9612, %v9604
    %v9733 = vpack.c.b16 %v9613, %v9605
    %v9734 = vpack.c.b16 %v9614, %v9606
    %v9735 = vpack.c.b16 %v9615, %v9607
    %v9736 = vpack.c.b16 %v9616, %v9608
    %v9737 = vpack.c.b16 %v9625, %v9617
    %v9738 = vpack.c.b16 %v9626, %v9618
    %v9739 = vpack.c.b16 %v9627, %v9619
    %v9740 = vpack.c.b16 %v9628, %v9620
    %v9741 = vpack.c.b16 %v9629, %v9621
    %v9742 = vpack.c.b16 %v9630, %v9622
    %v9743 = vpack.c.b16 %v9631, %v9623
    %v9744 = vpack.c.b16 %v9632, %v9624
    %v9745 = vpack.c.b16 %v9641, %v9633
    %v9746 = vpack.c.b16 %v9642, %v9634
    %v9747 = vpack.c.b16 %v9643, %v9635
    %v9748 = vpack.c.b16 %v9644, %v9636
    %v9749 = vpack.c.b16 %v9645, %v9637
    %v9750 = vpack.c.b16 %v9646, %v9638
    %v9751 = vpack.c.b16 %v9647, %v9639
    %v9752 = vpack.c.b16 %v9648, %v9640
    %v9753 = vpack.c.b16 %v9657, %v9649
    %v9754 = vpack.c.b16 %v9658, %v9650
    %v9755 = vpack.c.b16 %v9659, %v9651
    %v9756 = vpack.c.b16 %v9660, %v9652
    %v9757 = vpack.c.b16 %v9661, %v9653
    %v9758 = vpack.c.b16 %v9662, %v9654
    %v9759 = vpack.c.b16 %v9663, %v9655
    %v9760 = vpack.c.b16 %v9664, %v9656
    %v9761 = vpack.c.b16 %v9673, %v9665
    %v9762 = vpack.c.b16 %v9674, %v9666
    %v9763 = vpack.c.b16 %v9675, %v9667
    %v9764 = vpack.c.b16 %v9676, %v9668
    %v9765 = vpack.c.b16 %v9677, %v9669
    %v9766 = vpack.c.b16 %v9678, %v9670
    %v9767 = vpack.c.b16 %v9679, %v9671
    %v9768 = vpack.c.b16 %v9680, %v9672
    %v9769 = vpack.c.b16 %v9689, %v9681
    %v9770 = vpack.c.b16 %v9690, %v9682
    %v9771 = vpack.c.b16 %v9691, %v9683
    %v9772 = vpack.c.b16 %v9692, %v9684
    %v9773 = vpack.c.b16 %v9693, %v9685
    %v9774 = vpack.c.b16 %v9694, %v9686
    %v9775 = vpack.c.b16 %v9695, %v9687
    %v9776 = vpack.c.b16 %v9696, %v9688
    %v9777 = vpack.c.b16 %v9705, %v9697
    %v9778 = vpack.c.b16 %v9706, %v9698
    %v9779 = vpack.c.b16 %v9707, %v9699
    %v9780 = vpack.c.b16 %v9708, %v9700
    %v9781 = vpack.c.b16 %v9709, %v9701
    %v9782 = vpack.c.b16 %v9710, %v9702
    %v9783 = vpack.c.b16 %v9711, %v9703
    %v9784 = vpack.c.b16 %v9712, %v9704
    %v9785 = vpack.c.b16 %v9721, %v9713
    %v9786 = vpack.c.b16 %v9722, %v9714
    %v9787 = vpack.c.b16 %v9723, %v9715
    %v9788 = vpack.c.b16 %v9724, %v9716
    %v9789 = vpack.c.b16 %v9725, %v9717
    %v9790 = vpack.c.b16 %v9726, %v9718
    %v9791 = vpack.c.b16 %v9727, %v9719
    %v9792 = vpack.c.b16 %v9728, %v9720
    %9857 = vmatpush.bf16.msra.mxu0 %v9785
    %9858 = vmatpush.bf16.msra.mxu0 %v9777
    %9859 = vmatpush.bf16.msra.mxu0 %v9769
    %9860 = vmatpush.bf16.msra.mxu0 %v9761
    %9861 = vmatpush.bf16.msra.mxu0 %v9753
    %9862 = vmatpush.bf16.msra.mxu0 %v9745
    %9863 = vmatpush.bf16.msra.mxu0 %v9737
    %9864 = vmatpush.bf16.msra.mxu0 %v9729
    %9865 = vmatmul.bf16.gmra.mxu0 %v9535
    %v9866 = vpop.f32.mrf.mxu0
    %v9867 = vadd.f32 0.0, %v9866
    %v9868 = vpop.f32.mrf.mxu0
    %9869 = vdwg.mxu0
    %9870 = vmatpush.bf16.msra.mxu0 %v9786
    %9871 = vmatpush.bf16.msra.mxu0 %v9778
    %9872 = vmatpush.bf16.msra.mxu0 %v9770
    %9873 = vmatpush.bf16.msra.mxu0 %v9762
    %9874 = vmatpush.bf16.msra.mxu0 %v9754
    %9875 = vmatpush.bf16.msra.mxu0 %v9746
    %9876 = vmatpush.bf16.msra.mxu0 %v9738
    %9877 = vmatpush.bf16.msra.mxu0 %v9730
    %9878 = vmatmul.bf16.gmra.mxu0 %v9535
    %v9879 = vpop.f32.mrf.mxu0
    %v9880 = vadd.f32 0.0, %v9879
    %v9881 = vpop.f32.mrf.mxu0
    %9882 = vdwg.mxu0
    %9883 = vmatpush.bf16.msra.mxu0 %v9787
    %9884 = vmatpush.bf16.msra.mxu0 %v9779
    %9885 = vmatpush.bf16.msra.mxu0 %v9771
    %9886 = vmatpush.bf16.msra.mxu0 %v9763
    %9887 = vmatpush.bf16.msra.mxu0 %v9755
    %9888 = vmatpush.bf16.msra.mxu0 %v9747
    %9889 = vmatpush.bf16.msra.mxu0 %v9739
    %9890 = vmatpush.bf16.msra.mxu0 %v9731
    %9891 = vmatmul.bf16.gmra.mxu0 %v9535
    %v9892 = vpop.f32.mrf.mxu0
    %v9893 = vadd.f32 0.0, %v9892
    %v9894 = vpop.f32.mrf.mxu0
    %9895 = vdwg.mxu0
    %9896 = vmatpush.bf16.msra.mxu0 %v9788
    %9897 = vmatpush.bf16.msra.mxu0 %v9780
    %9898 = vmatpush.bf16.msra.mxu0 %v9772
    %9899 = vmatpush.bf16.msra.mxu0 %v9764
    %9900 = vmatpush.bf16.msra.mxu0 %v9756
    %9901 = vmatpush.bf16.msra.mxu0 %v9748
    %9902 = vmatpush.bf16.msra.mxu0 %v9740
    %9903 = vmatpush.bf16.msra.mxu0 %v9732
    %9904 = vmatmul.bf16.gmra.mxu0 %v9535
    %v9905 = vpop.f32.mrf.mxu0
    %v9906 = vadd.f32 0.0, %v9905
    %v9907 = vpop.f32.mrf.mxu0
    %9908 = vdwg.mxu0
    %9909 = vmatpush.bf16.msra.mxu0 %v9789
    %9910 = vmatpush.bf16.msra.mxu0 %v9781
    %9911 = vmatpush.bf16.msra.mxu0 %v9773
    %9912 = vmatpush.bf16.msra.mxu0 %v9765
    %9913 = vmatpush.bf16.msra.mxu0 %v9757
    %9914 = vmatpush.bf16.msra.mxu0 %v9749
    %9915 = vmatpush.bf16.msra.mxu0 %v9741
    %9916 = vmatpush.bf16.msra.mxu0 %v9733
    %9917 = vmatmul.bf16.gmra.mxu0 %v9535
    %v9918 = vpop.f32.mrf.mxu0
    %v9919 = vadd.f32 0.0, %v9918
    %v9920 = vpop.f32.mrf.mxu0
    %9921 = vdwg.mxu0
    %9922 = vmatpush.bf16.msra.mxu0 %v9790
    %9923 = vmatpush.bf16.msra.mxu0 %v9782
    %9924 = vmatpush.bf16.msra.mxu0 %v9774
    %9925 = vmatpush.bf16.msra.mxu0 %v9766
    %9926 = vmatpush.bf16.msra.mxu0 %v9758
    %9927 = vmatpush.bf16.msra.mxu0 %v9750
    %9928 = vmatpush.bf16.msra.mxu0 %v9742
    %9929 = vmatpush.bf16.msra.mxu0 %v9734
    %9930 = vmatmul.bf16.gmra.mxu0 %v9535
    %v9931 = vpop.f32.mrf.mxu0
    %v9932 = vadd.f32 0.0, %v9931
    %v9933 = vpop.f32.mrf.mxu0
    %9934 = vdwg.mxu0
    %9935 = vmatpush.bf16.msra.mxu0 %v9791
    %9936 = vmatpush.bf16.msra.mxu0 %v9783
    %9937 = vmatpush.bf16.msra.mxu0 %v9775
    %9938 = vmatpush.bf16.msra.mxu0 %v9767
    %9939 = vmatpush.bf16.msra.mxu0 %v9759
    %9940 = vmatpush.bf16.msra.mxu0 %v9751
    %9941 = vmatpush.bf16.msra.mxu0 %v9743
    %9942 = vmatpush.bf16.msra.mxu0 %v9735
    %9943 = vmatmul.bf16.gmra.mxu0 %v9535
    %v9944 = vpop.f32.mrf.mxu0
    %v9945 = vadd.f32 0.0, %v9944
    %v9946 = vpop.f32.mrf.mxu0
    %9947 = vdwg.mxu0
    %9948 = vmatpush.bf16.msra.mxu0 %v9792
    %9949 = vmatpush.bf16.msra.mxu0 %v9784
    %9950 = vmatpush.bf16.msra.mxu0 %v9776
    %9951 = vmatpush.bf16.msra.mxu0 %v9768
    %9952 = vmatpush.bf16.msra.mxu0 %v9760
    %9953 = vmatpush.bf16.msra.mxu0 %v9752
    %9954 = vmatpush.bf16.msra.mxu0 %v9744
    %9955 = vmatpush.bf16.msra.mxu0 %v9736
    %9956 = vmatmul.bf16.gmra.mxu0 %v9535
    %v9957 = vpop.f32.mrf.mxu0
    %v9958 = vadd.f32 0.0, %v9957
    %v9959 = vpop.f32.mrf.mxu0
    %9960 = vdwg.mxu0
    %v9961 = vadd.f32 %v9448, %v9867
    %v9962 = vadd.f32 %v9449, %v9880
    %v9963 = vadd.f32 %v9450, %v9893
    %v9964 = vadd.f32 %v9451, %v9906
    %v9965 = vadd.f32 %v9452, %v9919
    %v9966 = vadd.f32 %v9453, %v9932
    %v9967 = vadd.f32 %v9454, %v9945
    %v9968 = vadd.f32 %v9455, %v9958
    %s9969 = scalar_lea.vmem [#allocation13], 5632
    %v9970 = vld [vmem:[%s9969] sm:$0xff]
    %v9971 = vld [vmem:[%s9969 + $0x8] sm:$0xff]
    %v9972 = vld [vmem:[%s9969 + $0x10] sm:$0xff]
    %v9973 = vld [vmem:[%s9969 + $0x18] sm:$0xff]
    %v9974 = vld [vmem:[%s9969 + $0x20] sm:$0xff]
    %v9975 = vld [vmem:[%s9969 + $0x28] sm:$0xff]
    %v9976 = vld [vmem:[%s9969 + $0x30] sm:$0xff]
    %v9977 = vld [vmem:[%s9969 + $0x38] sm:$0xff]
    %v9978 = vld [vmem:[%s9969 + $0x40] sm:$0xff]
    %v9979 = vld [vmem:[%s9969 + $0x48] sm:$0xff]
    %v9980 = vld [vmem:[%s9969 + $0x50] sm:$0xff]
    %v9981 = vld [vmem:[%s9969 + $0x58] sm:$0xff]
    %v9982 = vld [vmem:[%s9969 + $0x60] sm:$0xff]
    %v9983 = vld [vmem:[%s9969 + $0x68] sm:$0xff]
    %v9984 = vld [vmem:[%s9969 + $0x70] sm:$0xff]
    %v9985 = vld [vmem:[%s9969 + $0x78] sm:$0xff]
    %v9986 = vld [vmem:[%s9969 + $0x80] sm:$0xff]
    %v9987 = vld [vmem:[%s9969 + $0x88] sm:$0xff]
    %v9988 = vld [vmem:[%s9969 + $0x90] sm:$0xff]
    %v9989 = vld [vmem:[%s9969 + $0x98] sm:$0xff]
    %v9990 = vld [vmem:[%s9969 + $0xa0] sm:$0xff]
    %v9991 = vld [vmem:[%s9969 + $0xa8] sm:$0xff]
    %v9992 = vld [vmem:[%s9969 + $0xb0] sm:$0xff]
    %v9993 = vld [vmem:[%s9969 + $0xb8] sm:$0xff]
    %v9994 = vld [vmem:[%s9969 + $0xc0] sm:$0xff]
    %v9995 = vld [vmem:[%s9969 + $0xc8] sm:$0xff]
    %v9996 = vld [vmem:[%s9969 + $0xd0] sm:$0xff]
    %v9997 = vld [vmem:[%s9969 + $0xd8] sm:$0xff]
    %v9998 = vld [vmem:[%s9969 + $0xe0] sm:$0xff]
    %v9999 = vld [vmem:[%s9969 + $0xe8] sm:$0xff]
    %v10000 = vld [vmem:[%s9969 + $0xf0] sm:$0xff]
    %v10001 = vld [vmem:[%s9969 + $0xf8] sm:$0xff]
    %v10002 = vld [vmem:[%s9969 + $0x100] sm:$0xff]
    %v10003 = vld [vmem:[%s9969 + $0x108] sm:$0xff]
    %v10004 = vld [vmem:[%s9969 + $0x110] sm:$0xff]
    %v10005 = vld [vmem:[%s9969 + $0x118] sm:$0xff]
    %v10006 = vld [vmem:[%s9969 + $0x120] sm:$0xff]
    %v10007 = vld [vmem:[%s9969 + $0x128] sm:$0xff]
    %v10008 = vld [vmem:[%s9969 + $0x130] sm:$0xff]
    %v10009 = vld [vmem:[%s9969 + $0x138] sm:$0xff]
    %v10010 = vld [vmem:[%s9969 + $0x140] sm:$0xff]
    %v10011 = vld [vmem:[%s9969 + $0x148] sm:$0xff]
    %v10012 = vld [vmem:[%s9969 + $0x150] sm:$0xff]
    %v10013 = vld [vmem:[%s9969 + $0x158] sm:$0xff]
    %v10014 = vld [vmem:[%s9969 + $0x160] sm:$0xff]
    %v10015 = vld [vmem:[%s9969 + $0x168] sm:$0xff]
    %v10016 = vld [vmem:[%s9969 + $0x170] sm:$0xff]
    %v10017 = vld [vmem:[%s9969 + $0x178] sm:$0xff]
    %v10018 = vld [vmem:[%s9969 + $0x180] sm:$0xff]
    %v10019 = vld [vmem:[%s9969 + $0x188] sm:$0xff]
    %v10020 = vld [vmem:[%s9969 + $0x190] sm:$0xff]
    %v10021 = vld [vmem:[%s9969 + $0x198] sm:$0xff]
    %v10022 = vld [vmem:[%s9969 + $0x1a0] sm:$0xff]
    %v10023 = vld [vmem:[%s9969 + $0x1a8] sm:$0xff]
    %v10024 = vld [vmem:[%s9969 + $0x1b0] sm:$0xff]
    %v10025 = vld [vmem:[%s9969 + $0x1b8] sm:$0xff]
    %v10026 = vld [vmem:[%s9969 + $0x1c0] sm:$0xff]
    %v10027 = vld [vmem:[%s9969 + $0x1c8] sm:$0xff]
    %v10028 = vld [vmem:[%s9969 + $0x1d0] sm:$0xff]
    %v10029 = vld [vmem:[%s9969 + $0x1d8] sm:$0xff]
    %v10030 = vld [vmem:[%s9969 + $0x1e0] sm:$0xff]
    %v10031 = vld [vmem:[%s9969 + $0x1e8] sm:$0xff]
    %v10032 = vld [vmem:[%s9969 + $0x1f0] sm:$0xff]
    %v10033 = vld [vmem:[%s9969 + $0x1f8] sm:$0xff]
    %v10034 = vrot.slane %v8487, 3
    %v10035 = vrot.slane %v8488, 2
    %v10036 = vsel %vm4442, %v10035, %v10034
    %v10037 = vrot.slane %v8489, 1
    %v10038 = vsel %vm4445, %v10037, %v10036
    %v10039 = vsel %vm4448, %v8490, %v10038
    %v10040 = vrot.slane %v8491, 7
    %v10041 = vsel %vm4451, %v10040, %v10039
    %v10042 = vrot.slane %v8492, 6
    %v10043 = vsel %vm4454, %v10042, %v10041
    %v10044 = vrot.slane %v8493, 5
    %v10045 = vsel %vm4457, %v10044, %v10043
    %v10046 = vrot.slane %v8494, 4
    %v10047 = vsel %vm4460, %v10046, %v10045
    %v10048 = vpack.c.b16 %v10047, %v10047
    %v10114 = vunpack.c.l.b16 %v9970
    %v10115 = vunpack.c.h.b16 %v9970
    %v10116 = vunpack.c.l.b16 %v9971
    %v10117 = vunpack.c.h.b16 %v9971
    %v10118 = vunpack.c.l.b16 %v9972
    %v10119 = vunpack.c.h.b16 %v9972
    %v10120 = vunpack.c.l.b16 %v9973
    %v10121 = vunpack.c.h.b16 %v9973
    %v10122 = vunpack.c.l.b16 %v9974
    %v10123 = vunpack.c.h.b16 %v9974
    %v10124 = vunpack.c.l.b16 %v9975
    %v10125 = vunpack.c.h.b16 %v9975
    %v10126 = vunpack.c.l.b16 %v9976
    %v10127 = vunpack.c.h.b16 %v9976
    %v10128 = vunpack.c.l.b16 %v9977
    %v10129 = vunpack.c.h.b16 %v9977
    %v10130 = vunpack.c.l.b16 %v9978
    %v10131 = vunpack.c.h.b16 %v9978
    %v10132 = vunpack.c.l.b16 %v9979
    %v10133 = vunpack.c.h.b16 %v9979
    %v10134 = vunpack.c.l.b16 %v9980
    %v10135 = vunpack.c.h.b16 %v9980
    %v10136 = vunpack.c.l.b16 %v9981
    %v10137 = vunpack.c.h.b16 %v9981
    %v10138 = vunpack.c.l.b16 %v9982
    %v10139 = vunpack.c.h.b16 %v9982
    %v10140 = vunpack.c.l.b16 %v9983
    %v10141 = vunpack.c.h.b16 %v9983
    %v10142 = vunpack.c.l.b16 %v9984
    %v10143 = vunpack.c.h.b16 %v9984
    %v10144 = vunpack.c.l.b16 %v9985
    %v10145 = vunpack.c.h.b16 %v9985
    %v10146 = vunpack.c.l.b16 %v9986
    %v10147 = vunpack.c.h.b16 %v9986
    %v10148 = vunpack.c.l.b16 %v9987
    %v10149 = vunpack.c.h.b16 %v9987
    %v10150 = vunpack.c.l.b16 %v9988
    %v10151 = vunpack.c.h.b16 %v9988
    %v10152 = vunpack.c.l.b16 %v9989
    %v10153 = vunpack.c.h.b16 %v9989
    %v10154 = vunpack.c.l.b16 %v9990
    %v10155 = vunpack.c.h.b16 %v9990
    %v10156 = vunpack.c.l.b16 %v9991
    %v10157 = vunpack.c.h.b16 %v9991
    %v10158 = vunpack.c.l.b16 %v9992
    %v10159 = vunpack.c.h.b16 %v9992
    %v10160 = vunpack.c.l.b16 %v9993
    %v10161 = vunpack.c.h.b16 %v9993
    %v10162 = vunpack.c.l.b16 %v9994
    %v10163 = vunpack.c.h.b16 %v9994
    %v10164 = vunpack.c.l.b16 %v9995
    %v10165 = vunpack.c.h.b16 %v9995
    %v10166 = vunpack.c.l.b16 %v9996
    %v10167 = vunpack.c.h.b16 %v9996
    %v10168 = vunpack.c.l.b16 %v9997
    %v10169 = vunpack.c.h.b16 %v9997
    %v10170 = vunpack.c.l.b16 %v9998
    %v10171 = vunpack.c.h.b16 %v9998
    %v10172 = vunpack.c.l.b16 %v9999
    %v10173 = vunpack.c.h.b16 %v9999
    %v10174 = vunpack.c.l.b16 %v10000
    %v10175 = vunpack.c.h.b16 %v10000
    %v10176 = vunpack.c.l.b16 %v10001
    %v10177 = vunpack.c.h.b16 %v10001
    %v10178 = vunpack.c.l.b16 %v10002
    %v10179 = vunpack.c.h.b16 %v10002
    %v10180 = vunpack.c.l.b16 %v10003
    %v10181 = vunpack.c.h.b16 %v10003
    %v10182 = vunpack.c.l.b16 %v10004
    %v10183 = vunpack.c.h.b16 %v10004
    %v10184 = vunpack.c.l.b16 %v10005
    %v10185 = vunpack.c.h.b16 %v10005
    %v10186 = vunpack.c.l.b16 %v10006
    %v10187 = vunpack.c.h.b16 %v10006
    %v10188 = vunpack.c.l.b16 %v10007
    %v10189 = vunpack.c.h.b16 %v10007
    %v10190 = vunpack.c.l.b16 %v10008
    %v10191 = vunpack.c.h.b16 %v10008
    %v10192 = vunpack.c.l.b16 %v10009
    %v10193 = vunpack.c.h.b16 %v10009
    %v10194 = vunpack.c.l.b16 %v10010
    %v10195 = vunpack.c.h.b16 %v10010
    %v10196 = vunpack.c.l.b16 %v10011
    %v10197 = vunpack.c.h.b16 %v10011
    %v10198 = vunpack.c.l.b16 %v10012
    %v10199 = vunpack.c.h.b16 %v10012
    %v10200 = vunpack.c.l.b16 %v10013
    %v10201 = vunpack.c.h.b16 %v10013
    %v10202 = vunpack.c.l.b16 %v10014
    %v10203 = vunpack.c.h.b16 %v10014
    %v10204 = vunpack.c.l.b16 %v10015
    %v10205 = vunpack.c.h.b16 %v10015
    %v10206 = vunpack.c.l.b16 %v10016
    %v10207 = vunpack.c.h.b16 %v10016
    %v10208 = vunpack.c.l.b16 %v10017
    %v10209 = vunpack.c.h.b16 %v10017
    %v10210 = vunpack.c.l.b16 %v10018
    %v10211 = vunpack.c.h.b16 %v10018
    %v10212 = vunpack.c.l.b16 %v10019
    %v10213 = vunpack.c.h.b16 %v10019
    %v10214 = vunpack.c.l.b16 %v10020
    %v10215 = vunpack.c.h.b16 %v10020
    %v10216 = vunpack.c.l.b16 %v10021
    %v10217 = vunpack.c.h.b16 %v10021
    %v10218 = vunpack.c.l.b16 %v10022
    %v10219 = vunpack.c.h.b16 %v10022
    %v10220 = vunpack.c.l.b16 %v10023
    %v10221 = vunpack.c.h.b16 %v10023
    %v10222 = vunpack.c.l.b16 %v10024
    %v10223 = vunpack.c.h.b16 %v10024
    %v10224 = vunpack.c.l.b16 %v10025
    %v10225 = vunpack.c.h.b16 %v10025
    %v10226 = vunpack.c.l.b16 %v10026
    %v10227 = vunpack.c.h.b16 %v10026
    %v10228 = vunpack.c.l.b16 %v10027
    %v10229 = vunpack.c.h.b16 %v10027
    %v10230 = vunpack.c.l.b16 %v10028
    %v10231 = vunpack.c.h.b16 %v10028
    %v10232 = vunpack.c.l.b16 %v10029
    %v10233 = vunpack.c.h.b16 %v10029
    %v10234 = vunpack.c.l.b16 %v10030
    %v10235 = vunpack.c.h.b16 %v10030
    %v10236 = vunpack.c.l.b16 %v10031
    %v10237 = vunpack.c.h.b16 %v10031
    %v10238 = vunpack.c.l.b16 %v10032
    %v10239 = vunpack.c.h.b16 %v10032
    %v10240 = vunpack.c.l.b16 %v10033
    %v10241 = vunpack.c.h.b16 %v10033
    %v10242 = vpack.c.b16 %v10122, %v10114
    %v10243 = vpack.c.b16 %v10123, %v10115
    %v10244 = vpack.c.b16 %v10124, %v10116
    %v10245 = vpack.c.b16 %v10125, %v10117
    %v10246 = vpack.c.b16 %v10126, %v10118
    %v10247 = vpack.c.b16 %v10127, %v10119
    %v10248 = vpack.c.b16 %v10128, %v10120
    %v10249 = vpack.c.b16 %v10129, %v10121
    %v10250 = vpack.c.b16 %v10138, %v10130
    %v10251 = vpack.c.b16 %v10139, %v10131
    %v10252 = vpack.c.b16 %v10140, %v10132
    %v10253 = vpack.c.b16 %v10141, %v10133
    %v10254 = vpack.c.b16 %v10142, %v10134
    %v10255 = vpack.c.b16 %v10143, %v10135
    %v10256 = vpack.c.b16 %v10144, %v10136
    %v10257 = vpack.c.b16 %v10145, %v10137
    %v10258 = vpack.c.b16 %v10154, %v10146
    %v10259 = vpack.c.b16 %v10155, %v10147
    %v10260 = vpack.c.b16 %v10156, %v10148
    %v10261 = vpack.c.b16 %v10157, %v10149
    %v10262 = vpack.c.b16 %v10158, %v10150
    %v10263 = vpack.c.b16 %v10159, %v10151
    %v10264 = vpack.c.b16 %v10160, %v10152
    %v10265 = vpack.c.b16 %v10161, %v10153
    %v10266 = vpack.c.b16 %v10170, %v10162
    %v10267 = vpack.c.b16 %v10171, %v10163
    %v10268 = vpack.c.b16 %v10172, %v10164
    %v10269 = vpack.c.b16 %v10173, %v10165
    %v10270 = vpack.c.b16 %v10174, %v10166
    %v10271 = vpack.c.b16 %v10175, %v10167
    %v10272 = vpack.c.b16 %v10176, %v10168
    %v10273 = vpack.c.b16 %v10177, %v10169
    %v10274 = vpack.c.b16 %v10186, %v10178
    %v10275 = vpack.c.b16 %v10187, %v10179
    %v10276 = vpack.c.b16 %v10188, %v10180
    %v10277 = vpack.c.b16 %v10189, %v10181
    %v10278 = vpack.c.b16 %v10190, %v10182
    %v10279 = vpack.c.b16 %v10191, %v10183
    %v10280 = vpack.c.b16 %v10192, %v10184
    %v10281 = vpack.c.b16 %v10193, %v10185
    %v10282 = vpack.c.b16 %v10202, %v10194
    %v10283 = vpack.c.b16 %v10203, %v10195
    %v10284 = vpack.c.b16 %v10204, %v10196
    %v10285 = vpack.c.b16 %v10205, %v10197
    %v10286 = vpack.c.b16 %v10206, %v10198
    %v10287 = vpack.c.b16 %v10207, %v10199
    %v10288 = vpack.c.b16 %v10208, %v10200
    %v10289 = vpack.c.b16 %v10209, %v10201
    %v10290 = vpack.c.b16 %v10218, %v10210
    %v10291 = vpack.c.b16 %v10219, %v10211
    %v10292 = vpack.c.b16 %v10220, %v10212
    %v10293 = vpack.c.b16 %v10221, %v10213
    %v10294 = vpack.c.b16 %v10222, %v10214
    %v10295 = vpack.c.b16 %v10223, %v10215
    %v10296 = vpack.c.b16 %v10224, %v10216
    %v10297 = vpack.c.b16 %v10225, %v10217
    %v10298 = vpack.c.b16 %v10234, %v10226
    %v10299 = vpack.c.b16 %v10235, %v10227
    %v10300 = vpack.c.b16 %v10236, %v10228
    %v10301 = vpack.c.b16 %v10237, %v10229
    %v10302 = vpack.c.b16 %v10238, %v10230
    %v10303 = vpack.c.b16 %v10239, %v10231
    %v10304 = vpack.c.b16 %v10240, %v10232
    %v10305 = vpack.c.b16 %v10241, %v10233
    %10370 = vmatpush.bf16.msra.mxu0 %v10298
    %10371 = vmatpush.bf16.msra.mxu0 %v10290
    %10372 = vmatpush.bf16.msra.mxu0 %v10282
    %10373 = vmatpush.bf16.msra.mxu0 %v10274
    %10374 = vmatpush.bf16.msra.mxu0 %v10266
    %10375 = vmatpush.bf16.msra.mxu0 %v10258
    %10376 = vmatpush.bf16.msra.mxu0 %v10250
    %10377 = vmatpush.bf16.msra.mxu0 %v10242
    %10378 = vmatmul.bf16.gmra.mxu0 %v10048
    %v10379 = vpop.f32.mrf.mxu0
    %v10380 = vadd.f32 0.0, %v10379
    %v10381 = vpop.f32.mrf.mxu0
    %10382 = vdwg.mxu0
    %10383 = vmatpush.bf16.msra.mxu0 %v10299
    %10384 = vmatpush.bf16.msra.mxu0 %v10291
    %10385 = vmatpush.bf16.msra.mxu0 %v10283
    %10386 = vmatpush.bf16.msra.mxu0 %v10275
    %10387 = vmatpush.bf16.msra.mxu0 %v10267
    %10388 = vmatpush.bf16.msra.mxu0 %v10259
    %10389 = vmatpush.bf16.msra.mxu0 %v10251
    %10390 = vmatpush.bf16.msra.mxu0 %v10243
    %10391 = vmatmul.bf16.gmra.mxu0 %v10048
    %v10392 = vpop.f32.mrf.mxu0
    %v10393 = vadd.f32 0.0, %v10392
    %v10394 = vpop.f32.mrf.mxu0
    %10395 = vdwg.mxu0
    %10396 = vmatpush.bf16.msra.mxu0 %v10300
    %10397 = vmatpush.bf16.msra.mxu0 %v10292
    %10398 = vmatpush.bf16.msra.mxu0 %v10284
    %10399 = vmatpush.bf16.msra.mxu0 %v10276
    %10400 = vmatpush.bf16.msra.mxu0 %v10268
    %10401 = vmatpush.bf16.msra.mxu0 %v10260
    %10402 = vmatpush.bf16.msra.mxu0 %v10252
    %10403 = vmatpush.bf16.msra.mxu0 %v10244
    %10404 = vmatmul.bf16.gmra.mxu0 %v10048
    %v10405 = vpop.f32.mrf.mxu0
    %v10406 = vadd.f32 0.0, %v10405
    %v10407 = vpop.f32.mrf.mxu0
    %10408 = vdwg.mxu0
    %10409 = vmatpush.bf16.msra.mxu0 %v10301
    %10410 = vmatpush.bf16.msra.mxu0 %v10293
    %10411 = vmatpush.bf16.msra.mxu0 %v10285
    %10412 = vmatpush.bf16.msra.mxu0 %v10277
    %10413 = vmatpush.bf16.msra.mxu0 %v10269
    %10414 = vmatpush.bf16.msra.mxu0 %v10261
    %10415 = vmatpush.bf16.msra.mxu0 %v10253
    %10416 = vmatpush.bf16.msra.mxu0 %v10245
    %10417 = vmatmul.bf16.gmra.mxu0 %v10048
    %v10418 = vpop.f32.mrf.mxu0
    %v10419 = vadd.f32 0.0, %v10418
    %v10420 = vpop.f32.mrf.mxu0
    %10421 = vdwg.mxu0
    %10422 = vmatpush.bf16.msra.mxu0 %v10302
    %10423 = vmatpush.bf16.msra.mxu0 %v10294
    %10424 = vmatpush.bf16.msra.mxu0 %v10286
    %10425 = vmatpush.bf16.msra.mxu0 %v10278
    %10426 = vmatpush.bf16.msra.mxu0 %v10270
    %10427 = vmatpush.bf16.msra.mxu0 %v10262
    %10428 = vmatpush.bf16.msra.mxu0 %v10254
    %10429 = vmatpush.bf16.msra.mxu0 %v10246
    %10430 = vmatmul.bf16.gmra.mxu0 %v10048
    %v10431 = vpop.f32.mrf.mxu0
    %v10432 = vadd.f32 0.0, %v10431
    %v10433 = vpop.f32.mrf.mxu0
    %10434 = vdwg.mxu0
    %10435 = vmatpush.bf16.msra.mxu0 %v10303
    %10436 = vmatpush.bf16.msra.mxu0 %v10295
    %10437 = vmatpush.bf16.msra.mxu0 %v10287
    %10438 = vmatpush.bf16.msra.mxu0 %v10279
    %10439 = vmatpush.bf16.msra.mxu0 %v10271
    %10440 = vmatpush.bf16.msra.mxu0 %v10263
    %10441 = vmatpush.bf16.msra.mxu0 %v10255
    %10442 = vmatpush.bf16.msra.mxu0 %v10247
    %10443 = vmatmul.bf16.gmra.mxu0 %v10048
    %v10444 = vpop.f32.mrf.mxu0
    %v10445 = vadd.f32 0.0, %v10444
    %v10446 = vpop.f32.mrf.mxu0
    %10447 = vdwg.mxu0
    %10448 = vmatpush.bf16.msra.mxu0 %v10304
    %10449 = vmatpush.bf16.msra.mxu0 %v10296
    %10450 = vmatpush.bf16.msra.mxu0 %v10288
    %10451 = vmatpush.bf16.msra.mxu0 %v10280
    %10452 = vmatpush.bf16.msra.mxu0 %v10272
    %10453 = vmatpush.bf16.msra.mxu0 %v10264
    %10454 = vmatpush.bf16.msra.mxu0 %v10256
    %10455 = vmatpush.bf16.msra.mxu0 %v10248
    %10456 = vmatmul.bf16.gmra.mxu0 %v10048
    %v10457 = vpop.f32.mrf.mxu0
    %v10458 = vadd.f32 0.0, %v10457
    %v10459 = vpop.f32.mrf.mxu0
    %10460 = vdwg.mxu0
    %10461 = vmatpush.bf16.msra.mxu0 %v10305
    %10462 = vmatpush.bf16.msra.mxu0 %v10297
    %10463 = vmatpush.bf16.msra.mxu0 %v10289
    %10464 = vmatpush.bf16.msra.mxu0 %v10281
    %10465 = vmatpush.bf16.msra.mxu0 %v10273
    %10466 = vmatpush.bf16.msra.mxu0 %v10265
    %10467 = vmatpush.bf16.msra.mxu0 %v10257
    %10468 = vmatpush.bf16.msra.mxu0 %v10249
    %10469 = vmatmul.bf16.gmra.mxu0 %v10048
    %v10470 = vpop.f32.mrf.mxu0
    %v10471 = vadd.f32 0.0, %v10470
    %v10472 = vpop.f32.mrf.mxu0
    %10473 = vdwg.mxu0
    %v10474 = vadd.f32 %v9961, %v10380
    %v10475 = vadd.f32 %v9962, %v10393
    %v10476 = vadd.f32 %v9963, %v10406
    %v10477 = vadd.f32 %v9964, %v10419
    %v10478 = vadd.f32 %v9965, %v10432
    %v10479 = vadd.f32 %v9966, %v10445
    %v10480 = vadd.f32 %v9967, %v10458
    %v10481 = vadd.f32 %v9968, %v10471
    %s10482 = scalar_lea.vmem [#allocation13], 6144
    %v10483 = vld [vmem:[%s10482] sm:$0xff]
    %v10484 = vld [vmem:[%s10482 + $0x8] sm:$0xff]
    %v10485 = vld [vmem:[%s10482 + $0x10] sm:$0xff]
    %v10486 = vld [vmem:[%s10482 + $0x18] sm:$0xff]
    %v10487 = vld [vmem:[%s10482 + $0x20] sm:$0xff]
    %v10488 = vld [vmem:[%s10482 + $0x28] sm:$0xff]
    %v10489 = vld [vmem:[%s10482 + $0x30] sm:$0xff]
    %v10490 = vld [vmem:[%s10482 + $0x38] sm:$0xff]
    %v10491 = vld [vmem:[%s10482 + $0x40] sm:$0xff]
    %v10492 = vld [vmem:[%s10482 + $0x48] sm:$0xff]
    %v10493 = vld [vmem:[%s10482 + $0x50] sm:$0xff]
    %v10494 = vld [vmem:[%s10482 + $0x58] sm:$0xff]
    %v10495 = vld [vmem:[%s10482 + $0x60] sm:$0xff]
    %v10496 = vld [vmem:[%s10482 + $0x68] sm:$0xff]
    %v10497 = vld [vmem:[%s10482 + $0x70] sm:$0xff]
    %v10498 = vld [vmem:[%s10482 + $0x78] sm:$0xff]
    %v10499 = vld [vmem:[%s10482 + $0x80] sm:$0xff]
    %v10500 = vld [vmem:[%s10482 + $0x88] sm:$0xff]
    %v10501 = vld [vmem:[%s10482 + $0x90] sm:$0xff]
    %v10502 = vld [vmem:[%s10482 + $0x98] sm:$0xff]
    %v10503 = vld [vmem:[%s10482 + $0xa0] sm:$0xff]
    %v10504 = vld [vmem:[%s10482 + $0xa8] sm:$0xff]
    %v10505 = vld [vmem:[%s10482 + $0xb0] sm:$0xff]
    %v10506 = vld [vmem:[%s10482 + $0xb8] sm:$0xff]
    %v10507 = vld [vmem:[%s10482 + $0xc0] sm:$0xff]
    %v10508 = vld [vmem:[%s10482 + $0xc8] sm:$0xff]
    %v10509 = vld [vmem:[%s10482 + $0xd0] sm:$0xff]
    %v10510 = vld [vmem:[%s10482 + $0xd8] sm:$0xff]
    %v10511 = vld [vmem:[%s10482 + $0xe0] sm:$0xff]
    %v10512 = vld [vmem:[%s10482 + $0xe8] sm:$0xff]
    %v10513 = vld [vmem:[%s10482 + $0xf0] sm:$0xff]
    %v10514 = vld [vmem:[%s10482 + $0xf8] sm:$0xff]
    %v10515 = vld [vmem:[%s10482 + $0x100] sm:$0xff]
    %v10516 = vld [vmem:[%s10482 + $0x108] sm:$0xff]
    %v10517 = vld [vmem:[%s10482 + $0x110] sm:$0xff]
    %v10518 = vld [vmem:[%s10482 + $0x118] sm:$0xff]
    %v10519 = vld [vmem:[%s10482 + $0x120] sm:$0xff]
    %v10520 = vld [vmem:[%s10482 + $0x128] sm:$0xff]
    %v10521 = vld [vmem:[%s10482 + $0x130] sm:$0xff]
    %v10522 = vld [vmem:[%s10482 + $0x138] sm:$0xff]
    %v10523 = vld [vmem:[%s10482 + $0x140] sm:$0xff]
    %v10524 = vld [vmem:[%s10482 + $0x148] sm:$0xff]
    %v10525 = vld [vmem:[%s10482 + $0x150] sm:$0xff]
    %v10526 = vld [vmem:[%s10482 + $0x158] sm:$0xff]
    %v10527 = vld [vmem:[%s10482 + $0x160] sm:$0xff]
    %v10528 = vld [vmem:[%s10482 + $0x168] sm:$0xff]
    %v10529 = vld [vmem:[%s10482 + $0x170] sm:$0xff]
    %v10530 = vld [vmem:[%s10482 + $0x178] sm:$0xff]
    %v10531 = vld [vmem:[%s10482 + $0x180] sm:$0xff]
    %v10532 = vld [vmem:[%s10482 + $0x188] sm:$0xff]
    %v10533 = vld [vmem:[%s10482 + $0x190] sm:$0xff]
    %v10534 = vld [vmem:[%s10482 + $0x198] sm:$0xff]
    %v10535 = vld [vmem:[%s10482 + $0x1a0] sm:$0xff]
    %v10536 = vld [vmem:[%s10482 + $0x1a8] sm:$0xff]
    %v10537 = vld [vmem:[%s10482 + $0x1b0] sm:$0xff]
    %v10538 = vld [vmem:[%s10482 + $0x1b8] sm:$0xff]
    %v10539 = vld [vmem:[%s10482 + $0x1c0] sm:$0xff]
    %v10540 = vld [vmem:[%s10482 + $0x1c8] sm:$0xff]
    %v10541 = vld [vmem:[%s10482 + $0x1d0] sm:$0xff]
    %v10542 = vld [vmem:[%s10482 + $0x1d8] sm:$0xff]
    %v10543 = vld [vmem:[%s10482 + $0x1e0] sm:$0xff]
    %v10544 = vld [vmem:[%s10482 + $0x1e8] sm:$0xff]
    %v10545 = vld [vmem:[%s10482 + $0x1f0] sm:$0xff]
    %v10546 = vld [vmem:[%s10482 + $0x1f8] sm:$0xff]
    %v10547 = vrot.slane %v8487, 4
    %v10548 = vrot.slane %v8488, 3
    %v10549 = vsel %vm4442, %v10548, %v10547
    %v10550 = vrot.slane %v8489, 2
    %v10551 = vsel %vm4445, %v10550, %v10549
    %v10552 = vrot.slane %v8490, 1
    %v10553 = vsel %vm4448, %v10552, %v10551
    %v10554 = vsel %vm4451, %v8491, %v10553
    %v10555 = vrot.slane %v8492, 7
    %v10556 = vsel %vm4454, %v10555, %v10554
    %v10557 = vrot.slane %v8493, 6
    %v10558 = vsel %vm4457, %v10557, %v10556
    %v10559 = vrot.slane %v8494, 5
    %v10560 = vsel %vm4460, %v10559, %v10558
    %v10561 = vpack.c.b16 %v10560, %v10560
    %v10627 = vunpack.c.l.b16 %v10483
    %v10628 = vunpack.c.h.b16 %v10483
    %v10629 = vunpack.c.l.b16 %v10484
    %v10630 = vunpack.c.h.b16 %v10484
    %v10631 = vunpack.c.l.b16 %v10485
    %v10632 = vunpack.c.h.b16 %v10485
    %v10633 = vunpack.c.l.b16 %v10486
    %v10634 = vunpack.c.h.b16 %v10486
    %v10635 = vunpack.c.l.b16 %v10487
    %v10636 = vunpack.c.h.b16 %v10487
    %v10637 = vunpack.c.l.b16 %v10488
    %v10638 = vunpack.c.h.b16 %v10488
    %v10639 = vunpack.c.l.b16 %v10489
    %v10640 = vunpack.c.h.b16 %v10489
    %v10641 = vunpack.c.l.b16 %v10490
    %v10642 = vunpack.c.h.b16 %v10490
    %v10643 = vunpack.c.l.b16 %v10491
    %v10644 = vunpack.c.h.b16 %v10491
    %v10645 = vunpack.c.l.b16 %v10492
    %v10646 = vunpack.c.h.b16 %v10492
    %v10647 = vunpack.c.l.b16 %v10493
    %v10648 = vunpack.c.h.b16 %v10493
    %v10649 = vunpack.c.l.b16 %v10494
    %v10650 = vunpack.c.h.b16 %v10494
    %v10651 = vunpack.c.l.b16 %v10495
    %v10652 = vunpack.c.h.b16 %v10495
    %v10653 = vunpack.c.l.b16 %v10496
    %v10654 = vunpack.c.h.b16 %v10496
    %v10655 = vunpack.c.l.b16 %v10497
    %v10656 = vunpack.c.h.b16 %v10497
    %v10657 = vunpack.c.l.b16 %v10498
    %v10658 = vunpack.c.h.b16 %v10498
    %v10659 = vunpack.c.l.b16 %v10499
    %v10660 = vunpack.c.h.b16 %v10499
    %v10661 = vunpack.c.l.b16 %v10500
    %v10662 = vunpack.c.h.b16 %v10500
    %v10663 = vunpack.c.l.b16 %v10501
    %v10664 = vunpack.c.h.b16 %v10501
    %v10665 = vunpack.c.l.b16 %v10502
    %v10666 = vunpack.c.h.b16 %v10502
    %v10667 = vunpack.c.l.b16 %v10503
    %v10668 = vunpack.c.h.b16 %v10503
    %v10669 = vunpack.c.l.b16 %v10504
    %v10670 = vunpack.c.h.b16 %v10504
    %v10671 = vunpack.c.l.b16 %v10505
    %v10672 = vunpack.c.h.b16 %v10505
    %v10673 = vunpack.c.l.b16 %v10506
    %v10674 = vunpack.c.h.b16 %v10506
    %v10675 = vunpack.c.l.b16 %v10507
    %v10676 = vunpack.c.h.b16 %v10507
    %v10677 = vunpack.c.l.b16 %v10508
    %v10678 = vunpack.c.h.b16 %v10508
    %v10679 = vunpack.c.l.b16 %v10509
    %v10680 = vunpack.c.h.b16 %v10509
    %v10681 = vunpack.c.l.b16 %v10510
    %v10682 = vunpack.c.h.b16 %v10510
    %v10683 = vunpack.c.l.b16 %v10511
    %v10684 = vunpack.c.h.b16 %v10511
    %v10685 = vunpack.c.l.b16 %v10512
    %v10686 = vunpack.c.h.b16 %v10512
    %v10687 = vunpack.c.l.b16 %v10513
    %v10688 = vunpack.c.h.b16 %v10513
    %v10689 = vunpack.c.l.b16 %v10514
    %v10690 = vunpack.c.h.b16 %v10514
    %v10691 = vunpack.c.l.b16 %v10515
    %v10692 = vunpack.c.h.b16 %v10515
    %v10693 = vunpack.c.l.b16 %v10516
    %v10694 = vunpack.c.h.b16 %v10516
    %v10695 = vunpack.c.l.b16 %v10517
    %v10696 = vunpack.c.h.b16 %v10517
    %v10697 = vunpack.c.l.b16 %v10518
    %v10698 = vunpack.c.h.b16 %v10518
    %v10699 = vunpack.c.l.b16 %v10519
    %v10700 = vunpack.c.h.b16 %v10519
    %v10701 = vunpack.c.l.b16 %v10520
    %v10702 = vunpack.c.h.b16 %v10520
    %v10703 = vunpack.c.l.b16 %v10521
    %v10704 = vunpack.c.h.b16 %v10521
    %v10705 = vunpack.c.l.b16 %v10522
    %v10706 = vunpack.c.h.b16 %v10522
    %v10707 = vunpack.c.l.b16 %v10523
    %v10708 = vunpack.c.h.b16 %v10523
    %v10709 = vunpack.c.l.b16 %v10524
    %v10710 = vunpack.c.h.b16 %v10524
    %v10711 = vunpack.c.l.b16 %v10525
    %v10712 = vunpack.c.h.b16 %v10525
    %v10713 = vunpack.c.l.b16 %v10526
    %v10714 = vunpack.c.h.b16 %v10526
    %v10715 = vunpack.c.l.b16 %v10527
    %v10716 = vunpack.c.h.b16 %v10527
    %v10717 = vunpack.c.l.b16 %v10528
    %v10718 = vunpack.c.h.b16 %v10528
    %v10719 = vunpack.c.l.b16 %v10529
    %v10720 = vunpack.c.h.b16 %v10529
    %v10721 = vunpack.c.l.b16 %v10530
    %v10722 = vunpack.c.h.b16 %v10530
    %v10723 = vunpack.c.l.b16 %v10531
    %v10724 = vunpack.c.h.b16 %v10531
    %v10725 = vunpack.c.l.b16 %v10532
    %v10726 = vunpack.c.h.b16 %v10532
    %v10727 = vunpack.c.l.b16 %v10533
    %v10728 = vunpack.c.h.b16 %v10533
    %v10729 = vunpack.c.l.b16 %v10534
    %v10730 = vunpack.c.h.b16 %v10534
    %v10731 = vunpack.c.l.b16 %v10535
    %v10732 = vunpack.c.h.b16 %v10535
    %v10733 = vunpack.c.l.b16 %v10536
    %v10734 = vunpack.c.h.b16 %v10536
    %v10735 = vunpack.c.l.b16 %v10537
    %v10736 = vunpack.c.h.b16 %v10537
    %v10737 = vunpack.c.l.b16 %v10538
    %v10738 = vunpack.c.h.b16 %v10538
    %v10739 = vunpack.c.l.b16 %v10539
    %v10740 = vunpack.c.h.b16 %v10539
    %v10741 = vunpack.c.l.b16 %v10540
    %v10742 = vunpack.c.h.b16 %v10540
    %v10743 = vunpack.c.l.b16 %v10541
    %v10744 = vunpack.c.h.b16 %v10541
    %v10745 = vunpack.c.l.b16 %v10542
    %v10746 = vunpack.c.h.b16 %v10542
    %v10747 = vunpack.c.l.b16 %v10543
    %v10748 = vunpack.c.h.b16 %v10543
    %v10749 = vunpack.c.l.b16 %v10544
    %v10750 = vunpack.c.h.b16 %v10544
    %v10751 = vunpack.c.l.b16 %v10545
    %v10752 = vunpack.c.h.b16 %v10545
    %v10753 = vunpack.c.l.b16 %v10546
    %v10754 = vunpack.c.h.b16 %v10546
    %v10755 = vpack.c.b16 %v10635, %v10627
    %v10756 = vpack.c.b16 %v10636, %v10628
    %v10757 = vpack.c.b16 %v10637, %v10629
    %v10758 = vpack.c.b16 %v10638, %v10630
    %v10759 = vpack.c.b16 %v10639, %v10631
    %v10760 = vpack.c.b16 %v10640, %v10632
    %v10761 = vpack.c.b16 %v10641, %v10633
    %v10762 = vpack.c.b16 %v10642, %v10634
    %v10763 = vpack.c.b16 %v10651, %v10643
    %v10764 = vpack.c.b16 %v10652, %v10644
    %v10765 = vpack.c.b16 %v10653, %v10645
    %v10766 = vpack.c.b16 %v10654, %v10646
    %v10767 = vpack.c.b16 %v10655, %v10647
    %v10768 = vpack.c.b16 %v10656, %v10648
    %v10769 = vpack.c.b16 %v10657, %v10649
    %v10770 = vpack.c.b16 %v10658, %v10650
    %v10771 = vpack.c.b16 %v10667, %v10659
    %v10772 = vpack.c.b16 %v10668, %v10660
    %v10773 = vpack.c.b16 %v10669, %v10661
    %v10774 = vpack.c.b16 %v10670, %v10662
    %v10775 = vpack.c.b16 %v10671, %v10663
    %v10776 = vpack.c.b16 %v10672, %v10664
    %v10777 = vpack.c.b16 %v10673, %v10665
    %v10778 = vpack.c.b16 %v10674, %v10666
    %v10779 = vpack.c.b16 %v10683, %v10675
    %v10780 = vpack.c.b16 %v10684, %v10676
    %v10781 = vpack.c.b16 %v10685, %v10677
    %v10782 = vpack.c.b16 %v10686, %v10678
    %v10783 = vpack.c.b16 %v10687, %v10679
    %v10784 = vpack.c.b16 %v10688, %v10680
    %v10785 = vpack.c.b16 %v10689, %v10681
    %v10786 = vpack.c.b16 %v10690, %v10682
    %v10787 = vpack.c.b16 %v10699, %v10691
    %v10788 = vpack.c.b16 %v10700, %v10692
    %v10789 = vpack.c.b16 %v10701, %v10693
    %v10790 = vpack.c.b16 %v10702, %v10694
    %v10791 = vpack.c.b16 %v10703, %v10695
    %v10792 = vpack.c.b16 %v10704, %v10696
    %v10793 = vpack.c.b16 %v10705, %v10697
    %v10794 = vpack.c.b16 %v10706, %v10698
    %v10795 = vpack.c.b16 %v10715, %v10707
    %v10796 = vpack.c.b16 %v10716, %v10708
    %v10797 = vpack.c.b16 %v10717, %v10709
    %v10798 = vpack.c.b16 %v10718, %v10710
    %v10799 = vpack.c.b16 %v10719, %v10711
    %v10800 = vpack.c.b16 %v10720, %v10712
    %v10801 = vpack.c.b16 %v10721, %v10713
    %v10802 = vpack.c.b16 %v10722, %v10714
    %v10803 = vpack.c.b16 %v10731, %v10723
    %v10804 = vpack.c.b16 %v10732, %v10724
    %v10805 = vpack.c.b16 %v10733, %v10725
    %v10806 = vpack.c.b16 %v10734, %v10726
    %v10807 = vpack.c.b16 %v10735, %v10727
    %v10808 = vpack.c.b16 %v10736, %v10728
    %v10809 = vpack.c.b16 %v10737, %v10729
    %v10810 = vpack.c.b16 %v10738, %v10730
    %v10811 = vpack.c.b16 %v10747, %v10739
    %v10812 = vpack.c.b16 %v10748, %v10740
    %v10813 = vpack.c.b16 %v10749, %v10741
    %v10814 = vpack.c.b16 %v10750, %v10742
    %v10815 = vpack.c.b16 %v10751, %v10743
    %v10816 = vpack.c.b16 %v10752, %v10744
    %v10817 = vpack.c.b16 %v10753, %v10745
    %v10818 = vpack.c.b16 %v10754, %v10746
    %10883 = vmatpush.bf16.msra.mxu0 %v10811
    %10884 = vmatpush.bf16.msra.mxu0 %v10803
    %10885 = vmatpush.bf16.msra.mxu0 %v10795
    %10886 = vmatpush.bf16.msra.mxu0 %v10787
    %10887 = vmatpush.bf16.msra.mxu0 %v10779
    %10888 = vmatpush.bf16.msra.mxu0 %v10771
    %10889 = vmatpush.bf16.msra.mxu0 %v10763
    %10890 = vmatpush.bf16.msra.mxu0 %v10755
    %10891 = vmatmul.bf16.gmra.mxu0 %v10561
    %v10892 = vpop.f32.mrf.mxu0
    %v10893 = vadd.f32 0.0, %v10892
    %v10894 = vpop.f32.mrf.mxu0
    %10895 = vdwg.mxu0
    %10896 = vmatpush.bf16.msra.mxu0 %v10812
    %10897 = vmatpush.bf16.msra.mxu0 %v10804
    %10898 = vmatpush.bf16.msra.mxu0 %v10796
    %10899 = vmatpush.bf16.msra.mxu0 %v10788
    %10900 = vmatpush.bf16.msra.mxu0 %v10780
    %10901 = vmatpush.bf16.msra.mxu0 %v10772
    %10902 = vmatpush.bf16.msra.mxu0 %v10764
    %10903 = vmatpush.bf16.msra.mxu0 %v10756
    %10904 = vmatmul.bf16.gmra.mxu0 %v10561
    %v10905 = vpop.f32.mrf.mxu0
    %v10906 = vadd.f32 0.0, %v10905
    %v10907 = vpop.f32.mrf.mxu0
    %10908 = vdwg.mxu0
    %10909 = vmatpush.bf16.msra.mxu0 %v10813
    %10910 = vmatpush.bf16.msra.mxu0 %v10805
    %10911 = vmatpush.bf16.msra.mxu0 %v10797
    %10912 = vmatpush.bf16.msra.mxu0 %v10789
    %10913 = vmatpush.bf16.msra.mxu0 %v10781
    %10914 = vmatpush.bf16.msra.mxu0 %v10773
    %10915 = vmatpush.bf16.msra.mxu0 %v10765
    %10916 = vmatpush.bf16.msra.mxu0 %v10757
    %10917 = vmatmul.bf16.gmra.mxu0 %v10561
    %v10918 = vpop.f32.mrf.mxu0
    %v10919 = vadd.f32 0.0, %v10918
    %v10920 = vpop.f32.mrf.mxu0
    %10921 = vdwg.mxu0
    %10922 = vmatpush.bf16.msra.mxu0 %v10814
    %10923 = vmatpush.bf16.msra.mxu0 %v10806
    %10924 = vmatpush.bf16.msra.mxu0 %v10798
    %10925 = vmatpush.bf16.msra.mxu0 %v10790
    %10926 = vmatpush.bf16.msra.mxu0 %v10782
    %10927 = vmatpush.bf16.msra.mxu0 %v10774
    %10928 = vmatpush.bf16.msra.mxu0 %v10766
    %10929 = vmatpush.bf16.msra.mxu0 %v10758
    %10930 = vmatmul.bf16.gmra.mxu0 %v10561
    %v10931 = vpop.f32.mrf.mxu0
    %v10932 = vadd.f32 0.0, %v10931
    %v10933 = vpop.f32.mrf.mxu0
    %10934 = vdwg.mxu0
    %10935 = vmatpush.bf16.msra.mxu0 %v10815
    %10936 = vmatpush.bf16.msra.mxu0 %v10807
    %10937 = vmatpush.bf16.msra.mxu0 %v10799
    %10938 = vmatpush.bf16.msra.mxu0 %v10791
    %10939 = vmatpush.bf16.msra.mxu0 %v10783
    %10940 = vmatpush.bf16.msra.mxu0 %v10775
    %10941 = vmatpush.bf16.msra.mxu0 %v10767
    %10942 = vmatpush.bf16.msra.mxu0 %v10759
    %10943 = vmatmul.bf16.gmra.mxu0 %v10561
    %v10944 = vpop.f32.mrf.mxu0
    %v10945 = vadd.f32 0.0, %v10944
    %v10946 = vpop.f32.mrf.mxu0
    %10947 = vdwg.mxu0
    %10948 = vmatpush.bf16.msra.mxu0 %v10816
    %10949 = vmatpush.bf16.msra.mxu0 %v10808
    %10950 = vmatpush.bf16.msra.mxu0 %v10800
    %10951 = vmatpush.bf16.msra.mxu0 %v10792
    %10952 = vmatpush.bf16.msra.mxu0 %v10784
    %10953 = vmatpush.bf16.msra.mxu0 %v10776
    %10954 = vmatpush.bf16.msra.mxu0 %v10768
    %10955 = vmatpush.bf16.msra.mxu0 %v10760
    %10956 = vmatmul.bf16.gmra.mxu0 %v10561
    %v10957 = vpop.f32.mrf.mxu0
    %v10958 = vadd.f32 0.0, %v10957
    %v10959 = vpop.f32.mrf.mxu0
    %10960 = vdwg.mxu0
    %10961 = vmatpush.bf16.msra.mxu0 %v10817
    %10962 = vmatpush.bf16.msra.mxu0 %v10809
    %10963 = vmatpush.bf16.msra.mxu0 %v10801
    %10964 = vmatpush.bf16.msra.mxu0 %v10793
    %10965 = vmatpush.bf16.msra.mxu0 %v10785
    %10966 = vmatpush.bf16.msra.mxu0 %v10777
    %10967 = vmatpush.bf16.msra.mxu0 %v10769
    %10968 = vmatpush.bf16.msra.mxu0 %v10761
    %10969 = vmatmul.bf16.gmra.mxu0 %v10561
    %v10970 = vpop.f32.mrf.mxu0
    %v10971 = vadd.f32 0.0, %v10970
    %v10972 = vpop.f32.mrf.mxu0
    %10973 = vdwg.mxu0
    %10974 = vmatpush.bf16.msra.mxu0 %v10818
    %10975 = vmatpush.bf16.msra.mxu0 %v10810
    %10976 = vmatpush.bf16.msra.mxu0 %v10802
    %10977 = vmatpush.bf16.msra.mxu0 %v10794
    %10978 = vmatpush.bf16.msra.mxu0 %v10786
    %10979 = vmatpush.bf16.msra.mxu0 %v10778
    %10980 = vmatpush.bf16.msra.mxu0 %v10770
    %10981 = vmatpush.bf16.msra.mxu0 %v10762
    %10982 = vmatmul.bf16.gmra.mxu0 %v10561
    %v10983 = vpop.f32.mrf.mxu0
    %v10984 = vadd.f32 0.0, %v10983
    %v10985 = vpop.f32.mrf.mxu0
    %10986 = vdwg.mxu0
    %v10987 = vadd.f32 %v10474, %v10893
    %v10988 = vadd.f32 %v10475, %v10906
    %v10989 = vadd.f32 %v10476, %v10919
    %v10990 = vadd.f32 %v10477, %v10932
    %v10991 = vadd.f32 %v10478, %v10945
    %v10992 = vadd.f32 %v10479, %v10958
    %v10993 = vadd.f32 %v10480, %v10971
    %v10994 = vadd.f32 %v10481, %v10984
    %s10995 = scalar_lea.vmem [#allocation13], 6656
    %v10996 = vld [vmem:[%s10995] sm:$0xff]
    %v10997 = vld [vmem:[%s10995 + $0x8] sm:$0xff]
    %v10998 = vld [vmem:[%s10995 + $0x10] sm:$0xff]
    %v10999 = vld [vmem:[%s10995 + $0x18] sm:$0xff]
    %v11000 = vld [vmem:[%s10995 + $0x20] sm:$0xff]
    %v11001 = vld [vmem:[%s10995 + $0x28] sm:$0xff]
    %v11002 = vld [vmem:[%s10995 + $0x30] sm:$0xff]
    %v11003 = vld [vmem:[%s10995 + $0x38] sm:$0xff]
    %v11004 = vld [vmem:[%s10995 + $0x40] sm:$0xff]
    %v11005 = vld [vmem:[%s10995 + $0x48] sm:$0xff]
    %v11006 = vld [vmem:[%s10995 + $0x50] sm:$0xff]
    %v11007 = vld [vmem:[%s10995 + $0x58] sm:$0xff]
    %v11008 = vld [vmem:[%s10995 + $0x60] sm:$0xff]
    %v11009 = vld [vmem:[%s10995 + $0x68] sm:$0xff]
    %v11010 = vld [vmem:[%s10995 + $0x70] sm:$0xff]
    %v11011 = vld [vmem:[%s10995 + $0x78] sm:$0xff]
    %v11012 = vld [vmem:[%s10995 + $0x80] sm:$0xff]
    %v11013 = vld [vmem:[%s10995 + $0x88] sm:$0xff]
    %v11014 = vld [vmem:[%s10995 + $0x90] sm:$0xff]
    %v11015 = vld [vmem:[%s10995 + $0x98] sm:$0xff]
    %v11016 = vld [vmem:[%s10995 + $0xa0] sm:$0xff]
    %v11017 = vld [vmem:[%s10995 + $0xa8] sm:$0xff]
    %v11018 = vld [vmem:[%s10995 + $0xb0] sm:$0xff]
    %v11019 = vld [vmem:[%s10995 + $0xb8] sm:$0xff]
    %v11020 = vld [vmem:[%s10995 + $0xc0] sm:$0xff]
    %v11021 = vld [vmem:[%s10995 + $0xc8] sm:$0xff]
    %v11022 = vld [vmem:[%s10995 + $0xd0] sm:$0xff]
    %v11023 = vld [vmem:[%s10995 + $0xd8] sm:$0xff]
    %v11024 = vld [vmem:[%s10995 + $0xe0] sm:$0xff]
    %v11025 = vld [vmem:[%s10995 + $0xe8] sm:$0xff]
    %v11026 = vld [vmem:[%s10995 + $0xf0] sm:$0xff]
    %v11027 = vld [vmem:[%s10995 + $0xf8] sm:$0xff]
    %v11028 = vld [vmem:[%s10995 + $0x100] sm:$0xff]
    %v11029 = vld [vmem:[%s10995 + $0x108] sm:$0xff]
    %v11030 = vld [vmem:[%s10995 + $0x110] sm:$0xff]
    %v11031 = vld [vmem:[%s10995 + $0x118] sm:$0xff]
    %v11032 = vld [vmem:[%s10995 + $0x120] sm:$0xff]
    %v11033 = vld [vmem:[%s10995 + $0x128] sm:$0xff]
    %v11034 = vld [vmem:[%s10995 + $0x130] sm:$0xff]
    %v11035 = vld [vmem:[%s10995 + $0x138] sm:$0xff]
    %v11036 = vld [vmem:[%s10995 + $0x140] sm:$0xff]
    %v11037 = vld [vmem:[%s10995 + $0x148] sm:$0xff]
    %v11038 = vld [vmem:[%s10995 + $0x150] sm:$0xff]
    %v11039 = vld [vmem:[%s10995 + $0x158] sm:$0xff]
    %v11040 = vld [vmem:[%s10995 + $0x160] sm:$0xff]
    %v11041 = vld [vmem:[%s10995 + $0x168] sm:$0xff]
    %v11042 = vld [vmem:[%s10995 + $0x170] sm:$0xff]
    %v11043 = vld [vmem:[%s10995 + $0x178] sm:$0xff]
    %v11044 = vld [vmem:[%s10995 + $0x180] sm:$0xff]
    %v11045 = vld [vmem:[%s10995 + $0x188] sm:$0xff]
    %v11046 = vld [vmem:[%s10995 + $0x190] sm:$0xff]
    %v11047 = vld [vmem:[%s10995 + $0x198] sm:$0xff]
    %v11048 = vld [vmem:[%s10995 + $0x1a0] sm:$0xff]
    %v11049 = vld [vmem:[%s10995 + $0x1a8] sm:$0xff]
    %v11050 = vld [vmem:[%s10995 + $0x1b0] sm:$0xff]
    %v11051 = vld [vmem:[%s10995 + $0x1b8] sm:$0xff]
    %v11052 = vld [vmem:[%s10995 + $0x1c0] sm:$0xff]
    %v11053 = vld [vmem:[%s10995 + $0x1c8] sm:$0xff]
    %v11054 = vld [vmem:[%s10995 + $0x1d0] sm:$0xff]
    %v11055 = vld [vmem:[%s10995 + $0x1d8] sm:$0xff]
    %v11056 = vld [vmem:[%s10995 + $0x1e0] sm:$0xff]
    %v11057 = vld [vmem:[%s10995 + $0x1e8] sm:$0xff]
    %v11058 = vld [vmem:[%s10995 + $0x1f0] sm:$0xff]
    %v11059 = vld [vmem:[%s10995 + $0x1f8] sm:$0xff]
    %v11060 = vrot.slane %v8487, 5
    %v11061 = vrot.slane %v8488, 4
    %v11062 = vsel %vm4442, %v11061, %v11060
    %v11063 = vrot.slane %v8489, 3
    %v11064 = vsel %vm4445, %v11063, %v11062
    %v11065 = vrot.slane %v8490, 2
    %v11066 = vsel %vm4448, %v11065, %v11064
    %v11067 = vrot.slane %v8491, 1
    %v11068 = vsel %vm4451, %v11067, %v11066
    %v11069 = vsel %vm4454, %v8492, %v11068
    %v11070 = vrot.slane %v8493, 7
    %v11071 = vsel %vm4457, %v11070, %v11069
    %v11072 = vrot.slane %v8494, 6
    %v11073 = vsel %vm4460, %v11072, %v11071
    %v11074 = vpack.c.b16 %v11073, %v11073
    %v11140 = vunpack.c.l.b16 %v10996
    %v11141 = vunpack.c.h.b16 %v10996
    %v11142 = vunpack.c.l.b16 %v10997
    %v11143 = vunpack.c.h.b16 %v10997
    %v11144 = vunpack.c.l.b16 %v10998
    %v11145 = vunpack.c.h.b16 %v10998
    %v11146 = vunpack.c.l.b16 %v10999
    %v11147 = vunpack.c.h.b16 %v10999
    %v11148 = vunpack.c.l.b16 %v11000
    %v11149 = vunpack.c.h.b16 %v11000
    %v11150 = vunpack.c.l.b16 %v11001
    %v11151 = vunpack.c.h.b16 %v11001
    %v11152 = vunpack.c.l.b16 %v11002
    %v11153 = vunpack.c.h.b16 %v11002
    %v11154 = vunpack.c.l.b16 %v11003
    %v11155 = vunpack.c.h.b16 %v11003
    %v11156 = vunpack.c.l.b16 %v11004
    %v11157 = vunpack.c.h.b16 %v11004
    %v11158 = vunpack.c.l.b16 %v11005
    %v11159 = vunpack.c.h.b16 %v11005
    %v11160 = vunpack.c.l.b16 %v11006
    %v11161 = vunpack.c.h.b16 %v11006
    %v11162 = vunpack.c.l.b16 %v11007
    %v11163 = vunpack.c.h.b16 %v11007
    %v11164 = vunpack.c.l.b16 %v11008
    %v11165 = vunpack.c.h.b16 %v11008
    %v11166 = vunpack.c.l.b16 %v11009
    %v11167 = vunpack.c.h.b16 %v11009
    %v11168 = vunpack.c.l.b16 %v11010
    %v11169 = vunpack.c.h.b16 %v11010
    %v11170 = vunpack.c.l.b16 %v11011
    %v11171 = vunpack.c.h.b16 %v11011
    %v11172 = vunpack.c.l.b16 %v11012
    %v11173 = vunpack.c.h.b16 %v11012
    %v11174 = vunpack.c.l.b16 %v11013
    %v11175 = vunpack.c.h.b16 %v11013
    %v11176 = vunpack.c.l.b16 %v11014
    %v11177 = vunpack.c.h.b16 %v11014
    %v11178 = vunpack.c.l.b16 %v11015
    %v11179 = vunpack.c.h.b16 %v11015
    %v11180 = vunpack.c.l.b16 %v11016
    %v11181 = vunpack.c.h.b16 %v11016
    %v11182 = vunpack.c.l.b16 %v11017
    %v11183 = vunpack.c.h.b16 %v11017
    %v11184 = vunpack.c.l.b16 %v11018
    %v11185 = vunpack.c.h.b16 %v11018
    %v11186 = vunpack.c.l.b16 %v11019
    %v11187 = vunpack.c.h.b16 %v11019
    %v11188 = vunpack.c.l.b16 %v11020
    %v11189 = vunpack.c.h.b16 %v11020
    %v11190 = vunpack.c.l.b16 %v11021
    %v11191 = vunpack.c.h.b16 %v11021
    %v11192 = vunpack.c.l.b16 %v11022
    %v11193 = vunpack.c.h.b16 %v11022
    %v11194 = vunpack.c.l.b16 %v11023
    %v11195 = vunpack.c.h.b16 %v11023
    %v11196 = vunpack.c.l.b16 %v11024
    %v11197 = vunpack.c.h.b16 %v11024
    %v11198 = vunpack.c.l.b16 %v11025
    %v11199 = vunpack.c.h.b16 %v11025
    %v11200 = vunpack.c.l.b16 %v11026
    %v11201 = vunpack.c.h.b16 %v11026
    %v11202 = vunpack.c.l.b16 %v11027
    %v11203 = vunpack.c.h.b16 %v11027
    %v11204 = vunpack.c.l.b16 %v11028
    %v11205 = vunpack.c.h.b16 %v11028
    %v11206 = vunpack.c.l.b16 %v11029
    %v11207 = vunpack.c.h.b16 %v11029
    %v11208 = vunpack.c.l.b16 %v11030
    %v11209 = vunpack.c.h.b16 %v11030
    %v11210 = vunpack.c.l.b16 %v11031
    %v11211 = vunpack.c.h.b16 %v11031
    %v11212 = vunpack.c.l.b16 %v11032
    %v11213 = vunpack.c.h.b16 %v11032
    %v11214 = vunpack.c.l.b16 %v11033
    %v11215 = vunpack.c.h.b16 %v11033
    %v11216 = vunpack.c.l.b16 %v11034
    %v11217 = vunpack.c.h.b16 %v11034
    %v11218 = vunpack.c.l.b16 %v11035
    %v11219 = vunpack.c.h.b16 %v11035
    %v11220 = vunpack.c.l.b16 %v11036
    %v11221 = vunpack.c.h.b16 %v11036
    %v11222 = vunpack.c.l.b16 %v11037
    %v11223 = vunpack.c.h.b16 %v11037
    %v11224 = vunpack.c.l.b16 %v11038
    %v11225 = vunpack.c.h.b16 %v11038
    %v11226 = vunpack.c.l.b16 %v11039
    %v11227 = vunpack.c.h.b16 %v11039
    %v11228 = vunpack.c.l.b16 %v11040
    %v11229 = vunpack.c.h.b16 %v11040
    %v11230 = vunpack.c.l.b16 %v11041
    %v11231 = vunpack.c.h.b16 %v11041
    %v11232 = vunpack.c.l.b16 %v11042
    %v11233 = vunpack.c.h.b16 %v11042
    %v11234 = vunpack.c.l.b16 %v11043
    %v11235 = vunpack.c.h.b16 %v11043
    %v11236 = vunpack.c.l.b16 %v11044
    %v11237 = vunpack.c.h.b16 %v11044
    %v11238 = vunpack.c.l.b16 %v11045
    %v11239 = vunpack.c.h.b16 %v11045
    %v11240 = vunpack.c.l.b16 %v11046
    %v11241 = vunpack.c.h.b16 %v11046
    %v11242 = vunpack.c.l.b16 %v11047
    %v11243 = vunpack.c.h.b16 %v11047
    %v11244 = vunpack.c.l.b16 %v11048
    %v11245 = vunpack.c.h.b16 %v11048
    %v11246 = vunpack.c.l.b16 %v11049
    %v11247 = vunpack.c.h.b16 %v11049
    %v11248 = vunpack.c.l.b16 %v11050
    %v11249 = vunpack.c.h.b16 %v11050
    %v11250 = vunpack.c.l.b16 %v11051
    %v11251 = vunpack.c.h.b16 %v11051
    %v11252 = vunpack.c.l.b16 %v11052
    %v11253 = vunpack.c.h.b16 %v11052
    %v11254 = vunpack.c.l.b16 %v11053
    %v11255 = vunpack.c.h.b16 %v11053
    %v11256 = vunpack.c.l.b16 %v11054
    %v11257 = vunpack.c.h.b16 %v11054
    %v11258 = vunpack.c.l.b16 %v11055
    %v11259 = vunpack.c.h.b16 %v11055
    %v11260 = vunpack.c.l.b16 %v11056
    %v11261 = vunpack.c.h.b16 %v11056
    %v11262 = vunpack.c.l.b16 %v11057
    %v11263 = vunpack.c.h.b16 %v11057
    %v11264 = vunpack.c.l.b16 %v11058
    %v11265 = vunpack.c.h.b16 %v11058
    %v11266 = vunpack.c.l.b16 %v11059
    %v11267 = vunpack.c.h.b16 %v11059
    %v11268 = vpack.c.b16 %v11148, %v11140
    %v11269 = vpack.c.b16 %v11149, %v11141
    %v11270 = vpack.c.b16 %v11150, %v11142
    %v11271 = vpack.c.b16 %v11151, %v11143
    %v11272 = vpack.c.b16 %v11152, %v11144
    %v11273 = vpack.c.b16 %v11153, %v11145
    %v11274 = vpack.c.b16 %v11154, %v11146
    %v11275 = vpack.c.b16 %v11155, %v11147
    %v11276 = vpack.c.b16 %v11164, %v11156
    %v11277 = vpack.c.b16 %v11165, %v11157
    %v11278 = vpack.c.b16 %v11166, %v11158
    %v11279 = vpack.c.b16 %v11167, %v11159
    %v11280 = vpack.c.b16 %v11168, %v11160
    %v11281 = vpack.c.b16 %v11169, %v11161
    %v11282 = vpack.c.b16 %v11170, %v11162
    %v11283 = vpack.c.b16 %v11171, %v11163
    %v11284 = vpack.c.b16 %v11180, %v11172
    %v11285 = vpack.c.b16 %v11181, %v11173
    %v11286 = vpack.c.b16 %v11182, %v11174
    %v11287 = vpack.c.b16 %v11183, %v11175
    %v11288 = vpack.c.b16 %v11184, %v11176
    %v11289 = vpack.c.b16 %v11185, %v11177
    %v11290 = vpack.c.b16 %v11186, %v11178
    %v11291 = vpack.c.b16 %v11187, %v11179
    %v11292 = vpack.c.b16 %v11196, %v11188
    %v11293 = vpack.c.b16 %v11197, %v11189
    %v11294 = vpack.c.b16 %v11198, %v11190
    %v11295 = vpack.c.b16 %v11199, %v11191
    %v11296 = vpack.c.b16 %v11200, %v11192
    %v11297 = vpack.c.b16 %v11201, %v11193
    %v11298 = vpack.c.b16 %v11202, %v11194
    %v11299 = vpack.c.b16 %v11203, %v11195
    %v11300 = vpack.c.b16 %v11212, %v11204
    %v11301 = vpack.c.b16 %v11213, %v11205
    %v11302 = vpack.c.b16 %v11214, %v11206
    %v11303 = vpack.c.b16 %v11215, %v11207
    %v11304 = vpack.c.b16 %v11216, %v11208
    %v11305 = vpack.c.b16 %v11217, %v11209
    %v11306 = vpack.c.b16 %v11218, %v11210
    %v11307 = vpack.c.b16 %v11219, %v11211
    %v11308 = vpack.c.b16 %v11228, %v11220
    %v11309 = vpack.c.b16 %v11229, %v11221
    %v11310 = vpack.c.b16 %v11230, %v11222
    %v11311 = vpack.c.b16 %v11231, %v11223
    %v11312 = vpack.c.b16 %v11232, %v11224
    %v11313 = vpack.c.b16 %v11233, %v11225
    %v11314 = vpack.c.b16 %v11234, %v11226
    %v11315 = vpack.c.b16 %v11235, %v11227
    %v11316 = vpack.c.b16 %v11244, %v11236
    %v11317 = vpack.c.b16 %v11245, %v11237
    %v11318 = vpack.c.b16 %v11246, %v11238
    %v11319 = vpack.c.b16 %v11247, %v11239
    %v11320 = vpack.c.b16 %v11248, %v11240
    %v11321 = vpack.c.b16 %v11249, %v11241
    %v11322 = vpack.c.b16 %v11250, %v11242
    %v11323 = vpack.c.b16 %v11251, %v11243
    %v11324 = vpack.c.b16 %v11260, %v11252
    %v11325 = vpack.c.b16 %v11261, %v11253
    %v11326 = vpack.c.b16 %v11262, %v11254
    %v11327 = vpack.c.b16 %v11263, %v11255
    %v11328 = vpack.c.b16 %v11264, %v11256
    %v11329 = vpack.c.b16 %v11265, %v11257
    %v11330 = vpack.c.b16 %v11266, %v11258
    %v11331 = vpack.c.b16 %v11267, %v11259
    %11396 = vmatpush.bf16.msra.mxu0 %v11324
    %11397 = vmatpush.bf16.msra.mxu0 %v11316
    %11398 = vmatpush.bf16.msra.mxu0 %v11308
    %11399 = vmatpush.bf16.msra.mxu0 %v11300
    %11400 = vmatpush.bf16.msra.mxu0 %v11292
    %11401 = vmatpush.bf16.msra.mxu0 %v11284
    %11402 = vmatpush.bf16.msra.mxu0 %v11276
    %11403 = vmatpush.bf16.msra.mxu0 %v11268
    %11404 = vmatmul.bf16.gmra.mxu0 %v11074
    %v11405 = vpop.f32.mrf.mxu0
    %v11406 = vadd.f32 0.0, %v11405
    %v11407 = vpop.f32.mrf.mxu0
    %11408 = vdwg.mxu0
    %11409 = vmatpush.bf16.msra.mxu0 %v11325
    %11410 = vmatpush.bf16.msra.mxu0 %v11317
    %11411 = vmatpush.bf16.msra.mxu0 %v11309
    %11412 = vmatpush.bf16.msra.mxu0 %v11301
    %11413 = vmatpush.bf16.msra.mxu0 %v11293
    %11414 = vmatpush.bf16.msra.mxu0 %v11285
    %11415 = vmatpush.bf16.msra.mxu0 %v11277
    %11416 = vmatpush.bf16.msra.mxu0 %v11269
    %11417 = vmatmul.bf16.gmra.mxu0 %v11074
    %v11418 = vpop.f32.mrf.mxu0
    %v11419 = vadd.f32 0.0, %v11418
    %v11420 = vpop.f32.mrf.mxu0
    %11421 = vdwg.mxu0
    %11422 = vmatpush.bf16.msra.mxu0 %v11326
    %11423 = vmatpush.bf16.msra.mxu0 %v11318
    %11424 = vmatpush.bf16.msra.mxu0 %v11310
    %11425 = vmatpush.bf16.msra.mxu0 %v11302
    %11426 = vmatpush.bf16.msra.mxu0 %v11294
    %11427 = vmatpush.bf16.msra.mxu0 %v11286
    %11428 = vmatpush.bf16.msra.mxu0 %v11278
    %11429 = vmatpush.bf16.msra.mxu0 %v11270
    %11430 = vmatmul.bf16.gmra.mxu0 %v11074
    %v11431 = vpop.f32.mrf.mxu0
    %v11432 = vadd.f32 0.0, %v11431
    %v11433 = vpop.f32.mrf.mxu0
    %11434 = vdwg.mxu0
    %11435 = vmatpush.bf16.msra.mxu0 %v11327
    %11436 = vmatpush.bf16.msra.mxu0 %v11319
    %11437 = vmatpush.bf16.msra.mxu0 %v11311
    %11438 = vmatpush.bf16.msra.mxu0 %v11303
    %11439 = vmatpush.bf16.msra.mxu0 %v11295
    %11440 = vmatpush.bf16.msra.mxu0 %v11287
    %11441 = vmatpush.bf16.msra.mxu0 %v11279
    %11442 = vmatpush.bf16.msra.mxu0 %v11271
    %11443 = vmatmul.bf16.gmra.mxu0 %v11074
    %v11444 = vpop.f32.mrf.mxu0
    %v11445 = vadd.f32 0.0, %v11444
    %v11446 = vpop.f32.mrf.mxu0
    %11447 = vdwg.mxu0
    %11448 = vmatpush.bf16.msra.mxu0 %v11328
    %11449 = vmatpush.bf16.msra.mxu0 %v11320
    %11450 = vmatpush.bf16.msra.mxu0 %v11312
    %11451 = vmatpush.bf16.msra.mxu0 %v11304
    %11452 = vmatpush.bf16.msra.mxu0 %v11296
    %11453 = vmatpush.bf16.msra.mxu0 %v11288
    %11454 = vmatpush.bf16.msra.mxu0 %v11280
    %11455 = vmatpush.bf16.msra.mxu0 %v11272
    %11456 = vmatmul.bf16.gmra.mxu0 %v11074
    %v11457 = vpop.f32.mrf.mxu0
    %v11458 = vadd.f32 0.0, %v11457
    %v11459 = vpop.f32.mrf.mxu0
    %11460 = vdwg.mxu0
    %11461 = vmatpush.bf16.msra.mxu0 %v11329
    %11462 = vmatpush.bf16.msra.mxu0 %v11321
    %11463 = vmatpush.bf16.msra.mxu0 %v11313
    %11464 = vmatpush.bf16.msra.mxu0 %v11305
    %11465 = vmatpush.bf16.msra.mxu0 %v11297
    %11466 = vmatpush.bf16.msra.mxu0 %v11289
    %11467 = vmatpush.bf16.msra.mxu0 %v11281
    %11468 = vmatpush.bf16.msra.mxu0 %v11273
    %11469 = vmatmul.bf16.gmra.mxu0 %v11074
    %v11470 = vpop.f32.mrf.mxu0
    %v11471 = vadd.f32 0.0, %v11470
    %v11472 = vpop.f32.mrf.mxu0
    %11473 = vdwg.mxu0
    %11474 = vmatpush.bf16.msra.mxu0 %v11330
    %11475 = vmatpush.bf16.msra.mxu0 %v11322
    %11476 = vmatpush.bf16.msra.mxu0 %v11314
    %11477 = vmatpush.bf16.msra.mxu0 %v11306
    %11478 = vmatpush.bf16.msra.mxu0 %v11298
    %11479 = vmatpush.bf16.msra.mxu0 %v11290
    %11480 = vmatpush.bf16.msra.mxu0 %v11282
    %11481 = vmatpush.bf16.msra.mxu0 %v11274
    %11482 = vmatmul.bf16.gmra.mxu0 %v11074
    %v11483 = vpop.f32.mrf.mxu0
    %v11484 = vadd.f32 0.0, %v11483
    %v11485 = vpop.f32.mrf.mxu0
    %11486 = vdwg.mxu0
    %11487 = vmatpush.bf16.msra.mxu0 %v11331
    %11488 = vmatpush.bf16.msra.mxu0 %v11323
    %11489 = vmatpush.bf16.msra.mxu0 %v11315
    %11490 = vmatpush.bf16.msra.mxu0 %v11307
    %11491 = vmatpush.bf16.msra.mxu0 %v11299
    %11492 = vmatpush.bf16.msra.mxu0 %v11291
    %11493 = vmatpush.bf16.msra.mxu0 %v11283
    %11494 = vmatpush.bf16.msra.mxu0 %v11275
    %11495 = vmatmul.bf16.gmra.mxu0 %v11074
    %v11496 = vpop.f32.mrf.mxu0
    %v11497 = vadd.f32 0.0, %v11496
    %v11498 = vpop.f32.mrf.mxu0
    %11499 = vdwg.mxu0
    %v11500 = vadd.f32 %v10987, %v11406
    %v11501 = vadd.f32 %v10988, %v11419
    %v11502 = vadd.f32 %v10989, %v11432
    %v11503 = vadd.f32 %v10990, %v11445
    %v11504 = vadd.f32 %v10991, %v11458
    %v11505 = vadd.f32 %v10992, %v11471
    %v11506 = vadd.f32 %v10993, %v11484
    %v11507 = vadd.f32 %v10994, %v11497
    %s11508 = scalar_lea.vmem [#allocation13], 7168
    %v11509 = vld [vmem:[%s11508] sm:$0xff]
    %v11510 = vld [vmem:[%s11508 + $0x8] sm:$0xff]
    %v11511 = vld [vmem:[%s11508 + $0x10] sm:$0xff]
    %v11512 = vld [vmem:[%s11508 + $0x18] sm:$0xff]
    %v11513 = vld [vmem:[%s11508 + $0x20] sm:$0xff]
    %v11514 = vld [vmem:[%s11508 + $0x28] sm:$0xff]
    %v11515 = vld [vmem:[%s11508 + $0x30] sm:$0xff]
    %v11516 = vld [vmem:[%s11508 + $0x38] sm:$0xff]
    %v11517 = vld [vmem:[%s11508 + $0x40] sm:$0xff]
    %v11518 = vld [vmem:[%s11508 + $0x48] sm:$0xff]
    %v11519 = vld [vmem:[%s11508 + $0x50] sm:$0xff]
    %v11520 = vld [vmem:[%s11508 + $0x58] sm:$0xff]
    %v11521 = vld [vmem:[%s11508 + $0x60] sm:$0xff]
    %v11522 = vld [vmem:[%s11508 + $0x68] sm:$0xff]
    %v11523 = vld [vmem:[%s11508 + $0x70] sm:$0xff]
    %v11524 = vld [vmem:[%s11508 + $0x78] sm:$0xff]
    %v11525 = vld [vmem:[%s11508 + $0x80] sm:$0xff]
    %v11526 = vld [vmem:[%s11508 + $0x88] sm:$0xff]
    %v11527 = vld [vmem:[%s11508 + $0x90] sm:$0xff]
    %v11528 = vld [vmem:[%s11508 + $0x98] sm:$0xff]
    %v11529 = vld [vmem:[%s11508 + $0xa0] sm:$0xff]
    %v11530 = vld [vmem:[%s11508 + $0xa8] sm:$0xff]
    %v11531 = vld [vmem:[%s11508 + $0xb0] sm:$0xff]
    %v11532 = vld [vmem:[%s11508 + $0xb8] sm:$0xff]
    %v11533 = vld [vmem:[%s11508 + $0xc0] sm:$0xff]
    %v11534 = vld [vmem:[%s11508 + $0xc8] sm:$0xff]
    %v11535 = vld [vmem:[%s11508 + $0xd0] sm:$0xff]
    %v11536 = vld [vmem:[%s11508 + $0xd8] sm:$0xff]
    %v11537 = vld [vmem:[%s11508 + $0xe0] sm:$0xff]
    %v11538 = vld [vmem:[%s11508 + $0xe8] sm:$0xff]
    %v11539 = vld [vmem:[%s11508 + $0xf0] sm:$0xff]
    %v11540 = vld [vmem:[%s11508 + $0xf8] sm:$0xff]
    %v11541 = vld [vmem:[%s11508 + $0x100] sm:$0xff]
    %v11542 = vld [vmem:[%s11508 + $0x108] sm:$0xff]
    %v11543 = vld [vmem:[%s11508 + $0x110] sm:$0xff]
    %v11544 = vld [vmem:[%s11508 + $0x118] sm:$0xff]
    %v11545 = vld [vmem:[%s11508 + $0x120] sm:$0xff]
    %v11546 = vld [vmem:[%s11508 + $0x128] sm:$0xff]
    %v11547 = vld [vmem:[%s11508 + $0x130] sm:$0xff]
    %v11548 = vld [vmem:[%s11508 + $0x138] sm:$0xff]
    %v11549 = vld [vmem:[%s11508 + $0x140] sm:$0xff]
    %v11550 = vld [vmem:[%s11508 + $0x148] sm:$0xff]
    %v11551 = vld [vmem:[%s11508 + $0x150] sm:$0xff]
    %v11552 = vld [vmem:[%s11508 + $0x158] sm:$0xff]
    %v11553 = vld [vmem:[%s11508 + $0x160] sm:$0xff]
    %v11554 = vld [vmem:[%s11508 + $0x168] sm:$0xff]
    %v11555 = vld [vmem:[%s11508 + $0x170] sm:$0xff]
    %v11556 = vld [vmem:[%s11508 + $0x178] sm:$0xff]
    %v11557 = vld [vmem:[%s11508 + $0x180] sm:$0xff]
    %v11558 = vld [vmem:[%s11508 + $0x188] sm:$0xff]
    %v11559 = vld [vmem:[%s11508 + $0x190] sm:$0xff]
    %v11560 = vld [vmem:[%s11508 + $0x198] sm:$0xff]
    %v11561 = vld [vmem:[%s11508 + $0x1a0] sm:$0xff]
    %v11562 = vld [vmem:[%s11508 + $0x1a8] sm:$0xff]
    %v11563 = vld [vmem:[%s11508 + $0x1b0] sm:$0xff]
    %v11564 = vld [vmem:[%s11508 + $0x1b8] sm:$0xff]
    %v11565 = vld [vmem:[%s11508 + $0x1c0] sm:$0xff]
    %v11566 = vld [vmem:[%s11508 + $0x1c8] sm:$0xff]
    %v11567 = vld [vmem:[%s11508 + $0x1d0] sm:$0xff]
    %v11568 = vld [vmem:[%s11508 + $0x1d8] sm:$0xff]
    %v11569 = vld [vmem:[%s11508 + $0x1e0] sm:$0xff]
    %v11570 = vld [vmem:[%s11508 + $0x1e8] sm:$0xff]
    %v11571 = vld [vmem:[%s11508 + $0x1f0] sm:$0xff]
    %v11572 = vld [vmem:[%s11508 + $0x1f8] sm:$0xff]
    %v11573 = vrot.slane %v8487, 6
    %v11574 = vrot.slane %v8488, 5
    %v11575 = vsel %vm4442, %v11574, %v11573
    %v11576 = vrot.slane %v8489, 4
    %v11577 = vsel %vm4445, %v11576, %v11575
    %v11578 = vrot.slane %v8490, 3
    %v11579 = vsel %vm4448, %v11578, %v11577
    %v11580 = vrot.slane %v8491, 2
    %v11581 = vsel %vm4451, %v11580, %v11579
    %v11582 = vrot.slane %v8492, 1
    %v11583 = vsel %vm4454, %v11582, %v11581
    %v11584 = vsel %vm4457, %v8493, %v11583
    %v11585 = vrot.slane %v8494, 7
    %v11586 = vsel %vm4460, %v11585, %v11584
    %v11587 = vpack.c.b16 %v11586, %v11586
    %v11653 = vunpack.c.l.b16 %v11509
    %v11654 = vunpack.c.h.b16 %v11509
    %v11655 = vunpack.c.l.b16 %v11510
    %v11656 = vunpack.c.h.b16 %v11510
    %v11657 = vunpack.c.l.b16 %v11511
    %v11658 = vunpack.c.h.b16 %v11511
    %v11659 = vunpack.c.l.b16 %v11512
    %v11660 = vunpack.c.h.b16 %v11512
    %v11661 = vunpack.c.l.b16 %v11513
    %v11662 = vunpack.c.h.b16 %v11513
    %v11663 = vunpack.c.l.b16 %v11514
    %v11664 = vunpack.c.h.b16 %v11514
    %v11665 = vunpack.c.l.b16 %v11515
    %v11666 = vunpack.c.h.b16 %v11515
    %v11667 = vunpack.c.l.b16 %v11516
    %v11668 = vunpack.c.h.b16 %v11516
    %v11669 = vunpack.c.l.b16 %v11517
    %v11670 = vunpack.c.h.b16 %v11517
    %v11671 = vunpack.c.l.b16 %v11518
    %v11672 = vunpack.c.h.b16 %v11518
    %v11673 = vunpack.c.l.b16 %v11519
    %v11674 = vunpack.c.h.b16 %v11519
    %v11675 = vunpack.c.l.b16 %v11520
    %v11676 = vunpack.c.h.b16 %v11520
    %v11677 = vunpack.c.l.b16 %v11521
    %v11678 = vunpack.c.h.b16 %v11521
    %v11679 = vunpack.c.l.b16 %v11522
    %v11680 = vunpack.c.h.b16 %v11522
    %v11681 = vunpack.c.l.b16 %v11523
    %v11682 = vunpack.c.h.b16 %v11523
    %v11683 = vunpack.c.l.b16 %v11524
    %v11684 = vunpack.c.h.b16 %v11524
    %v11685 = vunpack.c.l.b16 %v11525
    %v11686 = vunpack.c.h.b16 %v11525
    %v11687 = vunpack.c.l.b16 %v11526
    %v11688 = vunpack.c.h.b16 %v11526
    %v11689 = vunpack.c.l.b16 %v11527
    %v11690 = vunpack.c.h.b16 %v11527
    %v11691 = vunpack.c.l.b16 %v11528
    %v11692 = vunpack.c.h.b16 %v11528
    %v11693 = vunpack.c.l.b16 %v11529
    %v11694 = vunpack.c.h.b16 %v11529
    %v11695 = vunpack.c.l.b16 %v11530
    %v11696 = vunpack.c.h.b16 %v11530
    %v11697 = vunpack.c.l.b16 %v11531
    %v11698 = vunpack.c.h.b16 %v11531
    %v11699 = vunpack.c.l.b16 %v11532
    %v11700 = vunpack.c.h.b16 %v11532
    %v11701 = vunpack.c.l.b16 %v11533
    %v11702 = vunpack.c.h.b16 %v11533
    %v11703 = vunpack.c.l.b16 %v11534
    %v11704 = vunpack.c.h.b16 %v11534
    %v11705 = vunpack.c.l.b16 %v11535
    %v11706 = vunpack.c.h.b16 %v11535
    %v11707 = vunpack.c.l.b16 %v11536
    %v11708 = vunpack.c.h.b16 %v11536
    %v11709 = vunpack.c.l.b16 %v11537
    %v11710 = vunpack.c.h.b16 %v11537
    %v11711 = vunpack.c.l.b16 %v11538
    %v11712 = vunpack.c.h.b16 %v11538
    %v11713 = vunpack.c.l.b16 %v11539
    %v11714 = vunpack.c.h.b16 %v11539
    %v11715 = vunpack.c.l.b16 %v11540
    %v11716 = vunpack.c.h.b16 %v11540
    %v11717 = vunpack.c.l.b16 %v11541
    %v11718 = vunpack.c.h.b16 %v11541
    %v11719 = vunpack.c.l.b16 %v11542
    %v11720 = vunpack.c.h.b16 %v11542
    %v11721 = vunpack.c.l.b16 %v11543
    %v11722 = vunpack.c.h.b16 %v11543
    %v11723 = vunpack.c.l.b16 %v11544
    %v11724 = vunpack.c.h.b16 %v11544
    %v11725 = vunpack.c.l.b16 %v11545
    %v11726 = vunpack.c.h.b16 %v11545
    %v11727 = vunpack.c.l.b16 %v11546
    %v11728 = vunpack.c.h.b16 %v11546
    %v11729 = vunpack.c.l.b16 %v11547
    %v11730 = vunpack.c.h.b16 %v11547
    %v11731 = vunpack.c.l.b16 %v11548
    %v11732 = vunpack.c.h.b16 %v11548
    %v11733 = vunpack.c.l.b16 %v11549
    %v11734 = vunpack.c.h.b16 %v11549
    %v11735 = vunpack.c.l.b16 %v11550
    %v11736 = vunpack.c.h.b16 %v11550
    %v11737 = vunpack.c.l.b16 %v11551
    %v11738 = vunpack.c.h.b16 %v11551
    %v11739 = vunpack.c.l.b16 %v11552
    %v11740 = vunpack.c.h.b16 %v11552
    %v11741 = vunpack.c.l.b16 %v11553
    %v11742 = vunpack.c.h.b16 %v11553
    %v11743 = vunpack.c.l.b16 %v11554
    %v11744 = vunpack.c.h.b16 %v11554
    %v11745 = vunpack.c.l.b16 %v11555
    %v11746 = vunpack.c.h.b16 %v11555
    %v11747 = vunpack.c.l.b16 %v11556
    %v11748 = vunpack.c.h.b16 %v11556
    %v11749 = vunpack.c.l.b16 %v11557
    %v11750 = vunpack.c.h.b16 %v11557
    %v11751 = vunpack.c.l.b16 %v11558
    %v11752 = vunpack.c.h.b16 %v11558
    %v11753 = vunpack.c.l.b16 %v11559
    %v11754 = vunpack.c.h.b16 %v11559
    %v11755 = vunpack.c.l.b16 %v11560
    %v11756 = vunpack.c.h.b16 %v11560
    %v11757 = vunpack.c.l.b16 %v11561
    %v11758 = vunpack.c.h.b16 %v11561
    %v11759 = vunpack.c.l.b16 %v11562
    %v11760 = vunpack.c.h.b16 %v11562
    %v11761 = vunpack.c.l.b16 %v11563
    %v11762 = vunpack.c.h.b16 %v11563
    %v11763 = vunpack.c.l.b16 %v11564
    %v11764 = vunpack.c.h.b16 %v11564
    %v11765 = vunpack.c.l.b16 %v11565
    %v11766 = vunpack.c.h.b16 %v11565
    %v11767 = vunpack.c.l.b16 %v11566
    %v11768 = vunpack.c.h.b16 %v11566
    %v11769 = vunpack.c.l.b16 %v11567
    %v11770 = vunpack.c.h.b16 %v11567
    %v11771 = vunpack.c.l.b16 %v11568
    %v11772 = vunpack.c.h.b16 %v11568
    %v11773 = vunpack.c.l.b16 %v11569
    %v11774 = vunpack.c.h.b16 %v11569
    %v11775 = vunpack.c.l.b16 %v11570
    %v11776 = vunpack.c.h.b16 %v11570
    %v11777 = vunpack.c.l.b16 %v11571
    %v11778 = vunpack.c.h.b16 %v11571
    %v11779 = vunpack.c.l.b16 %v11572
    %v11780 = vunpack.c.h.b16 %v11572
    %v11781 = vpack.c.b16 %v11661, %v11653
    %v11782 = vpack.c.b16 %v11662, %v11654
    %v11783 = vpack.c.b16 %v11663, %v11655
    %v11784 = vpack.c.b16 %v11664, %v11656
    %v11785 = vpack.c.b16 %v11665, %v11657
    %v11786 = vpack.c.b16 %v11666, %v11658
    %v11787 = vpack.c.b16 %v11667, %v11659
    %v11788 = vpack.c.b16 %v11668, %v11660
    %v11789 = vpack.c.b16 %v11677, %v11669
    %v11790 = vpack.c.b16 %v11678, %v11670
    %v11791 = vpack.c.b16 %v11679, %v11671
    %v11792 = vpack.c.b16 %v11680, %v11672
    %v11793 = vpack.c.b16 %v11681, %v11673
    %v11794 = vpack.c.b16 %v11682, %v11674
    %v11795 = vpack.c.b16 %v11683, %v11675
    %v11796 = vpack.c.b16 %v11684, %v11676
    %v11797 = vpack.c.b16 %v11693, %v11685
    %v11798 = vpack.c.b16 %v11694, %v11686
    %v11799 = vpack.c.b16 %v11695, %v11687
    %v11800 = vpack.c.b16 %v11696, %v11688
    %v11801 = vpack.c.b16 %v11697, %v11689
    %v11802 = vpack.c.b16 %v11698, %v11690
    %v11803 = vpack.c.b16 %v11699, %v11691
    %v11804 = vpack.c.b16 %v11700, %v11692
    %v11805 = vpack.c.b16 %v11709, %v11701
    %v11806 = vpack.c.b16 %v11710, %v11702
    %v11807 = vpack.c.b16 %v11711, %v11703
    %v11808 = vpack.c.b16 %v11712, %v11704
    %v11809 = vpack.c.b16 %v11713, %v11705
    %v11810 = vpack.c.b16 %v11714, %v11706
    %v11811 = vpack.c.b16 %v11715, %v11707
    %v11812 = vpack.c.b16 %v11716, %v11708
    %v11813 = vpack.c.b16 %v11725, %v11717
    %v11814 = vpack.c.b16 %v11726, %v11718
    %v11815 = vpack.c.b16 %v11727, %v11719
    %v11816 = vpack.c.b16 %v11728, %v11720
    %v11817 = vpack.c.b16 %v11729, %v11721
    %v11818 = vpack.c.b16 %v11730, %v11722
    %v11819 = vpack.c.b16 %v11731, %v11723
    %v11820 = vpack.c.b16 %v11732, %v11724
    %v11821 = vpack.c.b16 %v11741, %v11733
    %v11822 = vpack.c.b16 %v11742, %v11734
    %v11823 = vpack.c.b16 %v11743, %v11735
    %v11824 = vpack.c.b16 %v11744, %v11736
    %v11825 = vpack.c.b16 %v11745, %v11737
    %v11826 = vpack.c.b16 %v11746, %v11738
    %v11827 = vpack.c.b16 %v11747, %v11739
    %v11828 = vpack.c.b16 %v11748, %v11740
    %v11829 = vpack.c.b16 %v11757, %v11749
    %v11830 = vpack.c.b16 %v11758, %v11750
    %v11831 = vpack.c.b16 %v11759, %v11751
    %v11832 = vpack.c.b16 %v11760, %v11752
    %v11833 = vpack.c.b16 %v11761, %v11753
    %v11834 = vpack.c.b16 %v11762, %v11754
    %v11835 = vpack.c.b16 %v11763, %v11755
    %v11836 = vpack.c.b16 %v11764, %v11756
    %v11837 = vpack.c.b16 %v11773, %v11765
    %v11838 = vpack.c.b16 %v11774, %v11766
    %v11839 = vpack.c.b16 %v11775, %v11767
    %v11840 = vpack.c.b16 %v11776, %v11768
    %v11841 = vpack.c.b16 %v11777, %v11769
    %v11842 = vpack.c.b16 %v11778, %v11770
    %v11843 = vpack.c.b16 %v11779, %v11771
    %v11844 = vpack.c.b16 %v11780, %v11772
    %11909 = vmatpush.bf16.msra.mxu0 %v11837
    %11910 = vmatpush.bf16.msra.mxu0 %v11829
    %11911 = vmatpush.bf16.msra.mxu0 %v11821
    %11912 = vmatpush.bf16.msra.mxu0 %v11813
    %11913 = vmatpush.bf16.msra.mxu0 %v11805
    %11914 = vmatpush.bf16.msra.mxu0 %v11797
    %11915 = vmatpush.bf16.msra.mxu0 %v11789
    %11916 = vmatpush.bf16.msra.mxu0 %v11781
    %11917 = vmatmul.bf16.gmra.mxu0 %v11587
    %v11918 = vpop.f32.mrf.mxu0
    %v11919 = vadd.f32 0.0, %v11918
    %v11920 = vpop.f32.mrf.mxu0
    %11921 = vdwg.mxu0
    %11922 = vmatpush.bf16.msra.mxu0 %v11838
    %11923 = vmatpush.bf16.msra.mxu0 %v11830
    %11924 = vmatpush.bf16.msra.mxu0 %v11822
    %11925 = vmatpush.bf16.msra.mxu0 %v11814
    %11926 = vmatpush.bf16.msra.mxu0 %v11806
    %11927 = vmatpush.bf16.msra.mxu0 %v11798
    %11928 = vmatpush.bf16.msra.mxu0 %v11790
    %11929 = vmatpush.bf16.msra.mxu0 %v11782
    %11930 = vmatmul.bf16.gmra.mxu0 %v11587
    %v11931 = vpop.f32.mrf.mxu0
    %v11932 = vadd.f32 0.0, %v11931
    %v11933 = vpop.f32.mrf.mxu0
    %11934 = vdwg.mxu0
    %11935 = vmatpush.bf16.msra.mxu0 %v11839
    %11936 = vmatpush.bf16.msra.mxu0 %v11831
    %11937 = vmatpush.bf16.msra.mxu0 %v11823
    %11938 = vmatpush.bf16.msra.mxu0 %v11815
    %11939 = vmatpush.bf16.msra.mxu0 %v11807
    %11940 = vmatpush.bf16.msra.mxu0 %v11799
    %11941 = vmatpush.bf16.msra.mxu0 %v11791
    %11942 = vmatpush.bf16.msra.mxu0 %v11783
    %11943 = vmatmul.bf16.gmra.mxu0 %v11587
    %v11944 = vpop.f32.mrf.mxu0
    %v11945 = vadd.f32 0.0, %v11944
    %v11946 = vpop.f32.mrf.mxu0
    %11947 = vdwg.mxu0
    %11948 = vmatpush.bf16.msra.mxu0 %v11840
    %11949 = vmatpush.bf16.msra.mxu0 %v11832
    %11950 = vmatpush.bf16.msra.mxu0 %v11824
    %11951 = vmatpush.bf16.msra.mxu0 %v11816
    %11952 = vmatpush.bf16.msra.mxu0 %v11808
    %11953 = vmatpush.bf16.msra.mxu0 %v11800
    %11954 = vmatpush.bf16.msra.mxu0 %v11792
    %11955 = vmatpush.bf16.msra.mxu0 %v11784
    %11956 = vmatmul.bf16.gmra.mxu0 %v11587
    %v11957 = vpop.f32.mrf.mxu0
    %v11958 = vadd.f32 0.0, %v11957
    %v11959 = vpop.f32.mrf.mxu0
    %11960 = vdwg.mxu0
    %11961 = vmatpush.bf16.msra.mxu0 %v11841
    %11962 = vmatpush.bf16.msra.mxu0 %v11833
    %11963 = vmatpush.bf16.msra.mxu0 %v11825
    %11964 = vmatpush.bf16.msra.mxu0 %v11817
    %11965 = vmatpush.bf16.msra.mxu0 %v11809
    %11966 = vmatpush.bf16.msra.mxu0 %v11801
    %11967 = vmatpush.bf16.msra.mxu0 %v11793
    %11968 = vmatpush.bf16.msra.mxu0 %v11785
    %11969 = vmatmul.bf16.gmra.mxu0 %v11587
    %v11970 = vpop.f32.mrf.mxu0
    %v11971 = vadd.f32 0.0, %v11970
    %v11972 = vpop.f32.mrf.mxu0
    %11973 = vdwg.mxu0
    %11974 = vmatpush.bf16.msra.mxu0 %v11842
    %11975 = vmatpush.bf16.msra.mxu0 %v11834
    %11976 = vmatpush.bf16.msra.mxu0 %v11826
    %11977 = vmatpush.bf16.msra.mxu0 %v11818
    %11978 = vmatpush.bf16.msra.mxu0 %v11810
    %11979 = vmatpush.bf16.msra.mxu0 %v11802
    %11980 = vmatpush.bf16.msra.mxu0 %v11794
    %11981 = vmatpush.bf16.msra.mxu0 %v11786
    %11982 = vmatmul.bf16.gmra.mxu0 %v11587
    %v11983 = vpop.f32.mrf.mxu0
    %v11984 = vadd.f32 0.0, %v11983
    %v11985 = vpop.f32.mrf.mxu0
    %11986 = vdwg.mxu0
    %11987 = vmatpush.bf16.msra.mxu0 %v11843
    %11988 = vmatpush.bf16.msra.mxu0 %v11835
    %11989 = vmatpush.bf16.msra.mxu0 %v11827
    %11990 = vmatpush.bf16.msra.mxu0 %v11819
    %11991 = vmatpush.bf16.msra.mxu0 %v11811
    %11992 = vmatpush.bf16.msra.mxu0 %v11803
    %11993 = vmatpush.bf16.msra.mxu0 %v11795
    %11994 = vmatpush.bf16.msra.mxu0 %v11787
    %11995 = vmatmul.bf16.gmra.mxu0 %v11587
    %v11996 = vpop.f32.mrf.mxu0
    %v11997 = vadd.f32 0.0, %v11996
    %v11998 = vpop.f32.mrf.mxu0
    %11999 = vdwg.mxu0
    %12000 = vmatpush.bf16.msra.mxu0 %v11844
    %12001 = vmatpush.bf16.msra.mxu0 %v11836
    %12002 = vmatpush.bf16.msra.mxu0 %v11828
    %12003 = vmatpush.bf16.msra.mxu0 %v11820
    %12004 = vmatpush.bf16.msra.mxu0 %v11812
    %12005 = vmatpush.bf16.msra.mxu0 %v11804
    %12006 = vmatpush.bf16.msra.mxu0 %v11796
    %12007 = vmatpush.bf16.msra.mxu0 %v11788
    %12008 = vmatmul.bf16.gmra.mxu0 %v11587
    %v12009 = vpop.f32.mrf.mxu0
    %v12010 = vadd.f32 0.0, %v12009
    %v12011 = vpop.f32.mrf.mxu0
    %12012 = vdwg.mxu0
    %v12013 = vadd.f32 %v11500, %v11919
    %v12014 = vadd.f32 %v11501, %v11932
    %v12015 = vadd.f32 %v11502, %v11945
    %v12016 = vadd.f32 %v11503, %v11958
    %v12017 = vadd.f32 %v11504, %v11971
    %v12018 = vadd.f32 %v11505, %v11984
    %v12019 = vadd.f32 %v11506, %v11997
    %v12020 = vadd.f32 %v11507, %v12010
    %s12021 = scalar_lea.vmem [#allocation13], 7680
    %v12022 = vld [vmem:[%s12021] sm:$0xff]
    %v12023 = vld [vmem:[%s12021 + $0x8] sm:$0xff]
    %v12024 = vld [vmem:[%s12021 + $0x10] sm:$0xff]
    %v12025 = vld [vmem:[%s12021 + $0x18] sm:$0xff]
    %v12026 = vld [vmem:[%s12021 + $0x20] sm:$0xff]
    %v12027 = vld [vmem:[%s12021 + $0x28] sm:$0xff]
    %v12028 = vld [vmem:[%s12021 + $0x30] sm:$0xff]
    %v12029 = vld [vmem:[%s12021 + $0x38] sm:$0xff]
    %v12030 = vld [vmem:[%s12021 + $0x40] sm:$0xff]
    %v12031 = vld [vmem:[%s12021 + $0x48] sm:$0xff]
    %v12032 = vld [vmem:[%s12021 + $0x50] sm:$0xff]
    %v12033 = vld [vmem:[%s12021 + $0x58] sm:$0xff]
    %v12034 = vld [vmem:[%s12021 + $0x60] sm:$0xff]
    %v12035 = vld [vmem:[%s12021 + $0x68] sm:$0xff]
    %v12036 = vld [vmem:[%s12021 + $0x70] sm:$0xff]
    %v12037 = vld [vmem:[%s12021 + $0x78] sm:$0xff]
    %v12038 = vld [vmem:[%s12021 + $0x80] sm:$0xff]
    %v12039 = vld [vmem:[%s12021 + $0x88] sm:$0xff]
    %v12040 = vld [vmem:[%s12021 + $0x90] sm:$0xff]
    %v12041 = vld [vmem:[%s12021 + $0x98] sm:$0xff]
    %v12042 = vld [vmem:[%s12021 + $0xa0] sm:$0xff]
    %v12043 = vld [vmem:[%s12021 + $0xa8] sm:$0xff]
    %v12044 = vld [vmem:[%s12021 + $0xb0] sm:$0xff]
    %v12045 = vld [vmem:[%s12021 + $0xb8] sm:$0xff]
    %v12046 = vld [vmem:[%s12021 + $0xc0] sm:$0xff]
    %v12047 = vld [vmem:[%s12021 + $0xc8] sm:$0xff]
    %v12048 = vld [vmem:[%s12021 + $0xd0] sm:$0xff]
    %v12049 = vld [vmem:[%s12021 + $0xd8] sm:$0xff]
    %v12050 = vld [vmem:[%s12021 + $0xe0] sm:$0xff]
    %v12051 = vld [vmem:[%s12021 + $0xe8] sm:$0xff]
    %v12052 = vld [vmem:[%s12021 + $0xf0] sm:$0xff]
    %v12053 = vld [vmem:[%s12021 + $0xf8] sm:$0xff]
    %v12054 = vld [vmem:[%s12021 + $0x100] sm:$0xff]
    %v12055 = vld [vmem:[%s12021 + $0x108] sm:$0xff]
    %v12056 = vld [vmem:[%s12021 + $0x110] sm:$0xff]
    %v12057 = vld [vmem:[%s12021 + $0x118] sm:$0xff]
    %v12058 = vld [vmem:[%s12021 + $0x120] sm:$0xff]
    %v12059 = vld [vmem:[%s12021 + $0x128] sm:$0xff]
    %v12060 = vld [vmem:[%s12021 + $0x130] sm:$0xff]
    %v12061 = vld [vmem:[%s12021 + $0x138] sm:$0xff]
    %v12062 = vld [vmem:[%s12021 + $0x140] sm:$0xff]
    %v12063 = vld [vmem:[%s12021 + $0x148] sm:$0xff]
    %v12064 = vld [vmem:[%s12021 + $0x150] sm:$0xff]
    %v12065 = vld [vmem:[%s12021 + $0x158] sm:$0xff]
    %v12066 = vld [vmem:[%s12021 + $0x160] sm:$0xff]
    %v12067 = vld [vmem:[%s12021 + $0x168] sm:$0xff]
    %v12068 = vld [vmem:[%s12021 + $0x170] sm:$0xff]
    %v12069 = vld [vmem:[%s12021 + $0x178] sm:$0xff]
    %v12070 = vld [vmem:[%s12021 + $0x180] sm:$0xff]
    %v12071 = vld [vmem:[%s12021 + $0x188] sm:$0xff]
    %v12072 = vld [vmem:[%s12021 + $0x190] sm:$0xff]
    %v12073 = vld [vmem:[%s12021 + $0x198] sm:$0xff]
    %v12074 = vld [vmem:[%s12021 + $0x1a0] sm:$0xff]
    %v12075 = vld [vmem:[%s12021 + $0x1a8] sm:$0xff]
    %v12076 = vld [vmem:[%s12021 + $0x1b0] sm:$0xff]
    %v12077 = vld [vmem:[%s12021 + $0x1b8] sm:$0xff]
    %v12078 = vld [vmem:[%s12021 + $0x1c0] sm:$0xff]
    %v12079 = vld [vmem:[%s12021 + $0x1c8] sm:$0xff]
    %v12080 = vld [vmem:[%s12021 + $0x1d0] sm:$0xff]
    %v12081 = vld [vmem:[%s12021 + $0x1d8] sm:$0xff]
    %v12082 = vld [vmem:[%s12021 + $0x1e0] sm:$0xff]
    %v12083 = vld [vmem:[%s12021 + $0x1e8] sm:$0xff]
    %v12084 = vld [vmem:[%s12021 + $0x1f0] sm:$0xff]
    %v12085 = vld [vmem:[%s12021 + $0x1f8] sm:$0xff]
    %v12086 = vrot.slane %v8487, 7
    %v12087 = vrot.slane %v8488, 6
    %v12088 = vsel %vm4442, %v12087, %v12086
    %v12089 = vrot.slane %v8489, 5
    %v12090 = vsel %vm4445, %v12089, %v12088
    %v12091 = vrot.slane %v8490, 4
    %v12092 = vsel %vm4448, %v12091, %v12090
    %v12093 = vrot.slane %v8491, 3
    %v12094 = vsel %vm4451, %v12093, %v12092
    %v12095 = vrot.slane %v8492, 2
    %v12096 = vsel %vm4454, %v12095, %v12094
    %v12097 = vrot.slane %v8493, 1
    %v12098 = vsel %vm4457, %v12097, %v12096
    %v12099 = vsel %vm4460, %v8494, %v12098
    %v12100 = vpack.c.b16 %v12099, %v12099
    %v12166 = vunpack.c.l.b16 %v12022
    %v12167 = vunpack.c.h.b16 %v12022
    %v12168 = vunpack.c.l.b16 %v12023
    %v12169 = vunpack.c.h.b16 %v12023
    %v12170 = vunpack.c.l.b16 %v12024
    %v12171 = vunpack.c.h.b16 %v12024
    %v12172 = vunpack.c.l.b16 %v12025
    %v12173 = vunpack.c.h.b16 %v12025
    %v12174 = vunpack.c.l.b16 %v12026
    %v12175 = vunpack.c.h.b16 %v12026
    %v12176 = vunpack.c.l.b16 %v12027
    %v12177 = vunpack.c.h.b16 %v12027
    %v12178 = vunpack.c.l.b16 %v12028
    %v12179 = vunpack.c.h.b16 %v12028
    %v12180 = vunpack.c.l.b16 %v12029
    %v12181 = vunpack.c.h.b16 %v12029
    %v12182 = vunpack.c.l.b16 %v12030
    %v12183 = vunpack.c.h.b16 %v12030
    %v12184 = vunpack.c.l.b16 %v12031
    %v12185 = vunpack.c.h.b16 %v12031
    %v12186 = vunpack.c.l.b16 %v12032
    %v12187 = vunpack.c.h.b16 %v12032
    %v12188 = vunpack.c.l.b16 %v12033
    %v12189 = vunpack.c.h.b16 %v12033
    %v12190 = vunpack.c.l.b16 %v12034
    %v12191 = vunpack.c.h.b16 %v12034
    %v12192 = vunpack.c.l.b16 %v12035
    %v12193 = vunpack.c.h.b16 %v12035
    %v12194 = vunpack.c.l.b16 %v12036
    %v12195 = vunpack.c.h.b16 %v12036
    %v12196 = vunpack.c.l.b16 %v12037
    %v12197 = vunpack.c.h.b16 %v12037
    %v12198 = vunpack.c.l.b16 %v12038
    %v12199 = vunpack.c.h.b16 %v12038
    %v12200 = vunpack.c.l.b16 %v12039
    %v12201 = vunpack.c.h.b16 %v12039
    %v12202 = vunpack.c.l.b16 %v12040
    %v12203 = vunpack.c.h.b16 %v12040
    %v12204 = vunpack.c.l.b16 %v12041
    %v12205 = vunpack.c.h.b16 %v12041
    %v12206 = vunpack.c.l.b16 %v12042
    %v12207 = vunpack.c.h.b16 %v12042
    %v12208 = vunpack.c.l.b16 %v12043
    %v12209 = vunpack.c.h.b16 %v12043
    %v12210 = vunpack.c.l.b16 %v12044
    %v12211 = vunpack.c.h.b16 %v12044
    %v12212 = vunpack.c.l.b16 %v12045
    %v12213 = vunpack.c.h.b16 %v12045
    %v12214 = vunpack.c.l.b16 %v12046
    %v12215 = vunpack.c.h.b16 %v12046
    %v12216 = vunpack.c.l.b16 %v12047
    %v12217 = vunpack.c.h.b16 %v12047
    %v12218 = vunpack.c.l.b16 %v12048
    %v12219 = vunpack.c.h.b16 %v12048
    %v12220 = vunpack.c.l.b16 %v12049
    %v12221 = vunpack.c.h.b16 %v12049
    %v12222 = vunpack.c.l.b16 %v12050
    %v12223 = vunpack.c.h.b16 %v12050
    %v12224 = vunpack.c.l.b16 %v12051
    %v12225 = vunpack.c.h.b16 %v12051
    %v12226 = vunpack.c.l.b16 %v12052
    %v12227 = vunpack.c.h.b16 %v12052
    %v12228 = vunpack.c.l.b16 %v12053
    %v12229 = vunpack.c.h.b16 %v12053
    %v12230 = vunpack.c.l.b16 %v12054
    %v12231 = vunpack.c.h.b16 %v12054
    %v12232 = vunpack.c.l.b16 %v12055
    %v12233 = vunpack.c.h.b16 %v12055
    %v12234 = vunpack.c.l.b16 %v12056
    %v12235 = vunpack.c.h.b16 %v12056
    %v12236 = vunpack.c.l.b16 %v12057
    %v12237 = vunpack.c.h.b16 %v12057
    %v12238 = vunpack.c.l.b16 %v12058
    %v12239 = vunpack.c.h.b16 %v12058
    %v12240 = vunpack.c.l.b16 %v12059
    %v12241 = vunpack.c.h.b16 %v12059
    %v12242 = vunpack.c.l.b16 %v12060
    %v12243 = vunpack.c.h.b16 %v12060
    %v12244 = vunpack.c.l.b16 %v12061
    %v12245 = vunpack.c.h.b16 %v12061
    %v12246 = vunpack.c.l.b16 %v12062
    %v12247 = vunpack.c.h.b16 %v12062
    %v12248 = vunpack.c.l.b16 %v12063
    %v12249 = vunpack.c.h.b16 %v12063
    %v12250 = vunpack.c.l.b16 %v12064
    %v12251 = vunpack.c.h.b16 %v12064
    %v12252 = vunpack.c.l.b16 %v12065
    %v12253 = vunpack.c.h.b16 %v12065
    %v12254 = vunpack.c.l.b16 %v12066
    %v12255 = vunpack.c.h.b16 %v12066
    %v12256 = vunpack.c.l.b16 %v12067
    %v12257 = vunpack.c.h.b16 %v12067
    %v12258 = vunpack.c.l.b16 %v12068
    %v12259 = vunpack.c.h.b16 %v12068
    %v12260 = vunpack.c.l.b16 %v12069
    %v12261 = vunpack.c.h.b16 %v12069
    %v12262 = vunpack.c.l.b16 %v12070
    %v12263 = vunpack.c.h.b16 %v12070
    %v12264 = vunpack.c.l.b16 %v12071
    %v12265 = vunpack.c.h.b16 %v12071
    %v12266 = vunpack.c.l.b16 %v12072
    %v12267 = vunpack.c.h.b16 %v12072
    %v12268 = vunpack.c.l.b16 %v12073
    %v12269 = vunpack.c.h.b16 %v12073
    %v12270 = vunpack.c.l.b16 %v12074
    %v12271 = vunpack.c.h.b16 %v12074
    %v12272 = vunpack.c.l.b16 %v12075
    %v12273 = vunpack.c.h.b16 %v12075
    %v12274 = vunpack.c.l.b16 %v12076
    %v12275 = vunpack.c.h.b16 %v12076
    %v12276 = vunpack.c.l.b16 %v12077
    %v12277 = vunpack.c.h.b16 %v12077
    %v12278 = vunpack.c.l.b16 %v12078
    %v12279 = vunpack.c.h.b16 %v12078
    %v12280 = vunpack.c.l.b16 %v12079
    %v12281 = vunpack.c.h.b16 %v12079
    %v12282 = vunpack.c.l.b16 %v12080
    %v12283 = vunpack.c.h.b16 %v12080
    %v12284 = vunpack.c.l.b16 %v12081
    %v12285 = vunpack.c.h.b16 %v12081
    %v12286 = vunpack.c.l.b16 %v12082
    %v12287 = vunpack.c.h.b16 %v12082
    %v12288 = vunpack.c.l.b16 %v12083
    %v12289 = vunpack.c.h.b16 %v12083
    %v12290 = vunpack.c.l.b16 %v12084
    %v12291 = vunpack.c.h.b16 %v12084
    %v12292 = vunpack.c.l.b16 %v12085
    %v12293 = vunpack.c.h.b16 %v12085
    %v12294 = vpack.c.b16 %v12174, %v12166
    %v12295 = vpack.c.b16 %v12175, %v12167
    %v12296 = vpack.c.b16 %v12176, %v12168
    %v12297 = vpack.c.b16 %v12177, %v12169
    %v12298 = vpack.c.b16 %v12178, %v12170
    %v12299 = vpack.c.b16 %v12179, %v12171
    %v12300 = vpack.c.b16 %v12180, %v12172
    %v12301 = vpack.c.b16 %v12181, %v12173
    %v12302 = vpack.c.b16 %v12190, %v12182
    %v12303 = vpack.c.b16 %v12191, %v12183
    %v12304 = vpack.c.b16 %v12192, %v12184
    %v12305 = vpack.c.b16 %v12193, %v12185
    %v12306 = vpack.c.b16 %v12194, %v12186
    %v12307 = vpack.c.b16 %v12195, %v12187
    %v12308 = vpack.c.b16 %v12196, %v12188
    %v12309 = vpack.c.b16 %v12197, %v12189
    %v12310 = vpack.c.b16 %v12206, %v12198
    %v12311 = vpack.c.b16 %v12207, %v12199
    %v12312 = vpack.c.b16 %v12208, %v12200
    %v12313 = vpack.c.b16 %v12209, %v12201
    %v12314 = vpack.c.b16 %v12210, %v12202
    %v12315 = vpack.c.b16 %v12211, %v12203
    %v12316 = vpack.c.b16 %v12212, %v12204
    %v12317 = vpack.c.b16 %v12213, %v12205
    %v12318 = vpack.c.b16 %v12222, %v12214
    %v12319 = vpack.c.b16 %v12223, %v12215
    %v12320 = vpack.c.b16 %v12224, %v12216
    %v12321 = vpack.c.b16 %v12225, %v12217
    %v12322 = vpack.c.b16 %v12226, %v12218
    %v12323 = vpack.c.b16 %v12227, %v12219
    %v12324 = vpack.c.b16 %v12228, %v12220
    %v12325 = vpack.c.b16 %v12229, %v12221
    %v12326 = vpack.c.b16 %v12238, %v12230
    %v12327 = vpack.c.b16 %v12239, %v12231
    %v12328 = vpack.c.b16 %v12240, %v12232
    %v12329 = vpack.c.b16 %v12241, %v12233
    %v12330 = vpack.c.b16 %v12242, %v12234
    %v12331 = vpack.c.b16 %v12243, %v12235
    %v12332 = vpack.c.b16 %v12244, %v12236
    %v12333 = vpack.c.b16 %v12245, %v12237
    %v12334 = vpack.c.b16 %v12254, %v12246
    %v12335 = vpack.c.b16 %v12255, %v12247
    %v12336 = vpack.c.b16 %v12256, %v12248
    %v12337 = vpack.c.b16 %v12257, %v12249
    %v12338 = vpack.c.b16 %v12258, %v12250
    %v12339 = vpack.c.b16 %v12259, %v12251
    %v12340 = vpack.c.b16 %v12260, %v12252
    %v12341 = vpack.c.b16 %v12261, %v12253
    %v12342 = vpack.c.b16 %v12270, %v12262
    %v12343 = vpack.c.b16 %v12271, %v12263
    %v12344 = vpack.c.b16 %v12272, %v12264
    %v12345 = vpack.c.b16 %v12273, %v12265
    %v12346 = vpack.c.b16 %v12274, %v12266
    %v12347 = vpack.c.b16 %v12275, %v12267
    %v12348 = vpack.c.b16 %v12276, %v12268
    %v12349 = vpack.c.b16 %v12277, %v12269
    %v12350 = vpack.c.b16 %v12286, %v12278
    %v12351 = vpack.c.b16 %v12287, %v12279
    %v12352 = vpack.c.b16 %v12288, %v12280
    %v12353 = vpack.c.b16 %v12289, %v12281
    %v12354 = vpack.c.b16 %v12290, %v12282
    %v12355 = vpack.c.b16 %v12291, %v12283
    %v12356 = vpack.c.b16 %v12292, %v12284
    %v12357 = vpack.c.b16 %v12293, %v12285
    %12422 = vmatpush.bf16.msra.mxu0 %v12350
    %12423 = vmatpush.bf16.msra.mxu0 %v12342
    %12424 = vmatpush.bf16.msra.mxu0 %v12334
    %12425 = vmatpush.bf16.msra.mxu0 %v12326
    %12426 = vmatpush.bf16.msra.mxu0 %v12318
    %12427 = vmatpush.bf16.msra.mxu0 %v12310
    %12428 = vmatpush.bf16.msra.mxu0 %v12302
    %12429 = vmatpush.bf16.msra.mxu0 %v12294
    %12430 = vmatmul.bf16.gmra.mxu0 %v12100
    %v12431 = vpop.f32.mrf.mxu0
    %v12432 = vadd.f32 0.0, %v12431
    %v12433 = vpop.f32.mrf.mxu0
    %12434 = vdwg.mxu0
    %12435 = vmatpush.bf16.msra.mxu0 %v12351
    %12436 = vmatpush.bf16.msra.mxu0 %v12343
    %12437 = vmatpush.bf16.msra.mxu0 %v12335
    %12438 = vmatpush.bf16.msra.mxu0 %v12327
    %12439 = vmatpush.bf16.msra.mxu0 %v12319
    %12440 = vmatpush.bf16.msra.mxu0 %v12311
    %12441 = vmatpush.bf16.msra.mxu0 %v12303
    %12442 = vmatpush.bf16.msra.mxu0 %v12295
    %12443 = vmatmul.bf16.gmra.mxu0 %v12100
    %v12444 = vpop.f32.mrf.mxu0
    %v12445 = vadd.f32 0.0, %v12444
    %v12446 = vpop.f32.mrf.mxu0
    %12447 = vdwg.mxu0
    %12448 = vmatpush.bf16.msra.mxu0 %v12352
    %12449 = vmatpush.bf16.msra.mxu0 %v12344
    %12450 = vmatpush.bf16.msra.mxu0 %v12336
    %12451 = vmatpush.bf16.msra.mxu0 %v12328
    %12452 = vmatpush.bf16.msra.mxu0 %v12320
    %12453 = vmatpush.bf16.msra.mxu0 %v12312
    %12454 = vmatpush.bf16.msra.mxu0 %v12304
    %12455 = vmatpush.bf16.msra.mxu0 %v12296
    %12456 = vmatmul.bf16.gmra.mxu0 %v12100
    %v12457 = vpop.f32.mrf.mxu0
    %v12458 = vadd.f32 0.0, %v12457
    %v12459 = vpop.f32.mrf.mxu0
    %12460 = vdwg.mxu0
    %12461 = vmatpush.bf16.msra.mxu0 %v12353
    %12462 = vmatpush.bf16.msra.mxu0 %v12345
    %12463 = vmatpush.bf16.msra.mxu0 %v12337
    %12464 = vmatpush.bf16.msra.mxu0 %v12329
    %12465 = vmatpush.bf16.msra.mxu0 %v12321
    %12466 = vmatpush.bf16.msra.mxu0 %v12313
    %12467 = vmatpush.bf16.msra.mxu0 %v12305
    %12468 = vmatpush.bf16.msra.mxu0 %v12297
    %12469 = vmatmul.bf16.gmra.mxu0 %v12100
    %v12470 = vpop.f32.mrf.mxu0
    %v12471 = vadd.f32 0.0, %v12470
    %v12472 = vpop.f32.mrf.mxu0
    %12473 = vdwg.mxu0
    %12474 = vmatpush.bf16.msra.mxu0 %v12354
    %12475 = vmatpush.bf16.msra.mxu0 %v12346
    %12476 = vmatpush.bf16.msra.mxu0 %v12338
    %12477 = vmatpush.bf16.msra.mxu0 %v12330
    %12478 = vmatpush.bf16.msra.mxu0 %v12322
    %12479 = vmatpush.bf16.msra.mxu0 %v12314
    %12480 = vmatpush.bf16.msra.mxu0 %v12306
    %12481 = vmatpush.bf16.msra.mxu0 %v12298
    %12482 = vmatmul.bf16.gmra.mxu0 %v12100
    %v12483 = vpop.f32.mrf.mxu0
    %v12484 = vadd.f32 0.0, %v12483
    %v12485 = vpop.f32.mrf.mxu0
    %12486 = vdwg.mxu0
    %12487 = vmatpush.bf16.msra.mxu0 %v12355
    %12488 = vmatpush.bf16.msra.mxu0 %v12347
    %12489 = vmatpush.bf16.msra.mxu0 %v12339
    %12490 = vmatpush.bf16.msra.mxu0 %v12331
    %12491 = vmatpush.bf16.msra.mxu0 %v12323
    %12492 = vmatpush.bf16.msra.mxu0 %v12315
    %12493 = vmatpush.bf16.msra.mxu0 %v12307
    %12494 = vmatpush.bf16.msra.mxu0 %v12299
    %12495 = vmatmul.bf16.gmra.mxu0 %v12100
    %v12496 = vpop.f32.mrf.mxu0
    %v12497 = vadd.f32 0.0, %v12496
    %v12498 = vpop.f32.mrf.mxu0
    %12499 = vdwg.mxu0
    %12500 = vmatpush.bf16.msra.mxu0 %v12356
    %12501 = vmatpush.bf16.msra.mxu0 %v12348
    %12502 = vmatpush.bf16.msra.mxu0 %v12340
    %12503 = vmatpush.bf16.msra.mxu0 %v12332
    %12504 = vmatpush.bf16.msra.mxu0 %v12324
    %12505 = vmatpush.bf16.msra.mxu0 %v12316
    %12506 = vmatpush.bf16.msra.mxu0 %v12308
    %12507 = vmatpush.bf16.msra.mxu0 %v12300
    %12508 = vmatmul.bf16.gmra.mxu0 %v12100
    %v12509 = vpop.f32.mrf.mxu0
    %v12510 = vadd.f32 0.0, %v12509
    %v12511 = vpop.f32.mrf.mxu0
    %12512 = vdwg.mxu0
    %12513 = vmatpush.bf16.msra.mxu0 %v12357
    %12514 = vmatpush.bf16.msra.mxu0 %v12349
    %12515 = vmatpush.bf16.msra.mxu0 %v12341
    %12516 = vmatpush.bf16.msra.mxu0 %v12333
    %12517 = vmatpush.bf16.msra.mxu0 %v12325
    %12518 = vmatpush.bf16.msra.mxu0 %v12317
    %12519 = vmatpush.bf16.msra.mxu0 %v12309
    %12520 = vmatpush.bf16.msra.mxu0 %v12301
    %12521 = vmatmul.bf16.gmra.mxu0 %v12100
    %v12522 = vpop.f32.mrf.mxu0
    %v12523 = vadd.f32 0.0, %v12522
    %v12524 = vpop.f32.mrf.mxu0
    %12525 = vdwg.mxu0
    %v12526 = vadd.f32 %v12013, %v12432
    %v12527 = vadd.f32 %v12014, %v12445
    %v12528 = vadd.f32 %v12015, %v12458
    %v12529 = vadd.f32 %v12016, %v12471
    %v12530 = vadd.f32 %v12017, %v12484
    %v12531 = vadd.f32 %v12018, %v12497
    %v12532 = vadd.f32 %v12019, %v12510
    %v12533 = vadd.f32 %v12020, %v12523
    %v12534 = vld [vmem:[#allocation15] sm:$0xff]
    %v12536 = vperm.slane %v12534, 0
    %v12537 = vperm.slane %v12534, 1
    %v12538 = vperm.slane %v12534, 2
    %v12539 = vperm.slane %v12534, 3
    %v12540 = vperm.slane %v12534, 4
    %v12541 = vperm.slane %v12534, 5
    %v12542 = vperm.slane %v12534, 6
    %v12543 = vperm.slane %v12534, 7
    %v12552 = vadd.f32 %v12526, %v12536
    %v12553 = vadd.f32 %v12527, %v12537
    %v12554 = vadd.f32 %v12528, %v12538
    %v12555 = vadd.f32 %v12529, %v12539
    %v12556 = vadd.f32 %v12530, %v12540
    %v12557 = vadd.f32 %v12531, %v12541
    %v12558 = vadd.f32 %v12532, %v12542
    %v12559 = vadd.f32 %v12533, %v12543
    %v12560 = vmax.f32 %v12552, 0.0
    %v12561 = vmax.f32 %v12553, 0.0
    %v12562 = vmax.f32 %v12554, 0.0
    %v12563 = vmax.f32 %v12555, 0.0
    %v12564 = vmax.f32 %v12556, 0.0
    %v12565 = vmax.f32 %v12557, 0.0
    %v12566 = vmax.f32 %v12558, 0.0
    %v12567 = vmax.f32 %v12559, 0.0
    %v12568 = vpack.c.bf16 %v12560, %v12560
    %v12569 = vpack.c.bf16 %v12561, %v12561
    %v12570 = vpack.c.bf16 %v12562, %v12562
    %v12571 = vpack.c.bf16 %v12563, %v12563
    %v12572 = vpack.c.bf16 %v12564, %v12564
    %v12573 = vpack.c.bf16 %v12565, %v12565
    %v12574 = vpack.c.bf16 %v12566, %v12566
    %v12575 = vpack.c.bf16 %v12567, %v12567
    %v12576 = vld [vmem:[#allocation16] sm:$0xf]
    %v12577 = vld [vmem:[#allocation16 + $0x4] sm:$0xf]
    %v12578 = vld [vmem:[#allocation16 + $0x8] sm:$0xf]
    %v12579 = vld [vmem:[#allocation16 + $0xc] sm:$0xf]
    %v12580 = vld [vmem:[#allocation16 + $0x10] sm:$0xf]
    %v12581 = vld [vmem:[#allocation16 + $0x14] sm:$0xf]
    %v12582 = vld [vmem:[#allocation16 + $0x18] sm:$0xf]
    %v12583 = vld [vmem:[#allocation16 + $0x1c] sm:$0xf]
    %v12584 = vld [vmem:[#allocation16 + $0x20] sm:$0xf]
    %v12585 = vld [vmem:[#allocation16 + $0x24] sm:$0xf]
    %v12586 = vld [vmem:[#allocation16 + $0x28] sm:$0xf]
    %v12587 = vld [vmem:[#allocation16 + $0x2c] sm:$0xf]
    %v12588 = vld [vmem:[#allocation16 + $0x30] sm:$0xf]
    %v12589 = vld [vmem:[#allocation16 + $0x34] sm:$0xf]
    %v12590 = vld [vmem:[#allocation16 + $0x38] sm:$0xf]
    %v12591 = vld [vmem:[#allocation16 + $0x3c] sm:$0xf]
    %v12592 = vld [vmem:[#allocation16 + $0x40] sm:$0xf]
    %v12593 = vld [vmem:[#allocation16 + $0x44] sm:$0xf]
    %v12594 = vld [vmem:[#allocation16 + $0x48] sm:$0xf]
    %v12595 = vld [vmem:[#allocation16 + $0x4c] sm:$0xf]
    %v12596 = vld [vmem:[#allocation16 + $0x50] sm:$0xf]
    %v12597 = vld [vmem:[#allocation16 + $0x54] sm:$0xf]
    %v12598 = vld [vmem:[#allocation16 + $0x58] sm:$0xf]
    %v12599 = vld [vmem:[#allocation16 + $0x5c] sm:$0xf]
    %v12600 = vld [vmem:[#allocation16 + $0x60] sm:$0xf]
    %v12601 = vld [vmem:[#allocation16 + $0x64] sm:$0xf]
    %v12602 = vld [vmem:[#allocation16 + $0x68] sm:$0xf]
    %v12603 = vld [vmem:[#allocation16 + $0x6c] sm:$0xf]
    %v12604 = vld [vmem:[#allocation16 + $0x70] sm:$0xf]
    %v12605 = vld [vmem:[#allocation16 + $0x74] sm:$0xf]
    %v12606 = vld [vmem:[#allocation16 + $0x78] sm:$0xf]
    %v12607 = vld [vmem:[#allocation16 + $0x7c] sm:$0xf]
    %v12608 = vld [vmem:[#allocation16 + $0x80] sm:$0xf]
    %v12609 = vld [vmem:[#allocation16 + $0x84] sm:$0xf]
    %v12610 = vld [vmem:[#allocation16 + $0x88] sm:$0xf]
    %v12611 = vld [vmem:[#allocation16 + $0x8c] sm:$0xf]
    %v12612 = vld [vmem:[#allocation16 + $0x90] sm:$0xf]
    %v12613 = vld [vmem:[#allocation16 + $0x94] sm:$0xf]
    %v12614 = vld [vmem:[#allocation16 + $0x98] sm:$0xf]
    %v12615 = vld [vmem:[#allocation16 + $0x9c] sm:$0xf]
    %v12616 = vld [vmem:[#allocation16 + $0xa0] sm:$0xf]
    %v12617 = vld [vmem:[#allocation16 + $0xa4] sm:$0xf]
    %v12618 = vld [vmem:[#allocation16 + $0xa8] sm:$0xf]
    %v12619 = vld [vmem:[#allocation16 + $0xac] sm:$0xf]
    %v12620 = vld [vmem:[#allocation16 + $0xb0] sm:$0xf]
    %v12621 = vld [vmem:[#allocation16 + $0xb4] sm:$0xf]
    %v12622 = vld [vmem:[#allocation16 + $0xb8] sm:$0xf]
    %v12623 = vld [vmem:[#allocation16 + $0xbc] sm:$0xf]
    %v12624 = vld [vmem:[#allocation16 + $0xc0] sm:$0xf]
    %v12625 = vld [vmem:[#allocation16 + $0xc4] sm:$0xf]
    %v12626 = vld [vmem:[#allocation16 + $0xc8] sm:$0xf]
    %v12627 = vld [vmem:[#allocation16 + $0xcc] sm:$0xf]
    %v12628 = vld [vmem:[#allocation16 + $0xd0] sm:$0xf]
    %v12629 = vld [vmem:[#allocation16 + $0xd4] sm:$0xf]
    %v12630 = vld [vmem:[#allocation16 + $0xd8] sm:$0xf]
    %v12631 = vld [vmem:[#allocation16 + $0xdc] sm:$0xf]
    %v12632 = vld [vmem:[#allocation16 + $0xe0] sm:$0xf]
    %v12633 = vld [vmem:[#allocation16 + $0xe4] sm:$0xf]
    %v12634 = vld [vmem:[#allocation16 + $0xe8] sm:$0xf]
    %v12635 = vld [vmem:[#allocation16 + $0xec] sm:$0xf]
    %v12636 = vld [vmem:[#allocation16 + $0xf0] sm:$0xf]
    %v12637 = vld [vmem:[#allocation16 + $0xf4] sm:$0xf]
    %v12638 = vld [vmem:[#allocation16 + $0xf8] sm:$0xf]
    %v12639 = vld [vmem:[#allocation16 + $0xfc] sm:$0xf]
    %v12640 = vld [vmem:[#allocation16 + $0x100] sm:$0xf]
    %v12641 = vld [vmem:[#allocation16 + $0x104] sm:$0xf]
    %v12642 = vld [vmem:[#allocation16 + $0x108] sm:$0xf]
    %v12643 = vld [vmem:[#allocation16 + $0x10c] sm:$0xf]
    %v12644 = vld [vmem:[#allocation16 + $0x110] sm:$0xf]
    %v12645 = vld [vmem:[#allocation16 + $0x114] sm:$0xf]
    %v12646 = vld [vmem:[#allocation16 + $0x118] sm:$0xf]
    %v12647 = vld [vmem:[#allocation16 + $0x11c] sm:$0xf]
    %v12648 = vld [vmem:[#allocation16 + $0x120] sm:$0xf]
    %v12649 = vld [vmem:[#allocation16 + $0x124] sm:$0xf]
    %v12650 = vld [vmem:[#allocation16 + $0x128] sm:$0xf]
    %v12651 = vld [vmem:[#allocation16 + $0x12c] sm:$0xf]
    %v12652 = vld [vmem:[#allocation16 + $0x130] sm:$0xf]
    %v12653 = vld [vmem:[#allocation16 + $0x134] sm:$0xf]
    %v12654 = vld [vmem:[#allocation16 + $0x138] sm:$0xf]
    %v12655 = vld [vmem:[#allocation16 + $0x13c] sm:$0xf]
    %v12656 = vld [vmem:[#allocation16 + $0x140] sm:$0xf]
    %v12657 = vld [vmem:[#allocation16 + $0x144] sm:$0xf]
    %v12658 = vld [vmem:[#allocation16 + $0x148] sm:$0xf]
    %v12659 = vld [vmem:[#allocation16 + $0x14c] sm:$0xf]
    %v12660 = vld [vmem:[#allocation16 + $0x150] sm:$0xf]
    %v12661 = vld [vmem:[#allocation16 + $0x154] sm:$0xf]
    %v12662 = vld [vmem:[#allocation16 + $0x158] sm:$0xf]
    %v12663 = vld [vmem:[#allocation16 + $0x15c] sm:$0xf]
    %v12664 = vld [vmem:[#allocation16 + $0x160] sm:$0xf]
    %v12665 = vld [vmem:[#allocation16 + $0x164] sm:$0xf]
    %v12666 = vld [vmem:[#allocation16 + $0x168] sm:$0xf]
    %v12667 = vld [vmem:[#allocation16 + $0x16c] sm:$0xf]
    %v12668 = vld [vmem:[#allocation16 + $0x170] sm:$0xf]
    %v12669 = vld [vmem:[#allocation16 + $0x174] sm:$0xf]
    %v12670 = vld [vmem:[#allocation16 + $0x178] sm:$0xf]
    %v12671 = vld [vmem:[#allocation16 + $0x17c] sm:$0xf]
    %v12672 = vld [vmem:[#allocation16 + $0x180] sm:$0xf]
    %v12673 = vld [vmem:[#allocation16 + $0x184] sm:$0xf]
    %v12674 = vld [vmem:[#allocation16 + $0x188] sm:$0xf]
    %v12675 = vld [vmem:[#allocation16 + $0x18c] sm:$0xf]
    %v12676 = vld [vmem:[#allocation16 + $0x190] sm:$0xf]
    %v12677 = vld [vmem:[#allocation16 + $0x194] sm:$0xf]
    %v12678 = vld [vmem:[#allocation16 + $0x198] sm:$0xf]
    %v12679 = vld [vmem:[#allocation16 + $0x19c] sm:$0xf]
    %v12680 = vld [vmem:[#allocation16 + $0x1a0] sm:$0xf]
    %v12681 = vld [vmem:[#allocation16 + $0x1a4] sm:$0xf]
    %v12682 = vld [vmem:[#allocation16 + $0x1a8] sm:$0xf]
    %v12683 = vld [vmem:[#allocation16 + $0x1ac] sm:$0xf]
    %v12684 = vld [vmem:[#allocation16 + $0x1b0] sm:$0xf]
    %v12685 = vld [vmem:[#allocation16 + $0x1b4] sm:$0xf]
    %v12686 = vld [vmem:[#allocation16 + $0x1b8] sm:$0xf]
    %v12687 = vld [vmem:[#allocation16 + $0x1bc] sm:$0xf]
    %v12688 = vld [vmem:[#allocation16 + $0x1c0] sm:$0xf]
    %v12689 = vld [vmem:[#allocation16 + $0x1c4] sm:$0xf]
    %v12690 = vld [vmem:[#allocation16 + $0x1c8] sm:$0xf]
    %v12691 = vld [vmem:[#allocation16 + $0x1cc] sm:$0xf]
    %v12692 = vld [vmem:[#allocation16 + $0x1d0] sm:$0xf]
    %v12693 = vld [vmem:[#allocation16 + $0x1d4] sm:$0xf]
    %v12694 = vld [vmem:[#allocation16 + $0x1d8] sm:$0xf]
    %v12695 = vld [vmem:[#allocation16 + $0x1dc] sm:$0xf]
    %v12696 = vld [vmem:[#allocation16 + $0x1e0] sm:$0xf]
    %v12697 = vld [vmem:[#allocation16 + $0x1e4] sm:$0xf]
    %v12698 = vld [vmem:[#allocation16 + $0x1e8] sm:$0xf]
    %v12699 = vld [vmem:[#allocation16 + $0x1ec] sm:$0xf]
    %v12700 = vld [vmem:[#allocation16 + $0x1f0] sm:$0xf]
    %v12701 = vld [vmem:[#allocation16 + $0x1f4] sm:$0xf]
    %v12702 = vld [vmem:[#allocation16 + $0x1f8] sm:$0xf]
    %v12703 = vld [vmem:[#allocation16 + $0x1fc] sm:$0xf]
    %v12704 = vld [vmem:[#allocation18] sm:$0x1]
    %v12706 = vperm.slane %v12704, 0
    %v12836 = vunpack.c.l.b16 %v12576
    %v12837 = vunpack.c.l.b16 %v12577
    %v12838 = vunpack.c.l.b16 %v12578
    %v12839 = vunpack.c.l.b16 %v12579
    %v12840 = vunpack.c.l.b16 %v12580
    %v12841 = vunpack.c.l.b16 %v12581
    %v12842 = vunpack.c.l.b16 %v12582
    %v12843 = vunpack.c.l.b16 %v12583
    %v12844 = vunpack.c.l.b16 %v12584
    %v12845 = vunpack.c.l.b16 %v12585
    %v12846 = vunpack.c.l.b16 %v12586
    %v12847 = vunpack.c.l.b16 %v12587
    %v12848 = vunpack.c.l.b16 %v12588
    %v12849 = vunpack.c.l.b16 %v12589
    %v12850 = vunpack.c.l.b16 %v12590
    %v12851 = vunpack.c.l.b16 %v12591
    %v12852 = vunpack.c.l.b16 %v12592
    %v12853 = vunpack.c.l.b16 %v12593
    %v12854 = vunpack.c.l.b16 %v12594
    %v12855 = vunpack.c.l.b16 %v12595
    %v12856 = vunpack.c.l.b16 %v12596
    %v12857 = vunpack.c.l.b16 %v12597
    %v12858 = vunpack.c.l.b16 %v12598
    %v12859 = vunpack.c.l.b16 %v12599
    %v12860 = vunpack.c.l.b16 %v12600
    %v12861 = vunpack.c.l.b16 %v12601
    %v12862 = vunpack.c.l.b16 %v12602
    %v12863 = vunpack.c.l.b16 %v12603
    %v12864 = vunpack.c.l.b16 %v12604
    %v12865 = vunpack.c.l.b16 %v12605
    %v12866 = vunpack.c.l.b16 %v12606
    %v12867 = vunpack.c.l.b16 %v12607
    %v12868 = vunpack.c.l.b16 %v12608
    %v12869 = vunpack.c.l.b16 %v12609
    %v12870 = vunpack.c.l.b16 %v12610
    %v12871 = vunpack.c.l.b16 %v12611
    %v12872 = vunpack.c.l.b16 %v12612
    %v12873 = vunpack.c.l.b16 %v12613
    %v12874 = vunpack.c.l.b16 %v12614
    %v12875 = vunpack.c.l.b16 %v12615
    %v12876 = vunpack.c.l.b16 %v12616
    %v12877 = vunpack.c.l.b16 %v12617
    %v12878 = vunpack.c.l.b16 %v12618
    %v12879 = vunpack.c.l.b16 %v12619
    %v12880 = vunpack.c.l.b16 %v12620
    %v12881 = vunpack.c.l.b16 %v12621
    %v12882 = vunpack.c.l.b16 %v12622
    %v12883 = vunpack.c.l.b16 %v12623
    %v12884 = vunpack.c.l.b16 %v12624
    %v12885 = vunpack.c.l.b16 %v12625
    %v12886 = vunpack.c.l.b16 %v12626
    %v12887 = vunpack.c.l.b16 %v12627
    %v12888 = vunpack.c.l.b16 %v12628
    %v12889 = vunpack.c.l.b16 %v12629
    %v12890 = vunpack.c.l.b16 %v12630
    %v12891 = vunpack.c.l.b16 %v12631
    %v12892 = vunpack.c.l.b16 %v12632
    %v12893 = vunpack.c.l.b16 %v12633
    %v12894 = vunpack.c.l.b16 %v12634
    %v12895 = vunpack.c.l.b16 %v12635
    %v12896 = vunpack.c.l.b16 %v12636
    %v12897 = vunpack.c.l.b16 %v12637
    %v12898 = vunpack.c.l.b16 %v12638
    %v12899 = vunpack.c.l.b16 %v12639
    %v12900 = vunpack.c.l.b16 %v12640
    %v12901 = vunpack.c.l.b16 %v12641
    %v12902 = vunpack.c.l.b16 %v12642
    %v12903 = vunpack.c.l.b16 %v12643
    %v12904 = vunpack.c.l.b16 %v12644
    %v12905 = vunpack.c.l.b16 %v12645
    %v12906 = vunpack.c.l.b16 %v12646
    %v12907 = vunpack.c.l.b16 %v12647
    %v12908 = vunpack.c.l.b16 %v12648
    %v12909 = vunpack.c.l.b16 %v12649
    %v12910 = vunpack.c.l.b16 %v12650
    %v12911 = vunpack.c.l.b16 %v12651
    %v12912 = vunpack.c.l.b16 %v12652
    %v12913 = vunpack.c.l.b16 %v12653
    %v12914 = vunpack.c.l.b16 %v12654
    %v12915 = vunpack.c.l.b16 %v12655
    %v12916 = vunpack.c.l.b16 %v12656
    %v12917 = vunpack.c.l.b16 %v12657
    %v12918 = vunpack.c.l.b16 %v12658
    %v12919 = vunpack.c.l.b16 %v12659
    %v12920 = vunpack.c.l.b16 %v12660
    %v12921 = vunpack.c.l.b16 %v12661
    %v12922 = vunpack.c.l.b16 %v12662
    %v12923 = vunpack.c.l.b16 %v12663
    %v12924 = vunpack.c.l.b16 %v12664
    %v12925 = vunpack.c.l.b16 %v12665
    %v12926 = vunpack.c.l.b16 %v12666
    %v12927 = vunpack.c.l.b16 %v12667
    %v12928 = vunpack.c.l.b16 %v12668
    %v12929 = vunpack.c.l.b16 %v12669
    %v12930 = vunpack.c.l.b16 %v12670
    %v12931 = vunpack.c.l.b16 %v12671
    %v12932 = vunpack.c.l.b16 %v12672
    %v12933 = vunpack.c.l.b16 %v12673
    %v12934 = vunpack.c.l.b16 %v12674
    %v12935 = vunpack.c.l.b16 %v12675
    %v12936 = vunpack.c.l.b16 %v12676
    %v12937 = vunpack.c.l.b16 %v12677
    %v12938 = vunpack.c.l.b16 %v12678
    %v12939 = vunpack.c.l.b16 %v12679
    %v12940 = vunpack.c.l.b16 %v12680
    %v12941 = vunpack.c.l.b16 %v12681
    %v12942 = vunpack.c.l.b16 %v12682
    %v12943 = vunpack.c.l.b16 %v12683
    %v12944 = vunpack.c.l.b16 %v12684
    %v12945 = vunpack.c.l.b16 %v12685
    %v12946 = vunpack.c.l.b16 %v12686
    %v12947 = vunpack.c.l.b16 %v12687
    %v12948 = vunpack.c.l.b16 %v12688
    %v12949 = vunpack.c.l.b16 %v12689
    %v12950 = vunpack.c.l.b16 %v12690
    %v12951 = vunpack.c.l.b16 %v12691
    %v12952 = vunpack.c.l.b16 %v12692
    %v12953 = vunpack.c.l.b16 %v12693
    %v12954 = vunpack.c.l.b16 %v12694
    %v12955 = vunpack.c.l.b16 %v12695
    %v12956 = vunpack.c.l.b16 %v12696
    %v12957 = vunpack.c.l.b16 %v12697
    %v12958 = vunpack.c.l.b16 %v12698
    %v12959 = vunpack.c.l.b16 %v12699
    %v12960 = vunpack.c.l.b16 %v12700
    %v12961 = vunpack.c.l.b16 %v12701
    %v12962 = vunpack.c.l.b16 %v12702
    %v12963 = vunpack.c.l.b16 %v12703
    %v12964 = vpack.c.b16 %v12837, %v12836
    %v12965 = vpack.c.b16 %v12839, %v12838
    %v12966 = vpack.c.b16 %v12841, %v12840
    %v12967 = vpack.c.b16 %v12843, %v12842
    %v12968 = vpack.c.b16 %v12845, %v12844
    %v12969 = vpack.c.b16 %v12847, %v12846
    %v12970 = vpack.c.b16 %v12849, %v12848
    %v12971 = vpack.c.b16 %v12851, %v12850
    %v12972 = vpack.c.b16 %v12853, %v12852
    %v12973 = vpack.c.b16 %v12855, %v12854
    %v12974 = vpack.c.b16 %v12857, %v12856
    %v12975 = vpack.c.b16 %v12859, %v12858
    %v12976 = vpack.c.b16 %v12861, %v12860
    %v12977 = vpack.c.b16 %v12863, %v12862
    %v12978 = vpack.c.b16 %v12865, %v12864
    %v12979 = vpack.c.b16 %v12867, %v12866
    %v12980 = vpack.c.b16 %v12869, %v12868
    %v12981 = vpack.c.b16 %v12871, %v12870
    %v12982 = vpack.c.b16 %v12873, %v12872
    %v12983 = vpack.c.b16 %v12875, %v12874
    %v12984 = vpack.c.b16 %v12877, %v12876
    %v12985 = vpack.c.b16 %v12879, %v12878
    %v12986 = vpack.c.b16 %v12881, %v12880
    %v12987 = vpack.c.b16 %v12883, %v12882
    %v12988 = vpack.c.b16 %v12885, %v12884
    %v12989 = vpack.c.b16 %v12887, %v12886
    %v12990 = vpack.c.b16 %v12889, %v12888
    %v12991 = vpack.c.b16 %v12891, %v12890
    %v12992 = vpack.c.b16 %v12893, %v12892
    %v12993 = vpack.c.b16 %v12895, %v12894
    %v12994 = vpack.c.b16 %v12897, %v12896
    %v12995 = vpack.c.b16 %v12899, %v12898
    %v12996 = vpack.c.b16 %v12901, %v12900
    %v12997 = vpack.c.b16 %v12903, %v12902
    %v12998 = vpack.c.b16 %v12905, %v12904
    %v12999 = vpack.c.b16 %v12907, %v12906
    %v13000 = vpack.c.b16 %v12909, %v12908
    %v13001 = vpack.c.b16 %v12911, %v12910
    %v13002 = vpack.c.b16 %v12913, %v12912
    %v13003 = vpack.c.b16 %v12915, %v12914
    %v13004 = vpack.c.b16 %v12917, %v12916
    %v13005 = vpack.c.b16 %v12919, %v12918
    %v13006 = vpack.c.b16 %v12921, %v12920
    %v13007 = vpack.c.b16 %v12923, %v12922
    %v13008 = vpack.c.b16 %v12925, %v12924
    %v13009 = vpack.c.b16 %v12927, %v12926
    %v13010 = vpack.c.b16 %v12929, %v12928
    %v13011 = vpack.c.b16 %v12931, %v12930
    %v13012 = vpack.c.b16 %v12933, %v12932
    %v13013 = vpack.c.b16 %v12935, %v12934
    %v13014 = vpack.c.b16 %v12937, %v12936
    %v13015 = vpack.c.b16 %v12939, %v12938
    %v13016 = vpack.c.b16 %v12941, %v12940
    %v13017 = vpack.c.b16 %v12943, %v12942
    %v13018 = vpack.c.b16 %v12945, %v12944
    %v13019 = vpack.c.b16 %v12947, %v12946
    %v13020 = vpack.c.b16 %v12949, %v12948
    %v13021 = vpack.c.b16 %v12951, %v12950
    %v13022 = vpack.c.b16 %v12953, %v12952
    %v13023 = vpack.c.b16 %v12955, %v12954
    %v13024 = vpack.c.b16 %v12957, %v12956
    %v13025 = vpack.c.b16 %v12959, %v12958
    %v13026 = vpack.c.b16 %v12961, %v12960
    %v13027 = vpack.c.b16 %v12963, %v12962
    %13092 = vmatpush.bf16.msra.mxu0 %v12971
    %13093 = vmatpush.bf16.msra.mxu0 %v12970
    %13094 = vmatpush.bf16.msra.mxu0 %v12969
    %13095 = vmatpush.bf16.msra.mxu0 %v12968
    %13096 = vmatpush.bf16.msra.mxu0 %v12967
    %13097 = vmatpush.bf16.msra.mxu0 %v12966
    %13098 = vmatpush.bf16.msra.mxu0 %v12965
    %13099 = vmatpush.bf16.msra.mxu0 %v12964
    %13100 = vmatmul.bf16.gmra.mxu0 %v12568
    %v13101 = vpop.f32.mrf.mxu0
    %v13102 = vadd.f32 %v12706, %v13101
    %v13103 = vpop.f32.mrf.mxu0
    %13104 = vdwg.mxu0
    %13105 = vmatpush.bf16.msra.mxu0 %v12979
    %13106 = vmatpush.bf16.msra.mxu0 %v12978
    %13107 = vmatpush.bf16.msra.mxu0 %v12977
    %13108 = vmatpush.bf16.msra.mxu0 %v12976
    %13109 = vmatpush.bf16.msra.mxu0 %v12975
    %13110 = vmatpush.bf16.msra.mxu0 %v12974
    %13111 = vmatpush.bf16.msra.mxu0 %v12973
    %13112 = vmatpush.bf16.msra.mxu0 %v12972
    %13113 = vmatmul.bf16.gmra.mxu0 %v12569
    %v13114 = vpop.f32.mrf.mxu0
    %v13115 = vadd.f32 %v13102, %v13114
    %v13116 = vpop.f32.mrf.mxu0
    %13117 = vdwg.mxu0
    %13118 = vmatpush.bf16.msra.mxu0 %v12987
    %13119 = vmatpush.bf16.msra.mxu0 %v12986
    %13120 = vmatpush.bf16.msra.mxu0 %v12985
    %13121 = vmatpush.bf16.msra.mxu0 %v12984
    %13122 = vmatpush.bf16.msra.mxu0 %v12983
    %13123 = vmatpush.bf16.msra.mxu0 %v12982
    %13124 = vmatpush.bf16.msra.mxu0 %v12981
    %13125 = vmatpush.bf16.msra.mxu0 %v12980
    %13126 = vmatmul.bf16.gmra.mxu0 %v12570
    %v13127 = vpop.f32.mrf.mxu0
    %v13128 = vadd.f32 %v13115, %v13127
    %v13129 = vpop.f32.mrf.mxu0
    %13130 = vdwg.mxu0
    %13131 = vmatpush.bf16.msra.mxu0 %v12995
    %13132 = vmatpush.bf16.msra.mxu0 %v12994
    %13133 = vmatpush.bf16.msra.mxu0 %v12993
    %13134 = vmatpush.bf16.msra.mxu0 %v12992
    %13135 = vmatpush.bf16.msra.mxu0 %v12991
    %13136 = vmatpush.bf16.msra.mxu0 %v12990
    %13137 = vmatpush.bf16.msra.mxu0 %v12989
    %13138 = vmatpush.bf16.msra.mxu0 %v12988
    %13139 = vmatmul.bf16.gmra.mxu0 %v12571
    %v13140 = vpop.f32.mrf.mxu0
    %v13141 = vadd.f32 %v13128, %v13140
    %v13142 = vpop.f32.mrf.mxu0
    %13143 = vdwg.mxu0
    %13144 = vmatpush.bf16.msra.mxu0 %v13003
    %13145 = vmatpush.bf16.msra.mxu0 %v13002
    %13146 = vmatpush.bf16.msra.mxu0 %v13001
    %13147 = vmatpush.bf16.msra.mxu0 %v13000
    %13148 = vmatpush.bf16.msra.mxu0 %v12999
    %13149 = vmatpush.bf16.msra.mxu0 %v12998
    %13150 = vmatpush.bf16.msra.mxu0 %v12997
    %13151 = vmatpush.bf16.msra.mxu0 %v12996
    %13152 = vmatmul.bf16.gmra.mxu0 %v12572
    %v13153 = vpop.f32.mrf.mxu0
    %v13154 = vadd.f32 %v13141, %v13153
    %v13155 = vpop.f32.mrf.mxu0
    %13156 = vdwg.mxu0
    %13157 = vmatpush.bf16.msra.mxu0 %v13011
    %13158 = vmatpush.bf16.msra.mxu0 %v13010
    %13159 = vmatpush.bf16.msra.mxu0 %v13009
    %13160 = vmatpush.bf16.msra.mxu0 %v13008
    %13161 = vmatpush.bf16.msra.mxu0 %v13007
    %13162 = vmatpush.bf16.msra.mxu0 %v13006
    %13163 = vmatpush.bf16.msra.mxu0 %v13005
    %13164 = vmatpush.bf16.msra.mxu0 %v13004
    %13165 = vmatmul.bf16.gmra.mxu0 %v12573
    %v13166 = vpop.f32.mrf.mxu0
    %v13167 = vadd.f32 %v13154, %v13166
    %v13168 = vpop.f32.mrf.mxu0
    %13169 = vdwg.mxu0
    %13170 = vmatpush.bf16.msra.mxu0 %v13019
    %13171 = vmatpush.bf16.msra.mxu0 %v13018
    %13172 = vmatpush.bf16.msra.mxu0 %v13017
    %13173 = vmatpush.bf16.msra.mxu0 %v13016
    %13174 = vmatpush.bf16.msra.mxu0 %v13015
    %13175 = vmatpush.bf16.msra.mxu0 %v13014
    %13176 = vmatpush.bf16.msra.mxu0 %v13013
    %13177 = vmatpush.bf16.msra.mxu0 %v13012
    %13178 = vmatmul.bf16.gmra.mxu0 %v12574
    %v13179 = vpop.f32.mrf.mxu0
    %v13180 = vadd.f32 %v13167, %v13179
    %v13181 = vpop.f32.mrf.mxu0
    %13182 = vdwg.mxu0
    %13183 = vmatpush.bf16.msra.mxu0 %v13027
    %13184 = vmatpush.bf16.msra.mxu0 %v13026
    %13185 = vmatpush.bf16.msra.mxu0 %v13025
    %13186 = vmatpush.bf16.msra.mxu0 %v13024
    %13187 = vmatpush.bf16.msra.mxu0 %v13023
    %13188 = vmatpush.bf16.msra.mxu0 %v13022
    %13189 = vmatpush.bf16.msra.mxu0 %v13021
    %13190 = vmatpush.bf16.msra.mxu0 %v13020
    %13191 = vmatmul.bf16.gmra.mxu0 %v12575
    %v13192 = vpop.f32.mrf.mxu0
    %v13193 = vadd.f32 %v13180, %v13192
    %v13194 = vpop.f32.mrf.mxu0
    %13195 = vdwg.mxu0
    %v13196 = vlaneseq
    %v13197 = vand.u32 %v13196, 127
    %vm13198 = vcmp.lt.s32.totalorder %v13197, 4
    %v13199 = vsel %vm13198, %v13193, 0.0
    %13200 = vadd.xlane.f32.xlu0 %v13199
    %v13201 = vpop.xlane.xlu0 %13200
    %vm13202 = vcmp.eq.s32.totalorder %v13197, 4
    %v13203 = vsel %vm13202, %v13193, 0.0
    %13204 = vadd.xlane.f32.xlu0 %v13203
    %v13205 = vpop.xlane.xlu0 %13204
    %v13206 = vmul.f32 %v13201, 0.25
    %v13207 = vsub.f32 %v13205, %v13206
    %v13208 = vadd.f32 %v13193, %v13207
    %13209 = vst [vmem:[%s12] sm:$0xff] %v13208
    // Predicated region
    $region94: #{conv_dueling_dqn_forward.1} parent=1 // pred_check
      _
    $region95: #{conv_dueling_dqn_forward.1} parent=1 // pred_check_branch
      %13211 = sbr.rel (0) target = $region97
    $region96: #{conv_dueling_dqn_forward.1} parent=1 // pred_region
      _
    $region97: #{conv_dueling_dqn_forward.1} parent=1 // pred_fallthru
      _
    // Predicated region
    $region98: #{conv_dueling_dqn_forward.1} parent=1 // pred_check
      _
    $region99: #{conv_dueling_dqn_forward.1} parent=1 // pred_check_branch
      %13213 = sbr.rel (0) target = $region101
    $region100: #{conv_dueling_dqn_forward.1} parent=1 // pred_region
      _
    $region101: #{conv_dueling_dqn_forward.1} parent=1 // pred_fallthru
      _
    %13214 = vsyncpa [#allocation3], 1
    %13215 = vsyncpa [#allocation5], 1
    %13216 = vsyncpa [#allocation8], 1
    %13217 = vsyncpa [#allocation11], 1
    %13218 = vsyncpa [#allocation14], 1
    %13219 = vsyncpa [#allocation17], 1

</llo_original>
